<compile_context>
chip_gen: v7x
topology: tpu7x:2x2x1
jax: 0.10.0
libtpu: 0.0.40
codegen_flags: <defaults>
</compile_context>

<pallas_src>
import numpy as np
import jax
import jax.numpy as jnp
from jax.experimental import pallas as pl
from jax.experimental.pallas import tpu as pltpu


# ----------------------------- static geometry ----------------------------- #
H0 = W0 = 32
KH = KW = 5
NTAP = KH * KW                    # 25 conv taps
CIN = 3
K1 = 128                          # conv1 im2col K (75 valid lanes)
CPAD = 128                        # lane-dense channel / feature width
X_ROWS = 28 * 32                  # 896 conv1 output rows, r = i*32 + j (i<=27)
P1_ROWS = 14 * 16                 # 224 pool1 rows, r = h*16 + w
P1_PAD_ROWS = P1_ROWS + 8         # +8 zero rows so dj-shifted reads stay in bounds
C2_ROWS = 10 * 16                 # 160 conv2 output rows, r = i*16 + j (i<=9)
FC1_K = NTAP * CPAD               # 3200 lane-packed fc1 features


# ------------------------------ Pallas kernel ------------------------------ #

def _simple_cnn_kernel(x_ref, w1_ref, b1_ref, w2_ref, b2_ref,
                       wf1_ref, bf1_ref, wf2_ref, bf2_ref, wf3_ref, bf3_ref,
                       out_ref, stage_ref, p1_ref, shift_ref, c2_ref):
    """One grid step == one batch element; everything stays resident in VMEM."""
    f32 = jnp.float32
    bf16 = jnp.bfloat16

    # Deterministic zeros for the dj-shift overrun rows (only ever feed garbage
    # conv2 outputs that pool2 never reads, but keep them defined & finite).
    p1_ref[P1_ROWS:P1_PAD_ROWS, :] = jnp.zeros((P1_PAD_ROWS - P1_ROWS, CPAD), f32)

    # ---- conv1 (single im2col matmul) + bias + ReLU + pool1, fused per chunk --
    w1 = w1_ref[...]                  # (128,128) bf16, hoisted out of the loop
    b1 = b1_ref[...]                  # (1,128) f32
    for ph2 in range(7):              # 128 conv rows per chunk = 2 pool rows
        lhs = x_ref[ph2 * 128:(ph2 + 1) * 128, :]                  # (128,128) bf16
        y = jnp.dot(lhs, w1, preferred_element_type=f32)           # (128,128) f32
        y = jnp.maximum(y + b1, 0.0)                               # bias+ReLU fused
        for s in range(2):
            ph = 2 * ph2 + s
            # vertical 2x1 max over conv rows i = 2ph, 2ph+1 (aligned value slices)
            vm = jnp.maximum(y[s * 64:s * 64 + 32, :],
                             y[s * 64 + 32:s * 64 + 64, :])        # (32,128)
            stage_ref[...] = vm
            # horizontal 1x2 max + stride-2 compaction (2 strided reads)
            even = stage_ref[pl.ds(0, 16, stride=2), :]            # w = 0,2,..,30
            odd = stage_ref[pl.ds(1, 16, stride=2), :]             # w = 1,3,..,31
            p1_ref[ph * 16:(ph + 1) * 16, :] = jnp.maximum(even, odd)

    # ---- conv2: 25 taps accumulated in vregs, grouped by dj for alignment ----
    b2 = b2_ref[...]
    acc = None
    for dj in range(KW):
        # one (possibly misaligned) slab read per dj; di taps then read aligned
        shift_ref[...] = p1_ref[dj:dj + P1_ROWS, :].astype(bf16)   # (224,128) bf16
        for di in range(KH):
            t = di * KW + dj
            lhs = shift_ref[di * 16:di * 16 + C2_ROWS, :]          # (160,128) bf16
            part = jnp.dot(lhs, w2_ref[t], preferred_element_type=f32)
            acc = part if acc is None else acc + part
    c2_ref[...] = jnp.maximum(acc + b2, 0.0)                       # one store

    # ---- pool2 -> lane-concatenated (1, 3200) feature row -> one fc1 matmul --
    blks = []
    for ph in range(5):
        for pw in range(5):
            r0 = (2 * ph) * 16 + 2 * pw
            r1 = (2 * ph + 1) * 16 + 2 * pw
            blk = jnp.maximum(
                jnp.maximum(c2_ref[r0:r0 + 1, :], c2_ref[r0 + 1:r0 + 2, :]),
                jnp.maximum(c2_ref[r1:r1 + 1, :], c2_ref[r1 + 1:r1 + 2, :]))
            blks.append(blk)                                       # (1,128) f32
    flat = jnp.concatenate(blks, axis=1).astype(bf16)              # (1, 3200)

    h1 = jnp.dot(flat, wf1_ref[...], preferred_element_type=f32) + bf1_ref[...]
    h1 = jnp.maximum(h1, 0.0)
    h2 = jnp.dot(h1.astype(bf16), wf2_ref[...],
                 preferred_element_type=f32) + bf2_ref[...]
    h2 = jnp.maximum(h2, 0.0)
    out_ref[...] = jnp.dot(h2.astype(bf16), wf3_ref[...],
                           preferred_element_type=f32) + bf3_ref[...]


# ------------------------------- JAX wrapper -------------------------------- #

def simple_cnn_forward(x_nchw, pp):
    """x_nchw: (B, 3, 32, 32) float32; pp: padded bf16 params from prepare_params."""
    B, C, H, W = x_nchw.shape
    assert (C, H, W) == (CIN, H0, W0)

    # im2col-in-lanes for conv1: rows = i*32 + j (i<=27), lanes = tap*3 + cin.
    x = jnp.transpose(x_nchw, (0, 2, 3, 1))                        # NHWC
    xp = jnp.pad(x, ((0, 0), (0, 0), (0, KW - 1), (0, 0)))         # pad W for j+dj
    patches = [xp[:, di:di + 28, dj:dj + 32, :]
               for di in range(KH) for dj in range(KW)]            # 25 x (B,28,32,3)
    x_cols = jnp.concatenate(patches, axis=-1)                     # (B,28,32,75)
    x_cols = x_cols.reshape(B, X_ROWS, NTAP * CIN)
    x_cols = jnp.pad(x_cols, ((0, 0), (0, 0), (0, K1 - NTAP * CIN)))
    x_cols = x_cols.astype(jnp.bfloat16)                           # halve input DMA

    out = pl.pallas_call(
        _simple_cnn_kernel,
        out_shape=jax.ShapeDtypeStruct((B, 1, CPAD), jnp.float32),
        grid=(B,),
        in_specs=[
            pl.BlockSpec((None, X_ROWS, K1), lambda b: (b, 0, 0)),   # x_cols
            pl.BlockSpec((K1, CPAD), lambda b: (0, 0)),              # w1
            pl.BlockSpec((1, CPAD), lambda b: (0, 0)),               # b1
            pl.BlockSpec((NTAP, CPAD, CPAD), lambda b: (0, 0, 0)),   # w2
            pl.BlockSpec((1, CPAD), lambda b: (0, 0)),               # b2
            pl.BlockSpec((FC1_K, CPAD), lambda b: (0, 0)),           # w_fc1
            pl.BlockSpec((1, CPAD), lambda b: (0, 0)),               # b_fc1
            pl.BlockSpec((CPAD, CPAD), lambda b: (0, 0)),            # w_fc2
            pl.BlockSpec((1, CPAD), lambda b: (0, 0)),               # b_fc2
            pl.BlockSpec((CPAD, CPAD), lambda b: (0, 0)),            # w_fc3
            pl.BlockSpec((1, CPAD), lambda b: (0, 0)),               # b_fc3
        ],
        out_specs=pl.BlockSpec((None, 1, CPAD), lambda b: (b, 0, 0)),
        scratch_shapes=[
            pltpu.VMEM((32, CPAD), jnp.float32),             # pool1 staging
            pltpu.VMEM((P1_PAD_ROWS, CPAD), jnp.float32),    # pool1 output
            pltpu.VMEM((P1_ROWS, CPAD), jnp.bfloat16),       # dj-shifted pool1
            pltpu.VMEM((C2_ROWS, CPAD), jnp.float32),        # conv2 output
        ],
        compiler_params=pltpu.CompilerParams(
            dimension_semantics=("parallel",),               # v7x: batch across TCs
            vmem_limit_bytes=32 * 1024 * 1024,
        ),
    )(x_cols, pp['w1'], pp['b1'], pp['w2'], pp['b2'],
      pp['w_fc1'], pp['b_fc1'], pp['w_fc2'], pp['b_fc2'],
      pp['w_fc3'], pp['b_fc3'])

    return out[:, 0, :10]


# -------------------- one-time weight padding / permutation ----------------- #

def prepare_params(p):
    """Pad to lane-dense widths, pre-permute for the kernel layouts, cast bf16."""
    f32 = jnp.float32
    bf16 = jnp.bfloat16

    # conv1: (6,3,5,5) -> im2col weight (75->128, 6->128), k = (di*5+dj)*3 + cin
    w1 = jnp.transpose(p['w1'], (2, 3, 1, 0)).reshape(NTAP * CIN, 6)
    w1p = jnp.zeros((K1, CPAD), f32).at[:NTAP * CIN, :6].set(w1).astype(bf16)
    b1p = jnp.zeros((1, CPAD), f32).at[0, :6].set(p['b1'])

    # conv2: (16,6,5,5) -> (25 taps, 128, 128)
    w2 = jnp.transpose(p['w2'], (2, 3, 1, 0)).reshape(NTAP, 6, 16)
    w2p = jnp.zeros((NTAP, CPAD, CPAD), f32).at[:, :6, :16].set(w2).astype(bf16)
    b2p = jnp.zeros((1, CPAD), f32).at[0, :16].set(p['b2'])

    # fc1: (120, 400); torch feature index = c*25 + ph*5 + pw.
    # Kernel feature index = pos*128 + c with pos = ph*5 + pw (lane-concat order).
    wf1 = p['w_fc1'].reshape(120, 16, 5, 5)                        # [n, c, ph, pw]
    wf1 = jnp.transpose(wf1, (2, 3, 1, 0)).reshape(NTAP, 16, 120)  # [pos, c, n]
    wf1p = jnp.zeros((NTAP, CPAD, CPAD), f32).at[:, :16, :120].set(wf1)
    wf1p = wf1p.reshape(FC1_K, CPAD).astype(bf16)
    bf1p = jnp.zeros((1, CPAD), f32).at[0, :120].set(p['b_fc1'])

    wf2p = jnp.zeros((CPAD, CPAD), f32).at[:120, :84].set(p['w_fc2'].T).astype(bf16)
    bf2p = jnp.zeros((1, CPAD), f32).at[0, :84].set(p['b_fc2'])

    wf3p = jnp.zeros((CPAD, CPAD), f32).at[:84, :10].set(p['w_fc3'].T).astype(bf16)
    bf3p = jnp.zeros((1, CPAD), f32).at[0, :10].set(p['b_fc3'])

    return {'w1': w1p, 'b1': b1p, 'w2': w2p, 'b2': b2p,
            'w_fc1': wf1p, 'b_fc1': bf1p, 'w_fc2': wf2p, 'b_fc2': bf2p,
            'w_fc3': wf3p, 'b_fc3': bf3p}


# ----------------------- deterministic parameter init ----------------------- #

def init_params(key):
    ks = jax.random.split(key, 10)

    def u(k, shape, fan_in):
        bound = 1.0 / np.sqrt(fan_in)
        return jax.random.uniform(k, shape, jnp.float32, -bound, bound)

    return {
        'w1': u(ks[0], (6, 3, 5, 5), 3 * 5 * 5),   'b1': u(ks[1], (6,), 3 * 5 * 5),
        'w2': u(ks[2], (16, 6, 5, 5), 6 * 5 * 5),  'b2': u(ks[3], (16,), 6 * 5 * 5),
        'w_fc1': u(ks[4], (120, 400), 400),        'b_fc1': u(ks[5], (120,), 400),
        'w_fc2': u(ks[6], (84, 120), 120),         'b_fc2': u(ks[7], (84,), 120),
        'w_fc3': u(ks[8], (10, 84), 84),           'b_fc3': u(ks[9], (10,), 84),
    }


# --------------------------- pure-JAX reference ------------------------------ #

def _ref_forward(x, p):
    hp = jax.lax.Precision.HIGHEST

    def conv(x, w, b):
        y = jax.lax.conv_general_dilated(
            x, w, (1, 1), 'VALID',
            dimension_numbers=('NCHW', 'OIHW', 'NCHW'), precision=hp)
        return y + b[None, :, None, None]

    def pool(x):
        B, C, H, W = x.shape
        return x.reshape(B, C, H // 2, 2, W // 2, 2).max(axis=(3, 5))

    x = pool(jax.nn.relu(conv(x, p['w1'], p['b1'])))
    x = pool(jax.nn.relu(conv(x, p['w2'], p['b2'])))
    x = x.reshape(x.shape[0], -1)
    x = jax.nn.relu(jnp.dot(x, p['w_fc1'].T, precision=hp) + p['b_fc1'])
    x = jax.nn.relu(jnp.dot(x, p['w_fc2'].T, precision=hp) + p['b_fc2'])
    return jnp.dot(x, p['w_fc3'].T, precision=hp) + p['b_fc3']


if __name__ == "__main__":
    key = jax.random.PRNGKey(0)
    k_x, k_p = jax.random.split(key)
    params = init_params(k_p)
    pparams = prepare_params(params)   # one-time padding/permutation/bf16 cast
    # 32x32 spatial is required by the module (16*5*5 flatten after two convs+pools).
    x = jax.random.normal(k_x, (2, 3, 32, 32), jnp.float32)

    out = jax.jit(simple_cnn_forward)(x, pparams)
    out = jax.block_until_ready(out)
    assert out.shape == (2, 10) and out.dtype == jnp.float32

    ref = _ref_forward(x, params)
    # 5e-2 tolerance for the bf16-MXU variant (f32 accumulation, f32 element-wise).
    np.testing.assert_allclose(np.asarray(out), np.asarray(ref), rtol=5e-2, atol=5e-2)

    print("KERNEL_OK")
</pallas_src>

<mosaic_0001>
module attributes {stable_mosaic.version = 11 : i64} {
  func.func @_simple_cnn_kernel(%arg0: i32, %arg1: memref<1x896x128xbf16, #tpu.memory_space<vmem>>, %arg2: memref<128x128xbf16, #tpu.memory_space<vmem>>, %arg3: memref<1x128xf32, #tpu.memory_space<vmem>>, %arg4: memref<25x128x128xbf16, #tpu.memory_space<vmem>>, %arg5: memref<1x128xf32, #tpu.memory_space<vmem>>, %arg6: memref<3200x128xbf16, #tpu.memory_space<vmem>>, %arg7: memref<1x128xf32, #tpu.memory_space<vmem>>, %arg8: memref<128x128xbf16, #tpu.memory_space<vmem>>, %arg9: memref<1x128xf32, #tpu.memory_space<vmem>>, %arg10: memref<128x128xbf16, #tpu.memory_space<vmem>>, %arg11: memref<1x128xf32, #tpu.memory_space<vmem>>, %arg12: memref<1x1x128xf32, #tpu.memory_space<vmem>>, %arg13: memref<32x128xf32, #tpu.memory_space<vmem>>, %arg14: memref<232x128xf32, #tpu.memory_space<vmem>>, %arg15: memref<224x128xbf16, #tpu.memory_space<vmem>>, %arg16: memref<160x128xf32, #tpu.memory_space<vmem>>) attributes {dimension_semantics = [#tpu.dimension_semantics<parallel>], iteration_bounds = array<i64: 2>, scalar_prefetch = 0 : i64, scratch_operands = 4 : i64, tpu.core_type = #tpu.core_type<tc>, window_params = [{transform_indices = @transform_0, window_bounds = array<i64: 1, 896, 128>}, {pipeline_mode = #tpu.pipeline_mode<synchronous>, transform_indices = @transform_1, window_bounds = array<i64: 128, 128>}, {pipeline_mode = #tpu.pipeline_mode<synchronous>, transform_indices = @transform_2, window_bounds = array<i64: 1, 128>}, {pipeline_mode = #tpu.pipeline_mode<synchronous>, transform_indices = @transform_3, window_bounds = array<i64: 25, 128, 128>}, {pipeline_mode = #tpu.pipeline_mode<synchronous>, transform_indices = @transform_4, window_bounds = array<i64: 1, 128>}, {pipeline_mode = #tpu.pipeline_mode<synchronous>, transform_indices = @transform_5, window_bounds = array<i64: 3200, 128>}, {pipeline_mode = #tpu.pipeline_mode<synchronous>, transform_indices = @transform_6, window_bounds = array<i64: 1, 128>}, {pipeline_mode = #tpu.pipeline_mode<synchronous>, transform_indices = @transform_7, window_bounds = array<i64: 128, 128>}, {pipeline_mode = #tpu.pipeline_mode<synchronous>, transform_indices = @transform_8, window_bounds = array<i64: 1, 128>}, {pipeline_mode = #tpu.pipeline_mode<synchronous>, transform_indices = @transform_9, window_bounds = array<i64: 128, 128>}, {pipeline_mode = #tpu.pipeline_mode<synchronous>, transform_indices = @transform_10, window_bounds = array<i64: 1, 128>}, {transform_indices = @transform_11, window_bounds = array<i64: 1, 1, 128>}]} {
    %cst = arith.constant 0.000000e+00 : f32
    %0 = vector.broadcast %cst : f32 to vector<8x128xf32>
    %c224 = arith.constant 224 : index
    %c0 = arith.constant 0 : index
    %1 = vector.load %arg14[%c224, %c0] : memref<232x128xf32, #tpu.memory_space<vmem>>, vector<8x128xf32>
    tpu.vector_store %arg14[%c224, %c0], %0 {strides = array<i32>} : memref<232x128xf32, #tpu.memory_space<vmem>>, vector<8x128xf32>,
    %c0_0 = arith.constant 0 : index
    %c0_1 = arith.constant 0 : index
    %2 = vector.load %arg2[%c0_0, %c0_1] : memref<128x128xbf16, #tpu.memory_space<vmem>>, vector<128x128xbf16>
    %c0_2 = arith.constant 0 : index
    %c0_3 = arith.constant 0 : index
    %3 = vector.load %arg3[%c0_2, %c0_3] : memref<1x128xf32, #tpu.memory_space<vmem>>, vector<1x128xf32>
    %c0_4 = arith.constant 0 : index
    %c0_5 = arith.constant 0 : index
    %c0_6 = arith.constant 0 : index
    %4 = vector.load %arg1[%c0_4, %c0_5, %c0_6] : memref<1x896x128xbf16, #tpu.memory_space<vmem>>, vector<1x128x128xbf16>
    %5 = vector.shape_cast %4 : vector<1x128x128xbf16> to vector<128x128xbf16>
    %cst_7 = arith.constant dense<0.000000e+00> : vector<128x128xf32>
    %6 = tpu.matmul %5, %2, %cst_7 {dimension_numbers = #tpu.dot_dimension_numbers<[1], [0], [0], [1], [0, 0, 1, 1], [], []>} : vector<128x128xbf16>, vector<128x128xbf16>, vector<128x128xf32> -> vector<128x128xf32>
    %7 = vector.broadcast %3 : vector<1x128xf32> to vector<128x128xf32>
    %8 = arith.addf %6, %7 : vector<128x128xf32>
    %cst_8 = arith.constant 0.000000e+00 : f32
    %9 = vector.broadcast %cst_8 : f32 to vector<128x128xf32>
    %10 = arith.maximumf %8, %9 : vector<128x128xf32>
    %11 = vector.extract_strided_slice %10 {offsets = [0, 0], sizes = [32, 128], strides = [1, 1]} : vector<128x128xf32> to vector<32x128xf32>
    %12 = vector.extract_strided_slice %10 {offsets = [32, 0], sizes = [32, 128], strides = [1, 1]} : vector<128x128xf32> to vector<32x128xf32>
    %13 = arith.maximumf %11, %12 : vector<32x128xf32>
    %c0_9 = arith.constant 0 : index
    %c0_10 = arith.constant 0 : index
    %14 = vector.load %arg13[%c0_9, %c0_10] : memref<32x128xf32, #tpu.memory_space<vmem>>, vector<32x128xf32>
    tpu.vector_store %arg13[%c0_9, %c0_10], %13 {strides = array<i32>} : memref<32x128xf32, #tpu.memory_space<vmem>>, vector<32x128xf32>,
    %c0_11 = arith.constant 0 : index
    %c0_12 = arith.constant 0 : index
    %15 = tpu.strided_load %arg13[%c0_11, %c0_12] {strides = array<i32: 2, 1>} : memref<32x128xf32, #tpu.memory_space<vmem>>, vector<16x128xf32>
    %c1 = arith.constant 1 : index
    %c0_13 = arith.constant 0 : index
    %16 = tpu.strided_load %arg13[%c1, %c0_13] {strides = array<i32: 2, 1>} : memref<32x128xf32, #tpu.memory_space<vmem>>, vector<16x128xf32>
    %17 = arith.maximumf %15, %16 : vector<16x128xf32>
    %c0_14 = arith.constant 0 : index
    %c0_15 = arith.constant 0 : index
    %18 = vector.load %arg14[%c0_14, %c0_15] : memref<232x128xf32, #tpu.memory_space<vmem>>, vector<16x128xf32>
    tpu.vector_store %arg14[%c0_14, %c0_15], %17 {strides = array<i32>} : memref<232x128xf32, #tpu.memory_space<vmem>>, vector<16x128xf32>,
    %19 = vector.extract_strided_slice %10 {offsets = [64, 0], sizes = [32, 128], strides = [1, 1]} : vector<128x128xf32> to vector<32x128xf32>
    %20 = vector.extract_strided_slice %10 {offsets = [96, 0], sizes = [32, 128], strides = [1, 1]} : vector<128x128xf32> to vector<32x128xf32>
    %21 = arith.maximumf %19, %20 : vector<32x128xf32>
    %c0_16 = arith.constant 0 : index
    %c0_17 = arith.constant 0 : index
    %22 = vector.load %arg13[%c0_16, %c0_17] : memref<32x128xf32, #tpu.memory_space<vmem>>, vector<32x128xf32>
    tpu.vector_store %arg13[%c0_16, %c0_17], %21 {strides = array<i32>} : memref<32x128xf32, #tpu.memory_space<vmem>>, vector<32x128xf32>,
    %c0_18 = arith.constant 0 : index
    %c0_19 = arith.constant 0 : index
    %23 = tpu.strided_load %arg13[%c0_18, %c0_19] {strides = array<i32: 2, 1>} : memref<32x128xf32, #tpu.memory_space<vmem>>, vector<16x128xf32>
    %c1_20 = arith.constant 1 : index
    %c0_21 = arith.constant 0 : index
    %24 = tpu.strided_load %arg13[%c1_20, %c0_21] {strides = array<i32: 2, 1>} : memref<32x128xf32, #tpu.memory_space<vmem>>, vector<16x128xf32>
    %25 = arith.maximumf %23, %24 : vector<16x128xf32>
    %c16 = arith.constant 16 : index
    %c0_22 = arith.constant 0 : index
    %26 = vector.load %arg14[%c16, %c0_22] : memref<232x128xf32, #tpu.memory_space<vmem>>, vector<16x128xf32>
    tpu.vector_store %arg14[%c16, %c0_22], %25 {strides = array<i32>} : memref<232x128xf32, #tpu.memory_space<vmem>>, vector<16x128xf32>,
    %c0_23 = arith.constant 0 : index
    %c128 = arith.constant 128 : index
    %c0_24 = arith.constant 0 : index
    %27 = vector.load %arg1[%c0_23, %c128, %c0_24] : memref<1x896x128xbf16, #tpu.memory_space<vmem>>, vector<1x128x128xbf16>
    %28 = vector.shape_cast %27 : vector<1x128x128xbf16> to vector<128x128xbf16>
    %cst_25 = arith.constant dense<0.000000e+00> : vector<128x128xf32>
    %29 = tpu.matmul %28, %2, %cst_25 {dimension_numbers = #tpu.dot_dimension_numbers<[1], [0], [0], [1], [0, 0, 1, 1], [], []>} : vector<128x128xbf16>, vector<128x128xbf16>, vector<128x128xf32> -> vector<128x128xf32>
    %30 = vector.broadcast %3 : vector<1x128xf32> to vector<128x128xf32>
    %31 = arith.addf %29, %30 : vector<128x128xf32>
    %cst_26 = arith.constant 0.000000e+00 : f32
    %32 = vector.broadcast %cst_26 : f32 to vector<128x128xf32>
    %33 = arith.maximumf %31, %32 : vector<128x128xf32>
    %34 = vector.extract_strided_slice %33 {offsets = [0, 0], sizes = [32, 128], strides = [1, 1]} : vector<128x128xf32> to vector<32x128xf32>
    %35 = vector.extract_strided_slice %33 {offsets = [32, 0], sizes = [32, 128], strides = [1, 1]} : vector<128x128xf32> to vector<32x128xf32>
    %36 = arith.maximumf %34, %35 : vector<32x128xf32>
    %c0_27 = arith.constant 0 : index
    %c0_28 = arith.constant 0 : index
    %37 = vector.load %arg13[%c0_27, %c0_28] : memref<32x128xf32, #tpu.memory_space<vmem>>, vector<32x128xf32>
    tpu.vector_store %arg13[%c0_27, %c0_28], %36 {strides = array<i32>} : memref<32x128xf32, #tpu.memory_space<vmem>>, vector<32x128xf32>,
    %c0_29 = arith.constant 0 : index
    %c0_30 = arith.constant 0 : index
    %38 = tpu.strided_load %arg13[%c0_29, %c0_30] {strides = array<i32: 2, 1>} : memref<32x128xf32, #tpu.memory_space<vmem>>, vector<16x128xf32>
    %c1_31 = arith.constant 1 : index
    %c0_32 = arith.constant 0 : index
    %39 = tpu.strided_load %arg13[%c1_31, %c0_32] {strides = array<i32: 2, 1>} : memref<32x128xf32, #tpu.memory_space<vmem>>, vector<16x128xf32>
    %40 = arith.maximumf %38, %39 : vector<16x128xf32>
    %c32 = arith.constant 32 : index
    %c0_33 = arith.constant 0 : index
    %41 = vector.load %arg14[%c32, %c0_33] : memref<232x128xf32, #tpu.memory_space<vmem>>, vector<16x128xf32>
    tpu.vector_store %arg14[%c32, %c0_33], %40 {strides = array<i32>} : memref<232x128xf32, #tpu.memory_space<vmem>>, vector<16x128xf32>,
    %42 = vector.extract_strided_slice %33 {offsets = [64, 0], sizes = [32, 128], strides = [1, 1]} : vector<128x128xf32> to vector<32x128xf32>
    %43 = vector.extract_strided_slice %33 {offsets = [96, 0], sizes = [32, 128], strides = [1, 1]} : vector<128x128xf32> to vector<32x128xf32>
    %44 = arith.maximumf %42, %43 : vector<32x128xf32>
    %c0_34 = arith.constant 0 : index
    %c0_35 = arith.constant 0 : index
    %45 = vector.load %arg13[%c0_34, %c0_35] : memref<32x128xf32, #tpu.memory_space<vmem>>, vector<32x128xf32>
    tpu.vector_store %arg13[%c0_34, %c0_35], %44 {strides = array<i32>} : memref<32x128xf32, #tpu.memory_space<vmem>>, vector<32x128xf32>,
    %c0_36 = arith.constant 0 : index
    %c0_37 = arith.constant 0 : index
    %46 = tpu.strided_load %arg13[%c0_36, %c0_37] {strides = array<i32: 2, 1>} : memref<32x128xf32, #tpu.memory_space<vmem>>, vector<16x128xf32>
    %c1_38 = arith.constant 1 : index
    %c0_39 = arith.constant 0 : index
    %47 = tpu.strided_load %arg13[%c1_38, %c0_39] {strides = array<i32: 2, 1>} : memref<32x128xf32, #tpu.memory_space<vmem>>, vector<16x128xf32>
    %48 = arith.maximumf %46, %47 : vector<16x128xf32>
    %c48 = arith.constant 48 : index
    %c0_40 = arith.constant 0 : index
    %49 = vector.load %arg14[%c48, %c0_40] : memref<232x128xf32, #tpu.memory_space<vmem>>, vector<16x128xf32>
    tpu.vector_store %arg14[%c48, %c0_40], %48 {strides = array<i32>} : memref<232x128xf32, #tpu.memory_space<vmem>>, vector<16x128xf32>,
    %c0_41 = arith.constant 0 : index
    %c256 = arith.constant 256 : index
    %c0_42 = arith.constant 0 : index
    %50 = vector.load %arg1[%c0_41, %c256, %c0_42] : memref<1x896x128xbf16, #tpu.memory_space<vmem>>, vector<1x128x128xbf16>
    %51 = vector.shape_cast %50 : vector<1x128x128xbf16> to vector<128x128xbf16>
    %cst_43 = arith.constant dense<0.000000e+00> : vector<128x128xf32>
    %52 = tpu.matmul %51, %2, %cst_43 {dimension_numbers = #tpu.dot_dimension_numbers<[1], [0], [0], [1], [0, 0, 1, 1], [], []>} : vector<128x128xbf16>, vector<128x128xbf16>, vector<128x128xf32> -> vector<128x128xf32>
    %53 = vector.broadcast %3 : vector<1x128xf32> to vector<128x128xf32>
    %54 = arith.addf %52, %53 : vector<128x128xf32>
    %cst_44 = arith.constant 0.000000e+00 : f32
    %55 = vector.broadcast %cst_44 : f32 to vector<128x128xf32>
    %56 = arith.maximumf %54, %55 : vector<128x128xf32>
    %57 = vector.extract_strided_slice %56 {offsets = [0, 0], sizes = [32, 128], strides = [1, 1]} : vector<128x128xf32> to vector<32x128xf32>
    %58 = vector.extract_strided_slice %56 {offsets = [32, 0], sizes = [32, 128], strides = [1, 1]} : vector<128x128xf32> to vector<32x128xf32>
    %59 = arith.maximumf %57, %58 : vector<32x128xf32>
    %c0_45 = arith.constant 0 : index
    %c0_46 = arith.constant 0 : index
    %60 = vector.load %arg13[%c0_45, %c0_46] : memref<32x128xf32, #tpu.memory_space<vmem>>, vector<32x128xf32>
    tpu.vector_store %arg13[%c0_45, %c0_46], %59 {strides = array<i32>} : memref<32x128xf32, #tpu.memory_space<vmem>>, vector<32x128xf32>,
    %c0_47 = arith.constant 0 : index
    %c0_48 = arith.constant 0 : index
    %61 = tpu.strided_load %arg13[%c0_47, %c0_48] {strides = array<i32: 2, 1>} : memref<32x128xf32, #tpu.memory_space<vmem>>, vector<16x128xf32>
    %c1_49 = arith.constant 1 : index
    %c0_50 = arith.constant 0 : index
    %62 = tpu.strided_load %arg13[%c1_49, %c0_50] {strides = array<i32: 2, 1>} : memref<32x128xf32, #tpu.memory_space<vmem>>, vector<16x128xf32>
    %63 = arith.maximumf %61, %62 : vector<16x128xf32>
    %c64 = arith.constant 64 : index
    %c0_51 = arith.constant 0 : index
    %64 = vector.load %arg14[%c64, %c0_51] : memref<232x128xf32, #tpu.memory_space<vmem>>, vector<16x128xf32>
    tpu.vector_store %arg14[%c64, %c0_51], %63 {strides = array<i32>} : memref<232x128xf32, #tpu.memory_space<vmem>>, vector<16x128xf32>,
    %65 = vector.extract_strided_slice %56 {offsets = [64, 0], sizes = [32, 128], strides = [1, 1]} : vector<128x128xf32> to vector<32x128xf32>
    %66 = vector.extract_strided_slice %56 {offsets = [96, 0], sizes = [32, 128], strides = [1, 1]} : vector<128x128xf32> to vector<32x128xf32>
    %67 = arith.maximumf %65, %66 : vector<32x128xf32>
    %c0_52 = arith.constant 0 : index
    %c0_53 = arith.constant 0 : index
    %68 = vector.load %arg13[%c0_52, %c0_53] : memref<32x128xf32, #tpu.memory_space<vmem>>, vector<32x128xf32>
    tpu.vector_store %arg13[%c0_52, %c0_53], %67 {strides = array<i32>} : memref<32x128xf32, #tpu.memory_space<vmem>>, vector<32x128xf32>,
    %c0_54 = arith.constant 0 : index
    %c0_55 = arith.constant 0 : index
    %69 = tpu.strided_load %arg13[%c0_54, %c0_55] {strides = array<i32: 2, 1>} : memref<32x128xf32, #tpu.memory_space<vmem>>, vector<16x128xf32>
    %c1_56 = arith.constant 1 : index
    %c0_57 = arith.constant 0 : index
    %70 = tpu.strided_load %arg13[%c1_56, %c0_57] {strides = array<i32: 2, 1>} : memref<32x128xf32, #tpu.memory_space<vmem>>, vector<16x128xf32>
    %71 = arith.maximumf %69, %70 : vector<16x128xf32>
    %c80 = arith.constant 80 : index
    %c0_58 = arith.constant 0 : index
    %72 = vector.load %arg14[%c80, %c0_58] : memref<232x128xf32, #tpu.memory_space<vmem>>, vector<16x128xf32>
    tpu.vector_store %arg14[%c80, %c0_58], %71 {strides = array<i32>} : memref<232x128xf32, #tpu.memory_space<vmem>>, vector<16x128xf32>,
    %c0_59 = arith.constant 0 : index
    %c384 = arith.constant 384 : index
    %c0_60 = arith.constant 0 : index
    %73 = vector.load %arg1[%c0_59, %c384, %c0_60] : memref<1x896x128xbf16, #tpu.memory_space<vmem>>, vector<1x128x128xbf16>
    %74 = vector.shape_cast %73 : vector<1x128x128xbf16> to vector<128x128xbf16>
    %cst_61 = arith.constant dense<0.000000e+00> : vector<128x128xf32>
    %75 = tpu.matmul %74, %2, %cst_61 {dimension_numbers = #tpu.dot_dimension_numbers<[1], [0], [0], [1], [0, 0, 1, 1], [], []>} : vector<128x128xbf16>, vector<128x128xbf16>, vector<128x128xf32> -> vector<128x128xf32>
    %76 = vector.broadcast %3 : vector<1x128xf32> to vector<128x128xf32>
    %77 = arith.addf %75, %76 : vector<128x128xf32>
    %cst_62 = arith.constant 0.000000e+00 : f32
    %78 = vector.broadcast %cst_62 : f32 to vector<128x128xf32>
    %79 = arith.maximumf %77, %78 : vector<128x128xf32>
    %80 = vector.extract_strided_slice %79 {offsets = [0, 0], sizes = [32, 128], strides = [1, 1]} : vector<128x128xf32> to vector<32x128xf32>
    %81 = vector.extract_strided_slice %79 {offsets = [32, 0], sizes = [32, 128], strides = [1, 1]} : vector<128x128xf32> to vector<32x128xf32>
    %82 = arith.maximumf %80, %81 : vector<32x128xf32>
    %c0_63 = arith.constant 0 : index
    %c0_64 = arith.constant 0 : index
    %83 = vector.load %arg13[%c0_63, %c0_64] : memref<32x128xf32, #tpu.memory_space<vmem>>, vector<32x128xf32>
    tpu.vector_store %arg13[%c0_63, %c0_64], %82 {strides = array<i32>} : memref<32x128xf32, #tpu.memory_space<vmem>>, vector<32x128xf32>,
    %c0_65 = arith.constant 0 : index
    %c0_66 = arith.constant 0 : index
    %84 = tpu.strided_load %arg13[%c0_65, %c0_66] {strides = array<i32: 2, 1>} : memref<32x128xf32, #tpu.memory_space<vmem>>, vector<16x128xf32>
    %c1_67 = arith.constant 1 : index
    %c0_68 = arith.constant 0 : index
    %85 = tpu.strided_load %arg13[%c1_67, %c0_68] {strides = array<i32: 2, 1>} : memref<32x128xf32, #tpu.memory_space<vmem>>, vector<16x128xf32>
    %86 = arith.maximumf %84, %85 : vector<16x128xf32>
    %c96 = arith.constant 96 : index
    %c0_69 = arith.constant 0 : index
    %87 = vector.load %arg14[%c96, %c0_69] : memref<232x128xf32, #tpu.memory_space<vmem>>, vector<16x128xf32>
    tpu.vector_store %arg14[%c96, %c0_69], %86 {strides = array<i32>} : memref<232x128xf32, #tpu.memory_space<vmem>>, vector<16x128xf32>,
    %88 = vector.extract_strided_slice %79 {offsets = [64, 0], sizes = [32, 128], strides = [1, 1]} : vector<128x128xf32> to vector<32x128xf32>
    %89 = vector.extract_strided_slice %79 {offsets = [96, 0], sizes = [32, 128], strides = [1, 1]} : vector<128x128xf32> to vector<32x128xf32>
    %90 = arith.maximumf %88, %89 : vector<32x128xf32>
    %c0_70 = arith.constant 0 : index
    %c0_71 = arith.constant 0 : index
    %91 = vector.load %arg13[%c0_70, %c0_71] : memref<32x128xf32, #tpu.memory_space<vmem>>, vector<32x128xf32>
    tpu.vector_store %arg13[%c0_70, %c0_71], %90 {strides = array<i32>} : memref<32x128xf32, #tpu.memory_space<vmem>>, vector<32x128xf32>,
    %c0_72 = arith.constant 0 : index
    %c0_73 = arith.constant 0 : index
    %92 = tpu.strided_load %arg13[%c0_72, %c0_73] {strides = array<i32: 2, 1>} : memref<32x128xf32, #tpu.memory_space<vmem>>, vector<16x128xf32>
    %c1_74 = arith.constant 1 : index
    %c0_75 = arith.constant 0 : index
    %93 = tpu.strided_load %arg13[%c1_74, %c0_75] {strides = array<i32: 2, 1>} : memref<32x128xf32, #tpu.memory_space<vmem>>, vector<16x128xf32>
    %94 = arith.maximumf %92, %93 : vector<16x128xf32>
    %c112 = arith.constant 112 : index
    %c0_76 = arith.constant 0 : index
    %95 = vector.load %arg14[%c112, %c0_76] : memref<232x128xf32, #tpu.memory_space<vmem>>, vector<16x128xf32>
    tpu.vector_store %arg14[%c112, %c0_76], %94 {strides = array<i32>} : memref<232x128xf32, #tpu.memory_space<vmem>>, vector<16x128xf32>,
    %c0_77 = arith.constant 0 : index
    %c512 = arith.constant 512 : index
    %c0_78 = arith.constant 0 : index
    %96 = vector.load %arg1[%c0_77, %c512, %c0_78] : memref<1x896x128xbf16, #tpu.memory_space<vmem>>, vector<1x128x128xbf16>
    %97 = vector.shape_cast %96 : vector<1x128x128xbf16> to vector<128x128xbf16>
    %cst_79 = arith.constant dense<0.000000e+00> : vector<128x128xf32>
    %98 = tpu.matmul %97, %2, %cst_79 {dimension_numbers = #tpu.dot_dimension_numbers<[1], [0], [0], [1], [0, 0, 1, 1], [], []>} : vector<128x128xbf16>, vector<128x128xbf16>, vector<128x128xf32> -> vector<128x128xf32>
    %99 = vector.broadcast %3 : vector<1x128xf32> to vector<128x128xf32>
    %100 = arith.addf %98, %99 : vector<128x128xf32>
    %cst_80 = arith.constant 0.000000e+00 : f32
    %101 = vector.broadcast %cst_80 : f32 to vector<128x128xf32>
    %102 = arith.maximumf %100, %101 : vector<128x128xf32>
    %103 = vector.extract_strided_slice %102 {offsets = [0, 0], sizes = [32, 128], strides = [1, 1]} : vector<128x128xf32> to vector<32x128xf32>
    %104 = vector.extract_strided_slice %102 {offsets = [32, 0], sizes = [32, 128], strides = [1, 1]} : vector<128x128xf32> to vector<32x128xf32>
    %105 = arith.maximumf %103, %104 : vector<32x128xf32>
    %c0_81 = arith.constant 0 : index
    %c0_82 = arith.constant 0 : index
    %106 = vector.load %arg13[%c0_81, %c0_82] : memref<32x128xf32, #tpu.memory_space<vmem>>, vector<32x128xf32>
    tpu.vector_store %arg13[%c0_81, %c0_82], %105 {strides = array<i32>} : memref<32x128xf32, #tpu.memory_space<vmem>>, vector<32x128xf32>,
    %c0_83 = arith.constant 0 : index
    %c0_84 = arith.constant 0 : index
    %107 = tpu.strided_load %arg13[%c0_83, %c0_84] {strides = array<i32: 2, 1>} : memref<32x128xf32, #tpu.memory_space<vmem>>, vector<16x128xf32>
    %c1_85 = arith.constant 1 : index
    %c0_86 = arith.constant 0 : index
    %108 = tpu.strided_load %arg13[%c1_85, %c0_86] {strides = array<i32: 2, 1>} : memref<32x128xf32, #tpu.memory_space<vmem>>, vector<16x128xf32>
    %109 = arith.maximumf %107, %108 : vector<16x128xf32>
    %c128_87 = arith.constant 128 : index
    %c0_88 = arith.constant 0 : index
    %110 = vector.load %arg14[%c128_87, %c0_88] : memref<232x128xf32, #tpu.memory_space<vmem>>, vector<16x128xf32>
    tpu.vector_store %arg14[%c128_87, %c0_88], %109 {strides = array<i32>} : memref<232x128xf32, #tpu.memory_space<vmem>>, vector<16x128xf32>,
    %111 = vector.extract_strided_slice %102 {offsets = [64, 0], sizes = [32, 128], strides = [1, 1]} : vector<128x128xf32> to vector<32x128xf32>
    %112 = vector.extract_strided_slice %102 {offsets = [96, 0], sizes = [32, 128], strides = [1, 1]} : vector<128x128xf32> to vector<32x128xf32>
    %113 = arith.maximumf %111, %112 : vector<32x128xf32>
    %c0_89 = arith.constant 0 : index
    %c0_90 = arith.constant 0 : index
    %114 = vector.load %arg13[%c0_89, %c0_90] : memref<32x128xf32, #tpu.memory_space<vmem>>, vector<32x128xf32>
    tpu.vector_store %arg13[%c0_89, %c0_90], %113 {strides = array<i32>} : memref<32x128xf32, #tpu.memory_space<vmem>>, vector<32x128xf32>,
    %c0_91 = arith.constant 0 : index
    %c0_92 = arith.constant 0 : index
    %115 = tpu.strided_load %arg13[%c0_91, %c0_92] {strides = array<i32: 2, 1>} : memref<32x128xf32, #tpu.memory_space<vmem>>, vector<16x128xf32>
    %c1_93 = arith.constant 1 : index
    %c0_94 = arith.constant 0 : index
    %116 = tpu.strided_load %arg13[%c1_93, %c0_94] {strides = array<i32: 2, 1>} : memref<32x128xf32, #tpu.memory_space<vmem>>, vector<16x128xf32>
    %117 = arith.maximumf %115, %116 : vector<16x128xf32>
    %c144 = arith.constant 144 : index
    %c0_95 = arith.constant 0 : index
    %118 = vector.load %arg14[%c144, %c0_95] : memref<232x128xf32, #tpu.memory_space<vmem>>, vector<16x128xf32>
    tpu.vector_store %arg14[%c144, %c0_95], %117 {strides = array<i32>} : memref<232x128xf32, #tpu.memory_space<vmem>>, vector<16x128xf32>,
    %c0_96 = arith.constant 0 : index
    %c640 = arith.constant 640 : index
    %c0_97 = arith.constant 0 : index
    %119 = vector.load %arg1[%c0_96, %c640, %c0_97] : memref<1x896x128xbf16, #tpu.memory_space<vmem>>, vector<1x128x128xbf16>
    %120 = vector.shape_cast %119 : vector<1x128x128xbf16> to vector<128x128xbf16>
    %cst_98 = arith.constant dense<0.000000e+00> : vector<128x128xf32>
    %121 = tpu.matmul %120, %2, %cst_98 {dimension_numbers = #tpu.dot_dimension_numbers<[1], [0], [0], [1], [0, 0, 1, 1], [], []>} : vector<128x128xbf16>, vector<128x128xbf16>, vector<128x128xf32> -> vector<128x128xf32>
    %122 = vector.broadcast %3 : vector<1x128xf32> to vector<128x128xf32>
    %123 = arith.addf %121, %122 : vector<128x128xf32>
    %cst_99 = arith.constant 0.000000e+00 : f32
    %124 = vector.broadcast %cst_99 : f32 to vector<128x128xf32>
    %125 = arith.maximumf %123, %124 : vector<128x128xf32>
    %126 = vector.extract_strided_slice %125 {offsets = [0, 0], sizes = [32, 128], strides = [1, 1]} : vector<128x128xf32> to vector<32x128xf32>
    %127 = vector.extract_strided_slice %125 {offsets = [32, 0], sizes = [32, 128], strides = [1, 1]} : vector<128x128xf32> to vector<32x128xf32>
    %128 = arith.maximumf %126, %127 : vector<32x128xf32>
    %c0_100 = arith.constant 0 : index
    %c0_101 = arith.constant 0 : index
    %129 = vector.load %arg13[%c0_100, %c0_101] : memref<32x128xf32, #tpu.memory_space<vmem>>, vector<32x128xf32>
    tpu.vector_store %arg13[%c0_100, %c0_101], %128 {strides = array<i32>} : memref<32x128xf32, #tpu.memory_space<vmem>>, vector<32x128xf32>,
    %c0_102 = arith.constant 0 : index
    %c0_103 = arith.constant 0 : index
    %130 = tpu.strided_load %arg13[%c0_102, %c0_103] {strides = array<i32: 2, 1>} : memref<32x128xf32, #tpu.memory_space<vmem>>, vector<16x128xf32>
    %c1_104 = arith.constant 1 : index
    %c0_105 = arith.constant 0 : index
    %131 = tpu.strided_load %arg13[%c1_104, %c0_105] {strides = array<i32: 2, 1>} : memref<32x128xf32, #tpu.memory_space<vmem>>, vector<16x128xf32>
    %132 = arith.maximumf %130, %131 : vector<16x128xf32>
    %c160 = arith.constant 160 : index
    %c0_106 = arith.constant 0 : index
    %133 = vector.load %arg14[%c160, %c0_106] : memref<232x128xf32, #tpu.memory_space<vmem>>, vector<16x128xf32>
    tpu.vector_store %arg14[%c160, %c0_106], %132 {strides = array<i32>} : memref<232x128xf32, #tpu.memory_space<vmem>>, vector<16x128xf32>,
    %134 = vector.extract_strided_slice %125 {offsets = [64, 0], sizes = [32, 128], strides = [1, 1]} : vector<128x128xf32> to vector<32x128xf32>
    %135 = vector.extract_strided_slice %125 {offsets = [96, 0], sizes = [32, 128], strides = [1, 1]} : vector<128x128xf32> to vector<32x128xf32>
    %136 = arith.maximumf %134, %135 : vector<32x128xf32>
    %c0_107 = arith.constant 0 : index
    %c0_108 = arith.constant 0 : index
    %137 = vector.load %arg13[%c0_107, %c0_108] : memref<32x128xf32, #tpu.memory_space<vmem>>, vector<32x128xf32>
    tpu.vector_store %arg13[%c0_107, %c0_108], %136 {strides = array<i32>} : memref<32x128xf32, #tpu.memory_space<vmem>>, vector<32x128xf32>,
    %c0_109 = arith.constant 0 : index
    %c0_110 = arith.constant 0 : index
    %138 = tpu.strided_load %arg13[%c0_109, %c0_110] {strides = array<i32: 2, 1>} : memref<32x128xf32, #tpu.memory_space<vmem>>, vector<16x128xf32>
    %c1_111 = arith.constant 1 : index
    %c0_112 = arith.constant 0 : index
    %139 = tpu.strided_load %arg13[%c1_111, %c0_112] {strides = array<i32: 2, 1>} : memref<32x128xf32, #tpu.memory_space<vmem>>, vector<16x128xf32>
    %140 = arith.maximumf %138, %139 : vector<16x128xf32>
    %c176 = arith.constant 176 : index
    %c0_113 = arith.constant 0 : index
    %141 = vector.load %arg14[%c176, %c0_113] : memref<232x128xf32, #tpu.memory_space<vmem>>, vector<16x128xf32>
    tpu.vector_store %arg14[%c176, %c0_113], %140 {strides = array<i32>} : memref<232x128xf32, #tpu.memory_space<vmem>>, vector<16x128xf32>,
    %c0_114 = arith.constant 0 : index
    %c768 = arith.constant 768 : index
    %c0_115 = arith.constant 0 : index
    %142 = vector.load %arg1[%c0_114, %c768, %c0_115] : memref<1x896x128xbf16, #tpu.memory_space<vmem>>, vector<1x128x128xbf16>
    %143 = vector.shape_cast %142 : vector<1x128x128xbf16> to vector<128x128xbf16>
    %cst_116 = arith.constant dense<0.000000e+00> : vector<128x128xf32>
    %144 = tpu.matmul %143, %2, %cst_116 {dimension_numbers = #tpu.dot_dimension_numbers<[1], [0], [0], [1], [0, 0, 1, 1], [], []>} : vector<128x128xbf16>, vector<128x128xbf16>, vector<128x128xf32> -> vector<128x128xf32>
    %145 = vector.broadcast %3 : vector<1x128xf32> to vector<128x128xf32>
    %146 = arith.addf %144, %145 : vector<128x128xf32>
    %cst_117 = arith.constant 0.000000e+00 : f32
    %147 = vector.broadcast %cst_117 : f32 to vector<128x128xf32>
    %148 = arith.maximumf %146, %147 : vector<128x128xf32>
    %149 = vector.extract_strided_slice %148 {offsets = [0, 0], sizes = [32, 128], strides = [1, 1]} : vector<128x128xf32> to vector<32x128xf32>
    %150 = vector.extract_strided_slice %148 {offsets = [32, 0], sizes = [32, 128], strides = [1, 1]} : vector<128x128xf32> to vector<32x128xf32>
    %151 = arith.maximumf %149, %150 : vector<32x128xf32>
    %c0_118 = arith.constant 0 : index
    %c0_119 = arith.constant 0 : index
    %152 = vector.load %arg13[%c0_118, %c0_119] : memref<32x128xf32, #tpu.memory_space<vmem>>, vector<32x128xf32>
    tpu.vector_store %arg13[%c0_118, %c0_119], %151 {strides = array<i32>} : memref<32x128xf32, #tpu.memory_space<vmem>>, vector<32x128xf32>,
    %c0_120 = arith.constant 0 : index
    %c0_121 = arith.constant 0 : index
    %153 = tpu.strided_load %arg13[%c0_120, %c0_121] {strides = array<i32: 2, 1>} : memref<32x128xf32, #tpu.memory_space<vmem>>, vector<16x128xf32>
    %c1_122 = arith.constant 1 : index
    %c0_123 = arith.constant 0 : index
    %154 = tpu.strided_load %arg13[%c1_122, %c0_123] {strides = array<i32: 2, 1>} : memref<32x128xf32, #tpu.memory_space<vmem>>, vector<16x128xf32>
    %155 = arith.maximumf %153, %154 : vector<16x128xf32>
    %c192 = arith.constant 192 : index
    %c0_124 = arith.constant 0 : index
    %156 = vector.load %arg14[%c192, %c0_124] : memref<232x128xf32, #tpu.memory_space<vmem>>, vector<16x128xf32>
    tpu.vector_store %arg14[%c192, %c0_124], %155 {strides = array<i32>} : memref<232x128xf32, #tpu.memory_space<vmem>>, vector<16x128xf32>,
    %157 = vector.extract_strided_slice %148 {offsets = [64, 0], sizes = [32, 128], strides = [1, 1]} : vector<128x128xf32> to vector<32x128xf32>
    %158 = vector.extract_strided_slice %148 {offsets = [96, 0], sizes = [32, 128], strides = [1, 1]} : vector<128x128xf32> to vector<32x128xf32>
    %159 = arith.maximumf %157, %158 : vector<32x128xf32>
    %c0_125 = arith.constant 0 : index
    %c0_126 = arith.constant 0 : index
    %160 = vector.load %arg13[%c0_125, %c0_126] : memref<32x128xf32, #tpu.memory_space<vmem>>, vector<32x128xf32>
    tpu.vector_store %arg13[%c0_125, %c0_126], %159 {strides = array<i32>} : memref<32x128xf32, #tpu.memory_space<vmem>>, vector<32x128xf32>,
    %c0_127 = arith.constant 0 : index
    %c0_128 = arith.constant 0 : index
    %161 = tpu.strided_load %arg13[%c0_127, %c0_128] {strides = array<i32: 2, 1>} : memref<32x128xf32, #tpu.memory_space<vmem>>, vector<16x128xf32>
    %c1_129 = arith.constant 1 : index
    %c0_130 = arith.constant 0 : index
    %162 = tpu.strided_load %arg13[%c1_129, %c0_130] {strides = array<i32: 2, 1>} : memref<32x128xf32, #tpu.memory_space<vmem>>, vector<16x128xf32>
    %163 = arith.maximumf %161, %162 : vector<16x128xf32>
    %c208 = arith.constant 208 : index
    %c0_131 = arith.constant 0 : index
    %164 = vector.load %arg14[%c208, %c0_131] : memref<232x128xf32, #tpu.memory_space<vmem>>, vector<16x128xf32>
    tpu.vector_store %arg14[%c208, %c0_131], %163 {strides = array<i32>} : memref<232x128xf32, #tpu.memory_space<vmem>>, vector<16x128xf32>,
    %c0_132 = arith.constant 0 : index
    %c0_133 = arith.constant 0 : index
    %165 = vector.load %arg5[%c0_132, %c0_133] : memref<1x128xf32, #tpu.memory_space<vmem>>, vector<1x128xf32>
    %c0_134 = arith.constant 0 : index
    %c0_135 = arith.constant 0 : index
    %166 = vector.load %arg14[%c0_134, %c0_135] : memref<232x128xf32, #tpu.memory_space<vmem>>, vector<224x128xf32>
    %167 = arith.truncf %166 : vector<224x128xf32> to vector<224x128xbf16>
    %c0_136 = arith.constant 0 : index
    %c0_137 = arith.constant 0 : index
    %168 = vector.load %arg15[%c0_136, %c0_137] : memref<224x128xbf16, #tpu.memory_space<vmem>>, vector<224x128xbf16>
    tpu.vector_store %arg15[%c0_136, %c0_137], %167 {strides = array<i32>} : memref<224x128xbf16, #tpu.memory_space<vmem>>, vector<224x128xbf16>,
    %c0_138 = arith.constant 0 : index
    %c0_139 = arith.constant 0 : index
    %169 = vector.load %arg15[%c0_138, %c0_139] : memref<224x128xbf16, #tpu.memory_space<vmem>>, vector<160x128xbf16>
    %c0_140 = arith.constant 0 : index
    %c0_141 = arith.constant 0 : index
    %c0_142 = arith.constant 0 : index
    %170 = vector.load %arg4[%c0_140, %c0_141, %c0_142] : memref<25x128x128xbf16, #tpu.memory_space<vmem>>, vector<1x128x128xbf16>
    %171 = vector.shape_cast %170 : vector<1x128x128xbf16> to vector<128x128xbf16>
    %cst_143 = arith.constant dense<0.000000e+00> : vector<160x128xf32>
    %172 = tpu.matmul %169, %171, %cst_143 {dimension_numbers = #tpu.dot_dimension_numbers<[1], [0], [0], [1], [0, 0, 1, 1], [], []>} : vector<160x128xbf16>, vector<128x128xbf16>, vector<160x128xf32> -> vector<160x128xf32>
    %c16_144 = arith.constant 16 : index
    %c0_145 = arith.constant 0 : index
    %173 = vector.load %arg15[%c16_144, %c0_145] : memref<224x128xbf16, #tpu.memory_space<vmem>>, vector<160x128xbf16>
    %c5 = arith.constant 5 : index
    %c0_146 = arith.constant 0 : index
    %c0_147 = arith.constant 0 : index
    %174 = vector.load %arg4[%c5, %c0_146, %c0_147] : memref<25x128x128xbf16, #tpu.memory_space<vmem>>, vector<1x128x128xbf16>
    %175 = vector.shape_cast %174 : vector<1x128x128xbf16> to vector<128x128xbf16>
    %cst_148 = arith.constant dense<0.000000e+00> : vector<160x128xf32>
    %176 = tpu.matmul %173, %175, %cst_148 {dimension_numbers = #tpu.dot_dimension_numbers<[1], [0], [0], [1], [0, 0, 1, 1], [], []>} : vector<160x128xbf16>, vector<128x128xbf16>, vector<160x128xf32> -> vector<160x128xf32>
    %177 = arith.addf %172, %176 : vector<160x128xf32>
    %c32_149 = arith.constant 32 : index
    %c0_150 = arith.constant 0 : index
    %178 = vector.load %arg15[%c32_149, %c0_150] : memref<224x128xbf16, #tpu.memory_space<vmem>>, vector<160x128xbf16>
    %c10 = arith.constant 10 : index
    %c0_151 = arith.constant 0 : index
    %c0_152 = arith.constant 0 : index
    %179 = vector.load %arg4[%c10, %c0_151, %c0_152] : memref<25x128x128xbf16, #tpu.memory_space<vmem>>, vector<1x128x128xbf16>
    %180 = vector.shape_cast %179 : vector<1x128x128xbf16> to vector<128x128xbf16>
    %cst_153 = arith.constant dense<0.000000e+00> : vector<160x128xf32>
    %181 = tpu.matmul %178, %180, %cst_153 {dimension_numbers = #tpu.dot_dimension_numbers<[1], [0], [0], [1], [0, 0, 1, 1], [], []>} : vector<160x128xbf16>, vector<128x128xbf16>, vector<160x128xf32> -> vector<160x128xf32>
    %182 = arith.addf %177, %181 : vector<160x128xf32>
    %c48_154 = arith.constant 48 : index
    %c0_155 = arith.constant 0 : index
    %183 = vector.load %arg15[%c48_154, %c0_155] : memref<224x128xbf16, #tpu.memory_space<vmem>>, vector<160x128xbf16>
    %c15 = arith.constant 15 : index
    %c0_156 = arith.constant 0 : index
    %c0_157 = arith.constant 0 : index
    %184 = vector.load %arg4[%c15, %c0_156, %c0_157] : memref<25x128x128xbf16, #tpu.memory_space<vmem>>, vector<1x128x128xbf16>
    %185 = vector.shape_cast %184 : vector<1x128x128xbf16> to vector<128x128xbf16>
    %cst_158 = arith.constant dense<0.000000e+00> : vector<160x128xf32>
    %186 = tpu.matmul %183, %185, %cst_158 {dimension_numbers = #tpu.dot_dimension_numbers<[1], [0], [0], [1], [0, 0, 1, 1], [], []>} : vector<160x128xbf16>, vector<128x128xbf16>, vector<160x128xf32> -> vector<160x128xf32>
    %187 = arith.addf %182, %186 : vector<160x128xf32>
    %c64_159 = arith.constant 64 : index
    %c0_160 = arith.constant 0 : index
    %188 = vector.load %arg15[%c64_159, %c0_160] : memref<224x128xbf16, #tpu.memory_space<vmem>>, vector<160x128xbf16>
    %c20 = arith.constant 20 : index
    %c0_161 = arith.constant 0 : index
    %c0_162 = arith.constant 0 : index
    %189 = vector.load %arg4[%c20, %c0_161, %c0_162] : memref<25x128x128xbf16, #tpu.memory_space<vmem>>, vector<1x128x128xbf16>
    %190 = vector.shape_cast %189 : vector<1x128x128xbf16> to vector<128x128xbf16>
    %cst_163 = arith.constant dense<0.000000e+00> : vector<160x128xf32>
    %191 = tpu.matmul %188, %190, %cst_163 {dimension_numbers = #tpu.dot_dimension_numbers<[1], [0], [0], [1], [0, 0, 1, 1], [], []>} : vector<160x128xbf16>, vector<128x128xbf16>, vector<160x128xf32> -> vector<160x128xf32>
    %192 = arith.addf %187, %191 : vector<160x128xf32>
    %c1_164 = arith.constant 1 : index
    %c0_165 = arith.constant 0 : index
    %193 = vector.load %arg14[%c1_164, %c0_165] : memref<232x128xf32, #tpu.memory_space<vmem>>, vector<224x128xf32>
    %194 = arith.truncf %193 : vector<224x128xf32> to vector<224x128xbf16>
    %c0_166 = arith.constant 0 : index
    %c0_167 = arith.constant 0 : index
    %195 = vector.load %arg15[%c0_166, %c0_167] : memref<224x128xbf16, #tpu.memory_space<vmem>>, vector<224x128xbf16>
    tpu.vector_store %arg15[%c0_166, %c0_167], %194 {strides = array<i32>} : memref<224x128xbf16, #tpu.memory_space<vmem>>, vector<224x128xbf16>,
    %c0_168 = arith.constant 0 : index
    %c0_169 = arith.constant 0 : index
    %196 = vector.load %arg15[%c0_168, %c0_169] : memref<224x128xbf16, #tpu.memory_space<vmem>>, vector<160x128xbf16>
    %c1_170 = arith.constant 1 : index
    %c0_171 = arith.constant 0 : index
    %c0_172 = arith.constant 0 : index
    %197 = vector.load %arg4[%c1_170, %c0_171, %c0_172] : memref<25x128x128xbf16, #tpu.memory_space<vmem>>, vector<1x128x128xbf16>
    %198 = vector.shape_cast %197 : vector<1x128x128xbf16> to vector<128x128xbf16>
    %cst_173 = arith.constant dense<0.000000e+00> : vector<160x128xf32>
    %199 = tpu.matmul %196, %198, %cst_173 {dimension_numbers = #tpu.dot_dimension_numbers<[1], [0], [0], [1], [0, 0, 1, 1], [], []>} : vector<160x128xbf16>, vector<128x128xbf16>, vector<160x128xf32> -> vector<160x128xf32>
    %200 = arith.addf %192, %199 : vector<160x128xf32>
    %c16_174 = arith.constant 16 : index
    %c0_175 = arith.constant 0 : index
    %201 = vector.load %arg15[%c16_174, %c0_175] : memref<224x128xbf16, #tpu.memory_space<vmem>>, vector<160x128xbf16>
    %c6 = arith.constant 6 : index
    %c0_176 = arith.constant 0 : index
    %c0_177 = arith.constant 0 : index
    %202 = vector.load %arg4[%c6, %c0_176, %c0_177] : memref<25x128x128xbf16, #tpu.memory_space<vmem>>, vector<1x128x128xbf16>
    %203 = vector.shape_cast %202 : vector<1x128x128xbf16> to vector<128x128xbf16>
    %cst_178 = arith.constant dense<0.000000e+00> : vector<160x128xf32>
    %204 = tpu.matmul %201, %203, %cst_178 {dimension_numbers = #tpu.dot_dimension_numbers<[1], [0], [0], [1], [0, 0, 1, 1], [], []>} : vector<160x128xbf16>, vector<128x128xbf16>, vector<160x128xf32> -> vector<160x128xf32>
    %205 = arith.addf %200, %204 : vector<160x128xf32>
    %c32_179 = arith.constant 32 : index
    %c0_180 = arith.constant 0 : index
    %206 = vector.load %arg15[%c32_179, %c0_180] : memref<224x128xbf16, #tpu.memory_space<vmem>>, vector<160x128xbf16>
    %c11 = arith.constant 11 : index
    %c0_181 = arith.constant 0 : index
    %c0_182 = arith.constant 0 : index
    %207 = vector.load %arg4[%c11, %c0_181, %c0_182] : memref<25x128x128xbf16, #tpu.memory_space<vmem>>, vector<1x128x128xbf16>
    %208 = vector.shape_cast %207 : vector<1x128x128xbf16> to vector<128x128xbf16>
    %cst_183 = arith.constant dense<0.000000e+00> : vector<160x128xf32>
    %209 = tpu.matmul %206, %208, %cst_183 {dimension_numbers = #tpu.dot_dimension_numbers<[1], [0], [0], [1], [0, 0, 1, 1], [], []>} : vector<160x128xbf16>, vector<128x128xbf16>, vector<160x128xf32> -> vector<160x128xf32>
    %210 = arith.addf %205, %209 : vector<160x128xf32>
    %c48_184 = arith.constant 48 : index
    %c0_185 = arith.constant 0 : index
    %211 = vector.load %arg15[%c48_184, %c0_185] : memref<224x128xbf16, #tpu.memory_space<vmem>>, vector<160x128xbf16>
    %c16_186 = arith.constant 16 : index
    %c0_187 = arith.constant 0 : index
    %c0_188 = arith.constant 0 : index
    %212 = vector.load %arg4[%c16_186, %c0_187, %c0_188] : memref<25x128x128xbf16, #tpu.memory_space<vmem>>, vector<1x128x128xbf16>
    %213 = vector.shape_cast %212 : vector<1x128x128xbf16> to vector<128x128xbf16>
    %cst_189 = arith.constant dense<0.000000e+00> : vector<160x128xf32>
    %214 = tpu.matmul %211, %213, %cst_189 {dimension_numbers = #tpu.dot_dimension_numbers<[1], [0], [0], [1], [0, 0, 1, 1], [], []>} : vector<160x128xbf16>, vector<128x128xbf16>, vector<160x128xf32> -> vector<160x128xf32>
    %215 = arith.addf %210, %214 : vector<160x128xf32>
    %c64_190 = arith.constant 64 : index
    %c0_191 = arith.constant 0 : index
    %216 = vector.load %arg15[%c64_190, %c0_191] : memref<224x128xbf16, #tpu.memory_space<vmem>>, vector<160x128xbf16>
    %c21 = arith.constant 21 : index
    %c0_192 = arith.constant 0 : index
    %c0_193 = arith.constant 0 : index
    %217 = vector.load %arg4[%c21, %c0_192, %c0_193] : memref<25x128x128xbf16, #tpu.memory_space<vmem>>, vector<1x128x128xbf16>
    %218 = vector.shape_cast %217 : vector<1x128x128xbf16> to vector<128x128xbf16>
    %cst_194 = arith.constant dense<0.000000e+00> : vector<160x128xf32>
    %219 = tpu.matmul %216, %218, %cst_194 {dimension_numbers = #tpu.dot_dimension_numbers<[1], [0], [0], [1], [0, 0, 1, 1], [], []>} : vector<160x128xbf16>, vector<128x128xbf16>, vector<160x128xf32> -> vector<160x128xf32>
    %220 = arith.addf %215, %219 : vector<160x128xf32>
    %c2 = arith.constant 2 : index
    %c0_195 = arith.constant 0 : index
    %221 = vector.load %arg14[%c2, %c0_195] : memref<232x128xf32, #tpu.memory_space<vmem>>, vector<224x128xf32>
    %222 = arith.truncf %221 : vector<224x128xf32> to vector<224x128xbf16>
    %c0_196 = arith.constant 0 : index
    %c0_197 = arith.constant 0 : index
    %223 = vector.load %arg15[%c0_196, %c0_197] : memref<224x128xbf16, #tpu.memory_space<vmem>>, vector<224x128xbf16>
    tpu.vector_store %arg15[%c0_196, %c0_197], %222 {strides = array<i32>} : memref<224x128xbf16, #tpu.memory_space<vmem>>, vector<224x128xbf16>,
    %c0_198 = arith.constant 0 : index
    %c0_199 = arith.constant 0 : index
    %224 = vector.load %arg15[%c0_198, %c0_199] : memref<224x128xbf16, #tpu.memory_space<vmem>>, vector<160x128xbf16>
    %c2_200 = arith.constant 2 : index
    %c0_201 = arith.constant 0 : index
    %c0_202 = arith.constant 0 : index
    %225 = vector.load %arg4[%c2_200, %c0_201, %c0_202] : memref<25x128x128xbf16, #tpu.memory_space<vmem>>, vector<1x128x128xbf16>
    %226 = vector.shape_cast %225 : vector<1x128x128xbf16> to vector<128x128xbf16>
    %cst_203 = arith.constant dense<0.000000e+00> : vector<160x128xf32>
    %227 = tpu.matmul %224, %226, %cst_203 {dimension_numbers = #tpu.dot_dimension_numbers<[1], [0], [0], [1], [0, 0, 1, 1], [], []>} : vector<160x128xbf16>, vector<128x128xbf16>, vector<160x128xf32> -> vector<160x128xf32>
    %228 = arith.addf %220, %227 : vector<160x128xf32>
    %c16_204 = arith.constant 16 : index
    %c0_205 = arith.constant 0 : index
    %229 = vector.load %arg15[%c16_204, %c0_205] : memref<224x128xbf16, #tpu.memory_space<vmem>>, vector<160x128xbf16>
    %c7 = arith.constant 7 : index
    %c0_206 = arith.constant 0 : index
    %c0_207 = arith.constant 0 : index
    %230 = vector.load %arg4[%c7, %c0_206, %c0_207] : memref<25x128x128xbf16, #tpu.memory_space<vmem>>, vector<1x128x128xbf16>
    %231 = vector.shape_cast %230 : vector<1x128x128xbf16> to vector<128x128xbf16>
    %cst_208 = arith.constant dense<0.000000e+00> : vector<160x128xf32>
    %232 = tpu.matmul %229, %231, %cst_208 {dimension_numbers = #tpu.dot_dimension_numbers<[1], [0], [0], [1], [0, 0, 1, 1], [], []>} : vector<160x128xbf16>, vector<128x128xbf16>, vector<160x128xf32> -> vector<160x128xf32>
    %233 = arith.addf %228, %232 : vector<160x128xf32>
    %c32_209 = arith.constant 32 : index
    %c0_210 = arith.constant 0 : index
    %234 = vector.load %arg15[%c32_209, %c0_210] : memref<224x128xbf16, #tpu.memory_space<vmem>>, vector<160x128xbf16>
    %c12 = arith.constant 12 : index
    %c0_211 = arith.constant 0 : index
    %c0_212 = arith.constant 0 : index
    %235 = vector.load %arg4[%c12, %c0_211, %c0_212] : memref<25x128x128xbf16, #tpu.memory_space<vmem>>, vector<1x128x128xbf16>
    %236 = vector.shape_cast %235 : vector<1x128x128xbf16> to vector<128x128xbf16>
    %cst_213 = arith.constant dense<0.000000e+00> : vector<160x128xf32>
    %237 = tpu.matmul %234, %236, %cst_213 {dimension_numbers = #tpu.dot_dimension_numbers<[1], [0], [0], [1], [0, 0, 1, 1], [], []>} : vector<160x128xbf16>, vector<128x128xbf16>, vector<160x128xf32> -> vector<160x128xf32>
    %238 = arith.addf %233, %237 : vector<160x128xf32>
    %c48_214 = arith.constant 48 : index
    %c0_215 = arith.constant 0 : index
    %239 = vector.load %arg15[%c48_214, %c0_215] : memref<224x128xbf16, #tpu.memory_space<vmem>>, vector<160x128xbf16>
    %c17 = arith.constant 17 : index
    %c0_216 = arith.constant 0 : index
    %c0_217 = arith.constant 0 : index
    %240 = vector.load %arg4[%c17, %c0_216, %c0_217] : memref<25x128x128xbf16, #tpu.memory_space<vmem>>, vector<1x128x128xbf16>
    %241 = vector.shape_cast %240 : vector<1x128x128xbf16> to vector<128x128xbf16>
    %cst_218 = arith.constant dense<0.000000e+00> : vector<160x128xf32>
    %242 = tpu.matmul %239, %241, %cst_218 {dimension_numbers = #tpu.dot_dimension_numbers<[1], [0], [0], [1], [0, 0, 1, 1], [], []>} : vector<160x128xbf16>, vector<128x128xbf16>, vector<160x128xf32> -> vector<160x128xf32>
    %243 = arith.addf %238, %242 : vector<160x128xf32>
    %c64_219 = arith.constant 64 : index
    %c0_220 = arith.constant 0 : index
    %244 = vector.load %arg15[%c64_219, %c0_220] : memref<224x128xbf16, #tpu.memory_space<vmem>>, vector<160x128xbf16>
    %c22 = arith.constant 22 : index
    %c0_221 = arith.constant 0 : index
    %c0_222 = arith.constant 0 : index
    %245 = vector.load %arg4[%c22, %c0_221, %c0_222] : memref<25x128x128xbf16, #tpu.memory_space<vmem>>, vector<1x128x128xbf16>
    %246 = vector.shape_cast %245 : vector<1x128x128xbf16> to vector<128x128xbf16>
    %cst_223 = arith.constant dense<0.000000e+00> : vector<160x128xf32>
    %247 = tpu.matmul %244, %246, %cst_223 {dimension_numbers = #tpu.dot_dimension_numbers<[1], [0], [0], [1], [0, 0, 1, 1], [], []>} : vector<160x128xbf16>, vector<128x128xbf16>, vector<160x128xf32> -> vector<160x128xf32>
    %248 = arith.addf %243, %247 : vector<160x128xf32>
    %c3 = arith.constant 3 : index
    %c0_224 = arith.constant 0 : index
    %249 = vector.load %arg14[%c3, %c0_224] : memref<232x128xf32, #tpu.memory_space<vmem>>, vector<224x128xf32>
    %250 = arith.truncf %249 : vector<224x128xf32> to vector<224x128xbf16>
    %c0_225 = arith.constant 0 : index
    %c0_226 = arith.constant 0 : index
    %251 = vector.load %arg15[%c0_225, %c0_226] : memref<224x128xbf16, #tpu.memory_space<vmem>>, vector<224x128xbf16>
    tpu.vector_store %arg15[%c0_225, %c0_226], %250 {strides = array<i32>} : memref<224x128xbf16, #tpu.memory_space<vmem>>, vector<224x128xbf16>,
    %c0_227 = arith.constant 0 : index
    %c0_228 = arith.constant 0 : index
    %252 = vector.load %arg15[%c0_227, %c0_228] : memref<224x128xbf16, #tpu.memory_space<vmem>>, vector<160x128xbf16>
    %c3_229 = arith.constant 3 : index
    %c0_230 = arith.constant 0 : index
    %c0_231 = arith.constant 0 : index
    %253 = vector.load %arg4[%c3_229, %c0_230, %c0_231] : memref<25x128x128xbf16, #tpu.memory_space<vmem>>, vector<1x128x128xbf16>
    %254 = vector.shape_cast %253 : vector<1x128x128xbf16> to vector<128x128xbf16>
    %cst_232 = arith.constant dense<0.000000e+00> : vector<160x128xf32>
    %255 = tpu.matmul %252, %254, %cst_232 {dimension_numbers = #tpu.dot_dimension_numbers<[1], [0], [0], [1], [0, 0, 1, 1], [], []>} : vector<160x128xbf16>, vector<128x128xbf16>, vector<160x128xf32> -> vector<160x128xf32>
    %256 = arith.addf %248, %255 : vector<160x128xf32>
    %c16_233 = arith.constant 16 : index
    %c0_234 = arith.constant 0 : index
    %257 = vector.load %arg15[%c16_233, %c0_234] : memref<224x128xbf16, #tpu.memory_space<vmem>>, vector<160x128xbf16>
    %c8 = arith.constant 8 : index
    %c0_235 = arith.constant 0 : index
    %c0_236 = arith.constant 0 : index
    %258 = vector.load %arg4[%c8, %c0_235, %c0_236] : memref<25x128x128xbf16, #tpu.memory_space<vmem>>, vector<1x128x128xbf16>
    %259 = vector.shape_cast %258 : vector<1x128x128xbf16> to vector<128x128xbf16>
    %cst_237 = arith.constant dense<0.000000e+00> : vector<160x128xf32>
    %260 = tpu.matmul %257, %259, %cst_237 {dimension_numbers = #tpu.dot_dimension_numbers<[1], [0], [0], [1], [0, 0, 1, 1], [], []>} : vector<160x128xbf16>, vector<128x128xbf16>, vector<160x128xf32> -> vector<160x128xf32>
    %261 = arith.addf %256, %260 : vector<160x128xf32>
    %c32_238 = arith.constant 32 : index
    %c0_239 = arith.constant 0 : index
    %262 = vector.load %arg15[%c32_238, %c0_239] : memref<224x128xbf16, #tpu.memory_space<vmem>>, vector<160x128xbf16>
    %c13 = arith.constant 13 : index
    %c0_240 = arith.constant 0 : index
    %c0_241 = arith.constant 0 : index
    %263 = vector.load %arg4[%c13, %c0_240, %c0_241] : memref<25x128x128xbf16, #tpu.memory_space<vmem>>, vector<1x128x128xbf16>
    %264 = vector.shape_cast %263 : vector<1x128x128xbf16> to vector<128x128xbf16>
    %cst_242 = arith.constant dense<0.000000e+00> : vector<160x128xf32>
    %265 = tpu.matmul %262, %264, %cst_242 {dimension_numbers = #tpu.dot_dimension_numbers<[1], [0], [0], [1], [0, 0, 1, 1], [], []>} : vector<160x128xbf16>, vector<128x128xbf16>, vector<160x128xf32> -> vector<160x128xf32>
    %266 = arith.addf %261, %265 : vector<160x128xf32>
    %c48_243 = arith.constant 48 : index
    %c0_244 = arith.constant 0 : index
    %267 = vector.load %arg15[%c48_243, %c0_244] : memref<224x128xbf16, #tpu.memory_space<vmem>>, vector<160x128xbf16>
    %c18 = arith.constant 18 : index
    %c0_245 = arith.constant 0 : index
    %c0_246 = arith.constant 0 : index
    %268 = vector.load %arg4[%c18, %c0_245, %c0_246] : memref<25x128x128xbf16, #tpu.memory_space<vmem>>, vector<1x128x128xbf16>
    %269 = vector.shape_cast %268 : vector<1x128x128xbf16> to vector<128x128xbf16>
    %cst_247 = arith.constant dense<0.000000e+00> : vector<160x128xf32>
    %270 = tpu.matmul %267, %269, %cst_247 {dimension_numbers = #tpu.dot_dimension_numbers<[1], [0], [0], [1], [0, 0, 1, 1], [], []>} : vector<160x128xbf16>, vector<128x128xbf16>, vector<160x128xf32> -> vector<160x128xf32>
    %271 = arith.addf %266, %270 : vector<160x128xf32>
    %c64_248 = arith.constant 64 : index
    %c0_249 = arith.constant 0 : index
    %272 = vector.load %arg15[%c64_248, %c0_249] : memref<224x128xbf16, #tpu.memory_space<vmem>>, vector<160x128xbf16>
    %c23 = arith.constant 23 : index
    %c0_250 = arith.constant 0 : index
    %c0_251 = arith.constant 0 : index
    %273 = vector.load %arg4[%c23, %c0_250, %c0_251] : memref<25x128x128xbf16, #tpu.memory_space<vmem>>, vector<1x128x128xbf16>
    %274 = vector.shape_cast %273 : vector<1x128x128xbf16> to vector<128x128xbf16>
    %cst_252 = arith.constant dense<0.000000e+00> : vector<160x128xf32>
    %275 = tpu.matmul %272, %274, %cst_252 {dimension_numbers = #tpu.dot_dimension_numbers<[1], [0], [0], [1], [0, 0, 1, 1], [], []>} : vector<160x128xbf16>, vector<128x128xbf16>, vector<160x128xf32> -> vector<160x128xf32>
    %276 = arith.addf %271, %275 : vector<160x128xf32>
    %c4 = arith.constant 4 : index
    %c0_253 = arith.constant 0 : index
    %277 = vector.load %arg14[%c4, %c0_253] : memref<232x128xf32, #tpu.memory_space<vmem>>, vector<224x128xf32>
    %278 = arith.truncf %277 : vector<224x128xf32> to vector<224x128xbf16>
    %c0_254 = arith.constant 0 : index
    %c0_255 = arith.constant 0 : index
    %279 = vector.load %arg15[%c0_254, %c0_255] : memref<224x128xbf16, #tpu.memory_space<vmem>>, vector<224x128xbf16>
    tpu.vector_store %arg15[%c0_254, %c0_255], %278 {strides = array<i32>} : memref<224x128xbf16, #tpu.memory_space<vmem>>, vector<224x128xbf16>,
    %c0_256 = arith.constant 0 : index
    %c0_257 = arith.constant 0 : index
    %280 = vector.load %arg15[%c0_256, %c0_257] : memref<224x128xbf16, #tpu.memory_space<vmem>>, vector<160x128xbf16>
    %c4_258 = arith.constant 4 : index
    %c0_259 = arith.constant 0 : index
    %c0_260 = arith.constant 0 : index
    %281 = vector.load %arg4[%c4_258, %c0_259, %c0_260] : memref<25x128x128xbf16, #tpu.memory_space<vmem>>, vector<1x128x128xbf16>
    %282 = vector.shape_cast %281 : vector<1x128x128xbf16> to vector<128x128xbf16>
    %cst_261 = arith.constant dense<0.000000e+00> : vector<160x128xf32>
    %283 = tpu.matmul %280, %282, %cst_261 {dimension_numbers = #tpu.dot_dimension_numbers<[1], [0], [0], [1], [0, 0, 1, 1], [], []>} : vector<160x128xbf16>, vector<128x128xbf16>, vector<160x128xf32> -> vector<160x128xf32>
    %284 = arith.addf %276, %283 : vector<160x128xf32>
    %c16_262 = arith.constant 16 : index
    %c0_263 = arith.constant 0 : index
    %285 = vector.load %arg15[%c16_262, %c0_263] : memref<224x128xbf16, #tpu.memory_space<vmem>>, vector<160x128xbf16>
    %c9 = arith.constant 9 : index
    %c0_264 = arith.constant 0 : index
    %c0_265 = arith.constant 0 : index
    %286 = vector.load %arg4[%c9, %c0_264, %c0_265] : memref<25x128x128xbf16, #tpu.memory_space<vmem>>, vector<1x128x128xbf16>
    %287 = vector.shape_cast %286 : vector<1x128x128xbf16> to vector<128x128xbf16>
    %cst_266 = arith.constant dense<0.000000e+00> : vector<160x128xf32>
    %288 = tpu.matmul %285, %287, %cst_266 {dimension_numbers = #tpu.dot_dimension_numbers<[1], [0], [0], [1], [0, 0, 1, 1], [], []>} : vector<160x128xbf16>, vector<128x128xbf16>, vector<160x128xf32> -> vector<160x128xf32>
    %289 = arith.addf %284, %288 : vector<160x128xf32>
    %c32_267 = arith.constant 32 : index
    %c0_268 = arith.constant 0 : index
    %290 = vector.load %arg15[%c32_267, %c0_268] : memref<224x128xbf16, #tpu.memory_space<vmem>>, vector<160x128xbf16>
    %c14 = arith.constant 14 : index
    %c0_269 = arith.constant 0 : index
    %c0_270 = arith.constant 0 : index
    %291 = vector.load %arg4[%c14, %c0_269, %c0_270] : memref<25x128x128xbf16, #tpu.memory_space<vmem>>, vector<1x128x128xbf16>
    %292 = vector.shape_cast %291 : vector<1x128x128xbf16> to vector<128x128xbf16>
    %cst_271 = arith.constant dense<0.000000e+00> : vector<160x128xf32>
    %293 = tpu.matmul %290, %292, %cst_271 {dimension_numbers = #tpu.dot_dimension_numbers<[1], [0], [0], [1], [0, 0, 1, 1], [], []>} : vector<160x128xbf16>, vector<128x128xbf16>, vector<160x128xf32> -> vector<160x128xf32>
    %294 = arith.addf %289, %293 : vector<160x128xf32>
    %c48_272 = arith.constant 48 : index
    %c0_273 = arith.constant 0 : index
    %295 = vector.load %arg15[%c48_272, %c0_273] : memref<224x128xbf16, #tpu.memory_space<vmem>>, vector<160x128xbf16>
    %c19 = arith.constant 19 : index
    %c0_274 = arith.constant 0 : index
    %c0_275 = arith.constant 0 : index
    %296 = vector.load %arg4[%c19, %c0_274, %c0_275] : memref<25x128x128xbf16, #tpu.memory_space<vmem>>, vector<1x128x128xbf16>
    %297 = vector.shape_cast %296 : vector<1x128x128xbf16> to vector<128x128xbf16>
    %cst_276 = arith.constant dense<0.000000e+00> : vector<160x128xf32>
    %298 = tpu.matmul %295, %297, %cst_276 {dimension_numbers = #tpu.dot_dimension_numbers<[1], [0], [0], [1], [0, 0, 1, 1], [], []>} : vector<160x128xbf16>, vector<128x128xbf16>, vector<160x128xf32> -> vector<160x128xf32>
    %299 = arith.addf %294, %298 : vector<160x128xf32>
    %c64_277 = arith.constant 64 : index
    %c0_278 = arith.constant 0 : index
    %300 = vector.load %arg15[%c64_277, %c0_278] : memref<224x128xbf16, #tpu.memory_space<vmem>>, vector<160x128xbf16>
    %c24 = arith.constant 24 : index
    %c0_279 = arith.constant 0 : index
    %c0_280 = arith.constant 0 : index
    %301 = vector.load %arg4[%c24, %c0_279, %c0_280] : memref<25x128x128xbf16, #tpu.memory_space<vmem>>, vector<1x128x128xbf16>
    %302 = vector.shape_cast %301 : vector<1x128x128xbf16> to vector<128x128xbf16>
    %cst_281 = arith.constant dense<0.000000e+00> : vector<160x128xf32>
    %303 = tpu.matmul %300, %302, %cst_281 {dimension_numbers = #tpu.dot_dimension_numbers<[1], [0], [0], [1], [0, 0, 1, 1], [], []>} : vector<160x128xbf16>, vector<128x128xbf16>, vector<160x128xf32> -> vector<160x128xf32>
    %304 = arith.addf %299, %303 : vector<160x128xf32>
    %305 = vector.broadcast %165 : vector<1x128xf32> to vector<160x128xf32>
    %306 = arith.addf %304, %305 : vector<160x128xf32>
    %cst_282 = arith.constant 0.000000e+00 : f32
    %307 = vector.broadcast %cst_282 : f32 to vector<160x128xf32>
    %308 = arith.maximumf %306, %307 : vector<160x128xf32>
    %c0_283 = arith.constant 0 : index
    %c0_284 = arith.constant 0 : index
    %309 = vector.load %arg16[%c0_283, %c0_284] : memref<160x128xf32, #tpu.memory_space<vmem>>, vector<160x128xf32>
    tpu.vector_store %arg16[%c0_283, %c0_284], %308 {strides = array<i32>} : memref<160x128xf32, #tpu.memory_space<vmem>>, vector<160x128xf32>,
    %c0_285 = arith.constant 0 : index
    %c0_286 = arith.constant 0 : index
    %310 = vector.load %arg16[%c0_285, %c0_286] : memref<160x128xf32, #tpu.memory_space<vmem>>, vector<1x128xf32>
    %c1_287 = arith.constant 1 : index
    %c0_288 = arith.constant 0 : index
    %311 = vector.load %arg16[%c1_287, %c0_288] : memref<160x128xf32, #tpu.memory_space<vmem>>, vector<1x128xf32>
    %312 = arith.maximumf %310, %311 : vector<1x128xf32>
    %c16_289 = arith.constant 16 : index
    %c0_290 = arith.constant 0 : index
    %313 = vector.load %arg16[%c16_289, %c0_290] : memref<160x128xf32, #tpu.memory_space<vmem>>, vector<1x128xf32>
    %c17_291 = arith.constant 17 : index
    %c0_292 = arith.constant 0 : index
    %314 = vector.load %arg16[%c17_291, %c0_292] : memref<160x128xf32, #tpu.memory_space<vmem>>, vector<1x128xf32>
    %315 = arith.maximumf %313, %314 : vector<1x128xf32>
    %316 = arith.maximumf %312, %315 : vector<1x128xf32>
    %c2_293 = arith.constant 2 : index
    %c0_294 = arith.constant 0 : index
    %317 = vector.load %arg16[%c2_293, %c0_294] : memref<160x128xf32, #tpu.memory_space<vmem>>, vector<1x128xf32>
    %c3_295 = arith.constant 3 : index
    %c0_296 = arith.constant 0 : index
    %318 = vector.load %arg16[%c3_295, %c0_296] : memref<160x128xf32, #tpu.memory_space<vmem>>, vector<1x128xf32>
    %319 = arith.maximumf %317, %318 : vector<1x128xf32>
    %c18_297 = arith.constant 18 : index
    %c0_298 = arith.constant 0 : index
    %320 = vector.load %arg16[%c18_297, %c0_298] : memref<160x128xf32, #tpu.memory_space<vmem>>, vector<1x128xf32>
    %c19_299 = arith.constant 19 : index
    %c0_300 = arith.constant 0 : index
    %321 = vector.load %arg16[%c19_299, %c0_300] : memref<160x128xf32, #tpu.memory_space<vmem>>, vector<1x128xf32>
    %322 = arith.maximumf %320, %321 : vector<1x128xf32>
    %323 = arith.maximumf %319, %322 : vector<1x128xf32>
    %c4_301 = arith.constant 4 : index
    %c0_302 = arith.constant 0 : index
    %324 = vector.load %arg16[%c4_301, %c0_302] : memref<160x128xf32, #tpu.memory_space<vmem>>, vector<1x128xf32>
    %c5_303 = arith.constant 5 : index
    %c0_304 = arith.constant 0 : index
    %325 = vector.load %arg16[%c5_303, %c0_304] : memref<160x128xf32, #tpu.memory_space<vmem>>, vector<1x128xf32>
    %326 = arith.maximumf %324, %325 : vector<1x128xf32>
    %c20_305 = arith.constant 20 : index
    %c0_306 = arith.constant 0 : index
    %327 = vector.load %arg16[%c20_305, %c0_306] : memref<160x128xf32, #tpu.memory_space<vmem>>, vector<1x128xf32>
    %c21_307 = arith.constant 21 : index
    %c0_308 = arith.constant 0 : index
    %328 = vector.load %arg16[%c21_307, %c0_308] : memref<160x128xf32, #tpu.memory_space<vmem>>, vector<1x128xf32>
    %329 = arith.maximumf %327, %328 : vector<1x128xf32>
    %330 = arith.maximumf %326, %329 : vector<1x128xf32>
    %c6_309 = arith.constant 6 : index
    %c0_310 = arith.constant 0 : index
    %331 = vector.load %arg16[%c6_309, %c0_310] : memref<160x128xf32, #tpu.memory_space<vmem>>, vector<1x128xf32>
    %c7_311 = arith.constant 7 : index
    %c0_312 = arith.constant 0 : index
    %332 = vector.load %arg16[%c7_311, %c0_312] : memref<160x128xf32, #tpu.memory_space<vmem>>, vector<1x128xf32>
    %333 = arith.maximumf %331, %332 : vector<1x128xf32>
    %c22_313 = arith.constant 22 : index
    %c0_314 = arith.constant 0 : index
    %334 = vector.load %arg16[%c22_313, %c0_314] : memref<160x128xf32, #tpu.memory_space<vmem>>, vector<1x128xf32>
    %c23_315 = arith.constant 23 : index
    %c0_316 = arith.constant 0 : index
    %335 = vector.load %arg16[%c23_315, %c0_316] : memref<160x128xf32, #tpu.memory_space<vmem>>, vector<1x128xf32>
    %336 = arith.maximumf %334, %335 : vector<1x128xf32>
    %337 = arith.maximumf %333, %336 : vector<1x128xf32>
    %c8_317 = arith.constant 8 : index
    %c0_318 = arith.constant 0 : index
    %338 = vector.load %arg16[%c8_317, %c0_318] : memref<160x128xf32, #tpu.memory_space<vmem>>, vector<1x128xf32>
    %c9_319 = arith.constant 9 : index
    %c0_320 = arith.constant 0 : index
    %339 = vector.load %arg16[%c9_319, %c0_320] : memref<160x128xf32, #tpu.memory_space<vmem>>, vector<1x128xf32>
    %340 = arith.maximumf %338, %339 : vector<1x128xf32>
    %c24_321 = arith.constant 24 : index
    %c0_322 = arith.constant 0 : index
    %341 = vector.load %arg16[%c24_321, %c0_322] : memref<160x128xf32, #tpu.memory_space<vmem>>, vector<1x128xf32>
    %c25 = arith.constant 25 : index
    %c0_323 = arith.constant 0 : index
    %342 = vector.load %arg16[%c25, %c0_323] : memref<160x128xf32, #tpu.memory_space<vmem>>, vector<1x128xf32>
    %343 = arith.maximumf %341, %342 : vector<1x128xf32>
    %344 = arith.maximumf %340, %343 : vector<1x128xf32>
    %c32_324 = arith.constant 32 : index
    %c0_325 = arith.constant 0 : index
    %345 = vector.load %arg16[%c32_324, %c0_325] : memref<160x128xf32, #tpu.memory_space<vmem>>, vector<1x128xf32>
    %c33 = arith.constant 33 : index
    %c0_326 = arith.constant 0 : index
    %346 = vector.load %arg16[%c33, %c0_326] : memref<160x128xf32, #tpu.memory_space<vmem>>, vector<1x128xf32>
    %347 = arith.maximumf %345, %346 : vector<1x128xf32>
    %c48_327 = arith.constant 48 : index
    %c0_328 = arith.constant 0 : index
    %348 = vector.load %arg16[%c48_327, %c0_328] : memref<160x128xf32, #tpu.memory_space<vmem>>, vector<1x128xf32>
    %c49 = arith.constant 49 : index
    %c0_329 = arith.constant 0 : index
    %349 = vector.load %arg16[%c49, %c0_329] : memref<160x128xf32, #tpu.memory_space<vmem>>, vector<1x128xf32>
    %350 = arith.maximumf %348, %349 : vector<1x128xf32>
    %351 = arith.maximumf %347, %350 : vector<1x128xf32>
    %c34 = arith.constant 34 : index
    %c0_330 = arith.constant 0 : index
    %352 = vector.load %arg16[%c34, %c0_330] : memref<160x128xf32, #tpu.memory_space<vmem>>, vector<1x128xf32>
    %c35 = arith.constant 35 : index
    %c0_331 = arith.constant 0 : index
    %353 = vector.load %arg16[%c35, %c0_331] : memref<160x128xf32, #tpu.memory_space<vmem>>, vector<1x128xf32>
    %354 = arith.maximumf %352, %353 : vector<1x128xf32>
    %c50 = arith.constant 50 : index
    %c0_332 = arith.constant 0 : index
    %355 = vector.load %arg16[%c50, %c0_332] : memref<160x128xf32, #tpu.memory_space<vmem>>, vector<1x128xf32>
    %c51 = arith.constant 51 : index
    %c0_333 = arith.constant 0 : index
    %356 = vector.load %arg16[%c51, %c0_333] : memref<160x128xf32, #tpu.memory_space<vmem>>, vector<1x128xf32>
    %357 = arith.maximumf %355, %356 : vector<1x128xf32>
    %358 = arith.maximumf %354, %357 : vector<1x128xf32>
    %c36 = arith.constant 36 : index
    %c0_334 = arith.constant 0 : index
    %359 = vector.load %arg16[%c36, %c0_334] : memref<160x128xf32, #tpu.memory_space<vmem>>, vector<1x128xf32>
    %c37 = arith.constant 37 : index
    %c0_335 = arith.constant 0 : index
    %360 = vector.load %arg16[%c37, %c0_335] : memref<160x128xf32, #tpu.memory_space<vmem>>, vector<1x128xf32>
    %361 = arith.maximumf %359, %360 : vector<1x128xf32>
    %c52 = arith.constant 52 : index
    %c0_336 = arith.constant 0 : index
    %362 = vector.load %arg16[%c52, %c0_336] : memref<160x128xf32, #tpu.memory_space<vmem>>, vector<1x128xf32>
    %c53 = arith.constant 53 : index
    %c0_337 = arith.constant 0 : index
    %363 = vector.load %arg16[%c53, %c0_337] : memref<160x128xf32, #tpu.memory_space<vmem>>, vector<1x128xf32>
    %364 = arith.maximumf %362, %363 : vector<1x128xf32>
    %365 = arith.maximumf %361, %364 : vector<1x128xf32>
    %c38 = arith.constant 38 : index
    %c0_338 = arith.constant 0 : index
    %366 = vector.load %arg16[%c38, %c0_338] : memref<160x128xf32, #tpu.memory_space<vmem>>, vector<1x128xf32>
    %c39 = arith.constant 39 : index
    %c0_339 = arith.constant 0 : index
    %367 = vector.load %arg16[%c39, %c0_339] : memref<160x128xf32, #tpu.memory_space<vmem>>, vector<1x128xf32>
    %368 = arith.maximumf %366, %367 : vector<1x128xf32>
    %c54 = arith.constant 54 : index
    %c0_340 = arith.constant 0 : index
    %369 = vector.load %arg16[%c54, %c0_340] : memref<160x128xf32, #tpu.memory_space<vmem>>, vector<1x128xf32>
    %c55 = arith.constant 55 : index
    %c0_341 = arith.constant 0 : index
    %370 = vector.load %arg16[%c55, %c0_341] : memref<160x128xf32, #tpu.memory_space<vmem>>, vector<1x128xf32>
    %371 = arith.maximumf %369, %370 : vector<1x128xf32>
    %372 = arith.maximumf %368, %371 : vector<1x128xf32>
    %c40 = arith.constant 40 : index
    %c0_342 = arith.constant 0 : index
    %373 = vector.load %arg16[%c40, %c0_342] : memref<160x128xf32, #tpu.memory_space<vmem>>, vector<1x128xf32>
    %c41 = arith.constant 41 : index
    %c0_343 = arith.constant 0 : index
    %374 = vector.load %arg16[%c41, %c0_343] : memref<160x128xf32, #tpu.memory_space<vmem>>, vector<1x128xf32>
    %375 = arith.maximumf %373, %374 : vector<1x128xf32>
    %c56 = arith.constant 56 : index
    %c0_344 = arith.constant 0 : index
    %376 = vector.load %arg16[%c56, %c0_344] : memref<160x128xf32, #tpu.memory_space<vmem>>, vector<1x128xf32>
    %c57 = arith.constant 57 : index
    %c0_345 = arith.constant 0 : index
    %377 = vector.load %arg16[%c57, %c0_345] : memref<160x128xf32, #tpu.memory_space<vmem>>, vector<1x128xf32>
    %378 = arith.maximumf %376, %377 : vector<1x128xf32>
    %379 = arith.maximumf %375, %378 : vector<1x128xf32>
    %c64_346 = arith.constant 64 : index
    %c0_347 = arith.constant 0 : index
    %380 = vector.load %arg16[%c64_346, %c0_347] : memref<160x128xf32, #tpu.memory_space<vmem>>, vector<1x128xf32>
    %c65 = arith.constant 65 : index
    %c0_348 = arith.constant 0 : index
    %381 = vector.load %arg16[%c65, %c0_348] : memref<160x128xf32, #tpu.memory_space<vmem>>, vector<1x128xf32>
    %382 = arith.maximumf %380, %381 : vector<1x128xf32>
    %c80_349 = arith.constant 80 : index
    %c0_350 = arith.constant 0 : index
    %383 = vector.load %arg16[%c80_349, %c0_350] : memref<160x128xf32, #tpu.memory_space<vmem>>, vector<1x128xf32>
    %c81 = arith.constant 81 : index
    %c0_351 = arith.constant 0 : index
    %384 = vector.load %arg16[%c81, %c0_351] : memref<160x128xf32, #tpu.memory_space<vmem>>, vector<1x128xf32>
    %385 = arith.maximumf %383, %384 : vector<1x128xf32>
    %386 = arith.maximumf %382, %385 : vector<1x128xf32>
    %c66 = arith.constant 66 : index
    %c0_352 = arith.constant 0 : index
    %387 = vector.load %arg16[%c66, %c0_352] : memref<160x128xf32, #tpu.memory_space<vmem>>, vector<1x128xf32>
    %c67 = arith.constant 67 : index
    %c0_353 = arith.constant 0 : index
    %388 = vector.load %arg16[%c67, %c0_353] : memref<160x128xf32, #tpu.memory_space<vmem>>, vector<1x128xf32>
    %389 = arith.maximumf %387, %388 : vector<1x128xf32>
    %c82 = arith.constant 82 : index
    %c0_354 = arith.constant 0 : index
    %390 = vector.load %arg16[%c82, %c0_354] : memref<160x128xf32, #tpu.memory_space<vmem>>, vector<1x128xf32>
    %c83 = arith.constant 83 : index
    %c0_355 = arith.constant 0 : index
    %391 = vector.load %arg16[%c83, %c0_355] : memref<160x128xf32, #tpu.memory_space<vmem>>, vector<1x128xf32>
    %392 = arith.maximumf %390, %391 : vector<1x128xf32>
    %393 = arith.maximumf %389, %392 : vector<1x128xf32>
    %c68 = arith.constant 68 : index
    %c0_356 = arith.constant 0 : index
    %394 = vector.load %arg16[%c68, %c0_356] : memref<160x128xf32, #tpu.memory_space<vmem>>, vector<1x128xf32>
    %c69 = arith.constant 69 : index
    %c0_357 = arith.constant 0 : index
    %395 = vector.load %arg16[%c69, %c0_357] : memref<160x128xf32, #tpu.memory_space<vmem>>, vector<1x128xf32>
    %396 = arith.maximumf %394, %395 : vector<1x128xf32>
    %c84 = arith.constant 84 : index
    %c0_358 = arith.constant 0 : index
    %397 = vector.load %arg16[%c84, %c0_358] : memref<160x128xf32, #tpu.memory_space<vmem>>, vector<1x128xf32>
    %c85 = arith.constant 85 : index
    %c0_359 = arith.constant 0 : index
    %398 = vector.load %arg16[%c85, %c0_359] : memref<160x128xf32, #tpu.memory_space<vmem>>, vector<1x128xf32>
    %399 = arith.maximumf %397, %398 : vector<1x128xf32>
    %400 = arith.maximumf %396, %399 : vector<1x128xf32>
    %c70 = arith.constant 70 : index
    %c0_360 = arith.constant 0 : index
    %401 = vector.load %arg16[%c70, %c0_360] : memref<160x128xf32, #tpu.memory_space<vmem>>, vector<1x128xf32>
    %c71 = arith.constant 71 : index
    %c0_361 = arith.constant 0 : index
    %402 = vector.load %arg16[%c71, %c0_361] : memref<160x128xf32, #tpu.memory_space<vmem>>, vector<1x128xf32>
    %403 = arith.maximumf %401, %402 : vector<1x128xf32>
    %c86 = arith.constant 86 : index
    %c0_362 = arith.constant 0 : index
    %404 = vector.load %arg16[%c86, %c0_362] : memref<160x128xf32, #tpu.memory_space<vmem>>, vector<1x128xf32>
    %c87 = arith.constant 87 : index
    %c0_363 = arith.constant 0 : index
    %405 = vector.load %arg16[%c87, %c0_363] : memref<160x128xf32, #tpu.memory_space<vmem>>, vector<1x128xf32>
    %406 = arith.maximumf %404, %405 : vector<1x128xf32>
    %407 = arith.maximumf %403, %406 : vector<1x128xf32>
    %c72 = arith.constant 72 : index
    %c0_364 = arith.constant 0 : index
    %408 = vector.load %arg16[%c72, %c0_364] : memref<160x128xf32, #tpu.memory_space<vmem>>, vector<1x128xf32>
    %c73 = arith.constant 73 : index
    %c0_365 = arith.constant 0 : index
    %409 = vector.load %arg16[%c73, %c0_365] : memref<160x128xf32, #tpu.memory_space<vmem>>, vector<1x128xf32>
    %410 = arith.maximumf %408, %409 : vector<1x128xf32>
    %c88 = arith.constant 88 : index
    %c0_366 = arith.constant 0 : index
    %411 = vector.load %arg16[%c88, %c0_366] : memref<160x128xf32, #tpu.memory_space<vmem>>, vector<1x128xf32>
    %c89 = arith.constant 89 : index
    %c0_367 = arith.constant 0 : index
    %412 = vector.load %arg16[%c89, %c0_367] : memref<160x128xf32, #tpu.memory_space<vmem>>, vector<1x128xf32>
    %413 = arith.maximumf %411, %412 : vector<1x128xf32>
    %414 = arith.maximumf %410, %413 : vector<1x128xf32>
    %c96_368 = arith.constant 96 : index
    %c0_369 = arith.constant 0 : index
    %415 = vector.load %arg16[%c96_368, %c0_369] : memref<160x128xf32, #tpu.memory_space<vmem>>, vector<1x128xf32>
    %c97 = arith.constant 97 : index
    %c0_370 = arith.constant 0 : index
    %416 = vector.load %arg16[%c97, %c0_370] : memref<160x128xf32, #tpu.memory_space<vmem>>, vector<1x128xf32>
    %417 = arith.maximumf %415, %416 : vector<1x128xf32>
    %c112_371 = arith.constant 112 : index
    %c0_372 = arith.constant 0 : index
    %418 = vector.load %arg16[%c112_371, %c0_372] : memref<160x128xf32, #tpu.memory_space<vmem>>, vector<1x128xf32>
    %c113 = arith.constant 113 : index
    %c0_373 = arith.constant 0 : index
    %419 = vector.load %arg16[%c113, %c0_373] : memref<160x128xf32, #tpu.memory_space<vmem>>, vector<1x128xf32>
    %420 = arith.maximumf %418, %419 : vector<1x128xf32>
    %421 = arith.maximumf %417, %420 : vector<1x128xf32>
    %c98 = arith.constant 98 : index
    %c0_374 = arith.constant 0 : index
    %422 = vector.load %arg16[%c98, %c0_374] : memref<160x128xf32, #tpu.memory_space<vmem>>, vector<1x128xf32>
    %c99 = arith.constant 99 : index
    %c0_375 = arith.constant 0 : index
    %423 = vector.load %arg16[%c99, %c0_375] : memref<160x128xf32, #tpu.memory_space<vmem>>, vector<1x128xf32>
    %424 = arith.maximumf %422, %423 : vector<1x128xf32>
    %c114 = arith.constant 114 : index
    %c0_376 = arith.constant 0 : index
    %425 = vector.load %arg16[%c114, %c0_376] : memref<160x128xf32, #tpu.memory_space<vmem>>, vector<1x128xf32>
    %c115 = arith.constant 115 : index
    %c0_377 = arith.constant 0 : index
    %426 = vector.load %arg16[%c115, %c0_377] : memref<160x128xf32, #tpu.memory_space<vmem>>, vector<1x128xf32>
    %427 = arith.maximumf %425, %426 : vector<1x128xf32>
    %428 = arith.maximumf %424, %427 : vector<1x128xf32>
    %c100 = arith.constant 100 : index
    %c0_378 = arith.constant 0 : index
    %429 = vector.load %arg16[%c100, %c0_378] : memref<160x128xf32, #tpu.memory_space<vmem>>, vector<1x128xf32>
    %c101 = arith.constant 101 : index
    %c0_379 = arith.constant 0 : index
    %430 = vector.load %arg16[%c101, %c0_379] : memref<160x128xf32, #tpu.memory_space<vmem>>, vector<1x128xf32>
    %431 = arith.maximumf %429, %430 : vector<1x128xf32>
    %c116 = arith.constant 116 : index
    %c0_380 = arith.constant 0 : index
    %432 = vector.load %arg16[%c116, %c0_380] : memref<160x128xf32, #tpu.memory_space<vmem>>, vector<1x128xf32>
    %c117 = arith.constant 117 : index
    %c0_381 = arith.constant 0 : index
    %433 = vector.load %arg16[%c117, %c0_381] : memref<160x128xf32, #tpu.memory_space<vmem>>, vector<1x128xf32>
    %434 = arith.maximumf %432, %433 : vector<1x128xf32>
    %435 = arith.maximumf %431, %434 : vector<1x128xf32>
    %c102 = arith.constant 102 : index
    %c0_382 = arith.constant 0 : index
    %436 = vector.load %arg16[%c102, %c0_382] : memref<160x128xf32, #tpu.memory_space<vmem>>, vector<1x128xf32>
    %c103 = arith.constant 103 : index
    %c0_383 = arith.constant 0 : index
    %437 = vector.load %arg16[%c103, %c0_383] : memref<160x128xf32, #tpu.memory_space<vmem>>, vector<1x128xf32>
    %438 = arith.maximumf %436, %437 : vector<1x128xf32>
    %c118 = arith.constant 118 : index
    %c0_384 = arith.constant 0 : index
    %439 = vector.load %arg16[%c118, %c0_384] : memref<160x128xf32, #tpu.memory_space<vmem>>, vector<1x128xf32>
    %c119 = arith.constant 119 : index
    %c0_385 = arith.constant 0 : index
    %440 = vector.load %arg16[%c119, %c0_385] : memref<160x128xf32, #tpu.memory_space<vmem>>, vector<1x128xf32>
    %441 = arith.maximumf %439, %440 : vector<1x128xf32>
    %442 = arith.maximumf %438, %441 : vector<1x128xf32>
    %c104 = arith.constant 104 : index
    %c0_386 = arith.constant 0 : index
    %443 = vector.load %arg16[%c104, %c0_386] : memref<160x128xf32, #tpu.memory_space<vmem>>, vector<1x128xf32>
    %c105 = arith.constant 105 : index
    %c0_387 = arith.constant 0 : index
    %444 = vector.load %arg16[%c105, %c0_387] : memref<160x128xf32, #tpu.memory_space<vmem>>, vector<1x128xf32>
    %445 = arith.maximumf %443, %444 : vector<1x128xf32>
    %c120 = arith.constant 120 : index
    %c0_388 = arith.constant 0 : index
    %446 = vector.load %arg16[%c120, %c0_388] : memref<160x128xf32, #tpu.memory_space<vmem>>, vector<1x128xf32>
    %c121 = arith.constant 121 : index
    %c0_389 = arith.constant 0 : index
    %447 = vector.load %arg16[%c121, %c0_389] : memref<160x128xf32, #tpu.memory_space<vmem>>, vector<1x128xf32>
    %448 = arith.maximumf %446, %447 : vector<1x128xf32>
    %449 = arith.maximumf %445, %448 : vector<1x128xf32>
    %c128_390 = arith.constant 128 : index
    %c0_391 = arith.constant 0 : index
    %450 = vector.load %arg16[%c128_390, %c0_391] : memref<160x128xf32, #tpu.memory_space<vmem>>, vector<1x128xf32>
    %c129 = arith.constant 129 : index
    %c0_392 = arith.constant 0 : index
    %451 = vector.load %arg16[%c129, %c0_392] : memref<160x128xf32, #tpu.memory_space<vmem>>, vector<1x128xf32>
    %452 = arith.maximumf %450, %451 : vector<1x128xf32>
    %c144_393 = arith.constant 144 : index
    %c0_394 = arith.constant 0 : index
    %453 = vector.load %arg16[%c144_393, %c0_394] : memref<160x128xf32, #tpu.memory_space<vmem>>, vector<1x128xf32>
    %c145 = arith.constant 145 : index
    %c0_395 = arith.constant 0 : index
    %454 = vector.load %arg16[%c145, %c0_395] : memref<160x128xf32, #tpu.memory_space<vmem>>, vector<1x128xf32>
    %455 = arith.maximumf %453, %454 : vector<1x128xf32>
    %456 = arith.maximumf %452, %455 : vector<1x128xf32>
    %c130 = arith.constant 130 : index
    %c0_396 = arith.constant 0 : index
    %457 = vector.load %arg16[%c130, %c0_396] : memref<160x128xf32, #tpu.memory_space<vmem>>, vector<1x128xf32>
    %c131 = arith.constant 131 : index
    %c0_397 = arith.constant 0 : index
    %458 = vector.load %arg16[%c131, %c0_397] : memref<160x128xf32, #tpu.memory_space<vmem>>, vector<1x128xf32>
    %459 = arith.maximumf %457, %458 : vector<1x128xf32>
    %c146 = arith.constant 146 : index
    %c0_398 = arith.constant 0 : index
    %460 = vector.load %arg16[%c146, %c0_398] : memref<160x128xf32, #tpu.memory_space<vmem>>, vector<1x128xf32>
    %c147 = arith.constant 147 : index
    %c0_399 = arith.constant 0 : index
    %461 = vector.load %arg16[%c147, %c0_399] : memref<160x128xf32, #tpu.memory_space<vmem>>, vector<1x128xf32>
    %462 = arith.maximumf %460, %461 : vector<1x128xf32>
    %463 = arith.maximumf %459, %462 : vector<1x128xf32>
    %c132 = arith.constant 132 : index
    %c0_400 = arith.constant 0 : index
    %464 = vector.load %arg16[%c132, %c0_400] : memref<160x128xf32, #tpu.memory_space<vmem>>, vector<1x128xf32>
    %c133 = arith.constant 133 : index
    %c0_401 = arith.constant 0 : index
    %465 = vector.load %arg16[%c133, %c0_401] : memref<160x128xf32, #tpu.memory_space<vmem>>, vector<1x128xf32>
    %466 = arith.maximumf %464, %465 : vector<1x128xf32>
    %c148 = arith.constant 148 : index
    %c0_402 = arith.constant 0 : index
    %467 = vector.load %arg16[%c148, %c0_402] : memref<160x128xf32, #tpu.memory_space<vmem>>, vector<1x128xf32>
    %c149 = arith.constant 149 : index
    %c0_403 = arith.constant 0 : index
    %468 = vector.load %arg16[%c149, %c0_403] : memref<160x128xf32, #tpu.memory_space<vmem>>, vector<1x128xf32>
    %469 = arith.maximumf %467, %468 : vector<1x128xf32>
    %470 = arith.maximumf %466, %469 : vector<1x128xf32>
    %c134 = arith.constant 134 : index
    %c0_404 = arith.constant 0 : index
    %471 = vector.load %arg16[%c134, %c0_404] : memref<160x128xf32, #tpu.memory_space<vmem>>, vector<1x128xf32>
    %c135 = arith.constant 135 : index
    %c0_405 = arith.constant 0 : index
    %472 = vector.load %arg16[%c135, %c0_405] : memref<160x128xf32, #tpu.memory_space<vmem>>, vector<1x128xf32>
    %473 = arith.maximumf %471, %472 : vector<1x128xf32>
    %c150 = arith.constant 150 : index
    %c0_406 = arith.constant 0 : index
    %474 = vector.load %arg16[%c150, %c0_406] : memref<160x128xf32, #tpu.memory_space<vmem>>, vector<1x128xf32>
    %c151 = arith.constant 151 : index
    %c0_407 = arith.constant 0 : index
    %475 = vector.load %arg16[%c151, %c0_407] : memref<160x128xf32, #tpu.memory_space<vmem>>, vector<1x128xf32>
    %476 = arith.maximumf %474, %475 : vector<1x128xf32>
    %477 = arith.maximumf %473, %476 : vector<1x128xf32>
    %c136 = arith.constant 136 : index
    %c0_408 = arith.constant 0 : index
    %478 = vector.load %arg16[%c136, %c0_408] : memref<160x128xf32, #tpu.memory_space<vmem>>, vector<1x128xf32>
    %c137 = arith.constant 137 : index
    %c0_409 = arith.constant 0 : index
    %479 = vector.load %arg16[%c137, %c0_409] : memref<160x128xf32, #tpu.memory_space<vmem>>, vector<1x128xf32>
    %480 = arith.maximumf %478, %479 : vector<1x128xf32>
    %c152 = arith.constant 152 : index
    %c0_410 = arith.constant 0 : index
    %481 = vector.load %arg16[%c152, %c0_410] : memref<160x128xf32, #tpu.memory_space<vmem>>, vector<1x128xf32>
    %c153 = arith.constant 153 : index
    %c0_411 = arith.constant 0 : index
    %482 = vector.load %arg16[%c153, %c0_411] : memref<160x128xf32, #tpu.memory_space<vmem>>, vector<1x128xf32>
    %483 = arith.maximumf %481, %482 : vector<1x128xf32>
    %484 = arith.maximumf %480, %483 : vector<1x128xf32>
    %485 = tpu.concatenate %316, %323, %330, %337, %344, %351, %358, %365, %372, %379, %386, %393, %400, %407, %414, %421 in 1 : vector<1x128xf32>, vector<1x128xf32>, vector<1x128xf32>, vector<1x128xf32>, vector<1x128xf32>, vector<1x128xf32>, vector<1x128xf32>, vector<1x128xf32>, vector<1x128xf32>, vector<1x128xf32>, vector<1x128xf32>, vector<1x128xf32>, vector<1x128xf32>, vector<1x128xf32>, vector<1x128xf32>, vector<1x128xf32> -> vector<1x2048xf32>
    %486 = tpu.concatenate %428, %435, %442, %449, %456, %463, %470, %477, %484 in 1 : vector<1x128xf32>, vector<1x128xf32>, vector<1x128xf32>, vector<1x128xf32>, vector<1x128xf32>, vector<1x128xf32>, vector<1x128xf32>, vector<1x128xf32>, vector<1x128xf32> -> vector<1x1152xf32>
    %487 = tpu.concatenate %485, %486 in 1 : vector<1x2048xf32>, vector<1x1152xf32> -> vector<1x3200xf32>
    %488 = arith.truncf %487 : vector<1x3200xf32> to vector<1x3200xbf16>
    %c0_412 = arith.constant 0 : index
    %c0_413 = arith.constant 0 : index
    %489 = vector.load %arg6[%c0_412, %c0_413] : memref<3200x128xbf16, #tpu.memory_space<vmem>>, vector<3200x128xbf16>
    %cst_414 = arith.constant dense<0.000000e+00> : vector<1x128xf32>
    %490 = tpu.matmul %488, %489, %cst_414 {dimension_numbers = #tpu.dot_dimension_numbers<[1], [0], [0], [1], [0, 0, 1, 1], [], []>} : vector<1x3200xbf16>, vector<3200x128xbf16>, vector<1x128xf32> -> vector<1x128xf32>
    %c0_415 = arith.constant 0 : index
    %c0_416 = arith.constant 0 : index
    %491 = vector.load %arg7[%c0_415, %c0_416] : memref<1x128xf32, #tpu.memory_space<vmem>>, vector<1x128xf32>
    %492 = arith.addf %490, %491 : vector<1x128xf32>
    %cst_417 = arith.constant 0.000000e+00 : f32
    %493 = vector.broadcast %cst_417 : f32 to vector<1x128xf32>
    %494 = arith.maximumf %492, %493 : vector<1x128xf32>
    %495 = arith.truncf %494 : vector<1x128xf32> to vector<1x128xbf16>
    %c0_418 = arith.constant 0 : index
    %c0_419 = arith.constant 0 : index
    %496 = vector.load %arg8[%c0_418, %c0_419] : memref<128x128xbf16, #tpu.memory_space<vmem>>, vector<128x128xbf16>
    %cst_420 = arith.constant dense<0.000000e+00> : vector<1x128xf32>
    %497 = tpu.matmul %495, %496, %cst_420 {dimension_numbers = #tpu.dot_dimension_numbers<[1], [0], [0], [1], [0, 0, 1, 1], [], []>} : vector<1x128xbf16>, vector<128x128xbf16>, vector<1x128xf32> -> vector<1x128xf32>
    %c0_421 = arith.constant 0 : index
    %c0_422 = arith.constant 0 : index
    %498 = vector.load %arg9[%c0_421, %c0_422] : memref<1x128xf32, #tpu.memory_space<vmem>>, vector<1x128xf32>
    %499 = arith.addf %497, %498 : vector<1x128xf32>
    %cst_423 = arith.constant 0.000000e+00 : f32
    %500 = vector.broadcast %cst_423 : f32 to vector<1x128xf32>
    %501 = arith.maximumf %499, %500 : vector<1x128xf32>
    %502 = arith.truncf %501 : vector<1x128xf32> to vector<1x128xbf16>
    %c0_424 = arith.constant 0 : index
    %c0_425 = arith.constant 0 : index
    %503 = vector.load %arg10[%c0_424, %c0_425] : memref<128x128xbf16, #tpu.memory_space<vmem>>, vector<128x128xbf16>
    %cst_426 = arith.constant dense<0.000000e+00> : vector<1x128xf32>
    %504 = tpu.matmul %502, %503, %cst_426 {dimension_numbers = #tpu.dot_dimension_numbers<[1], [0], [0], [1], [0, 0, 1, 1], [], []>} : vector<1x128xbf16>, vector<128x128xbf16>, vector<1x128xf32> -> vector<1x128xf32>
    %c0_427 = arith.constant 0 : index
    %c0_428 = arith.constant 0 : index
    %505 = vector.load %arg11[%c0_427, %c0_428] : memref<1x128xf32, #tpu.memory_space<vmem>>, vector<1x128xf32>
    %506 = arith.addf %504, %505 : vector<1x128xf32>
    %c0_429 = arith.constant 0 : index
    %c0_430 = arith.constant 0 : index
    %c0_431 = arith.constant 0 : index
    %507 = vector.load %arg12[%c0_429, %c0_430, %c0_431] : memref<1x1x128xf32, #tpu.memory_space<vmem>>, vector<1x1x128xf32>
    %508 = vector.shape_cast %507 : vector<1x1x128xf32> to vector<1x128xf32>
    %509 = vector.shape_cast %506 : vector<1x128xf32> to vector<1x1x128xf32>
    tpu.vector_store %arg12[%c0_429, %c0_430, %c0_431], %509 {strides = array<i32>} : memref<1x1x128xf32, #tpu.memory_space<vmem>>, vector<1x1x128xf32>,
    return
  }
  func.func @transform_0(%arg0: i32) -> (i32, i32, i32) {
    %c0_i32 = arith.constant 0 : i32
    %c0_i32_0 = arith.constant 0 : i32
    %c0_i32_1 = arith.constant 0 : i32
    return %arg0, %c0_i32, %c0_i32_0 : i32, i32, i32
  }
  func.func @transform_1(%arg0: i32) -> (i32, i32) {
    %c0_i32 = arith.constant 0 : i32
    %c0_i32_0 = arith.constant 0 : i32
    %c0_i32_1 = arith.constant 0 : i32
    return %c0_i32, %c0_i32_0 : i32, i32
  }
  func.func @transform_2(%arg0: i32) -> (i32, i32) {
    %c0_i32 = arith.constant 0 : i32
    %c0_i32_0 = arith.constant 0 : i32
    %c0_i32_1 = arith.constant 0 : i32
    return %c0_i32, %c0_i32_0 : i32, i32
  }
  func.func @transform_3(%arg0: i32) -> (i32, i32, i32) {
    %c0_i32 = arith.constant 0 : i32
    %c0_i32_0 = arith.constant 0 : i32
    %c0_i32_1 = arith.constant 0 : i32
    %c0_i32_2 = arith.constant 0 : i32
    return %c0_i32, %c0_i32_0, %c0_i32_1 : i32, i32, i32
  }
  func.func @transform_4(%arg0: i32) -> (i32, i32) {
    %c0_i32 = arith.constant 0 : i32
    %c0_i32_0 = arith.constant 0 : i32
    %c0_i32_1 = arith.constant 0 : i32
    return %c0_i32, %c0_i32_0 : i32, i32
  }
  func.func @transform_5(%arg0: i32) -> (i32, i32) {
    %c0_i32 = arith.constant 0 : i32
    %c0_i32_0 = arith.constant 0 : i32
    %c0_i32_1 = arith.constant 0 : i32
    return %c0_i32, %c0_i32_0 : i32, i32
  }
  func.func @transform_6(%arg0: i32) -> (i32, i32) {
    %c0_i32 = arith.constant 0 : i32
    %c0_i32_0 = arith.constant 0 : i32
    %c0_i32_1 = arith.constant 0 : i32
    return %c0_i32, %c0_i32_0 : i32, i32
  }
  func.func @transform_7(%arg0: i32) -> (i32, i32) {
    %c0_i32 = arith.constant 0 : i32
    %c0_i32_0 = arith.constant 0 : i32
    %c0_i32_1 = arith.constant 0 : i32
    return %c0_i32, %c0_i32_0 : i32, i32
  }
  func.func @transform_8(%arg0: i32) -> (i32, i32) {
    %c0_i32 = arith.constant 0 : i32
    %c0_i32_0 = arith.constant 0 : i32
    %c0_i32_1 = arith.constant 0 : i32
    return %c0_i32, %c0_i32_0 : i32, i32
  }
  func.func @transform_9(%arg0: i32) -> (i32, i32) {
    %c0_i32 = arith.constant 0 : i32
    %c0_i32_0 = arith.constant 0 : i32
    %c0_i32_1 = arith.constant 0 : i32
    return %c0_i32, %c0_i32_0 : i32, i32
  }
  func.func @transform_10(%arg0: i32) -> (i32, i32) {
    %c0_i32 = arith.constant 0 : i32
    %c0_i32_0 = arith.constant 0 : i32
    %c0_i32_1 = arith.constant 0 : i32
    return %c0_i32, %c0_i32_0 : i32, i32
  }
  func.func @transform_11(%arg0: i32) -> (i32, i32, i32) {
    %c0_i32 = arith.constant 0 : i32
    %c0_i32_0 = arith.constant 0 : i32
    %c0_i32_1 = arith.constant 0 : i32
    return %arg0, %c0_i32, %c0_i32_0 : i32, i32, i32
  }
}

</mosaic_0001>

<llo_original>
// kernel: simple_cnn_forward.1
$region0: #{simple_cnn_forward.1}
  #allocation0 [shape = 'u32[]', space=smem, size = 0x4, offset = 0x4, fixed_abs, tag = 'smem constant byte address 0x4 - core index']
  #allocation1 [shape = 'u32[144,128]{1,0:T(1,128)}', space=vmem, size = 0x12000, scoped, tag = 'internal scratch']
  #allocation2 [shape = 'f32[32,128]{1,0:T(8,128)}', space=vmem, size = 0x4000, scoped, tag = 'scratch operand']
  #allocation3 [shape = 'f32[232,128]{1,0:T(8,128)}', space=vmem, size = 0x1d000, scoped, tag = 'scratch operand']
  #allocation4 [shape = 'bf16[224,128]{1,0:T(16,128)(2,1)}', space=vmem, size = 0xe000, scoped, tag = 'scratch operand']
  #allocation5 [shape = 'f32[160,128]{1,0:T(8,128)}', space=vmem, size = 0x14000, scoped, tag = 'scratch operand']
  %s0 = inlined_call_operand.vmem [shape: bf16[2,896,128], index: 0, kind: input, shape index: {}]
  %s1 = inlined_call_operand.vmem [shape: bf16[128,128], index: 1, kind: input, shape index: {}]
  %s2 = inlined_call_operand.vmem [shape: f32[1,128], index: 2, kind: input, shape index: {}]
  %s3 = inlined_call_operand.vmem [shape: bf16[25,128,128], index: 3, kind: input, shape index: {}]
  %s4 = inlined_call_operand.vmem [shape: f32[1,128], index: 4, kind: input, shape index: {}]
  %s5 = inlined_call_operand.vmem [shape: bf16[3200,128], index: 5, kind: input, shape index: {}]
  %s6 = inlined_call_operand.vmem [shape: f32[1,128], index: 6, kind: input, shape index: {}]
  %s7 = inlined_call_operand.vmem [shape: bf16[128,128], index: 7, kind: input, shape index: {}]
  %s8 = inlined_call_operand.vmem [shape: f32[1,128], index: 8, kind: input, shape index: {}]
  %s9 = inlined_call_operand.vmem [shape: bf16[128,128], index: 9, kind: input, shape index: {}]
  %s10 = inlined_call_operand.vmem [shape: f32[1,128], index: 10, kind: input, shape index: {}]
  %s11 = inlined_call_operand.hbm [shape: f32[2,1,128], index: 11, kind: output, shape index: {}]
  %s12 = sld [smem:[#allocation0]]
  $region77: #{simple_cnn_forward.1} parent=0
    _
  %s14 = ssub.s32 1, %s12
  %s15 = scalar_select 0, %s14, %s12
  $region1: #{simple_cnn_forward.1} parent=0
    #allocation6 [shape = 'u8[1024]{0}', space=vmem, size = 0x400, scoped, tag = 'output window, operand 0']
    #allocation7 [shape = 's32[2]{0}', space=sflag, size = 0x8, scoped, tag = 'scoped memory for simple_cnn_forward.1']
    %16 = vsyncpa [#allocation7], 0
    %s17 = scalar_lea.sflag [#allocation7], 1
    %18 = vsyncpa %s17, 0
    loop: start=0, step=1, limit=4
    $region2: #{simple_cnn_forward.1} parent=1 // loop_pre_header
      _
    $region3: #{simple_cnn_forward.1} parent=1 // loop_header
      %s20 = sphi 0, %s24
      %p21 = scmp.ge.s32.totalorder %s20, 4
      %s30 = sphi 0, %s32
      %s33 = sphi 0, %s30
      %s34 = sphi 0, %s33
      %s50 = sphi 0, %s34
      %s54 = sphi 0, %s54
      %s56 = sphi 0, %s54
      %s57 = sphi 0, %s56
      %s71 = sphi 0, %s57
      %s75 = sphi 0, %s75
      %s77 = sphi 0, %s75
      %s78 = sphi 0, %s77
      %s92 = sphi 0, %s78
      %s96 = sphi 0, %s96
      %s98 = sphi 0, %s96
      %s99 = sphi 0, %s98
      %s113 = sphi 0, %s99
      %s117 = sphi 0, %s117
      %s119 = sphi 0, %s117
      %s120 = sphi 0, %s119
      %s134 = sphi 0, %s120
      %s138 = sphi 0, %s138
      %s140 = sphi 0, %s138
      %s141 = sphi 0, %s140
      %s155 = sphi 0, %s141
      %s159 = sphi 0, %s159
      %s161 = sphi 0, %s159
      %s162 = sphi 0, %s161
      %s176 = sphi 0, %s162
      %s180 = sphi 0, %s180
      %s182 = sphi 0, %s180
      %s183 = sphi 0, %s182
      %s197 = sphi 0, %s183
      %s201 = sphi 0, %s201
      %s203 = sphi 0, %s201
      %s204 = sphi 0, %s203
      %s218 = sphi 0, %s204
      %s222 = sphi 0, %s222
      %s224 = sphi 0, %s222
      %s225 = sphi 0, %s224
      %s239 = sphi 0, %s225
      %s243 = sphi 0, %s243
      %s245 = sphi 0, %s243
      %s246 = sphi 0, %s245
      %s260 = sphi 0, %s246
      %s266 = sphi 0, %s268
      %s269 = sphi 0, %s266
      %s270 = sphi 0, %s269
      %s286 = sphi 0, %s270
    $region4: #{simple_cnn_forward.1} parent=1 // loop_header_branch
      %23 = sbr.rel (%p21) target = $region8
    $region5: #{simple_cnn_forward.1} parent=1 // loop_body
      %s25 = ssub.s32 %s20, 1
      %s26 = ssub.s32 %s20, 2
      %s27 = sadd.s32 %s20, 1
      %s28 = ssub.s32 %s20, %s27
      %p29 = scmp.eq.s32.totalorder %s28, 0
      %s31 = sadd.s32 %s30, 1
      %s32 = scalar_select %p29, %s30, %s31
      %p35 = pneg %p29
      %p36 = scmp.eq.s32.totalorder %s20, 1
      %p37 = por %p35, %p36
      %p38 = scmp.ne.s32.totalorder %s30, %s33
      %p39 = scmp.eq.s32.totalorder %s20, 0
      %p40 = por %p38, %p39
      %p41 = scmp.ne.s32.totalorder %s30, %s33
      %p42 = scmp.eq.s32.totalorder %s25, 1
      %p43 = por %p41, %p42
      %p44 = scmp.ne.s32.totalorder %s33, %s34
      %p45 = scmp.eq.s32.totalorder %s25, 0
      %p46 = por %p44, %p45
      %p47 = scmp.ne.s32.totalorder %s33, %s34
      %p48 = scmp.eq.s32.totalorder %s26, 1
      %p49 = por %p47, %p48
      %p51 = scmp.ne.s32.totalorder %s34, %s50
      %p52 = scmp.eq.s32.totalorder %s26, 0
      %p53 = por %p51, %p52
      %s55 = sadd.s32 %s54, 1
      %p58 = scmp.eq.s32.totalorder %s20, 1
      %p59 = scmp.ne.s32.totalorder %s54, %s56
      %p60 = scmp.eq.s32.totalorder %s20, 0
      %p61 = por %p59, %p60
      %p62 = scmp.ne.s32.totalorder %s54, %s56
      %p63 = scmp.eq.s32.totalorder %s25, 1
      %p64 = por %p62, %p63
      %p65 = scmp.ne.s32.totalorder %s56, %s57
      %p66 = scmp.eq.s32.totalorder %s25, 0
      %p67 = por %p65, %p66
      %p68 = scmp.ne.s32.totalorder %s56, %s57
      %p69 = scmp.eq.s32.totalorder %s26, 1
      %p70 = por %p68, %p69
      %p72 = scmp.ne.s32.totalorder %s57, %s71
      %p73 = scmp.eq.s32.totalorder %s26, 0
      %p74 = por %p72, %p73
      %s76 = sadd.s32 %s75, 1
      %p79 = scmp.eq.s32.totalorder %s20, 1
      %p80 = scmp.ne.s32.totalorder %s75, %s77
      %p81 = scmp.eq.s32.totalorder %s20, 0
      %p82 = por %p80, %p81
      %p83 = scmp.ne.s32.totalorder %s75, %s77
      %p84 = scmp.eq.s32.totalorder %s25, 1
      %p85 = por %p83, %p84
      %p86 = scmp.ne.s32.totalorder %s77, %s78
      %p87 = scmp.eq.s32.totalorder %s25, 0
      %p88 = por %p86, %p87
      %p89 = scmp.ne.s32.totalorder %s77, %s78
      %p90 = scmp.eq.s32.totalorder %s26, 1
      %p91 = por %p89, %p90
      %p93 = scmp.ne.s32.totalorder %s78, %s92
      %p94 = scmp.eq.s32.totalorder %s26, 0
      %p95 = por %p93, %p94
      %s97 = sadd.s32 %s96, 1
      %p100 = scmp.eq.s32.totalorder %s20, 1
      %p101 = scmp.ne.s32.totalorder %s96, %s98
      %p102 = scmp.eq.s32.totalorder %s20, 0
      %p103 = por %p101, %p102
      %p104 = scmp.ne.s32.totalorder %s96, %s98
      %p105 = scmp.eq.s32.totalorder %s25, 1
      %p106 = por %p104, %p105
      %p107 = scmp.ne.s32.totalorder %s98, %s99
      %p108 = scmp.eq.s32.totalorder %s25, 0
      %p109 = por %p107, %p108
      %p110 = scmp.ne.s32.totalorder %s98, %s99
      %p111 = scmp.eq.s32.totalorder %s26, 1
      %p112 = por %p110, %p111
      %p114 = scmp.ne.s32.totalorder %s99, %s113
      %p115 = scmp.eq.s32.totalorder %s26, 0
      %p116 = por %p114, %p115
      %s118 = sadd.s32 %s117, 1
      %p121 = scmp.eq.s32.totalorder %s20, 1
      %p122 = scmp.ne.s32.totalorder %s117, %s119
      %p123 = scmp.eq.s32.totalorder %s20, 0
      %p124 = por %p122, %p123
      %p125 = scmp.ne.s32.totalorder %s117, %s119
      %p126 = scmp.eq.s32.totalorder %s25, 1
      %p127 = por %p125, %p126
      %p128 = scmp.ne.s32.totalorder %s119, %s120
      %p129 = scmp.eq.s32.totalorder %s25, 0
      %p130 = por %p128, %p129
      %p131 = scmp.ne.s32.totalorder %s119, %s120
      %p132 = scmp.eq.s32.totalorder %s26, 1
      %p133 = por %p131, %p132
      %p135 = scmp.ne.s32.totalorder %s120, %s134
      %p136 = scmp.eq.s32.totalorder %s26, 0
      %p137 = por %p135, %p136
      %s139 = sadd.s32 %s138, 1
      %p142 = scmp.eq.s32.totalorder %s20, 1
      %p143 = scmp.ne.s32.totalorder %s138, %s140
      %p144 = scmp.eq.s32.totalorder %s20, 0
      %p145 = por %p143, %p144
      %p146 = scmp.ne.s32.totalorder %s138, %s140
      %p147 = scmp.eq.s32.totalorder %s25, 1
      %p148 = por %p146, %p147
      %p149 = scmp.ne.s32.totalorder %s140, %s141
      %p150 = scmp.eq.s32.totalorder %s25, 0
      %p151 = por %p149, %p150
      %p152 = scmp.ne.s32.totalorder %s140, %s141
      %p153 = scmp.eq.s32.totalorder %s26, 1
      %p154 = por %p152, %p153
      %p156 = scmp.ne.s32.totalorder %s141, %s155
      %p157 = scmp.eq.s32.totalorder %s26, 0
      %p158 = por %p156, %p157
      %s160 = sadd.s32 %s159, 1
      %p163 = scmp.eq.s32.totalorder %s20, 1
      %p164 = scmp.ne.s32.totalorder %s159, %s161
      %p165 = scmp.eq.s32.totalorder %s20, 0
      %p166 = por %p164, %p165
      %p167 = scmp.ne.s32.totalorder %s159, %s161
      %p168 = scmp.eq.s32.totalorder %s25, 1
      %p169 = por %p167, %p168
      %p170 = scmp.ne.s32.totalorder %s161, %s162
      %p171 = scmp.eq.s32.totalorder %s25, 0
      %p172 = por %p170, %p171
      %p173 = scmp.ne.s32.totalorder %s161, %s162
      %p174 = scmp.eq.s32.totalorder %s26, 1
      %p175 = por %p173, %p174
      %p177 = scmp.ne.s32.totalorder %s162, %s176
      %p178 = scmp.eq.s32.totalorder %s26, 0
      %p179 = por %p177, %p178
      %s181 = sadd.s32 %s180, 1
      %p184 = scmp.eq.s32.totalorder %s20, 1
      %p185 = scmp.ne.s32.totalorder %s180, %s182
      %p186 = scmp.eq.s32.totalorder %s20, 0
      %p187 = por %p185, %p186
      %p188 = scmp.ne.s32.totalorder %s180, %s182
      %p189 = scmp.eq.s32.totalorder %s25, 1
      %p190 = por %p188, %p189
      %p191 = scmp.ne.s32.totalorder %s182, %s183
      %p192 = scmp.eq.s32.totalorder %s25, 0
      %p193 = por %p191, %p192
      %p194 = scmp.ne.s32.totalorder %s182, %s183
      %p195 = scmp.eq.s32.totalorder %s26, 1
      %p196 = por %p194, %p195
      %p198 = scmp.ne.s32.totalorder %s183, %s197
      %p199 = scmp.eq.s32.totalorder %s26, 0
      %p200 = por %p198, %p199
      %s202 = sadd.s32 %s201, 1
      %p205 = scmp.eq.s32.totalorder %s20, 1
      %p206 = scmp.ne.s32.totalorder %s201, %s203
      %p207 = scmp.eq.s32.totalorder %s20, 0
      %p208 = por %p206, %p207
      %p209 = scmp.ne.s32.totalorder %s201, %s203
      %p210 = scmp.eq.s32.totalorder %s25, 1
      %p211 = por %p209, %p210
      %p212 = scmp.ne.s32.totalorder %s203, %s204
      %p213 = scmp.eq.s32.totalorder %s25, 0
      %p214 = por %p212, %p213
      %p215 = scmp.ne.s32.totalorder %s203, %s204
      %p216 = scmp.eq.s32.totalorder %s26, 1
      %p217 = por %p215, %p216
      %p219 = scmp.ne.s32.totalorder %s204, %s218
      %p220 = scmp.eq.s32.totalorder %s26, 0
      %p221 = por %p219, %p220
      %s223 = sadd.s32 %s222, 1
      %p226 = scmp.eq.s32.totalorder %s20, 1
      %p227 = scmp.ne.s32.totalorder %s222, %s224
      %p228 = scmp.eq.s32.totalorder %s20, 0
      %p229 = por %p227, %p228
      %p230 = scmp.ne.s32.totalorder %s222, %s224
      %p231 = scmp.eq.s32.totalorder %s25, 1
      %p232 = por %p230, %p231
      %p233 = scmp.ne.s32.totalorder %s224, %s225
      %p234 = scmp.eq.s32.totalorder %s25, 0
      %p235 = por %p233, %p234
      %p236 = scmp.ne.s32.totalorder %s224, %s225
      %p237 = scmp.eq.s32.totalorder %s26, 1
      %p238 = por %p236, %p237
      %p240 = scmp.ne.s32.totalorder %s225, %s239
      %p241 = scmp.eq.s32.totalorder %s26, 0
      %p242 = por %p240, %p241
      %s244 = sadd.s32 %s243, 1
      %p247 = scmp.eq.s32.totalorder %s20, 1
      %p248 = scmp.ne.s32.totalorder %s243, %s245
      %p249 = scmp.eq.s32.totalorder %s20, 0
      %p250 = por %p248, %p249
      %p251 = scmp.ne.s32.totalorder %s243, %s245
      %p252 = scmp.eq.s32.totalorder %s25, 1
      %p253 = por %p251, %p252
      %p254 = scmp.ne.s32.totalorder %s245, %s246
      %p255 = scmp.eq.s32.totalorder %s25, 0
      %p256 = por %p254, %p255
      %p257 = scmp.ne.s32.totalorder %s245, %s246
      %p258 = scmp.eq.s32.totalorder %s26, 1
      %p259 = por %p257, %p258
      %p261 = scmp.ne.s32.totalorder %s246, %s260
      %p262 = scmp.eq.s32.totalorder %s26, 0
      %p263 = por %p261, %p262
      %s264 = ssub.s32 %s20, %s27
      %p265 = scmp.eq.s32.totalorder %s264, 0
      %s267 = sadd.s32 %s266, 1
      %s268 = scalar_select %p265, %s266, %s267
      %p271 = pneg %p265
      %p272 = scmp.eq.s32.totalorder %s20, 1
      %p273 = por %p271, %p272
      %p274 = scmp.ne.s32.totalorder %s266, %s269
      %p275 = scmp.eq.s32.totalorder %s20, 0
      %p276 = por %p274, %p275
      %p277 = scmp.ne.s32.totalorder %s266, %s269
      %p278 = scmp.eq.s32.totalorder %s25, 1
      %p279 = por %p277, %p278
      %p280 = scmp.ne.s32.totalorder %s269, %s270
      %p281 = scmp.eq.s32.totalorder %s25, 0
      %p282 = por %p280, %p281
      %p283 = scmp.ne.s32.totalorder %s269, %s270
      %p284 = scmp.eq.s32.totalorder %s26, 1
      %p285 = por %p283, %p284
      %p287 = scmp.ne.s32.totalorder %s270, %s286
      %p288 = scmp.eq.s32.totalorder %s26, 0
      %p289 = por %p287, %p288
      %p290 = scmp.le.s32.totalorder 1, %s20
      %p291 = scmp.lt.s32.totalorder %s20, 3
      %p292 = pnand %p290, %p291
      %p293 = pneg %p292
      // Predicated region
      $region9: #{simple_cnn_forward.1} parent=5 // pred_check
        _
      $region10: #{simple_cnn_forward.1} parent=5 // pred_check_branch
        %295 = sbr.rel (%p292) target = $region12
      $region11: #{simple_cnn_forward.1} parent=5 // pred_region
        %s296 = ssub.s32 %s20, 1
        // Predicated region
        $region13: #{simple_cnn_forward.1} parent=11 // pred_check
          %p297 = pneg %p67
        $region14: #{simple_cnn_forward.1} parent=11 // pred_check_branch
          %299 = sbr.rel (%p297) target = $region16
        $region15: #{simple_cnn_forward.1} parent=11 // pred_region
          _
        $region16: #{simple_cnn_forward.1} parent=11 // pred_fallthru
          _
        // Predicated region
        $region17: #{simple_cnn_forward.1} parent=11 // pred_check
          %p300 = pneg %p88
        $region18: #{simple_cnn_forward.1} parent=11 // pred_check_branch
          %302 = sbr.rel (%p300) target = $region20
        $region19: #{simple_cnn_forward.1} parent=11 // pred_region
          _
        $region20: #{simple_cnn_forward.1} parent=11 // pred_fallthru
          _
        // Predicated region
        $region21: #{simple_cnn_forward.1} parent=11 // pred_check
          %p303 = pneg %p109
        $region22: #{simple_cnn_forward.1} parent=11 // pred_check_branch
          %305 = sbr.rel (%p303) target = $region24
        $region23: #{simple_cnn_forward.1} parent=11 // pred_region
          _
        $region24: #{simple_cnn_forward.1} parent=11 // pred_fallthru
          _
        // Predicated region
        $region25: #{simple_cnn_forward.1} parent=11 // pred_check
          %p306 = pneg %p130
        $region26: #{simple_cnn_forward.1} parent=11 // pred_check_branch
          %308 = sbr.rel (%p306) target = $region28
        $region27: #{simple_cnn_forward.1} parent=11 // pred_region
          _
        $region28: #{simple_cnn_forward.1} parent=11 // pred_fallthru
          _
        // Predicated region
        $region29: #{simple_cnn_forward.1} parent=11 // pred_check
          %p309 = pneg %p151
        $region30: #{simple_cnn_forward.1} parent=11 // pred_check_branch
          %311 = sbr.rel (%p309) target = $region32
        $region31: #{simple_cnn_forward.1} parent=11 // pred_region
          _
        $region32: #{simple_cnn_forward.1} parent=11 // pred_fallthru
          _
        // Predicated region
        $region33: #{simple_cnn_forward.1} parent=11 // pred_check
          %p312 = pneg %p172
        $region34: #{simple_cnn_forward.1} parent=11 // pred_check_branch
          %314 = sbr.rel (%p312) target = $region36
        $region35: #{simple_cnn_forward.1} parent=11 // pred_region
          _
        $region36: #{simple_cnn_forward.1} parent=11 // pred_fallthru
          _
        // Predicated region
        $region37: #{simple_cnn_forward.1} parent=11 // pred_check
          %p315 = pneg %p193
        $region38: #{simple_cnn_forward.1} parent=11 // pred_check_branch
          %317 = sbr.rel (%p315) target = $region40
        $region39: #{simple_cnn_forward.1} parent=11 // pred_region
          _
        $region40: #{simple_cnn_forward.1} parent=11 // pred_fallthru
          _
        // Predicated region
        $region41: #{simple_cnn_forward.1} parent=11 // pred_check
          %p318 = pneg %p214
        $region42: #{simple_cnn_forward.1} parent=11 // pred_check_branch
          %320 = sbr.rel (%p318) target = $region44
        $region43: #{simple_cnn_forward.1} parent=11 // pred_region
          _
        $region44: #{simple_cnn_forward.1} parent=11 // pred_fallthru
          _
        // Predicated region
        $region45: #{simple_cnn_forward.1} parent=11 // pred_check
          %p321 = pneg %p235
        $region46: #{simple_cnn_forward.1} parent=11 // pred_check_branch
          %323 = sbr.rel (%p321) target = $region48
        $region47: #{simple_cnn_forward.1} parent=11 // pred_region
          _
        $region48: #{simple_cnn_forward.1} parent=11 // pred_fallthru
          _
        // Predicated region
        $region49: #{simple_cnn_forward.1} parent=11 // pred_check
          %p324 = pneg %p256
        $region50: #{simple_cnn_forward.1} parent=11 // pred_check_branch
          %326 = sbr.rel (%p324) target = $region52
        $region51: #{simple_cnn_forward.1} parent=11 // pred_region
          _
        $region52: #{simple_cnn_forward.1} parent=11 // pred_fallthru
          _
      $region12: #{simple_cnn_forward.1} parent=5 // pred_fallthru
        _
      %p327 = scmp.lt.s32.totalorder %s20, 2
      // Predicated region
      $region53: #{simple_cnn_forward.1} parent=5 // pred_check
        %p328 = pneg %p327
      $region54: #{simple_cnn_forward.1} parent=5 // pred_check_branch
        %330 = sbr.rel (%p328) target = $region56
      $region55: #{simple_cnn_forward.1} parent=5 // pred_region
        // Predicated region
        $region57: #{simple_cnn_forward.1} parent=55 // pred_check
          %p331 = pneg %p40
        $region58: #{simple_cnn_forward.1} parent=55 // pred_check_branch
          %333 = sbr.rel (%p331) target = $region60
        $region59: #{simple_cnn_forward.1} parent=55 // pred_region
          %p334 = scmp.lt.s32.totalorder %s20, 1
          %s335 = scalar_select %p334, %s20, 1
          %s336 = smul.addr %s335, 112
          %s337 = smul.addr %s336, 4
          %s338 = scalar_lea.vmem %s0, %s337
        $region60: #{simple_cnn_forward.1} parent=55 // pred_fallthru
          _
      $region56: #{simple_cnn_forward.1} parent=5 // pred_fallthru
        _
      %p339 = scmp.le.s32.totalorder 1, %s20
      %p340 = scmp.lt.s32.totalorder %s20, 3
      %p341 = pnand %p339, %p340
      %p342 = pneg %p341
      // Predicated region
      $region61: #{simple_cnn_forward.1} parent=5 // pred_check
        _
      $region62: #{simple_cnn_forward.1} parent=5 // pred_check_branch
        %344 = sbr.rel (%p341) target = $region64
      $region63: #{simple_cnn_forward.1} parent=5 // pred_region
        %s345 = ssub.s32 %s20, 1
        %p346 = scmp.lt.s32.totalorder %s25, 1
        %s347 = scalar_select %p346, %s25, 1
        %s348 = smul.addr %s347, 112
        %s349 = smul.addr %s348, 4
        %s350 = scalar_lea.vmem %s0, %s349
        %p351 = pneg %p46
        %p352 = pneg %p43
        %p353 = pneg %p67
        %p354 = pneg %p64
        %p355 = pneg %p88
        %p356 = pneg %p85
        %p357 = pneg %p109
        %p358 = pneg %p106
        %p359 = pneg %p130
        %p360 = pneg %p127
        %p361 = pneg %p151
        %p362 = pneg %p148
        %p363 = pneg %p172
        %p364 = pneg %p169
        %p365 = pneg %p193
        %p366 = pneg %p190
        %p367 = pneg %p214
        %p368 = pneg %p211
        %p369 = pneg %p235
        %p370 = pneg %p232
        %p371 = pneg %p256
        %p372 = pneg %p253
        %p373 = pneg %p282
        %p374 = pneg %p279
        %s375 = sand.u32 %s269, 1
        %s376 = scalar_lea.sflag [#allocation7], %s375
        %s377 = sand.u32 %s269, 1
        %s378 = scalar_lea.vmem [#allocation6], %s377
        %p379 = scmp.lt.s32.totalorder %s25, 1
        %s380 = scalar_select %p379, %s25, 1
        %s381 = smul.addr %s380, 112
        %s382 = smul.addr %s381, 4
        %s383 = scalar_lea.vmem %s0, %s382
        %385 = vst [vmem:[#allocation3 + $0xe0] sm:$0xff] 0.0
        %v386 = vld [vmem:[%s1] sm:$0xf]
        %v387 = vld [vmem:[%s1 + $0x4] sm:$0xf]
        %v388 = vld [vmem:[%s1 + $0x8] sm:$0xf]
        %v389 = vld [vmem:[%s1 + $0xc] sm:$0xf]
        %v390 = vld [vmem:[%s1 + $0x10] sm:$0xf]
        %v391 = vld [vmem:[%s1 + $0x14] sm:$0xf]
        %v392 = vld [vmem:[%s1 + $0x18] sm:$0xf]
        %v393 = vld [vmem:[%s1 + $0x1c] sm:$0xf]
        %v394 = vld [vmem:[%s1 + $0x20] sm:$0xf]
        %v395 = vld [vmem:[%s1 + $0x24] sm:$0xf]
        %v396 = vld [vmem:[%s1 + $0x28] sm:$0xf]
        %v397 = vld [vmem:[%s1 + $0x2c] sm:$0xf]
        %v398 = vld [vmem:[%s1 + $0x30] sm:$0xf]
        %v399 = vld [vmem:[%s1 + $0x34] sm:$0xf]
        %v400 = vld [vmem:[%s1 + $0x38] sm:$0xf]
        %v401 = vld [vmem:[%s1 + $0x3c] sm:$0xf]
        %v402 = vld [vmem:[%s2] sm:$0x1]
        %v403 = vld [vmem:[%s383] sm:$0xf]
        %v404 = vld [vmem:[%s383 + $0x4] sm:$0xf]
        %v405 = vld [vmem:[%s383 + $0x8] sm:$0xf]
        %v406 = vld [vmem:[%s383 + $0xc] sm:$0xf]
        %v407 = vld [vmem:[%s383 + $0x10] sm:$0xf]
        %v408 = vld [vmem:[%s383 + $0x14] sm:$0xf]
        %v409 = vld [vmem:[%s383 + $0x18] sm:$0xf]
        %v410 = vld [vmem:[%s383 + $0x1c] sm:$0xf]
        %v411 = vld [vmem:[%s383 + $0x20] sm:$0xf]
        %v412 = vld [vmem:[%s383 + $0x24] sm:$0xf]
        %v413 = vld [vmem:[%s383 + $0x28] sm:$0xf]
        %v414 = vld [vmem:[%s383 + $0x2c] sm:$0xf]
        %v415 = vld [vmem:[%s383 + $0x30] sm:$0xf]
        %v416 = vld [vmem:[%s383 + $0x34] sm:$0xf]
        %v417 = vld [vmem:[%s383 + $0x38] sm:$0xf]
        %v418 = vld [vmem:[%s383 + $0x3c] sm:$0xf]
        %v420 = vlaneseq
        %v421 = vshrl.u32 %v420, 7
        %v422 = vsub.s32 0, %v421
        %v423 = vrot.slane %v402, %v422
        %v441 = vunpack.c.l.b16 %v403
        %v442 = vunpack.c.l.b16 %v404
        %v443 = vunpack.c.l.b16 %v405
        %v444 = vunpack.c.l.b16 %v406
        %v445 = vunpack.c.l.b16 %v407
        %v446 = vunpack.c.l.b16 %v408
        %v447 = vunpack.c.l.b16 %v409
        %v448 = vunpack.c.l.b16 %v410
        %v449 = vunpack.c.l.b16 %v411
        %v450 = vunpack.c.l.b16 %v412
        %v451 = vunpack.c.l.b16 %v413
        %v452 = vunpack.c.l.b16 %v414
        %v453 = vunpack.c.l.b16 %v415
        %v454 = vunpack.c.l.b16 %v416
        %v455 = vunpack.c.l.b16 %v417
        %v456 = vunpack.c.l.b16 %v418
        %v457 = vpack.c.b16 %v442, %v441
        %v458 = vpack.c.b16 %v444, %v443
        %v459 = vpack.c.b16 %v446, %v445
        %v460 = vpack.c.b16 %v448, %v447
        %v461 = vpack.c.b16 %v450, %v449
        %v462 = vpack.c.b16 %v452, %v451
        %v463 = vpack.c.b16 %v454, %v453
        %v464 = vpack.c.b16 %v456, %v455
        %v489 = vunpack.c.l.b16 %v386
        %v490 = vunpack.c.l.b16 %v387
        %v491 = vunpack.c.l.b16 %v388
        %v492 = vunpack.c.l.b16 %v389
        %v493 = vunpack.c.l.b16 %v390
        %v494 = vunpack.c.l.b16 %v391
        %v495 = vunpack.c.l.b16 %v392
        %v496 = vunpack.c.l.b16 %v393
        %v497 = vunpack.c.l.b16 %v394
        %v498 = vunpack.c.l.b16 %v395
        %v499 = vunpack.c.l.b16 %v396
        %v500 = vunpack.c.l.b16 %v397
        %v501 = vunpack.c.l.b16 %v398
        %v502 = vunpack.c.l.b16 %v399
        %v503 = vunpack.c.l.b16 %v400
        %v504 = vunpack.c.l.b16 %v401
        %v505 = vpack.c.b16 %v490, %v489
        %v506 = vpack.c.b16 %v492, %v491
        %v507 = vpack.c.b16 %v494, %v493
        %v508 = vpack.c.b16 %v496, %v495
        %v509 = vpack.c.b16 %v498, %v497
        %v510 = vpack.c.b16 %v500, %v499
        %v511 = vpack.c.b16 %v502, %v501
        %v512 = vpack.c.b16 %v504, %v503
        %521 = vmatprep.subr.bf16.mxu0 0
        %522 = vmatpush1.bf16.msra.mxu0 %v505
        %523 = vmatprep.subr.bf16.mxu0 0
        %524 = vmatpush1.bf16.msra.mxu0 %v506
        %525 = vmatprep.subr.bf16.mxu0 0
        %526 = vmatpush1.bf16.msra.mxu0 %v507
        %527 = vmatprep.subr.bf16.mxu0 0
        %528 = vmatpush1.bf16.msra.mxu0 %v508
        %529 = vmatprep.subr.bf16.mxu0 0
        %530 = vmatpush1.bf16.msra.mxu0 %v509
        %531 = vmatprep.subr.bf16.mxu0 0
        %532 = vmatpush1.bf16.msra.mxu0 %v510
        %533 = vmatprep.subr.bf16.mxu0 0
        %534 = vmatpush1.bf16.msra.mxu0 %v511
        %535 = vmatprep.subr.bf16.mxu0 0
        %536 = vmatpush1.bf16.msra.mxu0 %v512
        %537 = vmatprep.subr.bf16.mxu0 0
        %538 = vmatpush1.bf16.msra.mxu0 0
        %539 = vmatprep.subr.bf16.mxu0 0
        %540 = vmatpush1.bf16.msra.mxu0 0
        %541 = vmatprep.subr.bf16.mxu0 0
        %542 = vmatpush1.bf16.msra.mxu0 0
        %543 = vmatprep.subr.bf16.mxu0 0
        %544 = vmatpush1.bf16.msra.mxu0 0
        %545 = vmatprep.subr.bf16.mxu0 0
        %546 = vmatpush1.bf16.msra.mxu0 0
        %547 = vmatprep.subr.bf16.mxu0 0
        %548 = vmatpush1.bf16.msra.mxu0 0
        %549 = vmatprep.subr.bf16.mxu0 0
        %550 = vmatpush1.bf16.msra.mxu0 0
        %551 = vmatprep.subr.bf16.mxu0 0
        %552 = vmatpush1.bf16.msra.mxu0 0
        %553 = vmatprep.mubr.bf16.mxu0 0
        %554 = vmatmul.mubr.bf16.gmra.mrb[0].mxu0 %v457
        %v555 = vpop.f32.mrb[0].mxu0
        %v556 = vadd.f32 %v423, %v555
        %v557 = vpop.f32.mrb[0].mxu0
        %v558 = vpop.f32.mrb[0].mxu0
        %v559 = vadd.f32 %v423, %v558
        %v560 = vpop.f32.mrb[0].mxu0
        %561 = vmatprep.mubr.bf16.mxu0 0
        %562 = vmatmul.mubr.bf16.gmra.mrb[0].mxu0 %v458
        %v563 = vpop.f32.mrb[0].mxu0
        %v564 = vadd.f32 %v423, %v563
        %v565 = vpop.f32.mrb[0].mxu0
        %v566 = vpop.f32.mrb[0].mxu0
        %v567 = vadd.f32 %v423, %v566
        %v568 = vpop.f32.mrb[0].mxu0
        %569 = vmatprep.mubr.bf16.mxu0 0
        %570 = vmatmul.mubr.bf16.gmra.mrb[0].mxu0 %v459
        %v571 = vpop.f32.mrb[0].mxu0
        %v572 = vadd.f32 %v423, %v571
        %v573 = vpop.f32.mrb[0].mxu0
        %v574 = vpop.f32.mrb[0].mxu0
        %v575 = vadd.f32 %v423, %v574
        %v576 = vpop.f32.mrb[0].mxu0
        %577 = vmatprep.mubr.bf16.mxu0 0
        %578 = vmatmul.mubr.bf16.gmra.mrb[0].mxu0 %v460
        %v579 = vpop.f32.mrb[0].mxu0
        %v580 = vadd.f32 %v423, %v579
        %v581 = vpop.f32.mrb[0].mxu0
        %v582 = vpop.f32.mrb[0].mxu0
        %v583 = vadd.f32 %v423, %v582
        %v584 = vpop.f32.mrb[0].mxu0
        %585 = vmatprep.mubr.bf16.mxu0 0
        %586 = vmatmul.mubr.bf16.gmra.mrb[0].mxu0 %v461
        %v587 = vpop.f32.mrb[0].mxu0
        %v588 = vadd.f32 %v423, %v587
        %v589 = vpop.f32.mrb[0].mxu0
        %v590 = vpop.f32.mrb[0].mxu0
        %v591 = vadd.f32 %v423, %v590
        %v592 = vpop.f32.mrb[0].mxu0
        %593 = vmatprep.mubr.bf16.mxu0 0
        %594 = vmatmul.mubr.bf16.gmra.mrb[0].mxu0 %v462
        %v595 = vpop.f32.mrb[0].mxu0
        %v596 = vadd.f32 %v423, %v595
        %v597 = vpop.f32.mrb[0].mxu0
        %v598 = vpop.f32.mrb[0].mxu0
        %v599 = vadd.f32 %v423, %v598
        %v600 = vpop.f32.mrb[0].mxu0
        %601 = vmatprep.mubr.bf16.mxu0 0
        %602 = vmatmul.mubr.bf16.gmra.mrb[0].mxu0 %v463
        %v603 = vpop.f32.mrb[0].mxu0
        %v604 = vadd.f32 %v423, %v603
        %v605 = vpop.f32.mrb[0].mxu0
        %v606 = vpop.f32.mrb[0].mxu0
        %v607 = vadd.f32 %v423, %v606
        %v608 = vpop.f32.mrb[0].mxu0
        %609 = vmatprep.mubr.bf16.mxu0 0
        %610 = vmatmul.mubr.bf16.gmra.mrb[0].mxu0 %v464
        %v611 = vpop.f32.mrb[0].mxu0
        %v612 = vadd.f32 %v423, %v611
        %v613 = vpop.f32.mrb[0].mxu0
        %v614 = vpop.f32.mrb[0].mxu0
        %v615 = vadd.f32 %v423, %v614
        %v616 = vpop.f32.mrb[0].mxu0
        %617 = vdwg.mxu0
        %v618 = vmax.f32 %v556, 0.0
        %v619 = vmax.f32 %v559, 0.0
        %v620 = vmax.f32 %v564, 0.0
        %v621 = vmax.f32 %v567, 0.0
        %v622 = vmax.f32 %v572, 0.0
        %v623 = vmax.f32 %v575, 0.0
        %v624 = vmax.f32 %v580, 0.0
        %v625 = vmax.f32 %v583, 0.0
        %v626 = vmax.f32 %v588, 0.0
        %v627 = vmax.f32 %v591, 0.0
        %v628 = vmax.f32 %v596, 0.0
        %v629 = vmax.f32 %v599, 0.0
        %v630 = vmax.f32 %v604, 0.0
        %v631 = vmax.f32 %v607, 0.0
        %v632 = vmax.f32 %v612, 0.0
        %v633 = vmax.f32 %v615, 0.0
        %v634 = vmax.f32 %v618, %v622
        %v635 = vmax.f32 %v619, %v623
        %v636 = vmax.f32 %v620, %v624
        %v637 = vmax.f32 %v621, %v625
        %638 = vst [vmem:[#allocation2] sm:$0xff] %v634
        %639 = vst [vmem:[#allocation2 + $0x8] sm:$0xff] %v635
        %640 = vst [vmem:[#allocation2 + $0x10] sm:$0xff] %v636
        %641 = vst [vmem:[#allocation2 + $0x18] sm:$0xff] %v637
        %v642 = vld [vmem:[#allocation2] ss:$2 sm:$0xff]
        %s643 = scalar_lea.vmem [#allocation2], 16
        %v644 = vld [vmem:[%s643] ss:$2 sm:$0xff]
        %s645 = scalar_lea.vmem [#allocation2], 1
        %v646 = vld [vmem:[%s645] ss:$2 sm:$0xff]
        %s647 = scalar_lea.vmem [#allocation2], 17
        %v648 = vld [vmem:[%s647] ss:$2 sm:$0xff]
        %v649 = vmax.f32 %v642, %v646
        %v650 = vmax.f32 %v644, %v648
        %651 = vst [vmem:[#allocation3] sm:$0xff] %v649
        %652 = vst [vmem:[#allocation3 + $0x8] sm:$0xff] %v650
        %v653 = vmax.f32 %v626, %v630
        %v654 = vmax.f32 %v627, %v631
        %v655 = vmax.f32 %v628, %v632
        %v656 = vmax.f32 %v629, %v633
        %657 = vst [vmem:[#allocation2] sm:$0xff] %v653
        %658 = vst [vmem:[#allocation2 + $0x8] sm:$0xff] %v654
        %659 = vst [vmem:[#allocation2 + $0x10] sm:$0xff] %v655
        %660 = vst [vmem:[#allocation2 + $0x18] sm:$0xff] %v656
        %v661 = vld [vmem:[#allocation2] ss:$2 sm:$0xff]
        %v662 = vld [vmem:[%s643] ss:$2 sm:$0xff]
        %v663 = vld [vmem:[%s645] ss:$2 sm:$0xff]
        %v664 = vld [vmem:[%s647] ss:$2 sm:$0xff]
        %v665 = vmax.f32 %v661, %v663
        %v666 = vmax.f32 %v662, %v664
        %667 = vst [vmem:[#allocation3 + $0x10] sm:$0xff] %v665
        %668 = vst [vmem:[#allocation3 + $0x18] sm:$0xff] %v666
        %v669 = vld [vmem:[%s383 + $0x40] sm:$0xf]
        %v670 = vld [vmem:[%s383 + $0x44] sm:$0xf]
        %v671 = vld [vmem:[%s383 + $0x48] sm:$0xf]
        %v672 = vld [vmem:[%s383 + $0x4c] sm:$0xf]
        %v673 = vld [vmem:[%s383 + $0x50] sm:$0xf]
        %v674 = vld [vmem:[%s383 + $0x54] sm:$0xf]
        %v675 = vld [vmem:[%s383 + $0x58] sm:$0xf]
        %v676 = vld [vmem:[%s383 + $0x5c] sm:$0xf]
        %v677 = vld [vmem:[%s383 + $0x60] sm:$0xf]
        %v678 = vld [vmem:[%s383 + $0x64] sm:$0xf]
        %v679 = vld [vmem:[%s383 + $0x68] sm:$0xf]
        %v680 = vld [vmem:[%s383 + $0x6c] sm:$0xf]
        %v681 = vld [vmem:[%s383 + $0x70] sm:$0xf]
        %v682 = vld [vmem:[%s383 + $0x74] sm:$0xf]
        %v683 = vld [vmem:[%s383 + $0x78] sm:$0xf]
        %v684 = vld [vmem:[%s383 + $0x7c] sm:$0xf]
        %v701 = vunpack.c.l.b16 %v669
        %v702 = vunpack.c.l.b16 %v670
        %v703 = vunpack.c.l.b16 %v671
        %v704 = vunpack.c.l.b16 %v672
        %v705 = vunpack.c.l.b16 %v673
        %v706 = vunpack.c.l.b16 %v674
        %v707 = vunpack.c.l.b16 %v675
        %v708 = vunpack.c.l.b16 %v676
        %v709 = vunpack.c.l.b16 %v677
        %v710 = vunpack.c.l.b16 %v678
        %v711 = vunpack.c.l.b16 %v679
        %v712 = vunpack.c.l.b16 %v680
        %v713 = vunpack.c.l.b16 %v681
        %v714 = vunpack.c.l.b16 %v682
        %v715 = vunpack.c.l.b16 %v683
        %v716 = vunpack.c.l.b16 %v684
        %v717 = vpack.c.b16 %v702, %v701
        %v718 = vpack.c.b16 %v704, %v703
        %v719 = vpack.c.b16 %v706, %v705
        %v720 = vpack.c.b16 %v708, %v707
        %v721 = vpack.c.b16 %v710, %v709
        %v722 = vpack.c.b16 %v712, %v711
        %v723 = vpack.c.b16 %v714, %v713
        %v724 = vpack.c.b16 %v716, %v715
        %733 = vmatprep.subr.bf16.mxu0 0
        %734 = vmatpush1.bf16.msra.mxu0 %v505
        %735 = vmatprep.subr.bf16.mxu0 0
        %736 = vmatpush1.bf16.msra.mxu0 %v506
        %737 = vmatprep.subr.bf16.mxu0 0
        %738 = vmatpush1.bf16.msra.mxu0 %v507
        %739 = vmatprep.subr.bf16.mxu0 0
        %740 = vmatpush1.bf16.msra.mxu0 %v508
        %741 = vmatprep.subr.bf16.mxu0 0
        %742 = vmatpush1.bf16.msra.mxu0 %v509
        %743 = vmatprep.subr.bf16.mxu0 0
        %744 = vmatpush1.bf16.msra.mxu0 %v510
        %745 = vmatprep.subr.bf16.mxu0 0
        %746 = vmatpush1.bf16.msra.mxu0 %v511
        %747 = vmatprep.subr.bf16.mxu0 0
        %748 = vmatpush1.bf16.msra.mxu0 %v512
        %749 = vmatprep.subr.bf16.mxu0 0
        %750 = vmatpush1.bf16.msra.mxu0 0
        %751 = vmatprep.subr.bf16.mxu0 0
        %752 = vmatpush1.bf16.msra.mxu0 0
        %753 = vmatprep.subr.bf16.mxu0 0
        %754 = vmatpush1.bf16.msra.mxu0 0
        %755 = vmatprep.subr.bf16.mxu0 0
        %756 = vmatpush1.bf16.msra.mxu0 0
        %757 = vmatprep.subr.bf16.mxu0 0
        %758 = vmatpush1.bf16.msra.mxu0 0
        %759 = vmatprep.subr.bf16.mxu0 0
        %760 = vmatpush1.bf16.msra.mxu0 0
        %761 = vmatprep.subr.bf16.mxu0 0
        %762 = vmatpush1.bf16.msra.mxu0 0
        %763 = vmatprep.subr.bf16.mxu0 0
        %764 = vmatpush1.bf16.msra.mxu0 0
        %765 = vmatprep.mubr.bf16.mxu0 0
        %766 = vmatmul.mubr.bf16.gmra.mrb[0].mxu0 %v717
        %v767 = vpop.f32.mrb[0].mxu0
        %v768 = vadd.f32 %v423, %v767
        %v769 = vpop.f32.mrb[0].mxu0
        %v770 = vpop.f32.mrb[0].mxu0
        %v771 = vadd.f32 %v423, %v770
        %v772 = vpop.f32.mrb[0].mxu0
        %773 = vmatprep.mubr.bf16.mxu0 0
        %774 = vmatmul.mubr.bf16.gmra.mrb[0].mxu0 %v718
        %v775 = vpop.f32.mrb[0].mxu0
        %v776 = vadd.f32 %v423, %v775
        %v777 = vpop.f32.mrb[0].mxu0
        %v778 = vpop.f32.mrb[0].mxu0
        %v779 = vadd.f32 %v423, %v778
        %v780 = vpop.f32.mrb[0].mxu0
        %781 = vmatprep.mubr.bf16.mxu0 0
        %782 = vmatmul.mubr.bf16.gmra.mrb[0].mxu0 %v719
        %v783 = vpop.f32.mrb[0].mxu0
        %v784 = vadd.f32 %v423, %v783
        %v785 = vpop.f32.mrb[0].mxu0
        %v786 = vpop.f32.mrb[0].mxu0
        %v787 = vadd.f32 %v423, %v786
        %v788 = vpop.f32.mrb[0].mxu0
        %789 = vmatprep.mubr.bf16.mxu0 0
        %790 = vmatmul.mubr.bf16.gmra.mrb[0].mxu0 %v720
        %v791 = vpop.f32.mrb[0].mxu0
        %v792 = vadd.f32 %v423, %v791
        %v793 = vpop.f32.mrb[0].mxu0
        %v794 = vpop.f32.mrb[0].mxu0
        %v795 = vadd.f32 %v423, %v794
        %v796 = vpop.f32.mrb[0].mxu0
        %797 = vmatprep.mubr.bf16.mxu0 0
        %798 = vmatmul.mubr.bf16.gmra.mrb[0].mxu0 %v721
        %v799 = vpop.f32.mrb[0].mxu0
        %v800 = vadd.f32 %v423, %v799
        %v801 = vpop.f32.mrb[0].mxu0
        %v802 = vpop.f32.mrb[0].mxu0
        %v803 = vadd.f32 %v423, %v802
        %v804 = vpop.f32.mrb[0].mxu0
        %805 = vmatprep.mubr.bf16.mxu0 0
        %806 = vmatmul.mubr.bf16.gmra.mrb[0].mxu0 %v722
        %v807 = vpop.f32.mrb[0].mxu0
        %v808 = vadd.f32 %v423, %v807
        %v809 = vpop.f32.mrb[0].mxu0
        %v810 = vpop.f32.mrb[0].mxu0
        %v811 = vadd.f32 %v423, %v810
        %v812 = vpop.f32.mrb[0].mxu0
        %813 = vmatprep.mubr.bf16.mxu0 0
        %814 = vmatmul.mubr.bf16.gmra.mrb[0].mxu0 %v723
        %v815 = vpop.f32.mrb[0].mxu0
        %v816 = vadd.f32 %v423, %v815
        %v817 = vpop.f32.mrb[0].mxu0
        %v818 = vpop.f32.mrb[0].mxu0
        %v819 = vadd.f32 %v423, %v818
        %v820 = vpop.f32.mrb[0].mxu0
        %821 = vmatprep.mubr.bf16.mxu0 0
        %822 = vmatmul.mubr.bf16.gmra.mrb[0].mxu0 %v724
        %v823 = vpop.f32.mrb[0].mxu0
        %v824 = vadd.f32 %v423, %v823
        %v825 = vpop.f32.mrb[0].mxu0
        %v826 = vpop.f32.mrb[0].mxu0
        %v827 = vadd.f32 %v423, %v826
        %v828 = vpop.f32.mrb[0].mxu0
        %829 = vdwg.mxu0
        %v830 = vmax.f32 %v768, 0.0
        %v831 = vmax.f32 %v771, 0.0
        %v832 = vmax.f32 %v776, 0.0
        %v833 = vmax.f32 %v779, 0.0
        %v834 = vmax.f32 %v784, 0.0
        %v835 = vmax.f32 %v787, 0.0
        %v836 = vmax.f32 %v792, 0.0
        %v837 = vmax.f32 %v795, 0.0
        %v838 = vmax.f32 %v800, 0.0
        %v839 = vmax.f32 %v803, 0.0
        %v840 = vmax.f32 %v808, 0.0
        %v841 = vmax.f32 %v811, 0.0
        %v842 = vmax.f32 %v816, 0.0
        %v843 = vmax.f32 %v819, 0.0
        %v844 = vmax.f32 %v824, 0.0
        %v845 = vmax.f32 %v827, 0.0
        %v846 = vmax.f32 %v830, %v834
        %v847 = vmax.f32 %v831, %v835
        %v848 = vmax.f32 %v832, %v836
        %v849 = vmax.f32 %v833, %v837
        %850 = vst [vmem:[#allocation2] sm:$0xff] %v846
        %851 = vst [vmem:[#allocation2 + $0x8] sm:$0xff] %v847
        %852 = vst [vmem:[#allocation2 + $0x10] sm:$0xff] %v848
        %853 = vst [vmem:[#allocation2 + $0x18] sm:$0xff] %v849
        %v854 = vld [vmem:[#allocation2] ss:$2 sm:$0xff]
        %v855 = vld [vmem:[%s643] ss:$2 sm:$0xff]
        %v856 = vld [vmem:[%s645] ss:$2 sm:$0xff]
        %v857 = vld [vmem:[%s647] ss:$2 sm:$0xff]
        %v858 = vmax.f32 %v854, %v856
        %v859 = vmax.f32 %v855, %v857
        %860 = vst [vmem:[#allocation3 + $0x20] sm:$0xff] %v858
        %861 = vst [vmem:[#allocation3 + $0x28] sm:$0xff] %v859
        %v862 = vmax.f32 %v838, %v842
        %v863 = vmax.f32 %v839, %v843
        %v864 = vmax.f32 %v840, %v844
        %v865 = vmax.f32 %v841, %v845
        %866 = vst [vmem:[#allocation2] sm:$0xff] %v862
        %867 = vst [vmem:[#allocation2 + $0x8] sm:$0xff] %v863
        %868 = vst [vmem:[#allocation2 + $0x10] sm:$0xff] %v864
        %869 = vst [vmem:[#allocation2 + $0x18] sm:$0xff] %v865
        %v870 = vld [vmem:[#allocation2] ss:$2 sm:$0xff]
        %v871 = vld [vmem:[%s643] ss:$2 sm:$0xff]
        %v872 = vld [vmem:[%s645] ss:$2 sm:$0xff]
        %v873 = vld [vmem:[%s647] ss:$2 sm:$0xff]
        %v874 = vmax.f32 %v870, %v872
        %v875 = vmax.f32 %v871, %v873
        %876 = vst [vmem:[#allocation3 + $0x30] sm:$0xff] %v874
        %877 = vst [vmem:[#allocation3 + $0x38] sm:$0xff] %v875
        %v878 = vld [vmem:[%s383 + $0x80] sm:$0xf]
        %v879 = vld [vmem:[%s383 + $0x84] sm:$0xf]
        %v880 = vld [vmem:[%s383 + $0x88] sm:$0xf]
        %v881 = vld [vmem:[%s383 + $0x8c] sm:$0xf]
        %v882 = vld [vmem:[%s383 + $0x90] sm:$0xf]
        %v883 = vld [vmem:[%s383 + $0x94] sm:$0xf]
        %v884 = vld [vmem:[%s383 + $0x98] sm:$0xf]
        %v885 = vld [vmem:[%s383 + $0x9c] sm:$0xf]
        %v886 = vld [vmem:[%s383 + $0xa0] sm:$0xf]
        %v887 = vld [vmem:[%s383 + $0xa4] sm:$0xf]
        %v888 = vld [vmem:[%s383 + $0xa8] sm:$0xf]
        %v889 = vld [vmem:[%s383 + $0xac] sm:$0xf]
        %v890 = vld [vmem:[%s383 + $0xb0] sm:$0xf]
        %v891 = vld [vmem:[%s383 + $0xb4] sm:$0xf]
        %v892 = vld [vmem:[%s383 + $0xb8] sm:$0xf]
        %v893 = vld [vmem:[%s383 + $0xbc] sm:$0xf]
        %v910 = vunpack.c.l.b16 %v878
        %v911 = vunpack.c.l.b16 %v879
        %v912 = vunpack.c.l.b16 %v880
        %v913 = vunpack.c.l.b16 %v881
        %v914 = vunpack.c.l.b16 %v882
        %v915 = vunpack.c.l.b16 %v883
        %v916 = vunpack.c.l.b16 %v884
        %v917 = vunpack.c.l.b16 %v885
        %v918 = vunpack.c.l.b16 %v886
        %v919 = vunpack.c.l.b16 %v887
        %v920 = vunpack.c.l.b16 %v888
        %v921 = vunpack.c.l.b16 %v889
        %v922 = vunpack.c.l.b16 %v890
        %v923 = vunpack.c.l.b16 %v891
        %v924 = vunpack.c.l.b16 %v892
        %v925 = vunpack.c.l.b16 %v893
        %v926 = vpack.c.b16 %v911, %v910
        %v927 = vpack.c.b16 %v913, %v912
        %v928 = vpack.c.b16 %v915, %v914
        %v929 = vpack.c.b16 %v917, %v916
        %v930 = vpack.c.b16 %v919, %v918
        %v931 = vpack.c.b16 %v921, %v920
        %v932 = vpack.c.b16 %v923, %v922
        %v933 = vpack.c.b16 %v925, %v924
        %942 = vmatprep.subr.bf16.mxu0 0
        %943 = vmatpush1.bf16.msra.mxu0 %v505
        %944 = vmatprep.subr.bf16.mxu0 0
        %945 = vmatpush1.bf16.msra.mxu0 %v506
        %946 = vmatprep.subr.bf16.mxu0 0
        %947 = vmatpush1.bf16.msra.mxu0 %v507
        %948 = vmatprep.subr.bf16.mxu0 0
        %949 = vmatpush1.bf16.msra.mxu0 %v508
        %950 = vmatprep.subr.bf16.mxu0 0
        %951 = vmatpush1.bf16.msra.mxu0 %v509
        %952 = vmatprep.subr.bf16.mxu0 0
        %953 = vmatpush1.bf16.msra.mxu0 %v510
        %954 = vmatprep.subr.bf16.mxu0 0
        %955 = vmatpush1.bf16.msra.mxu0 %v511
        %956 = vmatprep.subr.bf16.mxu0 0
        %957 = vmatpush1.bf16.msra.mxu0 %v512
        %958 = vmatprep.subr.bf16.mxu0 0
        %959 = vmatpush1.bf16.msra.mxu0 0
        %960 = vmatprep.subr.bf16.mxu0 0
        %961 = vmatpush1.bf16.msra.mxu0 0
        %962 = vmatprep.subr.bf16.mxu0 0
        %963 = vmatpush1.bf16.msra.mxu0 0
        %964 = vmatprep.subr.bf16.mxu0 0
        %965 = vmatpush1.bf16.msra.mxu0 0
        %966 = vmatprep.subr.bf16.mxu0 0
        %967 = vmatpush1.bf16.msra.mxu0 0
        %968 = vmatprep.subr.bf16.mxu0 0
        %969 = vmatpush1.bf16.msra.mxu0 0
        %970 = vmatprep.subr.bf16.mxu0 0
        %971 = vmatpush1.bf16.msra.mxu0 0
        %972 = vmatprep.subr.bf16.mxu0 0
        %973 = vmatpush1.bf16.msra.mxu0 0
        %974 = vmatprep.mubr.bf16.mxu0 0
        %975 = vmatmul.mubr.bf16.gmra.mrb[0].mxu0 %v926
        %v976 = vpop.f32.mrb[0].mxu0
        %v977 = vadd.f32 %v423, %v976
        %v978 = vpop.f32.mrb[0].mxu0
        %v979 = vpop.f32.mrb[0].mxu0
        %v980 = vadd.f32 %v423, %v979
        %v981 = vpop.f32.mrb[0].mxu0
        %982 = vmatprep.mubr.bf16.mxu0 0
        %983 = vmatmul.mubr.bf16.gmra.mrb[0].mxu0 %v927
        %v984 = vpop.f32.mrb[0].mxu0
        %v985 = vadd.f32 %v423, %v984
        %v986 = vpop.f32.mrb[0].mxu0
        %v987 = vpop.f32.mrb[0].mxu0
        %v988 = vadd.f32 %v423, %v987
        %v989 = vpop.f32.mrb[0].mxu0
        %990 = vmatprep.mubr.bf16.mxu0 0
        %991 = vmatmul.mubr.bf16.gmra.mrb[0].mxu0 %v928
        %v992 = vpop.f32.mrb[0].mxu0
        %v993 = vadd.f32 %v423, %v992
        %v994 = vpop.f32.mrb[0].mxu0
        %v995 = vpop.f32.mrb[0].mxu0
        %v996 = vadd.f32 %v423, %v995
        %v997 = vpop.f32.mrb[0].mxu0
        %998 = vmatprep.mubr.bf16.mxu0 0
        %999 = vmatmul.mubr.bf16.gmra.mrb[0].mxu0 %v929
        %v1000 = vpop.f32.mrb[0].mxu0
        %v1001 = vadd.f32 %v423, %v1000
        %v1002 = vpop.f32.mrb[0].mxu0
        %v1003 = vpop.f32.mrb[0].mxu0
        %v1004 = vadd.f32 %v423, %v1003
        %v1005 = vpop.f32.mrb[0].mxu0
        %1006 = vmatprep.mubr.bf16.mxu0 0
        %1007 = vmatmul.mubr.bf16.gmra.mrb[0].mxu0 %v930
        %v1008 = vpop.f32.mrb[0].mxu0
        %v1009 = vadd.f32 %v423, %v1008
        %v1010 = vpop.f32.mrb[0].mxu0
        %v1011 = vpop.f32.mrb[0].mxu0
        %v1012 = vadd.f32 %v423, %v1011
        %v1013 = vpop.f32.mrb[0].mxu0
        %1014 = vmatprep.mubr.bf16.mxu0 0
        %1015 = vmatmul.mubr.bf16.gmra.mrb[0].mxu0 %v931
        %v1016 = vpop.f32.mrb[0].mxu0
        %v1017 = vadd.f32 %v423, %v1016
        %v1018 = vpop.f32.mrb[0].mxu0
        %v1019 = vpop.f32.mrb[0].mxu0
        %v1020 = vadd.f32 %v423, %v1019
        %v1021 = vpop.f32.mrb[0].mxu0
        %1022 = vmatprep.mubr.bf16.mxu0 0
        %1023 = vmatmul.mubr.bf16.gmra.mrb[0].mxu0 %v932
        %v1024 = vpop.f32.mrb[0].mxu0
        %v1025 = vadd.f32 %v423, %v1024
        %v1026 = vpop.f32.mrb[0].mxu0
        %v1027 = vpop.f32.mrb[0].mxu0
        %v1028 = vadd.f32 %v423, %v1027
        %v1029 = vpop.f32.mrb[0].mxu0
        %1030 = vmatprep.mubr.bf16.mxu0 0
        %1031 = vmatmul.mubr.bf16.gmra.mrb[0].mxu0 %v933
        %v1032 = vpop.f32.mrb[0].mxu0
        %v1033 = vadd.f32 %v423, %v1032
        %v1034 = vpop.f32.mrb[0].mxu0
        %v1035 = vpop.f32.mrb[0].mxu0
        %v1036 = vadd.f32 %v423, %v1035
        %v1037 = vpop.f32.mrb[0].mxu0
        %1038 = vdwg.mxu0
        %v1039 = vmax.f32 %v977, 0.0
        %v1040 = vmax.f32 %v980, 0.0
        %v1041 = vmax.f32 %v985, 0.0
        %v1042 = vmax.f32 %v988, 0.0
        %v1043 = vmax.f32 %v993, 0.0
        %v1044 = vmax.f32 %v996, 0.0
        %v1045 = vmax.f32 %v1001, 0.0
        %v1046 = vmax.f32 %v1004, 0.0
        %v1047 = vmax.f32 %v1009, 0.0
        %v1048 = vmax.f32 %v1012, 0.0
        %v1049 = vmax.f32 %v1017, 0.0
        %v1050 = vmax.f32 %v1020, 0.0
        %v1051 = vmax.f32 %v1025, 0.0
        %v1052 = vmax.f32 %v1028, 0.0
        %v1053 = vmax.f32 %v1033, 0.0
        %v1054 = vmax.f32 %v1036, 0.0
        %v1055 = vmax.f32 %v1039, %v1043
        %v1056 = vmax.f32 %v1040, %v1044
        %v1057 = vmax.f32 %v1041, %v1045
        %v1058 = vmax.f32 %v1042, %v1046
        %1059 = vst [vmem:[#allocation2] sm:$0xff] %v1055
        %1060 = vst [vmem:[#allocation2 + $0x8] sm:$0xff] %v1056
        %1061 = vst [vmem:[#allocation2 + $0x10] sm:$0xff] %v1057
        %1062 = vst [vmem:[#allocation2 + $0x18] sm:$0xff] %v1058
        %v1063 = vld [vmem:[#allocation2] ss:$2 sm:$0xff]
        %v1064 = vld [vmem:[%s643] ss:$2 sm:$0xff]
        %v1065 = vld [vmem:[%s645] ss:$2 sm:$0xff]
        %v1066 = vld [vmem:[%s647] ss:$2 sm:$0xff]
        %v1067 = vmax.f32 %v1063, %v1065
        %v1068 = vmax.f32 %v1064, %v1066
        %1069 = vst [vmem:[#allocation3 + $0x40] sm:$0xff] %v1067
        %1070 = vst [vmem:[#allocation3 + $0x48] sm:$0xff] %v1068
        %v1071 = vmax.f32 %v1047, %v1051
        %v1072 = vmax.f32 %v1048, %v1052
        %v1073 = vmax.f32 %v1049, %v1053
        %v1074 = vmax.f32 %v1050, %v1054
        %1075 = vst [vmem:[#allocation2] sm:$0xff] %v1071
        %1076 = vst [vmem:[#allocation2 + $0x8] sm:$0xff] %v1072
        %1077 = vst [vmem:[#allocation2 + $0x10] sm:$0xff] %v1073
        %1078 = vst [vmem:[#allocation2 + $0x18] sm:$0xff] %v1074
        %v1079 = vld [vmem:[#allocation2] ss:$2 sm:$0xff]
        %v1080 = vld [vmem:[%s643] ss:$2 sm:$0xff]
        %v1081 = vld [vmem:[%s645] ss:$2 sm:$0xff]
        %v1082 = vld [vmem:[%s647] ss:$2 sm:$0xff]
        %v1083 = vmax.f32 %v1079, %v1081
        %v1084 = vmax.f32 %v1080, %v1082
        %1085 = vst [vmem:[#allocation3 + $0x50] sm:$0xff] %v1083
        %1086 = vst [vmem:[#allocation3 + $0x58] sm:$0xff] %v1084
        %v1087 = vld [vmem:[%s383 + $0xc0] sm:$0xf]
        %v1088 = vld [vmem:[%s383 + $0xc4] sm:$0xf]
        %v1089 = vld [vmem:[%s383 + $0xc8] sm:$0xf]
        %v1090 = vld [vmem:[%s383 + $0xcc] sm:$0xf]
        %v1091 = vld [vmem:[%s383 + $0xd0] sm:$0xf]
        %v1092 = vld [vmem:[%s383 + $0xd4] sm:$0xf]
        %v1093 = vld [vmem:[%s383 + $0xd8] sm:$0xf]
        %v1094 = vld [vmem:[%s383 + $0xdc] sm:$0xf]
        %v1095 = vld [vmem:[%s383 + $0xe0] sm:$0xf]
        %v1096 = vld [vmem:[%s383 + $0xe4] sm:$0xf]
        %v1097 = vld [vmem:[%s383 + $0xe8] sm:$0xf]
        %v1098 = vld [vmem:[%s383 + $0xec] sm:$0xf]
        %v1099 = vld [vmem:[%s383 + $0xf0] sm:$0xf]
        %v1100 = vld [vmem:[%s383 + $0xf4] sm:$0xf]
        %v1101 = vld [vmem:[%s383 + $0xf8] sm:$0xf]
        %v1102 = vld [vmem:[%s383 + $0xfc] sm:$0xf]
        %v1119 = vunpack.c.l.b16 %v1087
        %v1120 = vunpack.c.l.b16 %v1088
        %v1121 = vunpack.c.l.b16 %v1089
        %v1122 = vunpack.c.l.b16 %v1090
        %v1123 = vunpack.c.l.b16 %v1091
        %v1124 = vunpack.c.l.b16 %v1092
        %v1125 = vunpack.c.l.b16 %v1093
        %v1126 = vunpack.c.l.b16 %v1094
        %v1127 = vunpack.c.l.b16 %v1095
        %v1128 = vunpack.c.l.b16 %v1096
        %v1129 = vunpack.c.l.b16 %v1097
        %v1130 = vunpack.c.l.b16 %v1098
        %v1131 = vunpack.c.l.b16 %v1099
        %v1132 = vunpack.c.l.b16 %v1100
        %v1133 = vunpack.c.l.b16 %v1101
        %v1134 = vunpack.c.l.b16 %v1102
        %v1135 = vpack.c.b16 %v1120, %v1119
        %v1136 = vpack.c.b16 %v1122, %v1121
        %v1137 = vpack.c.b16 %v1124, %v1123
        %v1138 = vpack.c.b16 %v1126, %v1125
        %v1139 = vpack.c.b16 %v1128, %v1127
        %v1140 = vpack.c.b16 %v1130, %v1129
        %v1141 = vpack.c.b16 %v1132, %v1131
        %v1142 = vpack.c.b16 %v1134, %v1133
        %1151 = vmatprep.subr.bf16.mxu0 0
        %1152 = vmatpush1.bf16.msra.mxu0 %v505
        %1153 = vmatprep.subr.bf16.mxu0 0
        %1154 = vmatpush1.bf16.msra.mxu0 %v506
        %1155 = vmatprep.subr.bf16.mxu0 0
        %1156 = vmatpush1.bf16.msra.mxu0 %v507
        %1157 = vmatprep.subr.bf16.mxu0 0
        %1158 = vmatpush1.bf16.msra.mxu0 %v508
        %1159 = vmatprep.subr.bf16.mxu0 0
        %1160 = vmatpush1.bf16.msra.mxu0 %v509
        %1161 = vmatprep.subr.bf16.mxu0 0
        %1162 = vmatpush1.bf16.msra.mxu0 %v510
        %1163 = vmatprep.subr.bf16.mxu0 0
        %1164 = vmatpush1.bf16.msra.mxu0 %v511
        %1165 = vmatprep.subr.bf16.mxu0 0
        %1166 = vmatpush1.bf16.msra.mxu0 %v512
        %1167 = vmatprep.subr.bf16.mxu0 0
        %1168 = vmatpush1.bf16.msra.mxu0 0
        %1169 = vmatprep.subr.bf16.mxu0 0
        %1170 = vmatpush1.bf16.msra.mxu0 0
        %1171 = vmatprep.subr.bf16.mxu0 0
        %1172 = vmatpush1.bf16.msra.mxu0 0
        %1173 = vmatprep.subr.bf16.mxu0 0
        %1174 = vmatpush1.bf16.msra.mxu0 0
        %1175 = vmatprep.subr.bf16.mxu0 0
        %1176 = vmatpush1.bf16.msra.mxu0 0
        %1177 = vmatprep.subr.bf16.mxu0 0
        %1178 = vmatpush1.bf16.msra.mxu0 0
        %1179 = vmatprep.subr.bf16.mxu0 0
        %1180 = vmatpush1.bf16.msra.mxu0 0
        %1181 = vmatprep.subr.bf16.mxu0 0
        %1182 = vmatpush1.bf16.msra.mxu0 0
        %1183 = vmatprep.mubr.bf16.mxu0 0
        %1184 = vmatmul.mubr.bf16.gmra.mrb[0].mxu0 %v1135
        %v1185 = vpop.f32.mrb[0].mxu0
        %v1186 = vadd.f32 %v423, %v1185
        %v1187 = vpop.f32.mrb[0].mxu0
        %v1188 = vpop.f32.mrb[0].mxu0
        %v1189 = vadd.f32 %v423, %v1188
        %v1190 = vpop.f32.mrb[0].mxu0
        %1191 = vmatprep.mubr.bf16.mxu0 0
        %1192 = vmatmul.mubr.bf16.gmra.mrb[0].mxu0 %v1136
        %v1193 = vpop.f32.mrb[0].mxu0
        %v1194 = vadd.f32 %v423, %v1193
        %v1195 = vpop.f32.mrb[0].mxu0
        %v1196 = vpop.f32.mrb[0].mxu0
        %v1197 = vadd.f32 %v423, %v1196
        %v1198 = vpop.f32.mrb[0].mxu0
        %1199 = vmatprep.mubr.bf16.mxu0 0
        %1200 = vmatmul.mubr.bf16.gmra.mrb[0].mxu0 %v1137
        %v1201 = vpop.f32.mrb[0].mxu0
        %v1202 = vadd.f32 %v423, %v1201
        %v1203 = vpop.f32.mrb[0].mxu0
        %v1204 = vpop.f32.mrb[0].mxu0
        %v1205 = vadd.f32 %v423, %v1204
        %v1206 = vpop.f32.mrb[0].mxu0
        %1207 = vmatprep.mubr.bf16.mxu0 0
        %1208 = vmatmul.mubr.bf16.gmra.mrb[0].mxu0 %v1138
        %v1209 = vpop.f32.mrb[0].mxu0
        %v1210 = vadd.f32 %v423, %v1209
        %v1211 = vpop.f32.mrb[0].mxu0
        %v1212 = vpop.f32.mrb[0].mxu0
        %v1213 = vadd.f32 %v423, %v1212
        %v1214 = vpop.f32.mrb[0].mxu0
        %1215 = vmatprep.mubr.bf16.mxu0 0
        %1216 = vmatmul.mubr.bf16.gmra.mrb[0].mxu0 %v1139
        %v1217 = vpop.f32.mrb[0].mxu0
        %v1218 = vadd.f32 %v423, %v1217
        %v1219 = vpop.f32.mrb[0].mxu0
        %v1220 = vpop.f32.mrb[0].mxu0
        %v1221 = vadd.f32 %v423, %v1220
        %v1222 = vpop.f32.mrb[0].mxu0
        %1223 = vmatprep.mubr.bf16.mxu0 0
        %1224 = vmatmul.mubr.bf16.gmra.mrb[0].mxu0 %v1140
        %v1225 = vpop.f32.mrb[0].mxu0
        %v1226 = vadd.f32 %v423, %v1225
        %v1227 = vpop.f32.mrb[0].mxu0
        %v1228 = vpop.f32.mrb[0].mxu0
        %v1229 = vadd.f32 %v423, %v1228
        %v1230 = vpop.f32.mrb[0].mxu0
        %1231 = vmatprep.mubr.bf16.mxu0 0
        %1232 = vmatmul.mubr.bf16.gmra.mrb[0].mxu0 %v1141
        %v1233 = vpop.f32.mrb[0].mxu0
        %v1234 = vadd.f32 %v423, %v1233
        %v1235 = vpop.f32.mrb[0].mxu0
        %v1236 = vpop.f32.mrb[0].mxu0
        %v1237 = vadd.f32 %v423, %v1236
        %v1238 = vpop.f32.mrb[0].mxu0
        %1239 = vmatprep.mubr.bf16.mxu0 0
        %1240 = vmatmul.mubr.bf16.gmra.mrb[0].mxu0 %v1142
        %v1241 = vpop.f32.mrb[0].mxu0
        %v1242 = vadd.f32 %v423, %v1241
        %v1243 = vpop.f32.mrb[0].mxu0
        %v1244 = vpop.f32.mrb[0].mxu0
        %v1245 = vadd.f32 %v423, %v1244
        %v1246 = vpop.f32.mrb[0].mxu0
        %1247 = vdwg.mxu0
        %v1248 = vmax.f32 %v1186, 0.0
        %v1249 = vmax.f32 %v1189, 0.0
        %v1250 = vmax.f32 %v1194, 0.0
        %v1251 = vmax.f32 %v1197, 0.0
        %v1252 = vmax.f32 %v1202, 0.0
        %v1253 = vmax.f32 %v1205, 0.0
        %v1254 = vmax.f32 %v1210, 0.0
        %v1255 = vmax.f32 %v1213, 0.0
        %v1256 = vmax.f32 %v1218, 0.0
        %v1257 = vmax.f32 %v1221, 0.0
        %v1258 = vmax.f32 %v1226, 0.0
        %v1259 = vmax.f32 %v1229, 0.0
        %v1260 = vmax.f32 %v1234, 0.0
        %v1261 = vmax.f32 %v1237, 0.0
        %v1262 = vmax.f32 %v1242, 0.0
        %v1263 = vmax.f32 %v1245, 0.0
        %v1264 = vmax.f32 %v1248, %v1252
        %v1265 = vmax.f32 %v1249, %v1253
        %v1266 = vmax.f32 %v1250, %v1254
        %v1267 = vmax.f32 %v1251, %v1255
        %1268 = vst [vmem:[#allocation2] sm:$0xff] %v1264
        %1269 = vst [vmem:[#allocation2 + $0x8] sm:$0xff] %v1265
        %1270 = vst [vmem:[#allocation2 + $0x10] sm:$0xff] %v1266
        %1271 = vst [vmem:[#allocation2 + $0x18] sm:$0xff] %v1267
        %v1272 = vld [vmem:[#allocation2] ss:$2 sm:$0xff]
        %v1273 = vld [vmem:[%s643] ss:$2 sm:$0xff]
        %v1274 = vld [vmem:[%s645] ss:$2 sm:$0xff]
        %v1275 = vld [vmem:[%s647] ss:$2 sm:$0xff]
        %v1276 = vmax.f32 %v1272, %v1274
        %v1277 = vmax.f32 %v1273, %v1275
        %1278 = vst [vmem:[#allocation3 + $0x60] sm:$0xff] %v1276
        %1279 = vst [vmem:[#allocation3 + $0x68] sm:$0xff] %v1277
        %v1280 = vmax.f32 %v1256, %v1260
        %v1281 = vmax.f32 %v1257, %v1261
        %v1282 = vmax.f32 %v1258, %v1262
        %v1283 = vmax.f32 %v1259, %v1263
        %1284 = vst [vmem:[#allocation2] sm:$0xff] %v1280
        %1285 = vst [vmem:[#allocation2 + $0x8] sm:$0xff] %v1281
        %1286 = vst [vmem:[#allocation2 + $0x10] sm:$0xff] %v1282
        %1287 = vst [vmem:[#allocation2 + $0x18] sm:$0xff] %v1283
        %v1288 = vld [vmem:[#allocation2] ss:$2 sm:$0xff]
        %v1289 = vld [vmem:[%s643] ss:$2 sm:$0xff]
        %v1290 = vld [vmem:[%s645] ss:$2 sm:$0xff]
        %v1291 = vld [vmem:[%s647] ss:$2 sm:$0xff]
        %v1292 = vmax.f32 %v1288, %v1290
        %v1293 = vmax.f32 %v1289, %v1291
        %1294 = vst [vmem:[#allocation3 + $0x70] sm:$0xff] %v1292
        %1295 = vst [vmem:[#allocation3 + $0x78] sm:$0xff] %v1293
        %v1296 = vld [vmem:[%s383 + $0x100] sm:$0xf]
        %v1297 = vld [vmem:[%s383 + $0x104] sm:$0xf]
        %v1298 = vld [vmem:[%s383 + $0x108] sm:$0xf]
        %v1299 = vld [vmem:[%s383 + $0x10c] sm:$0xf]
        %v1300 = vld [vmem:[%s383 + $0x110] sm:$0xf]
        %v1301 = vld [vmem:[%s383 + $0x114] sm:$0xf]
        %v1302 = vld [vmem:[%s383 + $0x118] sm:$0xf]
        %v1303 = vld [vmem:[%s383 + $0x11c] sm:$0xf]
        %v1304 = vld [vmem:[%s383 + $0x120] sm:$0xf]
        %v1305 = vld [vmem:[%s383 + $0x124] sm:$0xf]
        %v1306 = vld [vmem:[%s383 + $0x128] sm:$0xf]
        %v1307 = vld [vmem:[%s383 + $0x12c] sm:$0xf]
        %v1308 = vld [vmem:[%s383 + $0x130] sm:$0xf]
        %v1309 = vld [vmem:[%s383 + $0x134] sm:$0xf]
        %v1310 = vld [vmem:[%s383 + $0x138] sm:$0xf]
        %v1311 = vld [vmem:[%s383 + $0x13c] sm:$0xf]
        %v1328 = vunpack.c.l.b16 %v1296
        %v1329 = vunpack.c.l.b16 %v1297
        %v1330 = vunpack.c.l.b16 %v1298
        %v1331 = vunpack.c.l.b16 %v1299
        %v1332 = vunpack.c.l.b16 %v1300
        %v1333 = vunpack.c.l.b16 %v1301
        %v1334 = vunpack.c.l.b16 %v1302
        %v1335 = vunpack.c.l.b16 %v1303
        %v1336 = vunpack.c.l.b16 %v1304
        %v1337 = vunpack.c.l.b16 %v1305
        %v1338 = vunpack.c.l.b16 %v1306
        %v1339 = vunpack.c.l.b16 %v1307
        %v1340 = vunpack.c.l.b16 %v1308
        %v1341 = vunpack.c.l.b16 %v1309
        %v1342 = vunpack.c.l.b16 %v1310
        %v1343 = vunpack.c.l.b16 %v1311
        %v1344 = vpack.c.b16 %v1329, %v1328
        %v1345 = vpack.c.b16 %v1331, %v1330
        %v1346 = vpack.c.b16 %v1333, %v1332
        %v1347 = vpack.c.b16 %v1335, %v1334
        %v1348 = vpack.c.b16 %v1337, %v1336
        %v1349 = vpack.c.b16 %v1339, %v1338
        %v1350 = vpack.c.b16 %v1341, %v1340
        %v1351 = vpack.c.b16 %v1343, %v1342
        %1360 = vmatprep.subr.bf16.mxu0 0
        %1361 = vmatpush1.bf16.msra.mxu0 %v505
        %1362 = vmatprep.subr.bf16.mxu0 0
        %1363 = vmatpush1.bf16.msra.mxu0 %v506
        %1364 = vmatprep.subr.bf16.mxu0 0
        %1365 = vmatpush1.bf16.msra.mxu0 %v507
        %1366 = vmatprep.subr.bf16.mxu0 0
        %1367 = vmatpush1.bf16.msra.mxu0 %v508
        %1368 = vmatprep.subr.bf16.mxu0 0
        %1369 = vmatpush1.bf16.msra.mxu0 %v509
        %1370 = vmatprep.subr.bf16.mxu0 0
        %1371 = vmatpush1.bf16.msra.mxu0 %v510
        %1372 = vmatprep.subr.bf16.mxu0 0
        %1373 = vmatpush1.bf16.msra.mxu0 %v511
        %1374 = vmatprep.subr.bf16.mxu0 0
        %1375 = vmatpush1.bf16.msra.mxu0 %v512
        %1376 = vmatprep.subr.bf16.mxu0 0
        %1377 = vmatpush1.bf16.msra.mxu0 0
        %1378 = vmatprep.subr.bf16.mxu0 0
        %1379 = vmatpush1.bf16.msra.mxu0 0
        %1380 = vmatprep.subr.bf16.mxu0 0
        %1381 = vmatpush1.bf16.msra.mxu0 0
        %1382 = vmatprep.subr.bf16.mxu0 0
        %1383 = vmatpush1.bf16.msra.mxu0 0
        %1384 = vmatprep.subr.bf16.mxu0 0
        %1385 = vmatpush1.bf16.msra.mxu0 0
        %1386 = vmatprep.subr.bf16.mxu0 0
        %1387 = vmatpush1.bf16.msra.mxu0 0
        %1388 = vmatprep.subr.bf16.mxu0 0
        %1389 = vmatpush1.bf16.msra.mxu0 0
        %1390 = vmatprep.subr.bf16.mxu0 0
        %1391 = vmatpush1.bf16.msra.mxu0 0
        %1392 = vmatprep.mubr.bf16.mxu0 0
        %1393 = vmatmul.mubr.bf16.gmra.mrb[0].mxu0 %v1344
        %v1394 = vpop.f32.mrb[0].mxu0
        %v1395 = vadd.f32 %v423, %v1394
        %v1396 = vpop.f32.mrb[0].mxu0
        %v1397 = vpop.f32.mrb[0].mxu0
        %v1398 = vadd.f32 %v423, %v1397
        %v1399 = vpop.f32.mrb[0].mxu0
        %1400 = vmatprep.mubr.bf16.mxu0 0
        %1401 = vmatmul.mubr.bf16.gmra.mrb[0].mxu0 %v1345
        %v1402 = vpop.f32.mrb[0].mxu0
        %v1403 = vadd.f32 %v423, %v1402
        %v1404 = vpop.f32.mrb[0].mxu0
        %v1405 = vpop.f32.mrb[0].mxu0
        %v1406 = vadd.f32 %v423, %v1405
        %v1407 = vpop.f32.mrb[0].mxu0
        %1408 = vmatprep.mubr.bf16.mxu0 0
        %1409 = vmatmul.mubr.bf16.gmra.mrb[0].mxu0 %v1346
        %v1410 = vpop.f32.mrb[0].mxu0
        %v1411 = vadd.f32 %v423, %v1410
        %v1412 = vpop.f32.mrb[0].mxu0
        %v1413 = vpop.f32.mrb[0].mxu0
        %v1414 = vadd.f32 %v423, %v1413
        %v1415 = vpop.f32.mrb[0].mxu0
        %1416 = vmatprep.mubr.bf16.mxu0 0
        %1417 = vmatmul.mubr.bf16.gmra.mrb[0].mxu0 %v1347
        %v1418 = vpop.f32.mrb[0].mxu0
        %v1419 = vadd.f32 %v423, %v1418
        %v1420 = vpop.f32.mrb[0].mxu0
        %v1421 = vpop.f32.mrb[0].mxu0
        %v1422 = vadd.f32 %v423, %v1421
        %v1423 = vpop.f32.mrb[0].mxu0
        %1424 = vmatprep.mubr.bf16.mxu0 0
        %1425 = vmatmul.mubr.bf16.gmra.mrb[0].mxu0 %v1348
        %v1426 = vpop.f32.mrb[0].mxu0
        %v1427 = vadd.f32 %v423, %v1426
        %v1428 = vpop.f32.mrb[0].mxu0
        %v1429 = vpop.f32.mrb[0].mxu0
        %v1430 = vadd.f32 %v423, %v1429
        %v1431 = vpop.f32.mrb[0].mxu0
        %1432 = vmatprep.mubr.bf16.mxu0 0
        %1433 = vmatmul.mubr.bf16.gmra.mrb[0].mxu0 %v1349
        %v1434 = vpop.f32.mrb[0].mxu0
        %v1435 = vadd.f32 %v423, %v1434
        %v1436 = vpop.f32.mrb[0].mxu0
        %v1437 = vpop.f32.mrb[0].mxu0
        %v1438 = vadd.f32 %v423, %v1437
        %v1439 = vpop.f32.mrb[0].mxu0
        %1440 = vmatprep.mubr.bf16.mxu0 0
        %1441 = vmatmul.mubr.bf16.gmra.mrb[0].mxu0 %v1350
        %v1442 = vpop.f32.mrb[0].mxu0
        %v1443 = vadd.f32 %v423, %v1442
        %v1444 = vpop.f32.mrb[0].mxu0
        %v1445 = vpop.f32.mrb[0].mxu0
        %v1446 = vadd.f32 %v423, %v1445
        %v1447 = vpop.f32.mrb[0].mxu0
        %1448 = vmatprep.mubr.bf16.mxu0 0
        %1449 = vmatmul.mubr.bf16.gmra.mrb[0].mxu0 %v1351
        %v1450 = vpop.f32.mrb[0].mxu0
        %v1451 = vadd.f32 %v423, %v1450
        %v1452 = vpop.f32.mrb[0].mxu0
        %v1453 = vpop.f32.mrb[0].mxu0
        %v1454 = vadd.f32 %v423, %v1453
        %v1455 = vpop.f32.mrb[0].mxu0
        %1456 = vdwg.mxu0
        %v1457 = vmax.f32 %v1395, 0.0
        %v1458 = vmax.f32 %v1398, 0.0
        %v1459 = vmax.f32 %v1403, 0.0
        %v1460 = vmax.f32 %v1406, 0.0
        %v1461 = vmax.f32 %v1411, 0.0
        %v1462 = vmax.f32 %v1414, 0.0
        %v1463 = vmax.f32 %v1419, 0.0
        %v1464 = vmax.f32 %v1422, 0.0
        %v1465 = vmax.f32 %v1427, 0.0
        %v1466 = vmax.f32 %v1430, 0.0
        %v1467 = vmax.f32 %v1435, 0.0
        %v1468 = vmax.f32 %v1438, 0.0
        %v1469 = vmax.f32 %v1443, 0.0
        %v1470 = vmax.f32 %v1446, 0.0
        %v1471 = vmax.f32 %v1451, 0.0
        %v1472 = vmax.f32 %v1454, 0.0
        %v1473 = vmax.f32 %v1457, %v1461
        %v1474 = vmax.f32 %v1458, %v1462
        %v1475 = vmax.f32 %v1459, %v1463
        %v1476 = vmax.f32 %v1460, %v1464
        %1477 = vst [vmem:[#allocation2] sm:$0xff] %v1473
        %1478 = vst [vmem:[#allocation2 + $0x8] sm:$0xff] %v1474
        %1479 = vst [vmem:[#allocation2 + $0x10] sm:$0xff] %v1475
        %1480 = vst [vmem:[#allocation2 + $0x18] sm:$0xff] %v1476
        %v1481 = vld [vmem:[#allocation2] ss:$2 sm:$0xff]
        %v1482 = vld [vmem:[%s643] ss:$2 sm:$0xff]
        %v1483 = vld [vmem:[%s645] ss:$2 sm:$0xff]
        %v1484 = vld [vmem:[%s647] ss:$2 sm:$0xff]
        %v1485 = vmax.f32 %v1481, %v1483
        %v1486 = vmax.f32 %v1482, %v1484
        %1487 = vst [vmem:[#allocation3 + $0x80] sm:$0xff] %v1485
        %1488 = vst [vmem:[#allocation3 + $0x88] sm:$0xff] %v1486
        %v1489 = vmax.f32 %v1465, %v1469
        %v1490 = vmax.f32 %v1466, %v1470
        %v1491 = vmax.f32 %v1467, %v1471
        %v1492 = vmax.f32 %v1468, %v1472
        %1493 = vst [vmem:[#allocation2] sm:$0xff] %v1489
        %1494 = vst [vmem:[#allocation2 + $0x8] sm:$0xff] %v1490
        %1495 = vst [vmem:[#allocation2 + $0x10] sm:$0xff] %v1491
        %1496 = vst [vmem:[#allocation2 + $0x18] sm:$0xff] %v1492
        %v1497 = vld [vmem:[#allocation2] ss:$2 sm:$0xff]
        %v1498 = vld [vmem:[%s643] ss:$2 sm:$0xff]
        %v1499 = vld [vmem:[%s645] ss:$2 sm:$0xff]
        %v1500 = vld [vmem:[%s647] ss:$2 sm:$0xff]
        %v1501 = vmax.f32 %v1497, %v1499
        %v1502 = vmax.f32 %v1498, %v1500
        %1503 = vst [vmem:[#allocation3 + $0x90] sm:$0xff] %v1501
        %1504 = vst [vmem:[#allocation3 + $0x98] sm:$0xff] %v1502
        %v1505 = vld [vmem:[%s383 + $0x140] sm:$0xf]
        %v1506 = vld [vmem:[%s383 + $0x144] sm:$0xf]
        %v1507 = vld [vmem:[%s383 + $0x148] sm:$0xf]
        %v1508 = vld [vmem:[%s383 + $0x14c] sm:$0xf]
        %v1509 = vld [vmem:[%s383 + $0x150] sm:$0xf]
        %v1510 = vld [vmem:[%s383 + $0x154] sm:$0xf]
        %v1511 = vld [vmem:[%s383 + $0x158] sm:$0xf]
        %v1512 = vld [vmem:[%s383 + $0x15c] sm:$0xf]
        %v1513 = vld [vmem:[%s383 + $0x160] sm:$0xf]
        %v1514 = vld [vmem:[%s383 + $0x164] sm:$0xf]
        %v1515 = vld [vmem:[%s383 + $0x168] sm:$0xf]
        %v1516 = vld [vmem:[%s383 + $0x16c] sm:$0xf]
        %v1517 = vld [vmem:[%s383 + $0x170] sm:$0xf]
        %v1518 = vld [vmem:[%s383 + $0x174] sm:$0xf]
        %v1519 = vld [vmem:[%s383 + $0x178] sm:$0xf]
        %v1520 = vld [vmem:[%s383 + $0x17c] sm:$0xf]
        %v1537 = vunpack.c.l.b16 %v1505
        %v1538 = vunpack.c.l.b16 %v1506
        %v1539 = vunpack.c.l.b16 %v1507
        %v1540 = vunpack.c.l.b16 %v1508
        %v1541 = vunpack.c.l.b16 %v1509
        %v1542 = vunpack.c.l.b16 %v1510
        %v1543 = vunpack.c.l.b16 %v1511
        %v1544 = vunpack.c.l.b16 %v1512
        %v1545 = vunpack.c.l.b16 %v1513
        %v1546 = vunpack.c.l.b16 %v1514
        %v1547 = vunpack.c.l.b16 %v1515
        %v1548 = vunpack.c.l.b16 %v1516
        %v1549 = vunpack.c.l.b16 %v1517
        %v1550 = vunpack.c.l.b16 %v1518
        %v1551 = vunpack.c.l.b16 %v1519
        %v1552 = vunpack.c.l.b16 %v1520
        %v1553 = vpack.c.b16 %v1538, %v1537
        %v1554 = vpack.c.b16 %v1540, %v1539
        %v1555 = vpack.c.b16 %v1542, %v1541
        %v1556 = vpack.c.b16 %v1544, %v1543
        %v1557 = vpack.c.b16 %v1546, %v1545
        %v1558 = vpack.c.b16 %v1548, %v1547
        %v1559 = vpack.c.b16 %v1550, %v1549
        %v1560 = vpack.c.b16 %v1552, %v1551
        %1569 = vmatprep.subr.bf16.mxu0 0
        %1570 = vmatpush1.bf16.msra.mxu0 %v505
        %1571 = vmatprep.subr.bf16.mxu0 0
        %1572 = vmatpush1.bf16.msra.mxu0 %v506
        %1573 = vmatprep.subr.bf16.mxu0 0
        %1574 = vmatpush1.bf16.msra.mxu0 %v507
        %1575 = vmatprep.subr.bf16.mxu0 0
        %1576 = vmatpush1.bf16.msra.mxu0 %v508
        %1577 = vmatprep.subr.bf16.mxu0 0
        %1578 = vmatpush1.bf16.msra.mxu0 %v509
        %1579 = vmatprep.subr.bf16.mxu0 0
        %1580 = vmatpush1.bf16.msra.mxu0 %v510
        %1581 = vmatprep.subr.bf16.mxu0 0
        %1582 = vmatpush1.bf16.msra.mxu0 %v511
        %1583 = vmatprep.subr.bf16.mxu0 0
        %1584 = vmatpush1.bf16.msra.mxu0 %v512
        %1585 = vmatprep.subr.bf16.mxu0 0
        %1586 = vmatpush1.bf16.msra.mxu0 0
        %1587 = vmatprep.subr.bf16.mxu0 0
        %1588 = vmatpush1.bf16.msra.mxu0 0
        %1589 = vmatprep.subr.bf16.mxu0 0
        %1590 = vmatpush1.bf16.msra.mxu0 0
        %1591 = vmatprep.subr.bf16.mxu0 0
        %1592 = vmatpush1.bf16.msra.mxu0 0
        %1593 = vmatprep.subr.bf16.mxu0 0
        %1594 = vmatpush1.bf16.msra.mxu0 0
        %1595 = vmatprep.subr.bf16.mxu0 0
        %1596 = vmatpush1.bf16.msra.mxu0 0
        %1597 = vmatprep.subr.bf16.mxu0 0
        %1598 = vmatpush1.bf16.msra.mxu0 0
        %1599 = vmatprep.subr.bf16.mxu0 0
        %1600 = vmatpush1.bf16.msra.mxu0 0
        %1601 = vmatprep.mubr.bf16.mxu0 0
        %1602 = vmatmul.mubr.bf16.gmra.mrb[0].mxu0 %v1553
        %v1603 = vpop.f32.mrb[0].mxu0
        %v1604 = vadd.f32 %v423, %v1603
        %v1605 = vpop.f32.mrb[0].mxu0
        %v1606 = vpop.f32.mrb[0].mxu0
        %v1607 = vadd.f32 %v423, %v1606
        %v1608 = vpop.f32.mrb[0].mxu0
        %1609 = vmatprep.mubr.bf16.mxu0 0
        %1610 = vmatmul.mubr.bf16.gmra.mrb[0].mxu0 %v1554
        %v1611 = vpop.f32.mrb[0].mxu0
        %v1612 = vadd.f32 %v423, %v1611
        %v1613 = vpop.f32.mrb[0].mxu0
        %v1614 = vpop.f32.mrb[0].mxu0
        %v1615 = vadd.f32 %v423, %v1614
        %v1616 = vpop.f32.mrb[0].mxu0
        %1617 = vmatprep.mubr.bf16.mxu0 0
        %1618 = vmatmul.mubr.bf16.gmra.mrb[0].mxu0 %v1555
        %v1619 = vpop.f32.mrb[0].mxu0
        %v1620 = vadd.f32 %v423, %v1619
        %v1621 = vpop.f32.mrb[0].mxu0
        %v1622 = vpop.f32.mrb[0].mxu0
        %v1623 = vadd.f32 %v423, %v1622
        %v1624 = vpop.f32.mrb[0].mxu0
        %1625 = vmatprep.mubr.bf16.mxu0 0
        %1626 = vmatmul.mubr.bf16.gmra.mrb[0].mxu0 %v1556
        %v1627 = vpop.f32.mrb[0].mxu0
        %v1628 = vadd.f32 %v423, %v1627
        %v1629 = vpop.f32.mrb[0].mxu0
        %v1630 = vpop.f32.mrb[0].mxu0
        %v1631 = vadd.f32 %v423, %v1630
        %v1632 = vpop.f32.mrb[0].mxu0
        %1633 = vmatprep.mubr.bf16.mxu0 0
        %1634 = vmatmul.mubr.bf16.gmra.mrb[0].mxu0 %v1557
        %v1635 = vpop.f32.mrb[0].mxu0
        %v1636 = vadd.f32 %v423, %v1635
        %v1637 = vpop.f32.mrb[0].mxu0
        %v1638 = vpop.f32.mrb[0].mxu0
        %v1639 = vadd.f32 %v423, %v1638
        %v1640 = vpop.f32.mrb[0].mxu0
        %1641 = vmatprep.mubr.bf16.mxu0 0
        %1642 = vmatmul.mubr.bf16.gmra.mrb[0].mxu0 %v1558
        %v1643 = vpop.f32.mrb[0].mxu0
        %v1644 = vadd.f32 %v423, %v1643
        %v1645 = vpop.f32.mrb[0].mxu0
        %v1646 = vpop.f32.mrb[0].mxu0
        %v1647 = vadd.f32 %v423, %v1646
        %v1648 = vpop.f32.mrb[0].mxu0
        %1649 = vmatprep.mubr.bf16.mxu0 0
        %1650 = vmatmul.mubr.bf16.gmra.mrb[0].mxu0 %v1559
        %v1651 = vpop.f32.mrb[0].mxu0
        %v1652 = vadd.f32 %v423, %v1651
        %v1653 = vpop.f32.mrb[0].mxu0
        %v1654 = vpop.f32.mrb[0].mxu0
        %v1655 = vadd.f32 %v423, %v1654
        %v1656 = vpop.f32.mrb[0].mxu0
        %1657 = vmatprep.mubr.bf16.mxu0 0
        %1658 = vmatmul.mubr.bf16.gmra.mrb[0].mxu0 %v1560
        %v1659 = vpop.f32.mrb[0].mxu0
        %v1660 = vadd.f32 %v423, %v1659
        %v1661 = vpop.f32.mrb[0].mxu0
        %v1662 = vpop.f32.mrb[0].mxu0
        %v1663 = vadd.f32 %v423, %v1662
        %v1664 = vpop.f32.mrb[0].mxu0
        %1665 = vdwg.mxu0
        %v1666 = vmax.f32 %v1604, 0.0
        %v1667 = vmax.f32 %v1607, 0.0
        %v1668 = vmax.f32 %v1612, 0.0
        %v1669 = vmax.f32 %v1615, 0.0
        %v1670 = vmax.f32 %v1620, 0.0
        %v1671 = vmax.f32 %v1623, 0.0
        %v1672 = vmax.f32 %v1628, 0.0
        %v1673 = vmax.f32 %v1631, 0.0
        %v1674 = vmax.f32 %v1636, 0.0
        %v1675 = vmax.f32 %v1639, 0.0
        %v1676 = vmax.f32 %v1644, 0.0
        %v1677 = vmax.f32 %v1647, 0.0
        %v1678 = vmax.f32 %v1652, 0.0
        %v1679 = vmax.f32 %v1655, 0.0
        %v1680 = vmax.f32 %v1660, 0.0
        %v1681 = vmax.f32 %v1663, 0.0
        %v1682 = vmax.f32 %v1666, %v1670
        %v1683 = vmax.f32 %v1667, %v1671
        %v1684 = vmax.f32 %v1668, %v1672
        %v1685 = vmax.f32 %v1669, %v1673
        %1686 = vst [vmem:[#allocation2] sm:$0xff] %v1682
        %1687 = vst [vmem:[#allocation2 + $0x8] sm:$0xff] %v1683
        %1688 = vst [vmem:[#allocation2 + $0x10] sm:$0xff] %v1684
        %1689 = vst [vmem:[#allocation2 + $0x18] sm:$0xff] %v1685
        %v1690 = vld [vmem:[#allocation2] ss:$2 sm:$0xff]
        %v1691 = vld [vmem:[%s643] ss:$2 sm:$0xff]
        %v1692 = vld [vmem:[%s645] ss:$2 sm:$0xff]
        %v1693 = vld [vmem:[%s647] ss:$2 sm:$0xff]
        %v1694 = vmax.f32 %v1690, %v1692
        %v1695 = vmax.f32 %v1691, %v1693
        %1696 = vst [vmem:[#allocation3 + $0xa0] sm:$0xff] %v1694
        %1697 = vst [vmem:[#allocation3 + $0xa8] sm:$0xff] %v1695
        %v1698 = vmax.f32 %v1674, %v1678
        %v1699 = vmax.f32 %v1675, %v1679
        %v1700 = vmax.f32 %v1676, %v1680
        %v1701 = vmax.f32 %v1677, %v1681
        %1702 = vst [vmem:[#allocation2] sm:$0xff] %v1698
        %1703 = vst [vmem:[#allocation2 + $0x8] sm:$0xff] %v1699
        %1704 = vst [vmem:[#allocation2 + $0x10] sm:$0xff] %v1700
        %1705 = vst [vmem:[#allocation2 + $0x18] sm:$0xff] %v1701
        %v1706 = vld [vmem:[#allocation2] ss:$2 sm:$0xff]
        %v1707 = vld [vmem:[%s643] ss:$2 sm:$0xff]
        %v1708 = vld [vmem:[%s645] ss:$2 sm:$0xff]
        %v1709 = vld [vmem:[%s647] ss:$2 sm:$0xff]
        %v1710 = vmax.f32 %v1706, %v1708
        %v1711 = vmax.f32 %v1707, %v1709
        %1712 = vst [vmem:[#allocation3 + $0xb0] sm:$0xff] %v1710
        %1713 = vst [vmem:[#allocation3 + $0xb8] sm:$0xff] %v1711
        %v1714 = vld [vmem:[%s383 + $0x180] sm:$0xf]
        %v1715 = vld [vmem:[%s383 + $0x184] sm:$0xf]
        %v1716 = vld [vmem:[%s383 + $0x188] sm:$0xf]
        %v1717 = vld [vmem:[%s383 + $0x18c] sm:$0xf]
        %v1718 = vld [vmem:[%s383 + $0x190] sm:$0xf]
        %v1719 = vld [vmem:[%s383 + $0x194] sm:$0xf]
        %v1720 = vld [vmem:[%s383 + $0x198] sm:$0xf]
        %v1721 = vld [vmem:[%s383 + $0x19c] sm:$0xf]
        %v1722 = vld [vmem:[%s383 + $0x1a0] sm:$0xf]
        %v1723 = vld [vmem:[%s383 + $0x1a4] sm:$0xf]
        %v1724 = vld [vmem:[%s383 + $0x1a8] sm:$0xf]
        %v1725 = vld [vmem:[%s383 + $0x1ac] sm:$0xf]
        %v1726 = vld [vmem:[%s383 + $0x1b0] sm:$0xf]
        %v1727 = vld [vmem:[%s383 + $0x1b4] sm:$0xf]
        %v1728 = vld [vmem:[%s383 + $0x1b8] sm:$0xf]
        %v1729 = vld [vmem:[%s383 + $0x1bc] sm:$0xf]
        %v1746 = vunpack.c.l.b16 %v1714
        %v1747 = vunpack.c.l.b16 %v1715
        %v1748 = vunpack.c.l.b16 %v1716
        %v1749 = vunpack.c.l.b16 %v1717
        %v1750 = vunpack.c.l.b16 %v1718
        %v1751 = vunpack.c.l.b16 %v1719
        %v1752 = vunpack.c.l.b16 %v1720
        %v1753 = vunpack.c.l.b16 %v1721
        %v1754 = vunpack.c.l.b16 %v1722
        %v1755 = vunpack.c.l.b16 %v1723
        %v1756 = vunpack.c.l.b16 %v1724
        %v1757 = vunpack.c.l.b16 %v1725
        %v1758 = vunpack.c.l.b16 %v1726
        %v1759 = vunpack.c.l.b16 %v1727
        %v1760 = vunpack.c.l.b16 %v1728
        %v1761 = vunpack.c.l.b16 %v1729
        %v1762 = vpack.c.b16 %v1747, %v1746
        %v1763 = vpack.c.b16 %v1749, %v1748
        %v1764 = vpack.c.b16 %v1751, %v1750
        %v1765 = vpack.c.b16 %v1753, %v1752
        %v1766 = vpack.c.b16 %v1755, %v1754
        %v1767 = vpack.c.b16 %v1757, %v1756
        %v1768 = vpack.c.b16 %v1759, %v1758
        %v1769 = vpack.c.b16 %v1761, %v1760
        %1778 = vmatprep.subr.bf16.mxu0 0
        %1779 = vmatpush1.bf16.msra.mxu0 %v505
        %1780 = vmatprep.subr.bf16.mxu0 0
        %1781 = vmatpush1.bf16.msra.mxu0 %v506
        %1782 = vmatprep.subr.bf16.mxu0 0
        %1783 = vmatpush1.bf16.msra.mxu0 %v507
        %1784 = vmatprep.subr.bf16.mxu0 0
        %1785 = vmatpush1.bf16.msra.mxu0 %v508
        %1786 = vmatprep.subr.bf16.mxu0 0
        %1787 = vmatpush1.bf16.msra.mxu0 %v509
        %1788 = vmatprep.subr.bf16.mxu0 0
        %1789 = vmatpush1.bf16.msra.mxu0 %v510
        %1790 = vmatprep.subr.bf16.mxu0 0
        %1791 = vmatpush1.bf16.msra.mxu0 %v511
        %1792 = vmatprep.subr.bf16.mxu0 0
        %1793 = vmatpush1.bf16.msra.mxu0 %v512
        %1794 = vmatprep.subr.bf16.mxu0 0
        %1795 = vmatpush1.bf16.msra.mxu0 0
        %1796 = vmatprep.subr.bf16.mxu0 0
        %1797 = vmatpush1.bf16.msra.mxu0 0
        %1798 = vmatprep.subr.bf16.mxu0 0
        %1799 = vmatpush1.bf16.msra.mxu0 0
        %1800 = vmatprep.subr.bf16.mxu0 0
        %1801 = vmatpush1.bf16.msra.mxu0 0
        %1802 = vmatprep.subr.bf16.mxu0 0
        %1803 = vmatpush1.bf16.msra.mxu0 0
        %1804 = vmatprep.subr.bf16.mxu0 0
        %1805 = vmatpush1.bf16.msra.mxu0 0
        %1806 = vmatprep.subr.bf16.mxu0 0
        %1807 = vmatpush1.bf16.msra.mxu0 0
        %1808 = vmatprep.subr.bf16.mxu0 0
        %1809 = vmatpush1.bf16.msra.mxu0 0
        %1810 = vmatprep.mubr.bf16.mxu0 0
        %1811 = vmatmul.mubr.bf16.gmra.mrb[0].mxu0 %v1762
        %v1812 = vpop.f32.mrb[0].mxu0
        %v1813 = vadd.f32 %v423, %v1812
        %v1814 = vpop.f32.mrb[0].mxu0
        %v1815 = vpop.f32.mrb[0].mxu0
        %v1816 = vadd.f32 %v423, %v1815
        %v1817 = vpop.f32.mrb[0].mxu0
        %1818 = vmatprep.mubr.bf16.mxu0 0
        %1819 = vmatmul.mubr.bf16.gmra.mrb[0].mxu0 %v1763
        %v1820 = vpop.f32.mrb[0].mxu0
        %v1821 = vadd.f32 %v423, %v1820
        %v1822 = vpop.f32.mrb[0].mxu0
        %v1823 = vpop.f32.mrb[0].mxu0
        %v1824 = vadd.f32 %v423, %v1823
        %v1825 = vpop.f32.mrb[0].mxu0
        %1826 = vmatprep.mubr.bf16.mxu0 0
        %1827 = vmatmul.mubr.bf16.gmra.mrb[0].mxu0 %v1764
        %v1828 = vpop.f32.mrb[0].mxu0
        %v1829 = vadd.f32 %v423, %v1828
        %v1830 = vpop.f32.mrb[0].mxu0
        %v1831 = vpop.f32.mrb[0].mxu0
        %v1832 = vadd.f32 %v423, %v1831
        %v1833 = vpop.f32.mrb[0].mxu0
        %1834 = vmatprep.mubr.bf16.mxu0 0
        %1835 = vmatmul.mubr.bf16.gmra.mrb[0].mxu0 %v1765
        %v1836 = vpop.f32.mrb[0].mxu0
        %v1837 = vadd.f32 %v423, %v1836
        %v1838 = vpop.f32.mrb[0].mxu0
        %v1839 = vpop.f32.mrb[0].mxu0
        %v1840 = vadd.f32 %v423, %v1839
        %v1841 = vpop.f32.mrb[0].mxu0
        %1842 = vmatprep.mubr.bf16.mxu0 0
        %1843 = vmatmul.mubr.bf16.gmra.mrb[0].mxu0 %v1766
        %v1844 = vpop.f32.mrb[0].mxu0
        %v1845 = vadd.f32 %v423, %v1844
        %v1846 = vpop.f32.mrb[0].mxu0
        %v1847 = vpop.f32.mrb[0].mxu0
        %v1848 = vadd.f32 %v423, %v1847
        %v1849 = vpop.f32.mrb[0].mxu0
        %1850 = vmatprep.mubr.bf16.mxu0 0
        %1851 = vmatmul.mubr.bf16.gmra.mrb[0].mxu0 %v1767
        %v1852 = vpop.f32.mrb[0].mxu0
        %v1853 = vadd.f32 %v423, %v1852
        %v1854 = vpop.f32.mrb[0].mxu0
        %v1855 = vpop.f32.mrb[0].mxu0
        %v1856 = vadd.f32 %v423, %v1855
        %v1857 = vpop.f32.mrb[0].mxu0
        %1858 = vmatprep.mubr.bf16.mxu0 0
        %1859 = vmatmul.mubr.bf16.gmra.mrb[0].mxu0 %v1768
        %v1860 = vpop.f32.mrb[0].mxu0
        %v1861 = vadd.f32 %v423, %v1860
        %v1862 = vpop.f32.mrb[0].mxu0
        %v1863 = vpop.f32.mrb[0].mxu0
        %v1864 = vadd.f32 %v423, %v1863
        %v1865 = vpop.f32.mrb[0].mxu0
        %1866 = vmatprep.mubr.bf16.mxu0 0
        %1867 = vmatmul.mubr.bf16.gmra.mrb[0].mxu0 %v1769
        %v1868 = vpop.f32.mrb[0].mxu0
        %v1869 = vadd.f32 %v423, %v1868
        %v1870 = vpop.f32.mrb[0].mxu0
        %v1871 = vpop.f32.mrb[0].mxu0
        %v1872 = vadd.f32 %v423, %v1871
        %v1873 = vpop.f32.mrb[0].mxu0
        %1874 = vdwg.mxu0
        %v1875 = vmax.f32 %v1813, 0.0
        %v1876 = vmax.f32 %v1816, 0.0
        %v1877 = vmax.f32 %v1821, 0.0
        %v1878 = vmax.f32 %v1824, 0.0
        %v1879 = vmax.f32 %v1829, 0.0
        %v1880 = vmax.f32 %v1832, 0.0
        %v1881 = vmax.f32 %v1837, 0.0
        %v1882 = vmax.f32 %v1840, 0.0
        %v1883 = vmax.f32 %v1845, 0.0
        %v1884 = vmax.f32 %v1848, 0.0
        %v1885 = vmax.f32 %v1853, 0.0
        %v1886 = vmax.f32 %v1856, 0.0
        %v1887 = vmax.f32 %v1861, 0.0
        %v1888 = vmax.f32 %v1864, 0.0
        %v1889 = vmax.f32 %v1869, 0.0
        %v1890 = vmax.f32 %v1872, 0.0
        %v1891 = vmax.f32 %v1875, %v1879
        %v1892 = vmax.f32 %v1876, %v1880
        %v1893 = vmax.f32 %v1877, %v1881
        %v1894 = vmax.f32 %v1878, %v1882
        %1895 = vst [vmem:[#allocation2] sm:$0xff] %v1891
        %1896 = vst [vmem:[#allocation2 + $0x8] sm:$0xff] %v1892
        %1897 = vst [vmem:[#allocation2 + $0x10] sm:$0xff] %v1893
        %1898 = vst [vmem:[#allocation2 + $0x18] sm:$0xff] %v1894
        %v1899 = vld [vmem:[#allocation2] ss:$2 sm:$0xff]
        %v1900 = vld [vmem:[%s643] ss:$2 sm:$0xff]
        %v1901 = vld [vmem:[%s645] ss:$2 sm:$0xff]
        %v1902 = vld [vmem:[%s647] ss:$2 sm:$0xff]
        %v1903 = vmax.f32 %v1899, %v1901
        %v1904 = vmax.f32 %v1900, %v1902
        %1905 = vst [vmem:[#allocation3 + $0xc0] sm:$0xff] %v1903
        %1906 = vst [vmem:[#allocation3 + $0xc8] sm:$0xff] %v1904
        %v1907 = vmax.f32 %v1883, %v1887
        %v1908 = vmax.f32 %v1884, %v1888
        %v1909 = vmax.f32 %v1885, %v1889
        %v1910 = vmax.f32 %v1886, %v1890
        %1911 = vst [vmem:[#allocation2] sm:$0xff] %v1907
        %1912 = vst [vmem:[#allocation2 + $0x8] sm:$0xff] %v1908
        %1913 = vst [vmem:[#allocation2 + $0x10] sm:$0xff] %v1909
        %1914 = vst [vmem:[#allocation2 + $0x18] sm:$0xff] %v1910
        %v1915 = vld [vmem:[#allocation2] ss:$2 sm:$0xff]
        %v1916 = vld [vmem:[%s643] ss:$2 sm:$0xff]
        %v1917 = vld [vmem:[%s645] ss:$2 sm:$0xff]
        %v1918 = vld [vmem:[%s647] ss:$2 sm:$0xff]
        %v1919 = vmax.f32 %v1915, %v1917
        %v1920 = vmax.f32 %v1916, %v1918
        %1921 = vst [vmem:[#allocation3 + $0xd0] sm:$0xff] %v1919
        %1922 = vst [vmem:[#allocation3 + $0xd8] sm:$0xff] %v1920
        %v1923 = vld [vmem:[%s4] sm:$0x1]
        %v1924 = vld [vmem:[#allocation3] sm:$0xff]
        %v1925 = vld [vmem:[#allocation3 + $0x8] sm:$0xff]
        %v1926 = vld [vmem:[#allocation3 + $0x10] sm:$0xff]
        %v1927 = vld [vmem:[#allocation3 + $0x18] sm:$0xff]
        %v1928 = vld [vmem:[#allocation3 + $0x20] sm:$0xff]
        %v1929 = vld [vmem:[#allocation3 + $0x28] sm:$0xff]
        %v1930 = vld [vmem:[#allocation3 + $0x30] sm:$0xff]
        %v1931 = vld [vmem:[#allocation3 + $0x38] sm:$0xff]
        %v1932 = vld [vmem:[#allocation3 + $0x40] sm:$0xff]
        %v1933 = vld [vmem:[#allocation3 + $0x48] sm:$0xff]
        %v1934 = vld [vmem:[#allocation3 + $0x50] sm:$0xff]
        %v1935 = vld [vmem:[#allocation3 + $0x58] sm:$0xff]
        %v1936 = vld [vmem:[#allocation3 + $0x60] sm:$0xff]
        %v1937 = vld [vmem:[#allocation3 + $0x68] sm:$0xff]
        %v1938 = vld [vmem:[#allocation3 + $0x70] sm:$0xff]
        %v1939 = vld [vmem:[#allocation3 + $0x78] sm:$0xff]
        %v1940 = vld [vmem:[#allocation3 + $0x80] sm:$0xff]
        %v1941 = vld [vmem:[#allocation3 + $0x88] sm:$0xff]
        %v1942 = vld [vmem:[#allocation3 + $0x90] sm:$0xff]
        %v1943 = vld [vmem:[#allocation3 + $0x98] sm:$0xff]
        %v1944 = vld [vmem:[#allocation3 + $0xa0] sm:$0xff]
        %v1945 = vld [vmem:[#allocation3 + $0xa8] sm:$0xff]
        %v1946 = vld [vmem:[#allocation3 + $0xb0] sm:$0xff]
        %v1947 = vld [vmem:[#allocation3 + $0xb8] sm:$0xff]
        %v1948 = vld [vmem:[#allocation3 + $0xc0] sm:$0xff]
        %v1949 = vld [vmem:[#allocation3 + $0xc8] sm:$0xff]
        %v1950 = vld [vmem:[#allocation3 + $0xd0] sm:$0xff]
        %v1951 = vld [vmem:[#allocation3 + $0xd8] sm:$0xff]
        %v1952 = vpack.c.bf16 %v1925, %v1924
        %v1953 = vpack.c.bf16 %v1927, %v1926
        %v1954 = vpack.c.bf16 %v1929, %v1928
        %v1955 = vpack.c.bf16 %v1931, %v1930
        %v1956 = vpack.c.bf16 %v1933, %v1932
        %v1957 = vpack.c.bf16 %v1935, %v1934
        %v1958 = vpack.c.bf16 %v1937, %v1936
        %v1959 = vpack.c.bf16 %v1939, %v1938
        %v1960 = vpack.c.bf16 %v1941, %v1940
        %v1961 = vpack.c.bf16 %v1943, %v1942
        %v1962 = vpack.c.bf16 %v1945, %v1944
        %v1963 = vpack.c.bf16 %v1947, %v1946
        %v1964 = vpack.c.bf16 %v1949, %v1948
        %v1965 = vpack.c.bf16 %v1951, %v1950
        %1966 = vst [vmem:[#allocation4] sm:$0xff] %v1952
        %1967 = vst [vmem:[#allocation4 + $0x8] sm:$0xff] %v1953
        %1968 = vst [vmem:[#allocation4 + $0x10] sm:$0xff] %v1954
        %1969 = vst [vmem:[#allocation4 + $0x18] sm:$0xff] %v1955
        %1970 = vst [vmem:[#allocation4 + $0x20] sm:$0xff] %v1956
        %1971 = vst [vmem:[#allocation4 + $0x28] sm:$0xff] %v1957
        %1972 = vst [vmem:[#allocation4 + $0x30] sm:$0xff] %v1958
        %1973 = vst [vmem:[#allocation4 + $0x38] sm:$0xff] %v1959
        %1974 = vst [vmem:[#allocation4 + $0x40] sm:$0xff] %v1960
        %1975 = vst [vmem:[#allocation4 + $0x48] sm:$0xff] %v1961
        %1976 = vst [vmem:[#allocation4 + $0x50] sm:$0xff] %v1962
        %1977 = vst [vmem:[#allocation4 + $0x58] sm:$0xff] %v1963
        %1978 = vst [vmem:[#allocation4 + $0x60] sm:$0xff] %v1964
        %1979 = vst [vmem:[#allocation4 + $0x68] sm:$0xff] %v1965
        %v1980 = vld [vmem:[#allocation4] sm:$0xff]
        %v1981 = vld [vmem:[#allocation4 + $0x8] sm:$0xff]
        %v1982 = vld [vmem:[#allocation4 + $0x10] sm:$0xff]
        %v1983 = vld [vmem:[#allocation4 + $0x18] sm:$0xff]
        %v1984 = vld [vmem:[#allocation4 + $0x20] sm:$0xff]
        %v1985 = vld [vmem:[#allocation4 + $0x28] sm:$0xff]
        %v1986 = vld [vmem:[#allocation4 + $0x30] sm:$0xff]
        %v1987 = vld [vmem:[#allocation4 + $0x38] sm:$0xff]
        %v1988 = vld [vmem:[#allocation4 + $0x40] sm:$0xff]
        %v1989 = vld [vmem:[#allocation4 + $0x48] sm:$0xff]
        %v1990 = vld [vmem:[%s3] sm:$0xf]
        %v1991 = vld [vmem:[%s3 + $0x4] sm:$0xf]
        %v1992 = vld [vmem:[%s3 + $0x8] sm:$0xf]
        %v1993 = vld [vmem:[%s3 + $0xc] sm:$0xf]
        %v1994 = vld [vmem:[%s3 + $0x10] sm:$0xf]
        %v1995 = vld [vmem:[%s3 + $0x14] sm:$0xf]
        %v1996 = vld [vmem:[%s3 + $0x18] sm:$0xf]
        %v1997 = vld [vmem:[%s3 + $0x1c] sm:$0xf]
        %v1998 = vld [vmem:[%s3 + $0x20] sm:$0xf]
        %v1999 = vld [vmem:[%s3 + $0x24] sm:$0xf]
        %v2000 = vld [vmem:[%s3 + $0x28] sm:$0xf]
        %v2001 = vld [vmem:[%s3 + $0x2c] sm:$0xf]
        %v2002 = vld [vmem:[%s3 + $0x30] sm:$0xf]
        %v2003 = vld [vmem:[%s3 + $0x34] sm:$0xf]
        %v2004 = vld [vmem:[%s3 + $0x38] sm:$0xf]
        %v2005 = vld [vmem:[%s3 + $0x3c] sm:$0xf]
        %v2006 = vld [vmem:[#allocation4 + $0x50] sm:$0xff]
        %s2007 = scalar_lea.vmem %s3, 320
        %v2008 = vld [vmem:[%s2007] sm:$0xf]
        %v2009 = vld [vmem:[%s2007 + $0x4] sm:$0xf]
        %v2010 = vld [vmem:[%s2007 + $0x8] sm:$0xf]
        %v2011 = vld [vmem:[%s2007 + $0xc] sm:$0xf]
        %v2012 = vld [vmem:[%s2007 + $0x10] sm:$0xf]
        %v2013 = vld [vmem:[%s2007 + $0x14] sm:$0xf]
        %v2014 = vld [vmem:[%s2007 + $0x18] sm:$0xf]
        %v2015 = vld [vmem:[%s2007 + $0x1c] sm:$0xf]
        %v2016 = vld [vmem:[%s2007 + $0x20] sm:$0xf]
        %v2017 = vld [vmem:[%s2007 + $0x24] sm:$0xf]
        %v2018 = vld [vmem:[%s2007 + $0x28] sm:$0xf]
        %v2019 = vld [vmem:[%s2007 + $0x2c] sm:$0xf]
        %v2020 = vld [vmem:[%s2007 + $0x30] sm:$0xf]
        %v2021 = vld [vmem:[%s2007 + $0x34] sm:$0xf]
        %v2022 = vld [vmem:[%s2007 + $0x38] sm:$0xf]
        %v2023 = vld [vmem:[%s2007 + $0x3c] sm:$0xf]
        %v2040 = vunpack.c.l.b16 %v2008
        %v2041 = vunpack.c.l.b16 %v2009
        %v2042 = vunpack.c.l.b16 %v2010
        %v2043 = vunpack.c.l.b16 %v2011
        %v2044 = vunpack.c.l.b16 %v2012
        %v2045 = vunpack.c.l.b16 %v2013
        %v2046 = vunpack.c.l.b16 %v2014
        %v2047 = vunpack.c.l.b16 %v2015
        %v2048 = vunpack.c.l.b16 %v2016
        %v2049 = vunpack.c.l.b16 %v2017
        %v2050 = vunpack.c.l.b16 %v2018
        %v2051 = vunpack.c.l.b16 %v2019
        %v2052 = vunpack.c.l.b16 %v2020
        %v2053 = vunpack.c.l.b16 %v2021
        %v2054 = vunpack.c.l.b16 %v2022
        %v2055 = vunpack.c.l.b16 %v2023
        %v2056 = vpack.c.b16 %v2041, %v2040
        %v2057 = vpack.c.b16 %v2043, %v2042
        %v2058 = vpack.c.b16 %v2045, %v2044
        %v2059 = vpack.c.b16 %v2047, %v2046
        %v2060 = vpack.c.b16 %v2049, %v2048
        %v2061 = vpack.c.b16 %v2051, %v2050
        %v2062 = vpack.c.b16 %v2053, %v2052
        %v2063 = vpack.c.b16 %v2055, %v2054
        %2072 = vmatprep.subr.bf16.mxu0 0
        %2073 = vmatpush1.bf16.msra.mxu0 %v2056
        %2074 = vmatprep.subr.bf16.mxu0 0
        %2075 = vmatpush1.bf16.msra.mxu0 %v2057
        %2076 = vmatprep.subr.bf16.mxu0 0
        %2077 = vmatpush1.bf16.msra.mxu0 %v2058
        %2078 = vmatprep.subr.bf16.mxu0 0
        %2079 = vmatpush1.bf16.msra.mxu0 %v2059
        %2080 = vmatprep.subr.bf16.mxu0 0
        %2081 = vmatpush1.bf16.msra.mxu0 %v2060
        %2082 = vmatprep.subr.bf16.mxu0 0
        %2083 = vmatpush1.bf16.msra.mxu0 %v2061
        %2084 = vmatprep.subr.bf16.mxu0 0
        %2085 = vmatpush1.bf16.msra.mxu0 %v2062
        %2086 = vmatprep.subr.bf16.mxu0 0
        %2087 = vmatpush1.bf16.msra.mxu0 %v2063
        %2088 = vmatprep.subr.bf16.mxu0 0
        %2089 = vmatpush1.bf16.msra.mxu0 0
        %2090 = vmatprep.subr.bf16.mxu0 0
        %2091 = vmatpush1.bf16.msra.mxu0 0
        %2092 = vmatprep.subr.bf16.mxu0 0
        %2093 = vmatpush1.bf16.msra.mxu0 0
        %2094 = vmatprep.subr.bf16.mxu0 0
        %2095 = vmatpush1.bf16.msra.mxu0 0
        %2096 = vmatprep.subr.bf16.mxu0 0
        %2097 = vmatpush1.bf16.msra.mxu0 0
        %2098 = vmatprep.subr.bf16.mxu0 0
        %2099 = vmatpush1.bf16.msra.mxu0 0
        %2100 = vmatprep.subr.bf16.mxu0 0
        %2101 = vmatpush1.bf16.msra.mxu0 0
        %2102 = vmatprep.subr.bf16.mxu0 0
        %2103 = vmatpush1.bf16.msra.mxu0 0
        %2104 = vmatprep.mubr.bf16.mxu0 0
        %2105 = vmatmul.mubr.bf16.gmra.mrb[0].mxu0 %v1981
        %v2106 = vpop.f32.mrb[0].mxu0
        %v2107 = vadd.f32 0.0, %v2106
        %v2108 = vpop.f32.mrb[0].mxu0
        %v2109 = vpop.f32.mrb[0].mxu0
        %v2110 = vadd.f32 0.0, %v2109
        %v2111 = vpop.f32.mrb[0].mxu0
        %2112 = vmatprep.mubr.bf16.mxu0 0
        %2113 = vmatmul.mubr.bf16.gmra.mrb[0].mxu0 %v1982
        %v2114 = vpop.f32.mrb[0].mxu0
        %v2115 = vadd.f32 0.0, %v2114
        %v2116 = vpop.f32.mrb[0].mxu0
        %v2117 = vpop.f32.mrb[0].mxu0
        %v2118 = vadd.f32 0.0, %v2117
        %v2119 = vpop.f32.mrb[0].mxu0
        %2120 = vmatprep.mubr.bf16.mxu0 0
        %2121 = vmatmul.mubr.bf16.gmra.mrb[0].mxu0 %v1983
        %v2122 = vpop.f32.mrb[0].mxu0
        %v2123 = vadd.f32 0.0, %v2122
        %v2124 = vpop.f32.mrb[0].mxu0
        %v2125 = vpop.f32.mrb[0].mxu0
        %v2126 = vadd.f32 0.0, %v2125
        %v2127 = vpop.f32.mrb[0].mxu0
        %2128 = vmatprep.mubr.bf16.mxu0 0
        %2129 = vmatmul.mubr.bf16.gmra.mrb[0].mxu0 %v1984
        %v2130 = vpop.f32.mrb[0].mxu0
        %v2131 = vadd.f32 0.0, %v2130
        %v2132 = vpop.f32.mrb[0].mxu0
        %v2133 = vpop.f32.mrb[0].mxu0
        %v2134 = vadd.f32 0.0, %v2133
        %v2135 = vpop.f32.mrb[0].mxu0
        %2136 = vmatprep.mubr.bf16.mxu0 0
        %2137 = vmatmul.mubr.bf16.gmra.mrb[0].mxu0 %v1985
        %v2138 = vpop.f32.mrb[0].mxu0
        %v2139 = vadd.f32 0.0, %v2138
        %v2140 = vpop.f32.mrb[0].mxu0
        %v2141 = vpop.f32.mrb[0].mxu0
        %v2142 = vadd.f32 0.0, %v2141
        %v2143 = vpop.f32.mrb[0].mxu0
        %2144 = vmatprep.mubr.bf16.mxu0 0
        %2145 = vmatmul.mubr.bf16.gmra.mrb[0].mxu0 %v1986
        %v2146 = vpop.f32.mrb[0].mxu0
        %v2147 = vadd.f32 0.0, %v2146
        %v2148 = vpop.f32.mrb[0].mxu0
        %v2149 = vpop.f32.mrb[0].mxu0
        %v2150 = vadd.f32 0.0, %v2149
        %v2151 = vpop.f32.mrb[0].mxu0
        %2152 = vmatprep.mubr.bf16.mxu0 0
        %2153 = vmatmul.mubr.bf16.gmra.mrb[0].mxu0 %v1987
        %v2154 = vpop.f32.mrb[0].mxu0
        %v2155 = vadd.f32 0.0, %v2154
        %v2156 = vpop.f32.mrb[0].mxu0
        %v2157 = vpop.f32.mrb[0].mxu0
        %v2158 = vadd.f32 0.0, %v2157
        %v2159 = vpop.f32.mrb[0].mxu0
        %2160 = vmatprep.mubr.bf16.mxu0 0
        %2161 = vmatmul.mubr.bf16.gmra.mrb[0].mxu0 %v1988
        %v2162 = vpop.f32.mrb[0].mxu0
        %v2163 = vadd.f32 0.0, %v2162
        %v2164 = vpop.f32.mrb[0].mxu0
        %v2165 = vpop.f32.mrb[0].mxu0
        %v2166 = vadd.f32 0.0, %v2165
        %v2167 = vpop.f32.mrb[0].mxu0
        %2168 = vmatprep.mubr.bf16.mxu0 0
        %2169 = vmatmul.mubr.bf16.gmra.mrb[0].mxu0 %v1989
        %v2170 = vpop.f32.mrb[0].mxu0
        %v2171 = vadd.f32 0.0, %v2170
        %v2172 = vpop.f32.mrb[0].mxu0
        %v2173 = vpop.f32.mrb[0].mxu0
        %v2174 = vadd.f32 0.0, %v2173
        %v2175 = vpop.f32.mrb[0].mxu0
        %2176 = vmatprep.mubr.bf16.mxu0 0
        %2177 = vmatmul.mubr.bf16.gmra.mrb[0].mxu0 %v2006
        %v2178 = vpop.f32.mrb[0].mxu0
        %v2179 = vadd.f32 0.0, %v2178
        %v2180 = vpop.f32.mrb[0].mxu0
        %v2181 = vpop.f32.mrb[0].mxu0
        %v2182 = vadd.f32 0.0, %v2181
        %v2183 = vpop.f32.mrb[0].mxu0
        %2184 = vdwg.mxu0
        %v2201 = vunpack.c.l.b16 %v1990
        %v2202 = vunpack.c.l.b16 %v1991
        %v2203 = vunpack.c.l.b16 %v1992
        %v2204 = vunpack.c.l.b16 %v1993
        %v2205 = vunpack.c.l.b16 %v1994
        %v2206 = vunpack.c.l.b16 %v1995
        %v2207 = vunpack.c.l.b16 %v1996
        %v2208 = vunpack.c.l.b16 %v1997
        %v2209 = vunpack.c.l.b16 %v1998
        %v2210 = vunpack.c.l.b16 %v1999
        %v2211 = vunpack.c.l.b16 %v2000
        %v2212 = vunpack.c.l.b16 %v2001
        %v2213 = vunpack.c.l.b16 %v2002
        %v2214 = vunpack.c.l.b16 %v2003
        %v2215 = vunpack.c.l.b16 %v2004
        %v2216 = vunpack.c.l.b16 %v2005
        %v2217 = vpack.c.b16 %v2202, %v2201
        %v2218 = vpack.c.b16 %v2204, %v2203
        %v2219 = vpack.c.b16 %v2206, %v2205
        %v2220 = vpack.c.b16 %v2208, %v2207
        %v2221 = vpack.c.b16 %v2210, %v2209
        %v2222 = vpack.c.b16 %v2212, %v2211
        %v2223 = vpack.c.b16 %v2214, %v2213
        %v2224 = vpack.c.b16 %v2216, %v2215
        %2233 = vmatprep.subr.bf16.mxu0 0
        %2234 = vmatpush1.bf16.msra.mxu0 %v2217
        %2235 = vmatprep.subr.bf16.mxu0 0
        %2236 = vmatpush1.bf16.msra.mxu0 %v2218
        %2237 = vmatprep.subr.bf16.mxu0 0
        %2238 = vmatpush1.bf16.msra.mxu0 %v2219
        %2239 = vmatprep.subr.bf16.mxu0 0
        %2240 = vmatpush1.bf16.msra.mxu0 %v2220
        %2241 = vmatprep.subr.bf16.mxu0 0
        %2242 = vmatpush1.bf16.msra.mxu0 %v2221
        %2243 = vmatprep.subr.bf16.mxu0 0
        %2244 = vmatpush1.bf16.msra.mxu0 %v2222
        %2245 = vmatprep.subr.bf16.mxu0 0
        %2246 = vmatpush1.bf16.msra.mxu0 %v2223
        %2247 = vmatprep.subr.bf16.mxu0 0
        %2248 = vmatpush1.bf16.msra.mxu0 %v2224
        %2249 = vmatprep.subr.bf16.mxu0 0
        %2250 = vmatpush1.bf16.msra.mxu0 0
        %2251 = vmatprep.subr.bf16.mxu0 0
        %2252 = vmatpush1.bf16.msra.mxu0 0
        %2253 = vmatprep.subr.bf16.mxu0 0
        %2254 = vmatpush1.bf16.msra.mxu0 0
        %2255 = vmatprep.subr.bf16.mxu0 0
        %2256 = vmatpush1.bf16.msra.mxu0 0
        %2257 = vmatprep.subr.bf16.mxu0 0
        %2258 = vmatpush1.bf16.msra.mxu0 0
        %2259 = vmatprep.subr.bf16.mxu0 0
        %2260 = vmatpush1.bf16.msra.mxu0 0
        %2261 = vmatprep.subr.bf16.mxu0 0
        %2262 = vmatpush1.bf16.msra.mxu0 0
        %2263 = vmatprep.subr.bf16.mxu0 0
        %2264 = vmatpush1.bf16.msra.mxu0 0
        %2265 = vmatprep.mubr.bf16.mxu0 0
        %2266 = vmatmul.mubr.bf16.gmra.mrb[0].mxu0 %v1980
        %v2267 = vpop.f32.mrb[0].mxu0
        %v2268 = vadd.f32 %v2107, %v2267
        %v2269 = vpop.f32.mrb[0].mxu0
        %v2270 = vpop.f32.mrb[0].mxu0
        %v2271 = vadd.f32 %v2110, %v2270
        %v2272 = vpop.f32.mrb[0].mxu0
        %2273 = vmatprep.mubr.bf16.mxu0 0
        %2274 = vmatmul.mubr.bf16.gmra.mrb[0].mxu0 %v1981
        %v2275 = vpop.f32.mrb[0].mxu0
        %v2276 = vadd.f32 %v2115, %v2275
        %v2277 = vpop.f32.mrb[0].mxu0
        %v2278 = vpop.f32.mrb[0].mxu0
        %v2279 = vadd.f32 %v2118, %v2278
        %v2280 = vpop.f32.mrb[0].mxu0
        %2281 = vmatprep.mubr.bf16.mxu0 0
        %2282 = vmatmul.mubr.bf16.gmra.mrb[0].mxu0 %v1982
        %v2283 = vpop.f32.mrb[0].mxu0
        %v2284 = vadd.f32 %v2123, %v2283
        %v2285 = vpop.f32.mrb[0].mxu0
        %v2286 = vpop.f32.mrb[0].mxu0
        %v2287 = vadd.f32 %v2126, %v2286
        %v2288 = vpop.f32.mrb[0].mxu0
        %2289 = vmatprep.mubr.bf16.mxu0 0
        %2290 = vmatmul.mubr.bf16.gmra.mrb[0].mxu0 %v1983
        %v2291 = vpop.f32.mrb[0].mxu0
        %v2292 = vadd.f32 %v2131, %v2291
        %v2293 = vpop.f32.mrb[0].mxu0
        %v2294 = vpop.f32.mrb[0].mxu0
        %v2295 = vadd.f32 %v2134, %v2294
        %v2296 = vpop.f32.mrb[0].mxu0
        %2297 = vmatprep.mubr.bf16.mxu0 0
        %2298 = vmatmul.mubr.bf16.gmra.mrb[0].mxu0 %v1984
        %v2299 = vpop.f32.mrb[0].mxu0
        %v2300 = vadd.f32 %v2139, %v2299
        %v2301 = vpop.f32.mrb[0].mxu0
        %v2302 = vpop.f32.mrb[0].mxu0
        %v2303 = vadd.f32 %v2142, %v2302
        %v2304 = vpop.f32.mrb[0].mxu0
        %2305 = vmatprep.mubr.bf16.mxu0 0
        %2306 = vmatmul.mubr.bf16.gmra.mrb[0].mxu0 %v1985
        %v2307 = vpop.f32.mrb[0].mxu0
        %v2308 = vadd.f32 %v2147, %v2307
        %v2309 = vpop.f32.mrb[0].mxu0
        %v2310 = vpop.f32.mrb[0].mxu0
        %v2311 = vadd.f32 %v2150, %v2310
        %v2312 = vpop.f32.mrb[0].mxu0
        %2313 = vmatprep.mubr.bf16.mxu0 0
        %2314 = vmatmul.mubr.bf16.gmra.mrb[0].mxu0 %v1986
        %v2315 = vpop.f32.mrb[0].mxu0
        %v2316 = vadd.f32 %v2155, %v2315
        %v2317 = vpop.f32.mrb[0].mxu0
        %v2318 = vpop.f32.mrb[0].mxu0
        %v2319 = vadd.f32 %v2158, %v2318
        %v2320 = vpop.f32.mrb[0].mxu0
        %2321 = vmatprep.mubr.bf16.mxu0 0
        %2322 = vmatmul.mubr.bf16.gmra.mrb[0].mxu0 %v1987
        %v2323 = vpop.f32.mrb[0].mxu0
        %v2324 = vadd.f32 %v2163, %v2323
        %v2325 = vpop.f32.mrb[0].mxu0
        %v2326 = vpop.f32.mrb[0].mxu0
        %v2327 = vadd.f32 %v2166, %v2326
        %v2328 = vpop.f32.mrb[0].mxu0
        %2329 = vmatprep.mubr.bf16.mxu0 0
        %2330 = vmatmul.mubr.bf16.gmra.mrb[0].mxu0 %v1988
        %v2331 = vpop.f32.mrb[0].mxu0
        %v2332 = vadd.f32 %v2171, %v2331
        %v2333 = vpop.f32.mrb[0].mxu0
        %v2334 = vpop.f32.mrb[0].mxu0
        %v2335 = vadd.f32 %v2174, %v2334
        %v2336 = vpop.f32.mrb[0].mxu0
        %2337 = vmatprep.mubr.bf16.mxu0 0
        %2338 = vmatmul.mubr.bf16.gmra.mrb[0].mxu0 %v1989
        %v2339 = vpop.f32.mrb[0].mxu0
        %v2340 = vadd.f32 %v2179, %v2339
        %v2341 = vpop.f32.mrb[0].mxu0
        %v2342 = vpop.f32.mrb[0].mxu0
        %v2343 = vadd.f32 %v2182, %v2342
        %v2344 = vpop.f32.mrb[0].mxu0
        %2345 = vdwg.mxu0
        %v2346 = vld [vmem:[#allocation4 + $0x10] sm:$0xff]
        %v2347 = vld [vmem:[#allocation4 + $0x18] sm:$0xff]
        %v2348 = vld [vmem:[#allocation4 + $0x20] sm:$0xff]
        %v2349 = vld [vmem:[#allocation4 + $0x28] sm:$0xff]
        %v2350 = vld [vmem:[#allocation4 + $0x30] sm:$0xff]
        %v2351 = vld [vmem:[#allocation4 + $0x38] sm:$0xff]
        %v2352 = vld [vmem:[#allocation4 + $0x40] sm:$0xff]
        %v2353 = vld [vmem:[#allocation4 + $0x48] sm:$0xff]
        %v2354 = vld [vmem:[#allocation4 + $0x50] sm:$0xff]
        %v2355 = vld [vmem:[#allocation4 + $0x58] sm:$0xff]
        %s2356 = scalar_lea.vmem %s3, 640
        %v2357 = vld [vmem:[%s2356] sm:$0xf]
        %v2358 = vld [vmem:[%s2356 + $0x4] sm:$0xf]
        %v2359 = vld [vmem:[%s2356 + $0x8] sm:$0xf]
        %v2360 = vld [vmem:[%s2356 + $0xc] sm:$0xf]
        %v2361 = vld [vmem:[%s2356 + $0x10] sm:$0xf]
        %v2362 = vld [vmem:[%s2356 + $0x14] sm:$0xf]
        %v2363 = vld [vmem:[%s2356 + $0x18] sm:$0xf]
        %v2364 = vld [vmem:[%s2356 + $0x1c] sm:$0xf]
        %v2365 = vld [vmem:[%s2356 + $0x20] sm:$0xf]
        %v2366 = vld [vmem:[%s2356 + $0x24] sm:$0xf]
        %v2367 = vld [vmem:[%s2356 + $0x28] sm:$0xf]
        %v2368 = vld [vmem:[%s2356 + $0x2c] sm:$0xf]
        %v2369 = vld [vmem:[%s2356 + $0x30] sm:$0xf]
        %v2370 = vld [vmem:[%s2356 + $0x34] sm:$0xf]
        %v2371 = vld [vmem:[%s2356 + $0x38] sm:$0xf]
        %v2372 = vld [vmem:[%s2356 + $0x3c] sm:$0xf]
        %v2389 = vunpack.c.l.b16 %v2357
        %v2390 = vunpack.c.l.b16 %v2358
        %v2391 = vunpack.c.l.b16 %v2359
        %v2392 = vunpack.c.l.b16 %v2360
        %v2393 = vunpack.c.l.b16 %v2361
        %v2394 = vunpack.c.l.b16 %v2362
        %v2395 = vunpack.c.l.b16 %v2363
        %v2396 = vunpack.c.l.b16 %v2364
        %v2397 = vunpack.c.l.b16 %v2365
        %v2398 = vunpack.c.l.b16 %v2366
        %v2399 = vunpack.c.l.b16 %v2367
        %v2400 = vunpack.c.l.b16 %v2368
        %v2401 = vunpack.c.l.b16 %v2369
        %v2402 = vunpack.c.l.b16 %v2370
        %v2403 = vunpack.c.l.b16 %v2371
        %v2404 = vunpack.c.l.b16 %v2372
        %v2405 = vpack.c.b16 %v2390, %v2389
        %v2406 = vpack.c.b16 %v2392, %v2391
        %v2407 = vpack.c.b16 %v2394, %v2393
        %v2408 = vpack.c.b16 %v2396, %v2395
        %v2409 = vpack.c.b16 %v2398, %v2397
        %v2410 = vpack.c.b16 %v2400, %v2399
        %v2411 = vpack.c.b16 %v2402, %v2401
        %v2412 = vpack.c.b16 %v2404, %v2403
        %2421 = vmatprep.subr.bf16.mxu0 0
        %2422 = vmatpush1.bf16.msra.mxu0 %v2405
        %2423 = vmatprep.subr.bf16.mxu0 0
        %2424 = vmatpush1.bf16.msra.mxu0 %v2406
        %2425 = vmatprep.subr.bf16.mxu0 0
        %2426 = vmatpush1.bf16.msra.mxu0 %v2407
        %2427 = vmatprep.subr.bf16.mxu0 0
        %2428 = vmatpush1.bf16.msra.mxu0 %v2408
        %2429 = vmatprep.subr.bf16.mxu0 0
        %2430 = vmatpush1.bf16.msra.mxu0 %v2409
        %2431 = vmatprep.subr.bf16.mxu0 0
        %2432 = vmatpush1.bf16.msra.mxu0 %v2410
        %2433 = vmatprep.subr.bf16.mxu0 0
        %2434 = vmatpush1.bf16.msra.mxu0 %v2411
        %2435 = vmatprep.subr.bf16.mxu0 0
        %2436 = vmatpush1.bf16.msra.mxu0 %v2412
        %2437 = vmatprep.subr.bf16.mxu0 0
        %2438 = vmatpush1.bf16.msra.mxu0 0
        %2439 = vmatprep.subr.bf16.mxu0 0
        %2440 = vmatpush1.bf16.msra.mxu0 0
        %2441 = vmatprep.subr.bf16.mxu0 0
        %2442 = vmatpush1.bf16.msra.mxu0 0
        %2443 = vmatprep.subr.bf16.mxu0 0
        %2444 = vmatpush1.bf16.msra.mxu0 0
        %2445 = vmatprep.subr.bf16.mxu0 0
        %2446 = vmatpush1.bf16.msra.mxu0 0
        %2447 = vmatprep.subr.bf16.mxu0 0
        %2448 = vmatpush1.bf16.msra.mxu0 0
        %2449 = vmatprep.subr.bf16.mxu0 0
        %2450 = vmatpush1.bf16.msra.mxu0 0
        %2451 = vmatprep.subr.bf16.mxu0 0
        %2452 = vmatpush1.bf16.msra.mxu0 0
        %2453 = vmatprep.mubr.bf16.mxu0 0
        %2454 = vmatmul.mubr.bf16.gmra.mrb[0].mxu0 %v2346
        %v2455 = vpop.f32.mrb[0].mxu0
        %v2456 = vadd.f32 0.0, %v2455
        %v2457 = vpop.f32.mrb[0].mxu0
        %v2458 = vpop.f32.mrb[0].mxu0
        %v2459 = vadd.f32 0.0, %v2458
        %v2460 = vpop.f32.mrb[0].mxu0
        %2461 = vmatprep.mubr.bf16.mxu0 0
        %2462 = vmatmul.mubr.bf16.gmra.mrb[0].mxu0 %v2347
        %v2463 = vpop.f32.mrb[0].mxu0
        %v2464 = vadd.f32 0.0, %v2463
        %v2465 = vpop.f32.mrb[0].mxu0
        %v2466 = vpop.f32.mrb[0].mxu0
        %v2467 = vadd.f32 0.0, %v2466
        %v2468 = vpop.f32.mrb[0].mxu0
        %2469 = vmatprep.mubr.bf16.mxu0 0
        %2470 = vmatmul.mubr.bf16.gmra.mrb[0].mxu0 %v2348
        %v2471 = vpop.f32.mrb[0].mxu0
        %v2472 = vadd.f32 0.0, %v2471
        %v2473 = vpop.f32.mrb[0].mxu0
        %v2474 = vpop.f32.mrb[0].mxu0
        %v2475 = vadd.f32 0.0, %v2474
        %v2476 = vpop.f32.mrb[0].mxu0
        %2477 = vmatprep.mubr.bf16.mxu0 0
        %2478 = vmatmul.mubr.bf16.gmra.mrb[0].mxu0 %v2349
        %v2479 = vpop.f32.mrb[0].mxu0
        %v2480 = vadd.f32 0.0, %v2479
        %v2481 = vpop.f32.mrb[0].mxu0
        %v2482 = vpop.f32.mrb[0].mxu0
        %v2483 = vadd.f32 0.0, %v2482
        %v2484 = vpop.f32.mrb[0].mxu0
        %2485 = vmatprep.mubr.bf16.mxu0 0
        %2486 = vmatmul.mubr.bf16.gmra.mrb[0].mxu0 %v2350
        %v2487 = vpop.f32.mrb[0].mxu0
        %v2488 = vadd.f32 0.0, %v2487
        %v2489 = vpop.f32.mrb[0].mxu0
        %v2490 = vpop.f32.mrb[0].mxu0
        %v2491 = vadd.f32 0.0, %v2490
        %v2492 = vpop.f32.mrb[0].mxu0
        %2493 = vmatprep.mubr.bf16.mxu0 0
        %2494 = vmatmul.mubr.bf16.gmra.mrb[0].mxu0 %v2351
        %v2495 = vpop.f32.mrb[0].mxu0
        %v2496 = vadd.f32 0.0, %v2495
        %v2497 = vpop.f32.mrb[0].mxu0
        %v2498 = vpop.f32.mrb[0].mxu0
        %v2499 = vadd.f32 0.0, %v2498
        %v2500 = vpop.f32.mrb[0].mxu0
        %2501 = vmatprep.mubr.bf16.mxu0 0
        %2502 = vmatmul.mubr.bf16.gmra.mrb[0].mxu0 %v2352
        %v2503 = vpop.f32.mrb[0].mxu0
        %v2504 = vadd.f32 0.0, %v2503
        %v2505 = vpop.f32.mrb[0].mxu0
        %v2506 = vpop.f32.mrb[0].mxu0
        %v2507 = vadd.f32 0.0, %v2506
        %v2508 = vpop.f32.mrb[0].mxu0
        %2509 = vmatprep.mubr.bf16.mxu0 0
        %2510 = vmatmul.mubr.bf16.gmra.mrb[0].mxu0 %v2353
        %v2511 = vpop.f32.mrb[0].mxu0
        %v2512 = vadd.f32 0.0, %v2511
        %v2513 = vpop.f32.mrb[0].mxu0
        %v2514 = vpop.f32.mrb[0].mxu0
        %v2515 = vadd.f32 0.0, %v2514
        %v2516 = vpop.f32.mrb[0].mxu0
        %2517 = vmatprep.mubr.bf16.mxu0 0
        %2518 = vmatmul.mubr.bf16.gmra.mrb[0].mxu0 %v2354
        %v2519 = vpop.f32.mrb[0].mxu0
        %v2520 = vadd.f32 0.0, %v2519
        %v2521 = vpop.f32.mrb[0].mxu0
        %v2522 = vpop.f32.mrb[0].mxu0
        %v2523 = vadd.f32 0.0, %v2522
        %v2524 = vpop.f32.mrb[0].mxu0
        %2525 = vmatprep.mubr.bf16.mxu0 0
        %2526 = vmatmul.mubr.bf16.gmra.mrb[0].mxu0 %v2355
        %v2527 = vpop.f32.mrb[0].mxu0
        %v2528 = vadd.f32 0.0, %v2527
        %v2529 = vpop.f32.mrb[0].mxu0
        %v2530 = vpop.f32.mrb[0].mxu0
        %v2531 = vadd.f32 0.0, %v2530
        %v2532 = vpop.f32.mrb[0].mxu0
        %2533 = vdwg.mxu0
        %v2534 = vadd.f32 %v2268, %v2456
        %v2535 = vadd.f32 %v2271, %v2459
        %v2536 = vadd.f32 %v2276, %v2464
        %v2537 = vadd.f32 %v2279, %v2467
        %v2538 = vadd.f32 %v2284, %v2472
        %v2539 = vadd.f32 %v2287, %v2475
        %v2540 = vadd.f32 %v2292, %v2480
        %v2541 = vadd.f32 %v2295, %v2483
        %v2542 = vadd.f32 %v2300, %v2488
        %v2543 = vadd.f32 %v2303, %v2491
        %v2544 = vadd.f32 %v2308, %v2496
        %v2545 = vadd.f32 %v2311, %v2499
        %v2546 = vadd.f32 %v2316, %v2504
        %v2547 = vadd.f32 %v2319, %v2507
        %v2548 = vadd.f32 %v2324, %v2512
        %v2549 = vadd.f32 %v2327, %v2515
        %v2550 = vadd.f32 %v2332, %v2520
        %v2551 = vadd.f32 %v2335, %v2523
        %v2552 = vadd.f32 %v2340, %v2528
        %v2553 = vadd.f32 %v2343, %v2531
        %v2554 = vld [vmem:[#allocation4 + $0x18] sm:$0xff]
        %v2555 = vld [vmem:[#allocation4 + $0x20] sm:$0xff]
        %v2556 = vld [vmem:[#allocation4 + $0x28] sm:$0xff]
        %v2557 = vld [vmem:[#allocation4 + $0x30] sm:$0xff]
        %v2558 = vld [vmem:[#allocation4 + $0x38] sm:$0xff]
        %v2559 = vld [vmem:[#allocation4 + $0x40] sm:$0xff]
        %v2560 = vld [vmem:[#allocation4 + $0x48] sm:$0xff]
        %v2561 = vld [vmem:[#allocation4 + $0x50] sm:$0xff]
        %v2562 = vld [vmem:[#allocation4 + $0x58] sm:$0xff]
        %v2563 = vld [vmem:[#allocation4 + $0x60] sm:$0xff]
        %s2564 = scalar_lea.vmem %s3, 960
        %v2565 = vld [vmem:[%s2564] sm:$0xf]
        %v2566 = vld [vmem:[%s2564 + $0x4] sm:$0xf]
        %v2567 = vld [vmem:[%s2564 + $0x8] sm:$0xf]
        %v2568 = vld [vmem:[%s2564 + $0xc] sm:$0xf]
        %v2569 = vld [vmem:[%s2564 + $0x10] sm:$0xf]
        %v2570 = vld [vmem:[%s2564 + $0x14] sm:$0xf]
        %v2571 = vld [vmem:[%s2564 + $0x18] sm:$0xf]
        %v2572 = vld [vmem:[%s2564 + $0x1c] sm:$0xf]
        %v2573 = vld [vmem:[%s2564 + $0x20] sm:$0xf]
        %v2574 = vld [vmem:[%s2564 + $0x24] sm:$0xf]
        %v2575 = vld [vmem:[%s2564 + $0x28] sm:$0xf]
        %v2576 = vld [vmem:[%s2564 + $0x2c] sm:$0xf]
        %v2577 = vld [vmem:[%s2564 + $0x30] sm:$0xf]
        %v2578 = vld [vmem:[%s2564 + $0x34] sm:$0xf]
        %v2579 = vld [vmem:[%s2564 + $0x38] sm:$0xf]
        %v2580 = vld [vmem:[%s2564 + $0x3c] sm:$0xf]
        %v2597 = vunpack.c.l.b16 %v2565
        %v2598 = vunpack.c.l.b16 %v2566
        %v2599 = vunpack.c.l.b16 %v2567
        %v2600 = vunpack.c.l.b16 %v2568
        %v2601 = vunpack.c.l.b16 %v2569
        %v2602 = vunpack.c.l.b16 %v2570
        %v2603 = vunpack.c.l.b16 %v2571
        %v2604 = vunpack.c.l.b16 %v2572
        %v2605 = vunpack.c.l.b16 %v2573
        %v2606 = vunpack.c.l.b16 %v2574
        %v2607 = vunpack.c.l.b16 %v2575
        %v2608 = vunpack.c.l.b16 %v2576
        %v2609 = vunpack.c.l.b16 %v2577
        %v2610 = vunpack.c.l.b16 %v2578
        %v2611 = vunpack.c.l.b16 %v2579
        %v2612 = vunpack.c.l.b16 %v2580
        %v2613 = vpack.c.b16 %v2598, %v2597
        %v2614 = vpack.c.b16 %v2600, %v2599
        %v2615 = vpack.c.b16 %v2602, %v2601
        %v2616 = vpack.c.b16 %v2604, %v2603
        %v2617 = vpack.c.b16 %v2606, %v2605
        %v2618 = vpack.c.b16 %v2608, %v2607
        %v2619 = vpack.c.b16 %v2610, %v2609
        %v2620 = vpack.c.b16 %v2612, %v2611
        %2629 = vmatprep.subr.bf16.mxu0 0
        %2630 = vmatpush1.bf16.msra.mxu0 %v2613
        %2631 = vmatprep.subr.bf16.mxu0 0
        %2632 = vmatpush1.bf16.msra.mxu0 %v2614
        %2633 = vmatprep.subr.bf16.mxu0 0
        %2634 = vmatpush1.bf16.msra.mxu0 %v2615
        %2635 = vmatprep.subr.bf16.mxu0 0
        %2636 = vmatpush1.bf16.msra.mxu0 %v2616
        %2637 = vmatprep.subr.bf16.mxu0 0
        %2638 = vmatpush1.bf16.msra.mxu0 %v2617
        %2639 = vmatprep.subr.bf16.mxu0 0
        %2640 = vmatpush1.bf16.msra.mxu0 %v2618
        %2641 = vmatprep.subr.bf16.mxu0 0
        %2642 = vmatpush1.bf16.msra.mxu0 %v2619
        %2643 = vmatprep.subr.bf16.mxu0 0
        %2644 = vmatpush1.bf16.msra.mxu0 %v2620
        %2645 = vmatprep.subr.bf16.mxu0 0
        %2646 = vmatpush1.bf16.msra.mxu0 0
        %2647 = vmatprep.subr.bf16.mxu0 0
        %2648 = vmatpush1.bf16.msra.mxu0 0
        %2649 = vmatprep.subr.bf16.mxu0 0
        %2650 = vmatpush1.bf16.msra.mxu0 0
        %2651 = vmatprep.subr.bf16.mxu0 0
        %2652 = vmatpush1.bf16.msra.mxu0 0
        %2653 = vmatprep.subr.bf16.mxu0 0
        %2654 = vmatpush1.bf16.msra.mxu0 0
        %2655 = vmatprep.subr.bf16.mxu0 0
        %2656 = vmatpush1.bf16.msra.mxu0 0
        %2657 = vmatprep.subr.bf16.mxu0 0
        %2658 = vmatpush1.bf16.msra.mxu0 0
        %2659 = vmatprep.subr.bf16.mxu0 0
        %2660 = vmatpush1.bf16.msra.mxu0 0
        %2661 = vmatprep.mubr.bf16.mxu0 0
        %2662 = vmatmul.mubr.bf16.gmra.mrb[0].mxu0 %v2554
        %v2663 = vpop.f32.mrb[0].mxu0
        %v2664 = vadd.f32 0.0, %v2663
        %v2665 = vpop.f32.mrb[0].mxu0
        %v2666 = vpop.f32.mrb[0].mxu0
        %v2667 = vadd.f32 0.0, %v2666
        %v2668 = vpop.f32.mrb[0].mxu0
        %2669 = vmatprep.mubr.bf16.mxu0 0
        %2670 = vmatmul.mubr.bf16.gmra.mrb[0].mxu0 %v2555
        %v2671 = vpop.f32.mrb[0].mxu0
        %v2672 = vadd.f32 0.0, %v2671
        %v2673 = vpop.f32.mrb[0].mxu0
        %v2674 = vpop.f32.mrb[0].mxu0
        %v2675 = vadd.f32 0.0, %v2674
        %v2676 = vpop.f32.mrb[0].mxu0
        %2677 = vmatprep.mubr.bf16.mxu0 0
        %2678 = vmatmul.mubr.bf16.gmra.mrb[0].mxu0 %v2556
        %v2679 = vpop.f32.mrb[0].mxu0
        %v2680 = vadd.f32 0.0, %v2679
        %v2681 = vpop.f32.mrb[0].mxu0
        %v2682 = vpop.f32.mrb[0].mxu0
        %v2683 = vadd.f32 0.0, %v2682
        %v2684 = vpop.f32.mrb[0].mxu0
        %2685 = vmatprep.mubr.bf16.mxu0 0
        %2686 = vmatmul.mubr.bf16.gmra.mrb[0].mxu0 %v2557
        %v2687 = vpop.f32.mrb[0].mxu0
        %v2688 = vadd.f32 0.0, %v2687
        %v2689 = vpop.f32.mrb[0].mxu0
        %v2690 = vpop.f32.mrb[0].mxu0
        %v2691 = vadd.f32 0.0, %v2690
        %v2692 = vpop.f32.mrb[0].mxu0
        %2693 = vmatprep.mubr.bf16.mxu0 0
        %2694 = vmatmul.mubr.bf16.gmra.mrb[0].mxu0 %v2558
        %v2695 = vpop.f32.mrb[0].mxu0
        %v2696 = vadd.f32 0.0, %v2695
        %v2697 = vpop.f32.mrb[0].mxu0
        %v2698 = vpop.f32.mrb[0].mxu0
        %v2699 = vadd.f32 0.0, %v2698
        %v2700 = vpop.f32.mrb[0].mxu0
        %2701 = vmatprep.mubr.bf16.mxu0 0
        %2702 = vmatmul.mubr.bf16.gmra.mrb[0].mxu0 %v2559
        %v2703 = vpop.f32.mrb[0].mxu0
        %v2704 = vadd.f32 0.0, %v2703
        %v2705 = vpop.f32.mrb[0].mxu0
        %v2706 = vpop.f32.mrb[0].mxu0
        %v2707 = vadd.f32 0.0, %v2706
        %v2708 = vpop.f32.mrb[0].mxu0
        %2709 = vmatprep.mubr.bf16.mxu0 0
        %2710 = vmatmul.mubr.bf16.gmra.mrb[0].mxu0 %v2560
        %v2711 = vpop.f32.mrb[0].mxu0
        %v2712 = vadd.f32 0.0, %v2711
        %v2713 = vpop.f32.mrb[0].mxu0
        %v2714 = vpop.f32.mrb[0].mxu0
        %v2715 = vadd.f32 0.0, %v2714
        %v2716 = vpop.f32.mrb[0].mxu0
        %2717 = vmatprep.mubr.bf16.mxu0 0
        %2718 = vmatmul.mubr.bf16.gmra.mrb[0].mxu0 %v2561
        %v2719 = vpop.f32.mrb[0].mxu0
        %v2720 = vadd.f32 0.0, %v2719
        %v2721 = vpop.f32.mrb[0].mxu0
        %v2722 = vpop.f32.mrb[0].mxu0
        %v2723 = vadd.f32 0.0, %v2722
        %v2724 = vpop.f32.mrb[0].mxu0
        %2725 = vmatprep.mubr.bf16.mxu0 0
        %2726 = vmatmul.mubr.bf16.gmra.mrb[0].mxu0 %v2562
        %v2727 = vpop.f32.mrb[0].mxu0
        %v2728 = vadd.f32 0.0, %v2727
        %v2729 = vpop.f32.mrb[0].mxu0
        %v2730 = vpop.f32.mrb[0].mxu0
        %v2731 = vadd.f32 0.0, %v2730
        %v2732 = vpop.f32.mrb[0].mxu0
        %2733 = vmatprep.mubr.bf16.mxu0 0
        %2734 = vmatmul.mubr.bf16.gmra.mrb[0].mxu0 %v2563
        %v2735 = vpop.f32.mrb[0].mxu0
        %v2736 = vadd.f32 0.0, %v2735
        %v2737 = vpop.f32.mrb[0].mxu0
        %v2738 = vpop.f32.mrb[0].mxu0
        %v2739 = vadd.f32 0.0, %v2738
        %v2740 = vpop.f32.mrb[0].mxu0
        %2741 = vdwg.mxu0
        %v2742 = vadd.f32 %v2534, %v2664
        %v2743 = vadd.f32 %v2535, %v2667
        %v2744 = vadd.f32 %v2536, %v2672
        %v2745 = vadd.f32 %v2537, %v2675
        %v2746 = vadd.f32 %v2538, %v2680
        %v2747 = vadd.f32 %v2539, %v2683
        %v2748 = vadd.f32 %v2540, %v2688
        %v2749 = vadd.f32 %v2541, %v2691
        %v2750 = vadd.f32 %v2542, %v2696
        %v2751 = vadd.f32 %v2543, %v2699
        %v2752 = vadd.f32 %v2544, %v2704
        %v2753 = vadd.f32 %v2545, %v2707
        %v2754 = vadd.f32 %v2546, %v2712
        %v2755 = vadd.f32 %v2547, %v2715
        %v2756 = vadd.f32 %v2548, %v2720
        %v2757 = vadd.f32 %v2549, %v2723
        %v2758 = vadd.f32 %v2550, %v2728
        %v2759 = vadd.f32 %v2551, %v2731
        %v2760 = vadd.f32 %v2552, %v2736
        %v2761 = vadd.f32 %v2553, %v2739
        %v2762 = vld [vmem:[#allocation4 + $0x20] sm:$0xff]
        %v2763 = vld [vmem:[#allocation4 + $0x28] sm:$0xff]
        %v2764 = vld [vmem:[#allocation4 + $0x30] sm:$0xff]
        %v2765 = vld [vmem:[#allocation4 + $0x38] sm:$0xff]
        %v2766 = vld [vmem:[#allocation4 + $0x40] sm:$0xff]
        %v2767 = vld [vmem:[#allocation4 + $0x48] sm:$0xff]
        %v2768 = vld [vmem:[#allocation4 + $0x50] sm:$0xff]
        %v2769 = vld [vmem:[#allocation4 + $0x58] sm:$0xff]
        %v2770 = vld [vmem:[#allocation4 + $0x60] sm:$0xff]
        %v2771 = vld [vmem:[#allocation4 + $0x68] sm:$0xff]
        %s2772 = scalar_lea.vmem %s3, 1280
        %v2773 = vld [vmem:[%s2772] sm:$0xf]
        %v2774 = vld [vmem:[%s2772 + $0x4] sm:$0xf]
        %v2775 = vld [vmem:[%s2772 + $0x8] sm:$0xf]
        %v2776 = vld [vmem:[%s2772 + $0xc] sm:$0xf]
        %v2777 = vld [vmem:[%s2772 + $0x10] sm:$0xf]
        %v2778 = vld [vmem:[%s2772 + $0x14] sm:$0xf]
        %v2779 = vld [vmem:[%s2772 + $0x18] sm:$0xf]
        %v2780 = vld [vmem:[%s2772 + $0x1c] sm:$0xf]
        %v2781 = vld [vmem:[%s2772 + $0x20] sm:$0xf]
        %v2782 = vld [vmem:[%s2772 + $0x24] sm:$0xf]
        %v2783 = vld [vmem:[%s2772 + $0x28] sm:$0xf]
        %v2784 = vld [vmem:[%s2772 + $0x2c] sm:$0xf]
        %v2785 = vld [vmem:[%s2772 + $0x30] sm:$0xf]
        %v2786 = vld [vmem:[%s2772 + $0x34] sm:$0xf]
        %v2787 = vld [vmem:[%s2772 + $0x38] sm:$0xf]
        %v2788 = vld [vmem:[%s2772 + $0x3c] sm:$0xf]
        %v2805 = vunpack.c.l.b16 %v2773
        %v2806 = vunpack.c.l.b16 %v2774
        %v2807 = vunpack.c.l.b16 %v2775
        %v2808 = vunpack.c.l.b16 %v2776
        %v2809 = vunpack.c.l.b16 %v2777
        %v2810 = vunpack.c.l.b16 %v2778
        %v2811 = vunpack.c.l.b16 %v2779
        %v2812 = vunpack.c.l.b16 %v2780
        %v2813 = vunpack.c.l.b16 %v2781
        %v2814 = vunpack.c.l.b16 %v2782
        %v2815 = vunpack.c.l.b16 %v2783
        %v2816 = vunpack.c.l.b16 %v2784
        %v2817 = vunpack.c.l.b16 %v2785
        %v2818 = vunpack.c.l.b16 %v2786
        %v2819 = vunpack.c.l.b16 %v2787
        %v2820 = vunpack.c.l.b16 %v2788
        %v2821 = vpack.c.b16 %v2806, %v2805
        %v2822 = vpack.c.b16 %v2808, %v2807
        %v2823 = vpack.c.b16 %v2810, %v2809
        %v2824 = vpack.c.b16 %v2812, %v2811
        %v2825 = vpack.c.b16 %v2814, %v2813
        %v2826 = vpack.c.b16 %v2816, %v2815
        %v2827 = vpack.c.b16 %v2818, %v2817
        %v2828 = vpack.c.b16 %v2820, %v2819
        %2837 = vmatprep.subr.bf16.mxu0 0
        %2838 = vmatpush1.bf16.msra.mxu0 %v2821
        %2839 = vmatprep.subr.bf16.mxu0 0
        %2840 = vmatpush1.bf16.msra.mxu0 %v2822
        %2841 = vmatprep.subr.bf16.mxu0 0
        %2842 = vmatpush1.bf16.msra.mxu0 %v2823
        %2843 = vmatprep.subr.bf16.mxu0 0
        %2844 = vmatpush1.bf16.msra.mxu0 %v2824
        %2845 = vmatprep.subr.bf16.mxu0 0
        %2846 = vmatpush1.bf16.msra.mxu0 %v2825
        %2847 = vmatprep.subr.bf16.mxu0 0
        %2848 = vmatpush1.bf16.msra.mxu0 %v2826
        %2849 = vmatprep.subr.bf16.mxu0 0
        %2850 = vmatpush1.bf16.msra.mxu0 %v2827
        %2851 = vmatprep.subr.bf16.mxu0 0
        %2852 = vmatpush1.bf16.msra.mxu0 %v2828
        %2853 = vmatprep.subr.bf16.mxu0 0
        %2854 = vmatpush1.bf16.msra.mxu0 0
        %2855 = vmatprep.subr.bf16.mxu0 0
        %2856 = vmatpush1.bf16.msra.mxu0 0
        %2857 = vmatprep.subr.bf16.mxu0 0
        %2858 = vmatpush1.bf16.msra.mxu0 0
        %2859 = vmatprep.subr.bf16.mxu0 0
        %2860 = vmatpush1.bf16.msra.mxu0 0
        %2861 = vmatprep.subr.bf16.mxu0 0
        %2862 = vmatpush1.bf16.msra.mxu0 0
        %2863 = vmatprep.subr.bf16.mxu0 0
        %2864 = vmatpush1.bf16.msra.mxu0 0
        %2865 = vmatprep.subr.bf16.mxu0 0
        %2866 = vmatpush1.bf16.msra.mxu0 0
        %2867 = vmatprep.subr.bf16.mxu0 0
        %2868 = vmatpush1.bf16.msra.mxu0 0
        %2869 = vmatprep.mubr.bf16.mxu0 0
        %2870 = vmatmul.mubr.bf16.gmra.mrb[0].mxu0 %v2762
        %v2871 = vpop.f32.mrb[0].mxu0
        %v2872 = vadd.f32 0.0, %v2871
        %v2873 = vpop.f32.mrb[0].mxu0
        %v2874 = vpop.f32.mrb[0].mxu0
        %v2875 = vadd.f32 0.0, %v2874
        %v2876 = vpop.f32.mrb[0].mxu0
        %2877 = vmatprep.mubr.bf16.mxu0 0
        %2878 = vmatmul.mubr.bf16.gmra.mrb[0].mxu0 %v2763
        %v2879 = vpop.f32.mrb[0].mxu0
        %v2880 = vadd.f32 0.0, %v2879
        %v2881 = vpop.f32.mrb[0].mxu0
        %v2882 = vpop.f32.mrb[0].mxu0
        %v2883 = vadd.f32 0.0, %v2882
        %v2884 = vpop.f32.mrb[0].mxu0
        %2885 = vmatprep.mubr.bf16.mxu0 0
        %2886 = vmatmul.mubr.bf16.gmra.mrb[0].mxu0 %v2764
        %v2887 = vpop.f32.mrb[0].mxu0
        %v2888 = vadd.f32 0.0, %v2887
        %v2889 = vpop.f32.mrb[0].mxu0
        %v2890 = vpop.f32.mrb[0].mxu0
        %v2891 = vadd.f32 0.0, %v2890
        %v2892 = vpop.f32.mrb[0].mxu0
        %2893 = vmatprep.mubr.bf16.mxu0 0
        %2894 = vmatmul.mubr.bf16.gmra.mrb[0].mxu0 %v2765
        %v2895 = vpop.f32.mrb[0].mxu0
        %v2896 = vadd.f32 0.0, %v2895
        %v2897 = vpop.f32.mrb[0].mxu0
        %v2898 = vpop.f32.mrb[0].mxu0
        %v2899 = vadd.f32 0.0, %v2898
        %v2900 = vpop.f32.mrb[0].mxu0
        %2901 = vmatprep.mubr.bf16.mxu0 0
        %2902 = vmatmul.mubr.bf16.gmra.mrb[0].mxu0 %v2766
        %v2903 = vpop.f32.mrb[0].mxu0
        %v2904 = vadd.f32 0.0, %v2903
        %v2905 = vpop.f32.mrb[0].mxu0
        %v2906 = vpop.f32.mrb[0].mxu0
        %v2907 = vadd.f32 0.0, %v2906
        %v2908 = vpop.f32.mrb[0].mxu0
        %2909 = vmatprep.mubr.bf16.mxu0 0
        %2910 = vmatmul.mubr.bf16.gmra.mrb[0].mxu0 %v2767
        %v2911 = vpop.f32.mrb[0].mxu0
        %v2912 = vadd.f32 0.0, %v2911
        %v2913 = vpop.f32.mrb[0].mxu0
        %v2914 = vpop.f32.mrb[0].mxu0
        %v2915 = vadd.f32 0.0, %v2914
        %v2916 = vpop.f32.mrb[0].mxu0
        %2917 = vmatprep.mubr.bf16.mxu0 0
        %2918 = vmatmul.mubr.bf16.gmra.mrb[0].mxu0 %v2768
        %v2919 = vpop.f32.mrb[0].mxu0
        %v2920 = vadd.f32 0.0, %v2919
        %v2921 = vpop.f32.mrb[0].mxu0
        %v2922 = vpop.f32.mrb[0].mxu0
        %v2923 = vadd.f32 0.0, %v2922
        %v2924 = vpop.f32.mrb[0].mxu0
        %2925 = vmatprep.mubr.bf16.mxu0 0
        %2926 = vmatmul.mubr.bf16.gmra.mrb[0].mxu0 %v2769
        %v2927 = vpop.f32.mrb[0].mxu0
        %v2928 = vadd.f32 0.0, %v2927
        %v2929 = vpop.f32.mrb[0].mxu0
        %v2930 = vpop.f32.mrb[0].mxu0
        %v2931 = vadd.f32 0.0, %v2930
        %v2932 = vpop.f32.mrb[0].mxu0
        %2933 = vmatprep.mubr.bf16.mxu0 0
        %2934 = vmatmul.mubr.bf16.gmra.mrb[0].mxu0 %v2770
        %v2935 = vpop.f32.mrb[0].mxu0
        %v2936 = vadd.f32 0.0, %v2935
        %v2937 = vpop.f32.mrb[0].mxu0
        %v2938 = vpop.f32.mrb[0].mxu0
        %v2939 = vadd.f32 0.0, %v2938
        %v2940 = vpop.f32.mrb[0].mxu0
        %2941 = vmatprep.mubr.bf16.mxu0 0
        %2942 = vmatmul.mubr.bf16.gmra.mrb[0].mxu0 %v2771
        %v2943 = vpop.f32.mrb[0].mxu0
        %v2944 = vadd.f32 0.0, %v2943
        %v2945 = vpop.f32.mrb[0].mxu0
        %v2946 = vpop.f32.mrb[0].mxu0
        %v2947 = vadd.f32 0.0, %v2946
        %v2948 = vpop.f32.mrb[0].mxu0
        %2949 = vdwg.mxu0
        %v2950 = vadd.f32 %v2742, %v2872
        %v2951 = vadd.f32 %v2743, %v2875
        %v2952 = vadd.f32 %v2744, %v2880
        %v2953 = vadd.f32 %v2745, %v2883
        %v2954 = vadd.f32 %v2746, %v2888
        %v2955 = vadd.f32 %v2747, %v2891
        %v2956 = vadd.f32 %v2748, %v2896
        %v2957 = vadd.f32 %v2749, %v2899
        %v2958 = vadd.f32 %v2750, %v2904
        %v2959 = vadd.f32 %v2751, %v2907
        %v2960 = vadd.f32 %v2752, %v2912
        %v2961 = vadd.f32 %v2753, %v2915
        %v2962 = vadd.f32 %v2754, %v2920
        %v2963 = vadd.f32 %v2755, %v2923
        %v2964 = vadd.f32 %v2756, %v2928
        %v2965 = vadd.f32 %v2757, %v2931
        %v2966 = vadd.f32 %v2758, %v2936
        %v2967 = vadd.f32 %v2759, %v2939
        %v2968 = vadd.f32 %v2760, %v2944
        %v2969 = vadd.f32 %v2761, %v2947
        %v2970 = vld [vmem:[#allocation3 + $0x1] sm:$0xff]
        %v2971 = vld [vmem:[#allocation3 + $0x9] sm:$0xff]
        %v2972 = vld [vmem:[#allocation3 + $0x11] sm:$0xff]
        %v2973 = vld [vmem:[#allocation3 + $0x19] sm:$0xff]
        %v2974 = vld [vmem:[#allocation3 + $0x21] sm:$0xff]
        %v2975 = vld [vmem:[#allocation3 + $0x29] sm:$0xff]
        %v2976 = vld [vmem:[#allocation3 + $0x31] sm:$0xff]
        %v2977 = vld [vmem:[#allocation3 + $0x39] sm:$0xff]
        %v2978 = vld [vmem:[#allocation3 + $0x41] sm:$0xff]
        %v2979 = vld [vmem:[#allocation3 + $0x49] sm:$0xff]
        %v2980 = vld [vmem:[#allocation3 + $0x51] sm:$0xff]
        %v2981 = vld [vmem:[#allocation3 + $0x59] sm:$0xff]
        %v2982 = vld [vmem:[#allocation3 + $0x61] sm:$0xff]
        %v2983 = vld [vmem:[#allocation3 + $0x69] sm:$0xff]
        %v2984 = vld [vmem:[#allocation3 + $0x71] sm:$0xff]
        %v2985 = vld [vmem:[#allocation3 + $0x79] sm:$0xff]
        %v2986 = vld [vmem:[#allocation3 + $0x81] sm:$0xff]
        %v2987 = vld [vmem:[#allocation3 + $0x89] sm:$0xff]
        %v2988 = vld [vmem:[#allocation3 + $0x91] sm:$0xff]
        %v2989 = vld [vmem:[#allocation3 + $0x99] sm:$0xff]
        %v2990 = vld [vmem:[#allocation3 + $0xa1] sm:$0xff]
        %v2991 = vld [vmem:[#allocation3 + $0xa9] sm:$0xff]
        %v2992 = vld [vmem:[#allocation3 + $0xb1] sm:$0xff]
        %v2993 = vld [vmem:[#allocation3 + $0xb9] sm:$0xff]
        %v2994 = vld [vmem:[#allocation3 + $0xc1] sm:$0xff]
        %v2995 = vld [vmem:[#allocation3 + $0xc9] sm:$0xff]
        %v2996 = vld [vmem:[#allocation3 + $0xd1] sm:$0xff]
        %v2997 = vld [vmem:[#allocation3 + $0xd9] sm:$0xff]
        %v2998 = vpack.c.bf16 %v2971, %v2970
        %v2999 = vpack.c.bf16 %v2973, %v2972
        %v3000 = vpack.c.bf16 %v2975, %v2974
        %v3001 = vpack.c.bf16 %v2977, %v2976
        %v3002 = vpack.c.bf16 %v2979, %v2978
        %v3003 = vpack.c.bf16 %v2981, %v2980
        %v3004 = vpack.c.bf16 %v2983, %v2982
        %v3005 = vpack.c.bf16 %v2985, %v2984
        %v3006 = vpack.c.bf16 %v2987, %v2986
        %v3007 = vpack.c.bf16 %v2989, %v2988
        %v3008 = vpack.c.bf16 %v2991, %v2990
        %v3009 = vpack.c.bf16 %v2993, %v2992
        %v3010 = vpack.c.bf16 %v2995, %v2994
        %v3011 = vpack.c.bf16 %v2997, %v2996
        %3012 = vst [vmem:[#allocation4] sm:$0xff] %v2998
        %3013 = vst [vmem:[#allocation4 + $0x8] sm:$0xff] %v2999
        %3014 = vst [vmem:[#allocation4 + $0x10] sm:$0xff] %v3000
        %3015 = vst [vmem:[#allocation4 + $0x18] sm:$0xff] %v3001
        %3016 = vst [vmem:[#allocation4 + $0x20] sm:$0xff] %v3002
        %3017 = vst [vmem:[#allocation4 + $0x28] sm:$0xff] %v3003
        %3018 = vst [vmem:[#allocation4 + $0x30] sm:$0xff] %v3004
        %3019 = vst [vmem:[#allocation4 + $0x38] sm:$0xff] %v3005
        %3020 = vst [vmem:[#allocation4 + $0x40] sm:$0xff] %v3006
        %3021 = vst [vmem:[#allocation4 + $0x48] sm:$0xff] %v3007
        %3022 = vst [vmem:[#allocation4 + $0x50] sm:$0xff] %v3008
        %3023 = vst [vmem:[#allocation4 + $0x58] sm:$0xff] %v3009
        %3024 = vst [vmem:[#allocation4 + $0x60] sm:$0xff] %v3010
        %3025 = vst [vmem:[#allocation4 + $0x68] sm:$0xff] %v3011
        %v3026 = vld [vmem:[#allocation4] sm:$0xff]
        %v3027 = vld [vmem:[#allocation4 + $0x8] sm:$0xff]
        %v3028 = vld [vmem:[#allocation4 + $0x10] sm:$0xff]
        %v3029 = vld [vmem:[#allocation4 + $0x18] sm:$0xff]
        %v3030 = vld [vmem:[#allocation4 + $0x20] sm:$0xff]
        %v3031 = vld [vmem:[#allocation4 + $0x28] sm:$0xff]
        %v3032 = vld [vmem:[#allocation4 + $0x30] sm:$0xff]
        %v3033 = vld [vmem:[#allocation4 + $0x38] sm:$0xff]
        %v3034 = vld [vmem:[#allocation4 + $0x40] sm:$0xff]
        %v3035 = vld [vmem:[#allocation4 + $0x48] sm:$0xff]
        %s3036 = scalar_lea.vmem %s3, 64
        %v3037 = vld [vmem:[%s3036] sm:$0xf]
        %v3038 = vld [vmem:[%s3036 + $0x4] sm:$0xf]
        %v3039 = vld [vmem:[%s3036 + $0x8] sm:$0xf]
        %v3040 = vld [vmem:[%s3036 + $0xc] sm:$0xf]
        %v3041 = vld [vmem:[%s3036 + $0x10] sm:$0xf]
        %v3042 = vld [vmem:[%s3036 + $0x14] sm:$0xf]
        %v3043 = vld [vmem:[%s3036 + $0x18] sm:$0xf]
        %v3044 = vld [vmem:[%s3036 + $0x1c] sm:$0xf]
        %v3045 = vld [vmem:[%s3036 + $0x20] sm:$0xf]
        %v3046 = vld [vmem:[%s3036 + $0x24] sm:$0xf]
        %v3047 = vld [vmem:[%s3036 + $0x28] sm:$0xf]
        %v3048 = vld [vmem:[%s3036 + $0x2c] sm:$0xf]
        %v3049 = vld [vmem:[%s3036 + $0x30] sm:$0xf]
        %v3050 = vld [vmem:[%s3036 + $0x34] sm:$0xf]
        %v3051 = vld [vmem:[%s3036 + $0x38] sm:$0xf]
        %v3052 = vld [vmem:[%s3036 + $0x3c] sm:$0xf]
        %v3069 = vunpack.c.l.b16 %v3037
        %v3070 = vunpack.c.l.b16 %v3038
        %v3071 = vunpack.c.l.b16 %v3039
        %v3072 = vunpack.c.l.b16 %v3040
        %v3073 = vunpack.c.l.b16 %v3041
        %v3074 = vunpack.c.l.b16 %v3042
        %v3075 = vunpack.c.l.b16 %v3043
        %v3076 = vunpack.c.l.b16 %v3044
        %v3077 = vunpack.c.l.b16 %v3045
        %v3078 = vunpack.c.l.b16 %v3046
        %v3079 = vunpack.c.l.b16 %v3047
        %v3080 = vunpack.c.l.b16 %v3048
        %v3081 = vunpack.c.l.b16 %v3049
        %v3082 = vunpack.c.l.b16 %v3050
        %v3083 = vunpack.c.l.b16 %v3051
        %v3084 = vunpack.c.l.b16 %v3052
        %v3085 = vpack.c.b16 %v3070, %v3069
        %v3086 = vpack.c.b16 %v3072, %v3071
        %v3087 = vpack.c.b16 %v3074, %v3073
        %v3088 = vpack.c.b16 %v3076, %v3075
        %v3089 = vpack.c.b16 %v3078, %v3077
        %v3090 = vpack.c.b16 %v3080, %v3079
        %v3091 = vpack.c.b16 %v3082, %v3081
        %v3092 = vpack.c.b16 %v3084, %v3083
        %3101 = vmatprep.subr.bf16.mxu0 0
        %3102 = vmatpush1.bf16.msra.mxu0 %v3085
        %3103 = vmatprep.subr.bf16.mxu0 0
        %3104 = vmatpush1.bf16.msra.mxu0 %v3086
        %3105 = vmatprep.subr.bf16.mxu0 0
        %3106 = vmatpush1.bf16.msra.mxu0 %v3087
        %3107 = vmatprep.subr.bf16.mxu0 0
        %3108 = vmatpush1.bf16.msra.mxu0 %v3088
        %3109 = vmatprep.subr.bf16.mxu0 0
        %3110 = vmatpush1.bf16.msra.mxu0 %v3089
        %3111 = vmatprep.subr.bf16.mxu0 0
        %3112 = vmatpush1.bf16.msra.mxu0 %v3090
        %3113 = vmatprep.subr.bf16.mxu0 0
        %3114 = vmatpush1.bf16.msra.mxu0 %v3091
        %3115 = vmatprep.subr.bf16.mxu0 0
        %3116 = vmatpush1.bf16.msra.mxu0 %v3092
        %3117 = vmatprep.subr.bf16.mxu0 0
        %3118 = vmatpush1.bf16.msra.mxu0 0
        %3119 = vmatprep.subr.bf16.mxu0 0
        %3120 = vmatpush1.bf16.msra.mxu0 0
        %3121 = vmatprep.subr.bf16.mxu0 0
        %3122 = vmatpush1.bf16.msra.mxu0 0
        %3123 = vmatprep.subr.bf16.mxu0 0
        %3124 = vmatpush1.bf16.msra.mxu0 0
        %3125 = vmatprep.subr.bf16.mxu0 0
        %3126 = vmatpush1.bf16.msra.mxu0 0
        %3127 = vmatprep.subr.bf16.mxu0 0
        %3128 = vmatpush1.bf16.msra.mxu0 0
        %3129 = vmatprep.subr.bf16.mxu0 0
        %3130 = vmatpush1.bf16.msra.mxu0 0
        %3131 = vmatprep.subr.bf16.mxu0 0
        %3132 = vmatpush1.bf16.msra.mxu0 0
        %3133 = vmatprep.mubr.bf16.mxu0 0
        %3134 = vmatmul.mubr.bf16.gmra.mrb[0].mxu0 %v3026
        %v3135 = vpop.f32.mrb[0].mxu0
        %v3136 = vadd.f32 0.0, %v3135
        %v3137 = vpop.f32.mrb[0].mxu0
        %v3138 = vpop.f32.mrb[0].mxu0
        %v3139 = vadd.f32 0.0, %v3138
        %v3140 = vpop.f32.mrb[0].mxu0
        %3141 = vmatprep.mubr.bf16.mxu0 0
        %3142 = vmatmul.mubr.bf16.gmra.mrb[0].mxu0 %v3027
        %v3143 = vpop.f32.mrb[0].mxu0
        %v3144 = vadd.f32 0.0, %v3143
        %v3145 = vpop.f32.mrb[0].mxu0
        %v3146 = vpop.f32.mrb[0].mxu0
        %v3147 = vadd.f32 0.0, %v3146
        %v3148 = vpop.f32.mrb[0].mxu0
        %3149 = vmatprep.mubr.bf16.mxu0 0
        %3150 = vmatmul.mubr.bf16.gmra.mrb[0].mxu0 %v3028
        %v3151 = vpop.f32.mrb[0].mxu0
        %v3152 = vadd.f32 0.0, %v3151
        %v3153 = vpop.f32.mrb[0].mxu0
        %v3154 = vpop.f32.mrb[0].mxu0
        %v3155 = vadd.f32 0.0, %v3154
        %v3156 = vpop.f32.mrb[0].mxu0
        %3157 = vmatprep.mubr.bf16.mxu0 0
        %3158 = vmatmul.mubr.bf16.gmra.mrb[0].mxu0 %v3029
        %v3159 = vpop.f32.mrb[0].mxu0
        %v3160 = vadd.f32 0.0, %v3159
        %v3161 = vpop.f32.mrb[0].mxu0
        %v3162 = vpop.f32.mrb[0].mxu0
        %v3163 = vadd.f32 0.0, %v3162
        %v3164 = vpop.f32.mrb[0].mxu0
        %3165 = vmatprep.mubr.bf16.mxu0 0
        %3166 = vmatmul.mubr.bf16.gmra.mrb[0].mxu0 %v3030
        %v3167 = vpop.f32.mrb[0].mxu0
        %v3168 = vadd.f32 0.0, %v3167
        %v3169 = vpop.f32.mrb[0].mxu0
        %v3170 = vpop.f32.mrb[0].mxu0
        %v3171 = vadd.f32 0.0, %v3170
        %v3172 = vpop.f32.mrb[0].mxu0
        %3173 = vmatprep.mubr.bf16.mxu0 0
        %3174 = vmatmul.mubr.bf16.gmra.mrb[0].mxu0 %v3031
        %v3175 = vpop.f32.mrb[0].mxu0
        %v3176 = vadd.f32 0.0, %v3175
        %v3177 = vpop.f32.mrb[0].mxu0
        %v3178 = vpop.f32.mrb[0].mxu0
        %v3179 = vadd.f32 0.0, %v3178
        %v3180 = vpop.f32.mrb[0].mxu0
        %3181 = vmatprep.mubr.bf16.mxu0 0
        %3182 = vmatmul.mubr.bf16.gmra.mrb[0].mxu0 %v3032
        %v3183 = vpop.f32.mrb[0].mxu0
        %v3184 = vadd.f32 0.0, %v3183
        %v3185 = vpop.f32.mrb[0].mxu0
        %v3186 = vpop.f32.mrb[0].mxu0
        %v3187 = vadd.f32 0.0, %v3186
        %v3188 = vpop.f32.mrb[0].mxu0
        %3189 = vmatprep.mubr.bf16.mxu0 0
        %3190 = vmatmul.mubr.bf16.gmra.mrb[0].mxu0 %v3033
        %v3191 = vpop.f32.mrb[0].mxu0
        %v3192 = vadd.f32 0.0, %v3191
        %v3193 = vpop.f32.mrb[0].mxu0
        %v3194 = vpop.f32.mrb[0].mxu0
        %v3195 = vadd.f32 0.0, %v3194
        %v3196 = vpop.f32.mrb[0].mxu0
        %3197 = vmatprep.mubr.bf16.mxu0 0
        %3198 = vmatmul.mubr.bf16.gmra.mrb[0].mxu0 %v3034
        %v3199 = vpop.f32.mrb[0].mxu0
        %v3200 = vadd.f32 0.0, %v3199
        %v3201 = vpop.f32.mrb[0].mxu0
        %v3202 = vpop.f32.mrb[0].mxu0
        %v3203 = vadd.f32 0.0, %v3202
        %v3204 = vpop.f32.mrb[0].mxu0
        %3205 = vmatprep.mubr.bf16.mxu0 0
        %3206 = vmatmul.mubr.bf16.gmra.mrb[0].mxu0 %v3035
        %v3207 = vpop.f32.mrb[0].mxu0
        %v3208 = vadd.f32 0.0, %v3207
        %v3209 = vpop.f32.mrb[0].mxu0
        %v3210 = vpop.f32.mrb[0].mxu0
        %v3211 = vadd.f32 0.0, %v3210
        %v3212 = vpop.f32.mrb[0].mxu0
        %3213 = vdwg.mxu0
        %v3214 = vadd.f32 %v2950, %v3136
        %v3215 = vadd.f32 %v2951, %v3139
        %v3216 = vadd.f32 %v2952, %v3144
        %v3217 = vadd.f32 %v2953, %v3147
        %v3218 = vadd.f32 %v2954, %v3152
        %v3219 = vadd.f32 %v2955, %v3155
        %v3220 = vadd.f32 %v2956, %v3160
        %v3221 = vadd.f32 %v2957, %v3163
        %v3222 = vadd.f32 %v2958, %v3168
        %v3223 = vadd.f32 %v2959, %v3171
        %v3224 = vadd.f32 %v2960, %v3176
        %v3225 = vadd.f32 %v2961, %v3179
        %v3226 = vadd.f32 %v2962, %v3184
        %v3227 = vadd.f32 %v2963, %v3187
        %v3228 = vadd.f32 %v2964, %v3192
        %v3229 = vadd.f32 %v2965, %v3195
        %v3230 = vadd.f32 %v2966, %v3200
        %v3231 = vadd.f32 %v2967, %v3203
        %v3232 = vadd.f32 %v2968, %v3208
        %v3233 = vadd.f32 %v2969, %v3211
        %v3234 = vld [vmem:[#allocation4 + $0x8] sm:$0xff]
        %v3235 = vld [vmem:[#allocation4 + $0x10] sm:$0xff]
        %v3236 = vld [vmem:[#allocation4 + $0x18] sm:$0xff]
        %v3237 = vld [vmem:[#allocation4 + $0x20] sm:$0xff]
        %v3238 = vld [vmem:[#allocation4 + $0x28] sm:$0xff]
        %v3239 = vld [vmem:[#allocation4 + $0x30] sm:$0xff]
        %v3240 = vld [vmem:[#allocation4 + $0x38] sm:$0xff]
        %v3241 = vld [vmem:[#allocation4 + $0x40] sm:$0xff]
        %v3242 = vld [vmem:[#allocation4 + $0x48] sm:$0xff]
        %v3243 = vld [vmem:[#allocation4 + $0x50] sm:$0xff]
        %s3244 = scalar_lea.vmem %s3, 384
        %v3245 = vld [vmem:[%s3244] sm:$0xf]
        %v3246 = vld [vmem:[%s3244 + $0x4] sm:$0xf]
        %v3247 = vld [vmem:[%s3244 + $0x8] sm:$0xf]
        %v3248 = vld [vmem:[%s3244 + $0xc] sm:$0xf]
        %v3249 = vld [vmem:[%s3244 + $0x10] sm:$0xf]
        %v3250 = vld [vmem:[%s3244 + $0x14] sm:$0xf]
        %v3251 = vld [vmem:[%s3244 + $0x18] sm:$0xf]
        %v3252 = vld [vmem:[%s3244 + $0x1c] sm:$0xf]
        %v3253 = vld [vmem:[%s3244 + $0x20] sm:$0xf]
        %v3254 = vld [vmem:[%s3244 + $0x24] sm:$0xf]
        %v3255 = vld [vmem:[%s3244 + $0x28] sm:$0xf]
        %v3256 = vld [vmem:[%s3244 + $0x2c] sm:$0xf]
        %v3257 = vld [vmem:[%s3244 + $0x30] sm:$0xf]
        %v3258 = vld [vmem:[%s3244 + $0x34] sm:$0xf]
        %v3259 = vld [vmem:[%s3244 + $0x38] sm:$0xf]
        %v3260 = vld [vmem:[%s3244 + $0x3c] sm:$0xf]
        %v3277 = vunpack.c.l.b16 %v3245
        %v3278 = vunpack.c.l.b16 %v3246
        %v3279 = vunpack.c.l.b16 %v3247
        %v3280 = vunpack.c.l.b16 %v3248
        %v3281 = vunpack.c.l.b16 %v3249
        %v3282 = vunpack.c.l.b16 %v3250
        %v3283 = vunpack.c.l.b16 %v3251
        %v3284 = vunpack.c.l.b16 %v3252
        %v3285 = vunpack.c.l.b16 %v3253
        %v3286 = vunpack.c.l.b16 %v3254
        %v3287 = vunpack.c.l.b16 %v3255
        %v3288 = vunpack.c.l.b16 %v3256
        %v3289 = vunpack.c.l.b16 %v3257
        %v3290 = vunpack.c.l.b16 %v3258
        %v3291 = vunpack.c.l.b16 %v3259
        %v3292 = vunpack.c.l.b16 %v3260
        %v3293 = vpack.c.b16 %v3278, %v3277
        %v3294 = vpack.c.b16 %v3280, %v3279
        %v3295 = vpack.c.b16 %v3282, %v3281
        %v3296 = vpack.c.b16 %v3284, %v3283
        %v3297 = vpack.c.b16 %v3286, %v3285
        %v3298 = vpack.c.b16 %v3288, %v3287
        %v3299 = vpack.c.b16 %v3290, %v3289
        %v3300 = vpack.c.b16 %v3292, %v3291
        %3309 = vmatprep.subr.bf16.mxu0 0
        %3310 = vmatpush1.bf16.msra.mxu0 %v3293
        %3311 = vmatprep.subr.bf16.mxu0 0
        %3312 = vmatpush1.bf16.msra.mxu0 %v3294
        %3313 = vmatprep.subr.bf16.mxu0 0
        %3314 = vmatpush1.bf16.msra.mxu0 %v3295
        %3315 = vmatprep.subr.bf16.mxu0 0
        %3316 = vmatpush1.bf16.msra.mxu0 %v3296
        %3317 = vmatprep.subr.bf16.mxu0 0
        %3318 = vmatpush1.bf16.msra.mxu0 %v3297
        %3319 = vmatprep.subr.bf16.mxu0 0
        %3320 = vmatpush1.bf16.msra.mxu0 %v3298
        %3321 = vmatprep.subr.bf16.mxu0 0
        %3322 = vmatpush1.bf16.msra.mxu0 %v3299
        %3323 = vmatprep.subr.bf16.mxu0 0
        %3324 = vmatpush1.bf16.msra.mxu0 %v3300
        %3325 = vmatprep.subr.bf16.mxu0 0
        %3326 = vmatpush1.bf16.msra.mxu0 0
        %3327 = vmatprep.subr.bf16.mxu0 0
        %3328 = vmatpush1.bf16.msra.mxu0 0
        %3329 = vmatprep.subr.bf16.mxu0 0
        %3330 = vmatpush1.bf16.msra.mxu0 0
        %3331 = vmatprep.subr.bf16.mxu0 0
        %3332 = vmatpush1.bf16.msra.mxu0 0
        %3333 = vmatprep.subr.bf16.mxu0 0
        %3334 = vmatpush1.bf16.msra.mxu0 0
        %3335 = vmatprep.subr.bf16.mxu0 0
        %3336 = vmatpush1.bf16.msra.mxu0 0
        %3337 = vmatprep.subr.bf16.mxu0 0
        %3338 = vmatpush1.bf16.msra.mxu0 0
        %3339 = vmatprep.subr.bf16.mxu0 0
        %3340 = vmatpush1.bf16.msra.mxu0 0
        %3341 = vmatprep.mubr.bf16.mxu0 0
        %3342 = vmatmul.mubr.bf16.gmra.mrb[0].mxu0 %v3234
        %v3343 = vpop.f32.mrb[0].mxu0
        %v3344 = vadd.f32 0.0, %v3343
        %v3345 = vpop.f32.mrb[0].mxu0
        %v3346 = vpop.f32.mrb[0].mxu0
        %v3347 = vadd.f32 0.0, %v3346
        %v3348 = vpop.f32.mrb[0].mxu0
        %3349 = vmatprep.mubr.bf16.mxu0 0
        %3350 = vmatmul.mubr.bf16.gmra.mrb[0].mxu0 %v3235
        %v3351 = vpop.f32.mrb[0].mxu0
        %v3352 = vadd.f32 0.0, %v3351
        %v3353 = vpop.f32.mrb[0].mxu0
        %v3354 = vpop.f32.mrb[0].mxu0
        %v3355 = vadd.f32 0.0, %v3354
        %v3356 = vpop.f32.mrb[0].mxu0
        %3357 = vmatprep.mubr.bf16.mxu0 0
        %3358 = vmatmul.mubr.bf16.gmra.mrb[0].mxu0 %v3236
        %v3359 = vpop.f32.mrb[0].mxu0
        %v3360 = vadd.f32 0.0, %v3359
        %v3361 = vpop.f32.mrb[0].mxu0
        %v3362 = vpop.f32.mrb[0].mxu0
        %v3363 = vadd.f32 0.0, %v3362
        %v3364 = vpop.f32.mrb[0].mxu0
        %3365 = vmatprep.mubr.bf16.mxu0 0
        %3366 = vmatmul.mubr.bf16.gmra.mrb[0].mxu0 %v3237
        %v3367 = vpop.f32.mrb[0].mxu0
        %v3368 = vadd.f32 0.0, %v3367
        %v3369 = vpop.f32.mrb[0].mxu0
        %v3370 = vpop.f32.mrb[0].mxu0
        %v3371 = vadd.f32 0.0, %v3370
        %v3372 = vpop.f32.mrb[0].mxu0
        %3373 = vmatprep.mubr.bf16.mxu0 0
        %3374 = vmatmul.mubr.bf16.gmra.mrb[0].mxu0 %v3238
        %v3375 = vpop.f32.mrb[0].mxu0
        %v3376 = vadd.f32 0.0, %v3375
        %v3377 = vpop.f32.mrb[0].mxu0
        %v3378 = vpop.f32.mrb[0].mxu0
        %v3379 = vadd.f32 0.0, %v3378
        %v3380 = vpop.f32.mrb[0].mxu0
        %3381 = vmatprep.mubr.bf16.mxu0 0
        %3382 = vmatmul.mubr.bf16.gmra.mrb[0].mxu0 %v3239
        %v3383 = vpop.f32.mrb[0].mxu0
        %v3384 = vadd.f32 0.0, %v3383
        %v3385 = vpop.f32.mrb[0].mxu0
        %v3386 = vpop.f32.mrb[0].mxu0
        %v3387 = vadd.f32 0.0, %v3386
        %v3388 = vpop.f32.mrb[0].mxu0
        %3389 = vmatprep.mubr.bf16.mxu0 0
        %3390 = vmatmul.mubr.bf16.gmra.mrb[0].mxu0 %v3240
        %v3391 = vpop.f32.mrb[0].mxu0
        %v3392 = vadd.f32 0.0, %v3391
        %v3393 = vpop.f32.mrb[0].mxu0
        %v3394 = vpop.f32.mrb[0].mxu0
        %v3395 = vadd.f32 0.0, %v3394
        %v3396 = vpop.f32.mrb[0].mxu0
        %3397 = vmatprep.mubr.bf16.mxu0 0
        %3398 = vmatmul.mubr.bf16.gmra.mrb[0].mxu0 %v3241
        %v3399 = vpop.f32.mrb[0].mxu0
        %v3400 = vadd.f32 0.0, %v3399
        %v3401 = vpop.f32.mrb[0].mxu0
        %v3402 = vpop.f32.mrb[0].mxu0
        %v3403 = vadd.f32 0.0, %v3402
        %v3404 = vpop.f32.mrb[0].mxu0
        %3405 = vmatprep.mubr.bf16.mxu0 0
        %3406 = vmatmul.mubr.bf16.gmra.mrb[0].mxu0 %v3242
        %v3407 = vpop.f32.mrb[0].mxu0
        %v3408 = vadd.f32 0.0, %v3407
        %v3409 = vpop.f32.mrb[0].mxu0
        %v3410 = vpop.f32.mrb[0].mxu0
        %v3411 = vadd.f32 0.0, %v3410
        %v3412 = vpop.f32.mrb[0].mxu0
        %3413 = vmatprep.mubr.bf16.mxu0 0
        %3414 = vmatmul.mubr.bf16.gmra.mrb[0].mxu0 %v3243
        %v3415 = vpop.f32.mrb[0].mxu0
        %v3416 = vadd.f32 0.0, %v3415
        %v3417 = vpop.f32.mrb[0].mxu0
        %v3418 = vpop.f32.mrb[0].mxu0
        %v3419 = vadd.f32 0.0, %v3418
        %v3420 = vpop.f32.mrb[0].mxu0
        %3421 = vdwg.mxu0
        %v3422 = vadd.f32 %v3214, %v3344
        %v3423 = vadd.f32 %v3215, %v3347
        %v3424 = vadd.f32 %v3216, %v3352
        %v3425 = vadd.f32 %v3217, %v3355
        %v3426 = vadd.f32 %v3218, %v3360
        %v3427 = vadd.f32 %v3219, %v3363
        %v3428 = vadd.f32 %v3220, %v3368
        %v3429 = vadd.f32 %v3221, %v3371
        %v3430 = vadd.f32 %v3222, %v3376
        %v3431 = vadd.f32 %v3223, %v3379
        %v3432 = vadd.f32 %v3224, %v3384
        %v3433 = vadd.f32 %v3225, %v3387
        %v3434 = vadd.f32 %v3226, %v3392
        %v3435 = vadd.f32 %v3227, %v3395
        %v3436 = vadd.f32 %v3228, %v3400
        %v3437 = vadd.f32 %v3229, %v3403
        %v3438 = vadd.f32 %v3230, %v3408
        %v3439 = vadd.f32 %v3231, %v3411
        %v3440 = vadd.f32 %v3232, %v3416
        %v3441 = vadd.f32 %v3233, %v3419
        %v3442 = vld [vmem:[#allocation4 + $0x10] sm:$0xff]
        %v3443 = vld [vmem:[#allocation4 + $0x18] sm:$0xff]
        %v3444 = vld [vmem:[#allocation4 + $0x20] sm:$0xff]
        %v3445 = vld [vmem:[#allocation4 + $0x28] sm:$0xff]
        %v3446 = vld [vmem:[#allocation4 + $0x30] sm:$0xff]
        %v3447 = vld [vmem:[#allocation4 + $0x38] sm:$0xff]
        %v3448 = vld [vmem:[#allocation4 + $0x40] sm:$0xff]
        %v3449 = vld [vmem:[#allocation4 + $0x48] sm:$0xff]
        %v3450 = vld [vmem:[#allocation4 + $0x50] sm:$0xff]
        %v3451 = vld [vmem:[#allocation4 + $0x58] sm:$0xff]
        %s3452 = scalar_lea.vmem %s3, 704
        %v3453 = vld [vmem:[%s3452] sm:$0xf]
        %v3454 = vld [vmem:[%s3452 + $0x4] sm:$0xf]
        %v3455 = vld [vmem:[%s3452 + $0x8] sm:$0xf]
        %v3456 = vld [vmem:[%s3452 + $0xc] sm:$0xf]
        %v3457 = vld [vmem:[%s3452 + $0x10] sm:$0xf]
        %v3458 = vld [vmem:[%s3452 + $0x14] sm:$0xf]
        %v3459 = vld [vmem:[%s3452 + $0x18] sm:$0xf]
        %v3460 = vld [vmem:[%s3452 + $0x1c] sm:$0xf]
        %v3461 = vld [vmem:[%s3452 + $0x20] sm:$0xf]
        %v3462 = vld [vmem:[%s3452 + $0x24] sm:$0xf]
        %v3463 = vld [vmem:[%s3452 + $0x28] sm:$0xf]
        %v3464 = vld [vmem:[%s3452 + $0x2c] sm:$0xf]
        %v3465 = vld [vmem:[%s3452 + $0x30] sm:$0xf]
        %v3466 = vld [vmem:[%s3452 + $0x34] sm:$0xf]
        %v3467 = vld [vmem:[%s3452 + $0x38] sm:$0xf]
        %v3468 = vld [vmem:[%s3452 + $0x3c] sm:$0xf]
        %v3485 = vunpack.c.l.b16 %v3453
        %v3486 = vunpack.c.l.b16 %v3454
        %v3487 = vunpack.c.l.b16 %v3455
        %v3488 = vunpack.c.l.b16 %v3456
        %v3489 = vunpack.c.l.b16 %v3457
        %v3490 = vunpack.c.l.b16 %v3458
        %v3491 = vunpack.c.l.b16 %v3459
        %v3492 = vunpack.c.l.b16 %v3460
        %v3493 = vunpack.c.l.b16 %v3461
        %v3494 = vunpack.c.l.b16 %v3462
        %v3495 = vunpack.c.l.b16 %v3463
        %v3496 = vunpack.c.l.b16 %v3464
        %v3497 = vunpack.c.l.b16 %v3465
        %v3498 = vunpack.c.l.b16 %v3466
        %v3499 = vunpack.c.l.b16 %v3467
        %v3500 = vunpack.c.l.b16 %v3468
        %v3501 = vpack.c.b16 %v3486, %v3485
        %v3502 = vpack.c.b16 %v3488, %v3487
        %v3503 = vpack.c.b16 %v3490, %v3489
        %v3504 = vpack.c.b16 %v3492, %v3491
        %v3505 = vpack.c.b16 %v3494, %v3493
        %v3506 = vpack.c.b16 %v3496, %v3495
        %v3507 = vpack.c.b16 %v3498, %v3497
        %v3508 = vpack.c.b16 %v3500, %v3499
        %3517 = vmatprep.subr.bf16.mxu0 0
        %3518 = vmatpush1.bf16.msra.mxu0 %v3501
        %3519 = vmatprep.subr.bf16.mxu0 0
        %3520 = vmatpush1.bf16.msra.mxu0 %v3502
        %3521 = vmatprep.subr.bf16.mxu0 0
        %3522 = vmatpush1.bf16.msra.mxu0 %v3503
        %3523 = vmatprep.subr.bf16.mxu0 0
        %3524 = vmatpush1.bf16.msra.mxu0 %v3504
        %3525 = vmatprep.subr.bf16.mxu0 0
        %3526 = vmatpush1.bf16.msra.mxu0 %v3505
        %3527 = vmatprep.subr.bf16.mxu0 0
        %3528 = vmatpush1.bf16.msra.mxu0 %v3506
        %3529 = vmatprep.subr.bf16.mxu0 0
        %3530 = vmatpush1.bf16.msra.mxu0 %v3507
        %3531 = vmatprep.subr.bf16.mxu0 0
        %3532 = vmatpush1.bf16.msra.mxu0 %v3508
        %3533 = vmatprep.subr.bf16.mxu0 0
        %3534 = vmatpush1.bf16.msra.mxu0 0
        %3535 = vmatprep.subr.bf16.mxu0 0
        %3536 = vmatpush1.bf16.msra.mxu0 0
        %3537 = vmatprep.subr.bf16.mxu0 0
        %3538 = vmatpush1.bf16.msra.mxu0 0
        %3539 = vmatprep.subr.bf16.mxu0 0
        %3540 = vmatpush1.bf16.msra.mxu0 0
        %3541 = vmatprep.subr.bf16.mxu0 0
        %3542 = vmatpush1.bf16.msra.mxu0 0
        %3543 = vmatprep.subr.bf16.mxu0 0
        %3544 = vmatpush1.bf16.msra.mxu0 0
        %3545 = vmatprep.subr.bf16.mxu0 0
        %3546 = vmatpush1.bf16.msra.mxu0 0
        %3547 = vmatprep.subr.bf16.mxu0 0
        %3548 = vmatpush1.bf16.msra.mxu0 0
        %3549 = vmatprep.mubr.bf16.mxu0 0
        %3550 = vmatmul.mubr.bf16.gmra.mrb[0].mxu0 %v3442
        %v3551 = vpop.f32.mrb[0].mxu0
        %v3552 = vadd.f32 0.0, %v3551
        %v3553 = vpop.f32.mrb[0].mxu0
        %v3554 = vpop.f32.mrb[0].mxu0
        %v3555 = vadd.f32 0.0, %v3554
        %v3556 = vpop.f32.mrb[0].mxu0
        %3557 = vmatprep.mubr.bf16.mxu0 0
        %3558 = vmatmul.mubr.bf16.gmra.mrb[0].mxu0 %v3443
        %v3559 = vpop.f32.mrb[0].mxu0
        %v3560 = vadd.f32 0.0, %v3559
        %v3561 = vpop.f32.mrb[0].mxu0
        %v3562 = vpop.f32.mrb[0].mxu0
        %v3563 = vadd.f32 0.0, %v3562
        %v3564 = vpop.f32.mrb[0].mxu0
        %3565 = vmatprep.mubr.bf16.mxu0 0
        %3566 = vmatmul.mubr.bf16.gmra.mrb[0].mxu0 %v3444
        %v3567 = vpop.f32.mrb[0].mxu0
        %v3568 = vadd.f32 0.0, %v3567
        %v3569 = vpop.f32.mrb[0].mxu0
        %v3570 = vpop.f32.mrb[0].mxu0
        %v3571 = vadd.f32 0.0, %v3570
        %v3572 = vpop.f32.mrb[0].mxu0
        %3573 = vmatprep.mubr.bf16.mxu0 0
        %3574 = vmatmul.mubr.bf16.gmra.mrb[0].mxu0 %v3445
        %v3575 = vpop.f32.mrb[0].mxu0
        %v3576 = vadd.f32 0.0, %v3575
        %v3577 = vpop.f32.mrb[0].mxu0
        %v3578 = vpop.f32.mrb[0].mxu0
        %v3579 = vadd.f32 0.0, %v3578
        %v3580 = vpop.f32.mrb[0].mxu0
        %3581 = vmatprep.mubr.bf16.mxu0 0
        %3582 = vmatmul.mubr.bf16.gmra.mrb[0].mxu0 %v3446
        %v3583 = vpop.f32.mrb[0].mxu0
        %v3584 = vadd.f32 0.0, %v3583
        %v3585 = vpop.f32.mrb[0].mxu0
        %v3586 = vpop.f32.mrb[0].mxu0
        %v3587 = vadd.f32 0.0, %v3586
        %v3588 = vpop.f32.mrb[0].mxu0
        %3589 = vmatprep.mubr.bf16.mxu0 0
        %3590 = vmatmul.mubr.bf16.gmra.mrb[0].mxu0 %v3447
        %v3591 = vpop.f32.mrb[0].mxu0
        %v3592 = vadd.f32 0.0, %v3591
        %v3593 = vpop.f32.mrb[0].mxu0
        %v3594 = vpop.f32.mrb[0].mxu0
        %v3595 = vadd.f32 0.0, %v3594
        %v3596 = vpop.f32.mrb[0].mxu0
        %3597 = vmatprep.mubr.bf16.mxu0 0
        %3598 = vmatmul.mubr.bf16.gmra.mrb[0].mxu0 %v3448
        %v3599 = vpop.f32.mrb[0].mxu0
        %v3600 = vadd.f32 0.0, %v3599
        %v3601 = vpop.f32.mrb[0].mxu0
        %v3602 = vpop.f32.mrb[0].mxu0
        %v3603 = vadd.f32 0.0, %v3602
        %v3604 = vpop.f32.mrb[0].mxu0
        %3605 = vmatprep.mubr.bf16.mxu0 0
        %3606 = vmatmul.mubr.bf16.gmra.mrb[0].mxu0 %v3449
        %v3607 = vpop.f32.mrb[0].mxu0
        %v3608 = vadd.f32 0.0, %v3607
        %v3609 = vpop.f32.mrb[0].mxu0
        %v3610 = vpop.f32.mrb[0].mxu0
        %v3611 = vadd.f32 0.0, %v3610
        %v3612 = vpop.f32.mrb[0].mxu0
        %3613 = vmatprep.mubr.bf16.mxu0 0
        %3614 = vmatmul.mubr.bf16.gmra.mrb[0].mxu0 %v3450
        %v3615 = vpop.f32.mrb[0].mxu0
        %v3616 = vadd.f32 0.0, %v3615
        %v3617 = vpop.f32.mrb[0].mxu0
        %v3618 = vpop.f32.mrb[0].mxu0
        %v3619 = vadd.f32 0.0, %v3618
        %v3620 = vpop.f32.mrb[0].mxu0
        %3621 = vmatprep.mubr.bf16.mxu0 0
        %3622 = vmatmul.mubr.bf16.gmra.mrb[0].mxu0 %v3451
        %v3623 = vpop.f32.mrb[0].mxu0
        %v3624 = vadd.f32 0.0, %v3623
        %v3625 = vpop.f32.mrb[0].mxu0
        %v3626 = vpop.f32.mrb[0].mxu0
        %v3627 = vadd.f32 0.0, %v3626
        %v3628 = vpop.f32.mrb[0].mxu0
        %3629 = vdwg.mxu0
        %v3630 = vadd.f32 %v3422, %v3552
        %v3631 = vadd.f32 %v3423, %v3555
        %v3632 = vadd.f32 %v3424, %v3560
        %v3633 = vadd.f32 %v3425, %v3563
        %v3634 = vadd.f32 %v3426, %v3568
        %v3635 = vadd.f32 %v3427, %v3571
        %v3636 = vadd.f32 %v3428, %v3576
        %v3637 = vadd.f32 %v3429, %v3579
        %v3638 = vadd.f32 %v3430, %v3584
        %v3639 = vadd.f32 %v3431, %v3587
        %v3640 = vadd.f32 %v3432, %v3592
        %v3641 = vadd.f32 %v3433, %v3595
        %v3642 = vadd.f32 %v3434, %v3600
        %v3643 = vadd.f32 %v3435, %v3603
        %v3644 = vadd.f32 %v3436, %v3608
        %v3645 = vadd.f32 %v3437, %v3611
        %v3646 = vadd.f32 %v3438, %v3616
        %v3647 = vadd.f32 %v3439, %v3619
        %v3648 = vadd.f32 %v3440, %v3624
        %v3649 = vadd.f32 %v3441, %v3627
        %v3650 = vld [vmem:[#allocation4 + $0x18] sm:$0xff]
        %v3651 = vld [vmem:[#allocation4 + $0x20] sm:$0xff]
        %v3652 = vld [vmem:[#allocation4 + $0x28] sm:$0xff]
        %v3653 = vld [vmem:[#allocation4 + $0x30] sm:$0xff]
        %v3654 = vld [vmem:[#allocation4 + $0x38] sm:$0xff]
        %v3655 = vld [vmem:[#allocation4 + $0x40] sm:$0xff]
        %v3656 = vld [vmem:[#allocation4 + $0x48] sm:$0xff]
        %v3657 = vld [vmem:[#allocation4 + $0x50] sm:$0xff]
        %v3658 = vld [vmem:[#allocation4 + $0x58] sm:$0xff]
        %v3659 = vld [vmem:[#allocation4 + $0x60] sm:$0xff]
        %s3660 = scalar_lea.vmem %s3, 1024
        %v3661 = vld [vmem:[%s3660] sm:$0xf]
        %v3662 = vld [vmem:[%s3660 + $0x4] sm:$0xf]
        %v3663 = vld [vmem:[%s3660 + $0x8] sm:$0xf]
        %v3664 = vld [vmem:[%s3660 + $0xc] sm:$0xf]
        %v3665 = vld [vmem:[%s3660 + $0x10] sm:$0xf]
        %v3666 = vld [vmem:[%s3660 + $0x14] sm:$0xf]
        %v3667 = vld [vmem:[%s3660 + $0x18] sm:$0xf]
        %v3668 = vld [vmem:[%s3660 + $0x1c] sm:$0xf]
        %v3669 = vld [vmem:[%s3660 + $0x20] sm:$0xf]
        %v3670 = vld [vmem:[%s3660 + $0x24] sm:$0xf]
        %v3671 = vld [vmem:[%s3660 + $0x28] sm:$0xf]
        %v3672 = vld [vmem:[%s3660 + $0x2c] sm:$0xf]
        %v3673 = vld [vmem:[%s3660 + $0x30] sm:$0xf]
        %v3674 = vld [vmem:[%s3660 + $0x34] sm:$0xf]
        %v3675 = vld [vmem:[%s3660 + $0x38] sm:$0xf]
        %v3676 = vld [vmem:[%s3660 + $0x3c] sm:$0xf]
        %v3693 = vunpack.c.l.b16 %v3661
        %v3694 = vunpack.c.l.b16 %v3662
        %v3695 = vunpack.c.l.b16 %v3663
        %v3696 = vunpack.c.l.b16 %v3664
        %v3697 = vunpack.c.l.b16 %v3665
        %v3698 = vunpack.c.l.b16 %v3666
        %v3699 = vunpack.c.l.b16 %v3667
        %v3700 = vunpack.c.l.b16 %v3668
        %v3701 = vunpack.c.l.b16 %v3669
        %v3702 = vunpack.c.l.b16 %v3670
        %v3703 = vunpack.c.l.b16 %v3671
        %v3704 = vunpack.c.l.b16 %v3672
        %v3705 = vunpack.c.l.b16 %v3673
        %v3706 = vunpack.c.l.b16 %v3674
        %v3707 = vunpack.c.l.b16 %v3675
        %v3708 = vunpack.c.l.b16 %v3676
        %v3709 = vpack.c.b16 %v3694, %v3693
        %v3710 = vpack.c.b16 %v3696, %v3695
        %v3711 = vpack.c.b16 %v3698, %v3697
        %v3712 = vpack.c.b16 %v3700, %v3699
        %v3713 = vpack.c.b16 %v3702, %v3701
        %v3714 = vpack.c.b16 %v3704, %v3703
        %v3715 = vpack.c.b16 %v3706, %v3705
        %v3716 = vpack.c.b16 %v3708, %v3707
        %3725 = vmatprep.subr.bf16.mxu0 0
        %3726 = vmatpush1.bf16.msra.mxu0 %v3709
        %3727 = vmatprep.subr.bf16.mxu0 0
        %3728 = vmatpush1.bf16.msra.mxu0 %v3710
        %3729 = vmatprep.subr.bf16.mxu0 0
        %3730 = vmatpush1.bf16.msra.mxu0 %v3711
        %3731 = vmatprep.subr.bf16.mxu0 0
        %3732 = vmatpush1.bf16.msra.mxu0 %v3712
        %3733 = vmatprep.subr.bf16.mxu0 0
        %3734 = vmatpush1.bf16.msra.mxu0 %v3713
        %3735 = vmatprep.subr.bf16.mxu0 0
        %3736 = vmatpush1.bf16.msra.mxu0 %v3714
        %3737 = vmatprep.subr.bf16.mxu0 0
        %3738 = vmatpush1.bf16.msra.mxu0 %v3715
        %3739 = vmatprep.subr.bf16.mxu0 0
        %3740 = vmatpush1.bf16.msra.mxu0 %v3716
        %3741 = vmatprep.subr.bf16.mxu0 0
        %3742 = vmatpush1.bf16.msra.mxu0 0
        %3743 = vmatprep.subr.bf16.mxu0 0
        %3744 = vmatpush1.bf16.msra.mxu0 0
        %3745 = vmatprep.subr.bf16.mxu0 0
        %3746 = vmatpush1.bf16.msra.mxu0 0
        %3747 = vmatprep.subr.bf16.mxu0 0
        %3748 = vmatpush1.bf16.msra.mxu0 0
        %3749 = vmatprep.subr.bf16.mxu0 0
        %3750 = vmatpush1.bf16.msra.mxu0 0
        %3751 = vmatprep.subr.bf16.mxu0 0
        %3752 = vmatpush1.bf16.msra.mxu0 0
        %3753 = vmatprep.subr.bf16.mxu0 0
        %3754 = vmatpush1.bf16.msra.mxu0 0
        %3755 = vmatprep.subr.bf16.mxu0 0
        %3756 = vmatpush1.bf16.msra.mxu0 0
        %3757 = vmatprep.mubr.bf16.mxu0 0
        %3758 = vmatmul.mubr.bf16.gmra.mrb[0].mxu0 %v3650
        %v3759 = vpop.f32.mrb[0].mxu0
        %v3760 = vadd.f32 0.0, %v3759
        %v3761 = vpop.f32.mrb[0].mxu0
        %v3762 = vpop.f32.mrb[0].mxu0
        %v3763 = vadd.f32 0.0, %v3762
        %v3764 = vpop.f32.mrb[0].mxu0
        %3765 = vmatprep.mubr.bf16.mxu0 0
        %3766 = vmatmul.mubr.bf16.gmra.mrb[0].mxu0 %v3651
        %v3767 = vpop.f32.mrb[0].mxu0
        %v3768 = vadd.f32 0.0, %v3767
        %v3769 = vpop.f32.mrb[0].mxu0
        %v3770 = vpop.f32.mrb[0].mxu0
        %v3771 = vadd.f32 0.0, %v3770
        %v3772 = vpop.f32.mrb[0].mxu0
        %3773 = vmatprep.mubr.bf16.mxu0 0
        %3774 = vmatmul.mubr.bf16.gmra.mrb[0].mxu0 %v3652
        %v3775 = vpop.f32.mrb[0].mxu0
        %v3776 = vadd.f32 0.0, %v3775
        %v3777 = vpop.f32.mrb[0].mxu0
        %v3778 = vpop.f32.mrb[0].mxu0
        %v3779 = vadd.f32 0.0, %v3778
        %v3780 = vpop.f32.mrb[0].mxu0
        %3781 = vmatprep.mubr.bf16.mxu0 0
        %3782 = vmatmul.mubr.bf16.gmra.mrb[0].mxu0 %v3653
        %v3783 = vpop.f32.mrb[0].mxu0
        %v3784 = vadd.f32 0.0, %v3783
        %v3785 = vpop.f32.mrb[0].mxu0
        %v3786 = vpop.f32.mrb[0].mxu0
        %v3787 = vadd.f32 0.0, %v3786
        %v3788 = vpop.f32.mrb[0].mxu0
        %3789 = vmatprep.mubr.bf16.mxu0 0
        %3790 = vmatmul.mubr.bf16.gmra.mrb[0].mxu0 %v3654
        %v3791 = vpop.f32.mrb[0].mxu0
        %v3792 = vadd.f32 0.0, %v3791
        %v3793 = vpop.f32.mrb[0].mxu0
        %v3794 = vpop.f32.mrb[0].mxu0
        %v3795 = vadd.f32 0.0, %v3794
        %v3796 = vpop.f32.mrb[0].mxu0
        %3797 = vmatprep.mubr.bf16.mxu0 0
        %3798 = vmatmul.mubr.bf16.gmra.mrb[0].mxu0 %v3655
        %v3799 = vpop.f32.mrb[0].mxu0
        %v3800 = vadd.f32 0.0, %v3799
        %v3801 = vpop.f32.mrb[0].mxu0
        %v3802 = vpop.f32.mrb[0].mxu0
        %v3803 = vadd.f32 0.0, %v3802
        %v3804 = vpop.f32.mrb[0].mxu0
        %3805 = vmatprep.mubr.bf16.mxu0 0
        %3806 = vmatmul.mubr.bf16.gmra.mrb[0].mxu0 %v3656
        %v3807 = vpop.f32.mrb[0].mxu0
        %v3808 = vadd.f32 0.0, %v3807
        %v3809 = vpop.f32.mrb[0].mxu0
        %v3810 = vpop.f32.mrb[0].mxu0
        %v3811 = vadd.f32 0.0, %v3810
        %v3812 = vpop.f32.mrb[0].mxu0
        %3813 = vmatprep.mubr.bf16.mxu0 0
        %3814 = vmatmul.mubr.bf16.gmra.mrb[0].mxu0 %v3657
        %v3815 = vpop.f32.mrb[0].mxu0
        %v3816 = vadd.f32 0.0, %v3815
        %v3817 = vpop.f32.mrb[0].mxu0
        %v3818 = vpop.f32.mrb[0].mxu0
        %v3819 = vadd.f32 0.0, %v3818
        %v3820 = vpop.f32.mrb[0].mxu0
        %3821 = vmatprep.mubr.bf16.mxu0 0
        %3822 = vmatmul.mubr.bf16.gmra.mrb[0].mxu0 %v3658
        %v3823 = vpop.f32.mrb[0].mxu0
        %v3824 = vadd.f32 0.0, %v3823
        %v3825 = vpop.f32.mrb[0].mxu0
        %v3826 = vpop.f32.mrb[0].mxu0
        %v3827 = vadd.f32 0.0, %v3826
        %v3828 = vpop.f32.mrb[0].mxu0
        %3829 = vmatprep.mubr.bf16.mxu0 0
        %3830 = vmatmul.mubr.bf16.gmra.mrb[0].mxu0 %v3659
        %v3831 = vpop.f32.mrb[0].mxu0
        %v3832 = vadd.f32 0.0, %v3831
        %v3833 = vpop.f32.mrb[0].mxu0
        %v3834 = vpop.f32.mrb[0].mxu0
        %v3835 = vadd.f32 0.0, %v3834
        %v3836 = vpop.f32.mrb[0].mxu0
        %3837 = vdwg.mxu0
        %v3838 = vadd.f32 %v3630, %v3760
        %v3839 = vadd.f32 %v3631, %v3763
        %v3840 = vadd.f32 %v3632, %v3768
        %v3841 = vadd.f32 %v3633, %v3771
        %v3842 = vadd.f32 %v3634, %v3776
        %v3843 = vadd.f32 %v3635, %v3779
        %v3844 = vadd.f32 %v3636, %v3784
        %v3845 = vadd.f32 %v3637, %v3787
        %v3846 = vadd.f32 %v3638, %v3792
        %v3847 = vadd.f32 %v3639, %v3795
        %v3848 = vadd.f32 %v3640, %v3800
        %v3849 = vadd.f32 %v3641, %v3803
        %v3850 = vadd.f32 %v3642, %v3808
        %v3851 = vadd.f32 %v3643, %v3811
        %v3852 = vadd.f32 %v3644, %v3816
        %v3853 = vadd.f32 %v3645, %v3819
        %v3854 = vadd.f32 %v3646, %v3824
        %v3855 = vadd.f32 %v3647, %v3827
        %v3856 = vadd.f32 %v3648, %v3832
        %v3857 = vadd.f32 %v3649, %v3835
        %v3858 = vld [vmem:[#allocation4 + $0x20] sm:$0xff]
        %v3859 = vld [vmem:[#allocation4 + $0x28] sm:$0xff]
        %v3860 = vld [vmem:[#allocation4 + $0x30] sm:$0xff]
        %v3861 = vld [vmem:[#allocation4 + $0x38] sm:$0xff]
        %v3862 = vld [vmem:[#allocation4 + $0x40] sm:$0xff]
        %v3863 = vld [vmem:[#allocation4 + $0x48] sm:$0xff]
        %v3864 = vld [vmem:[#allocation4 + $0x50] sm:$0xff]
        %v3865 = vld [vmem:[#allocation4 + $0x58] sm:$0xff]
        %v3866 = vld [vmem:[#allocation4 + $0x60] sm:$0xff]
        %v3867 = vld [vmem:[#allocation4 + $0x68] sm:$0xff]
        %s3868 = scalar_lea.vmem %s3, 1344
        %v3869 = vld [vmem:[%s3868] sm:$0xf]
        %v3870 = vld [vmem:[%s3868 + $0x4] sm:$0xf]
        %v3871 = vld [vmem:[%s3868 + $0x8] sm:$0xf]
        %v3872 = vld [vmem:[%s3868 + $0xc] sm:$0xf]
        %v3873 = vld [vmem:[%s3868 + $0x10] sm:$0xf]
        %v3874 = vld [vmem:[%s3868 + $0x14] sm:$0xf]
        %v3875 = vld [vmem:[%s3868 + $0x18] sm:$0xf]
        %v3876 = vld [vmem:[%s3868 + $0x1c] sm:$0xf]
        %v3877 = vld [vmem:[%s3868 + $0x20] sm:$0xf]
        %v3878 = vld [vmem:[%s3868 + $0x24] sm:$0xf]
        %v3879 = vld [vmem:[%s3868 + $0x28] sm:$0xf]
        %v3880 = vld [vmem:[%s3868 + $0x2c] sm:$0xf]
        %v3881 = vld [vmem:[%s3868 + $0x30] sm:$0xf]
        %v3882 = vld [vmem:[%s3868 + $0x34] sm:$0xf]
        %v3883 = vld [vmem:[%s3868 + $0x38] sm:$0xf]
        %v3884 = vld [vmem:[%s3868 + $0x3c] sm:$0xf]
        %v3901 = vunpack.c.l.b16 %v3869
        %v3902 = vunpack.c.l.b16 %v3870
        %v3903 = vunpack.c.l.b16 %v3871
        %v3904 = vunpack.c.l.b16 %v3872
        %v3905 = vunpack.c.l.b16 %v3873
        %v3906 = vunpack.c.l.b16 %v3874
        %v3907 = vunpack.c.l.b16 %v3875
        %v3908 = vunpack.c.l.b16 %v3876
        %v3909 = vunpack.c.l.b16 %v3877
        %v3910 = vunpack.c.l.b16 %v3878
        %v3911 = vunpack.c.l.b16 %v3879
        %v3912 = vunpack.c.l.b16 %v3880
        %v3913 = vunpack.c.l.b16 %v3881
        %v3914 = vunpack.c.l.b16 %v3882
        %v3915 = vunpack.c.l.b16 %v3883
        %v3916 = vunpack.c.l.b16 %v3884
        %v3917 = vpack.c.b16 %v3902, %v3901
        %v3918 = vpack.c.b16 %v3904, %v3903
        %v3919 = vpack.c.b16 %v3906, %v3905
        %v3920 = vpack.c.b16 %v3908, %v3907
        %v3921 = vpack.c.b16 %v3910, %v3909
        %v3922 = vpack.c.b16 %v3912, %v3911
        %v3923 = vpack.c.b16 %v3914, %v3913
        %v3924 = vpack.c.b16 %v3916, %v3915
        %3933 = vmatprep.subr.bf16.mxu0 0
        %3934 = vmatpush1.bf16.msra.mxu0 %v3917
        %3935 = vmatprep.subr.bf16.mxu0 0
        %3936 = vmatpush1.bf16.msra.mxu0 %v3918
        %3937 = vmatprep.subr.bf16.mxu0 0
        %3938 = vmatpush1.bf16.msra.mxu0 %v3919
        %3939 = vmatprep.subr.bf16.mxu0 0
        %3940 = vmatpush1.bf16.msra.mxu0 %v3920
        %3941 = vmatprep.subr.bf16.mxu0 0
        %3942 = vmatpush1.bf16.msra.mxu0 %v3921
        %3943 = vmatprep.subr.bf16.mxu0 0
        %3944 = vmatpush1.bf16.msra.mxu0 %v3922
        %3945 = vmatprep.subr.bf16.mxu0 0
        %3946 = vmatpush1.bf16.msra.mxu0 %v3923
        %3947 = vmatprep.subr.bf16.mxu0 0
        %3948 = vmatpush1.bf16.msra.mxu0 %v3924
        %3949 = vmatprep.subr.bf16.mxu0 0
        %3950 = vmatpush1.bf16.msra.mxu0 0
        %3951 = vmatprep.subr.bf16.mxu0 0
        %3952 = vmatpush1.bf16.msra.mxu0 0
        %3953 = vmatprep.subr.bf16.mxu0 0
        %3954 = vmatpush1.bf16.msra.mxu0 0
        %3955 = vmatprep.subr.bf16.mxu0 0
        %3956 = vmatpush1.bf16.msra.mxu0 0
        %3957 = vmatprep.subr.bf16.mxu0 0
        %3958 = vmatpush1.bf16.msra.mxu0 0
        %3959 = vmatprep.subr.bf16.mxu0 0
        %3960 = vmatpush1.bf16.msra.mxu0 0
        %3961 = vmatprep.subr.bf16.mxu0 0
        %3962 = vmatpush1.bf16.msra.mxu0 0
        %3963 = vmatprep.subr.bf16.mxu0 0
        %3964 = vmatpush1.bf16.msra.mxu0 0
        %3965 = vmatprep.mubr.bf16.mxu0 0
        %3966 = vmatmul.mubr.bf16.gmra.mrb[0].mxu0 %v3858
        %v3967 = vpop.f32.mrb[0].mxu0
        %v3968 = vadd.f32 0.0, %v3967
        %v3969 = vpop.f32.mrb[0].mxu0
        %v3970 = vpop.f32.mrb[0].mxu0
        %v3971 = vadd.f32 0.0, %v3970
        %v3972 = vpop.f32.mrb[0].mxu0
        %3973 = vmatprep.mubr.bf16.mxu0 0
        %3974 = vmatmul.mubr.bf16.gmra.mrb[0].mxu0 %v3859
        %v3975 = vpop.f32.mrb[0].mxu0
        %v3976 = vadd.f32 0.0, %v3975
        %v3977 = vpop.f32.mrb[0].mxu0
        %v3978 = vpop.f32.mrb[0].mxu0
        %v3979 = vadd.f32 0.0, %v3978
        %v3980 = vpop.f32.mrb[0].mxu0
        %3981 = vmatprep.mubr.bf16.mxu0 0
        %3982 = vmatmul.mubr.bf16.gmra.mrb[0].mxu0 %v3860
        %v3983 = vpop.f32.mrb[0].mxu0
        %v3984 = vadd.f32 0.0, %v3983
        %v3985 = vpop.f32.mrb[0].mxu0
        %v3986 = vpop.f32.mrb[0].mxu0
        %v3987 = vadd.f32 0.0, %v3986
        %v3988 = vpop.f32.mrb[0].mxu0
        %3989 = vmatprep.mubr.bf16.mxu0 0
        %3990 = vmatmul.mubr.bf16.gmra.mrb[0].mxu0 %v3861
        %v3991 = vpop.f32.mrb[0].mxu0
        %v3992 = vadd.f32 0.0, %v3991
        %v3993 = vpop.f32.mrb[0].mxu0
        %v3994 = vpop.f32.mrb[0].mxu0
        %v3995 = vadd.f32 0.0, %v3994
        %v3996 = vpop.f32.mrb[0].mxu0
        %3997 = vmatprep.mubr.bf16.mxu0 0
        %3998 = vmatmul.mubr.bf16.gmra.mrb[0].mxu0 %v3862
        %v3999 = vpop.f32.mrb[0].mxu0
        %v4000 = vadd.f32 0.0, %v3999
        %v4001 = vpop.f32.mrb[0].mxu0
        %v4002 = vpop.f32.mrb[0].mxu0
        %v4003 = vadd.f32 0.0, %v4002
        %v4004 = vpop.f32.mrb[0].mxu0
        %4005 = vmatprep.mubr.bf16.mxu0 0
        %4006 = vmatmul.mubr.bf16.gmra.mrb[0].mxu0 %v3863
        %v4007 = vpop.f32.mrb[0].mxu0
        %v4008 = vadd.f32 0.0, %v4007
        %v4009 = vpop.f32.mrb[0].mxu0
        %v4010 = vpop.f32.mrb[0].mxu0
        %v4011 = vadd.f32 0.0, %v4010
        %v4012 = vpop.f32.mrb[0].mxu0
        %4013 = vmatprep.mubr.bf16.mxu0 0
        %4014 = vmatmul.mubr.bf16.gmra.mrb[0].mxu0 %v3864
        %v4015 = vpop.f32.mrb[0].mxu0
        %v4016 = vadd.f32 0.0, %v4015
        %v4017 = vpop.f32.mrb[0].mxu0
        %v4018 = vpop.f32.mrb[0].mxu0
        %v4019 = vadd.f32 0.0, %v4018
        %v4020 = vpop.f32.mrb[0].mxu0
        %4021 = vmatprep.mubr.bf16.mxu0 0
        %4022 = vmatmul.mubr.bf16.gmra.mrb[0].mxu0 %v3865
        %v4023 = vpop.f32.mrb[0].mxu0
        %v4024 = vadd.f32 0.0, %v4023
        %v4025 = vpop.f32.mrb[0].mxu0
        %v4026 = vpop.f32.mrb[0].mxu0
        %v4027 = vadd.f32 0.0, %v4026
        %v4028 = vpop.f32.mrb[0].mxu0
        %4029 = vmatprep.mubr.bf16.mxu0 0
        %4030 = vmatmul.mubr.bf16.gmra.mrb[0].mxu0 %v3866
        %v4031 = vpop.f32.mrb[0].mxu0
        %v4032 = vadd.f32 0.0, %v4031
        %v4033 = vpop.f32.mrb[0].mxu0
        %v4034 = vpop.f32.mrb[0].mxu0
        %v4035 = vadd.f32 0.0, %v4034
        %v4036 = vpop.f32.mrb[0].mxu0
        %4037 = vmatprep.mubr.bf16.mxu0 0
        %4038 = vmatmul.mubr.bf16.gmra.mrb[0].mxu0 %v3867
        %v4039 = vpop.f32.mrb[0].mxu0
        %v4040 = vadd.f32 0.0, %v4039
        %v4041 = vpop.f32.mrb[0].mxu0
        %v4042 = vpop.f32.mrb[0].mxu0
        %v4043 = vadd.f32 0.0, %v4042
        %v4044 = vpop.f32.mrb[0].mxu0
        %4045 = vdwg.mxu0
        %v4046 = vadd.f32 %v3838, %v3968
        %v4047 = vadd.f32 %v3839, %v3971
        %v4048 = vadd.f32 %v3840, %v3976
        %v4049 = vadd.f32 %v3841, %v3979
        %v4050 = vadd.f32 %v3842, %v3984
        %v4051 = vadd.f32 %v3843, %v3987
        %v4052 = vadd.f32 %v3844, %v3992
        %v4053 = vadd.f32 %v3845, %v3995
        %v4054 = vadd.f32 %v3846, %v4000
        %v4055 = vadd.f32 %v3847, %v4003
        %v4056 = vadd.f32 %v3848, %v4008
        %v4057 = vadd.f32 %v3849, %v4011
        %v4058 = vadd.f32 %v3850, %v4016
        %v4059 = vadd.f32 %v3851, %v4019
        %v4060 = vadd.f32 %v3852, %v4024
        %v4061 = vadd.f32 %v3853, %v4027
        %v4062 = vadd.f32 %v3854, %v4032
        %v4063 = vadd.f32 %v3855, %v4035
        %v4064 = vadd.f32 %v3856, %v4040
        %v4065 = vadd.f32 %v3857, %v4043
        %v4066 = vld [vmem:[#allocation3 + $0x2] sm:$0xff]
        %v4067 = vld [vmem:[#allocation3 + $0xa] sm:$0xff]
        %v4068 = vld [vmem:[#allocation3 + $0x12] sm:$0xff]
        %v4069 = vld [vmem:[#allocation3 + $0x1a] sm:$0xff]
        %v4070 = vld [vmem:[#allocation3 + $0x22] sm:$0xff]
        %v4071 = vld [vmem:[#allocation3 + $0x2a] sm:$0xff]
        %v4072 = vld [vmem:[#allocation3 + $0x32] sm:$0xff]
        %v4073 = vld [vmem:[#allocation3 + $0x3a] sm:$0xff]
        %v4074 = vld [vmem:[#allocation3 + $0x42] sm:$0xff]
        %v4075 = vld [vmem:[#allocation3 + $0x4a] sm:$0xff]
        %v4076 = vld [vmem:[#allocation3 + $0x52] sm:$0xff]
        %v4077 = vld [vmem:[#allocation3 + $0x5a] sm:$0xff]
        %v4078 = vld [vmem:[#allocation3 + $0x62] sm:$0xff]
        %v4079 = vld [vmem:[#allocation3 + $0x6a] sm:$0xff]
        %v4080 = vld [vmem:[#allocation3 + $0x72] sm:$0xff]
        %v4081 = vld [vmem:[#allocation3 + $0x7a] sm:$0xff]
        %v4082 = vld [vmem:[#allocation3 + $0x82] sm:$0xff]
        %v4083 = vld [vmem:[#allocation3 + $0x8a] sm:$0xff]
        %v4084 = vld [vmem:[#allocation3 + $0x92] sm:$0xff]
        %v4085 = vld [vmem:[#allocation3 + $0x9a] sm:$0xff]
        %v4086 = vld [vmem:[#allocation3 + $0xa2] sm:$0xff]
        %v4087 = vld [vmem:[#allocation3 + $0xaa] sm:$0xff]
        %v4088 = vld [vmem:[#allocation3 + $0xb2] sm:$0xff]
        %v4089 = vld [vmem:[#allocation3 + $0xba] sm:$0xff]
        %v4090 = vld [vmem:[#allocation3 + $0xc2] sm:$0xff]
        %v4091 = vld [vmem:[#allocation3 + $0xca] sm:$0xff]
        %v4092 = vld [vmem:[#allocation3 + $0xd2] sm:$0xff]
        %v4093 = vld [vmem:[#allocation3 + $0xda] sm:$0xff]
        %v4094 = vpack.c.bf16 %v4067, %v4066
        %v4095 = vpack.c.bf16 %v4069, %v4068
        %v4096 = vpack.c.bf16 %v4071, %v4070
        %v4097 = vpack.c.bf16 %v4073, %v4072
        %v4098 = vpack.c.bf16 %v4075, %v4074
        %v4099 = vpack.c.bf16 %v4077, %v4076
        %v4100 = vpack.c.bf16 %v4079, %v4078
        %v4101 = vpack.c.bf16 %v4081, %v4080
        %v4102 = vpack.c.bf16 %v4083, %v4082
        %v4103 = vpack.c.bf16 %v4085, %v4084
        %v4104 = vpack.c.bf16 %v4087, %v4086
        %v4105 = vpack.c.bf16 %v4089, %v4088
        %v4106 = vpack.c.bf16 %v4091, %v4090
        %v4107 = vpack.c.bf16 %v4093, %v4092
        %4108 = vst [vmem:[#allocation4] sm:$0xff] %v4094
        %4109 = vst [vmem:[#allocation4 + $0x8] sm:$0xff] %v4095
        %4110 = vst [vmem:[#allocation4 + $0x10] sm:$0xff] %v4096
        %4111 = vst [vmem:[#allocation4 + $0x18] sm:$0xff] %v4097
        %4112 = vst [vmem:[#allocation4 + $0x20] sm:$0xff] %v4098
        %4113 = vst [vmem:[#allocation4 + $0x28] sm:$0xff] %v4099
        %4114 = vst [vmem:[#allocation4 + $0x30] sm:$0xff] %v4100
        %4115 = vst [vmem:[#allocation4 + $0x38] sm:$0xff] %v4101
        %4116 = vst [vmem:[#allocation4 + $0x40] sm:$0xff] %v4102
        %4117 = vst [vmem:[#allocation4 + $0x48] sm:$0xff] %v4103
        %4118 = vst [vmem:[#allocation4 + $0x50] sm:$0xff] %v4104
        %4119 = vst [vmem:[#allocation4 + $0x58] sm:$0xff] %v4105
        %4120 = vst [vmem:[#allocation4 + $0x60] sm:$0xff] %v4106
        %4121 = vst [vmem:[#allocation4 + $0x68] sm:$0xff] %v4107
        %v4122 = vld [vmem:[#allocation4] sm:$0xff]
        %v4123 = vld [vmem:[#allocation4 + $0x8] sm:$0xff]
        %v4124 = vld [vmem:[#allocation4 + $0x10] sm:$0xff]
        %v4125 = vld [vmem:[#allocation4 + $0x18] sm:$0xff]
        %v4126 = vld [vmem:[#allocation4 + $0x20] sm:$0xff]
        %v4127 = vld [vmem:[#allocation4 + $0x28] sm:$0xff]
        %v4128 = vld [vmem:[#allocation4 + $0x30] sm:$0xff]
        %v4129 = vld [vmem:[#allocation4 + $0x38] sm:$0xff]
        %v4130 = vld [vmem:[#allocation4 + $0x40] sm:$0xff]
        %v4131 = vld [vmem:[#allocation4 + $0x48] sm:$0xff]
        %s4132 = scalar_lea.vmem %s3, 128
        %v4133 = vld [vmem:[%s4132] sm:$0xf]
        %v4134 = vld [vmem:[%s4132 + $0x4] sm:$0xf]
        %v4135 = vld [vmem:[%s4132 + $0x8] sm:$0xf]
        %v4136 = vld [vmem:[%s4132 + $0xc] sm:$0xf]
        %v4137 = vld [vmem:[%s4132 + $0x10] sm:$0xf]
        %v4138 = vld [vmem:[%s4132 + $0x14] sm:$0xf]
        %v4139 = vld [vmem:[%s4132 + $0x18] sm:$0xf]
        %v4140 = vld [vmem:[%s4132 + $0x1c] sm:$0xf]
        %v4141 = vld [vmem:[%s4132 + $0x20] sm:$0xf]
        %v4142 = vld [vmem:[%s4132 + $0x24] sm:$0xf]
        %v4143 = vld [vmem:[%s4132 + $0x28] sm:$0xf]
        %v4144 = vld [vmem:[%s4132 + $0x2c] sm:$0xf]
        %v4145 = vld [vmem:[%s4132 + $0x30] sm:$0xf]
        %v4146 = vld [vmem:[%s4132 + $0x34] sm:$0xf]
        %v4147 = vld [vmem:[%s4132 + $0x38] sm:$0xf]
        %v4148 = vld [vmem:[%s4132 + $0x3c] sm:$0xf]
        %v4165 = vunpack.c.l.b16 %v4133
        %v4166 = vunpack.c.l.b16 %v4134
        %v4167 = vunpack.c.l.b16 %v4135
        %v4168 = vunpack.c.l.b16 %v4136
        %v4169 = vunpack.c.l.b16 %v4137
        %v4170 = vunpack.c.l.b16 %v4138
        %v4171 = vunpack.c.l.b16 %v4139
        %v4172 = vunpack.c.l.b16 %v4140
        %v4173 = vunpack.c.l.b16 %v4141
        %v4174 = vunpack.c.l.b16 %v4142
        %v4175 = vunpack.c.l.b16 %v4143
        %v4176 = vunpack.c.l.b16 %v4144
        %v4177 = vunpack.c.l.b16 %v4145
        %v4178 = vunpack.c.l.b16 %v4146
        %v4179 = vunpack.c.l.b16 %v4147
        %v4180 = vunpack.c.l.b16 %v4148
        %v4181 = vpack.c.b16 %v4166, %v4165
        %v4182 = vpack.c.b16 %v4168, %v4167
        %v4183 = vpack.c.b16 %v4170, %v4169
        %v4184 = vpack.c.b16 %v4172, %v4171
        %v4185 = vpack.c.b16 %v4174, %v4173
        %v4186 = vpack.c.b16 %v4176, %v4175
        %v4187 = vpack.c.b16 %v4178, %v4177
        %v4188 = vpack.c.b16 %v4180, %v4179
        %4197 = vmatprep.subr.bf16.mxu0 0
        %4198 = vmatpush1.bf16.msra.mxu0 %v4181
        %4199 = vmatprep.subr.bf16.mxu0 0
        %4200 = vmatpush1.bf16.msra.mxu0 %v4182
        %4201 = vmatprep.subr.bf16.mxu0 0
        %4202 = vmatpush1.bf16.msra.mxu0 %v4183
        %4203 = vmatprep.subr.bf16.mxu0 0
        %4204 = vmatpush1.bf16.msra.mxu0 %v4184
        %4205 = vmatprep.subr.bf16.mxu0 0
        %4206 = vmatpush1.bf16.msra.mxu0 %v4185
        %4207 = vmatprep.subr.bf16.mxu0 0
        %4208 = vmatpush1.bf16.msra.mxu0 %v4186
        %4209 = vmatprep.subr.bf16.mxu0 0
        %4210 = vmatpush1.bf16.msra.mxu0 %v4187
        %4211 = vmatprep.subr.bf16.mxu0 0
        %4212 = vmatpush1.bf16.msra.mxu0 %v4188
        %4213 = vmatprep.subr.bf16.mxu0 0
        %4214 = vmatpush1.bf16.msra.mxu0 0
        %4215 = vmatprep.subr.bf16.mxu0 0
        %4216 = vmatpush1.bf16.msra.mxu0 0
        %4217 = vmatprep.subr.bf16.mxu0 0
        %4218 = vmatpush1.bf16.msra.mxu0 0
        %4219 = vmatprep.subr.bf16.mxu0 0
        %4220 = vmatpush1.bf16.msra.mxu0 0
        %4221 = vmatprep.subr.bf16.mxu0 0
        %4222 = vmatpush1.bf16.msra.mxu0 0
        %4223 = vmatprep.subr.bf16.mxu0 0
        %4224 = vmatpush1.bf16.msra.mxu0 0
        %4225 = vmatprep.subr.bf16.mxu0 0
        %4226 = vmatpush1.bf16.msra.mxu0 0
        %4227 = vmatprep.subr.bf16.mxu0 0
        %4228 = vmatpush1.bf16.msra.mxu0 0
        %4229 = vmatprep.mubr.bf16.mxu0 0
        %4230 = vmatmul.mubr.bf16.gmra.mrb[0].mxu0 %v4122
        %v4231 = vpop.f32.mrb[0].mxu0
        %v4232 = vadd.f32 0.0, %v4231
        %v4233 = vpop.f32.mrb[0].mxu0
        %v4234 = vpop.f32.mrb[0].mxu0
        %v4235 = vadd.f32 0.0, %v4234
        %v4236 = vpop.f32.mrb[0].mxu0
        %4237 = vmatprep.mubr.bf16.mxu0 0
        %4238 = vmatmul.mubr.bf16.gmra.mrb[0].mxu0 %v4123
        %v4239 = vpop.f32.mrb[0].mxu0
        %v4240 = vadd.f32 0.0, %v4239
        %v4241 = vpop.f32.mrb[0].mxu0
        %v4242 = vpop.f32.mrb[0].mxu0
        %v4243 = vadd.f32 0.0, %v4242
        %v4244 = vpop.f32.mrb[0].mxu0
        %4245 = vmatprep.mubr.bf16.mxu0 0
        %4246 = vmatmul.mubr.bf16.gmra.mrb[0].mxu0 %v4124
        %v4247 = vpop.f32.mrb[0].mxu0
        %v4248 = vadd.f32 0.0, %v4247
        %v4249 = vpop.f32.mrb[0].mxu0
        %v4250 = vpop.f32.mrb[0].mxu0
        %v4251 = vadd.f32 0.0, %v4250
        %v4252 = vpop.f32.mrb[0].mxu0
        %4253 = vmatprep.mubr.bf16.mxu0 0
        %4254 = vmatmul.mubr.bf16.gmra.mrb[0].mxu0 %v4125
        %v4255 = vpop.f32.mrb[0].mxu0
        %v4256 = vadd.f32 0.0, %v4255
        %v4257 = vpop.f32.mrb[0].mxu0
        %v4258 = vpop.f32.mrb[0].mxu0
        %v4259 = vadd.f32 0.0, %v4258
        %v4260 = vpop.f32.mrb[0].mxu0
        %4261 = vmatprep.mubr.bf16.mxu0 0
        %4262 = vmatmul.mubr.bf16.gmra.mrb[0].mxu0 %v4126
        %v4263 = vpop.f32.mrb[0].mxu0
        %v4264 = vadd.f32 0.0, %v4263
        %v4265 = vpop.f32.mrb[0].mxu0
        %v4266 = vpop.f32.mrb[0].mxu0
        %v4267 = vadd.f32 0.0, %v4266
        %v4268 = vpop.f32.mrb[0].mxu0
        %4269 = vmatprep.mubr.bf16.mxu0 0
        %4270 = vmatmul.mubr.bf16.gmra.mrb[0].mxu0 %v4127
        %v4271 = vpop.f32.mrb[0].mxu0
        %v4272 = vadd.f32 0.0, %v4271
        %v4273 = vpop.f32.mrb[0].mxu0
        %v4274 = vpop.f32.mrb[0].mxu0
        %v4275 = vadd.f32 0.0, %v4274
        %v4276 = vpop.f32.mrb[0].mxu0
        %4277 = vmatprep.mubr.bf16.mxu0 0
        %4278 = vmatmul.mubr.bf16.gmra.mrb[0].mxu0 %v4128
        %v4279 = vpop.f32.mrb[0].mxu0
        %v4280 = vadd.f32 0.0, %v4279
        %v4281 = vpop.f32.mrb[0].mxu0
        %v4282 = vpop.f32.mrb[0].mxu0
        %v4283 = vadd.f32 0.0, %v4282
        %v4284 = vpop.f32.mrb[0].mxu0
        %4285 = vmatprep.mubr.bf16.mxu0 0
        %4286 = vmatmul.mubr.bf16.gmra.mrb[0].mxu0 %v4129
        %v4287 = vpop.f32.mrb[0].mxu0
        %v4288 = vadd.f32 0.0, %v4287
        %v4289 = vpop.f32.mrb[0].mxu0
        %v4290 = vpop.f32.mrb[0].mxu0
        %v4291 = vadd.f32 0.0, %v4290
        %v4292 = vpop.f32.mrb[0].mxu0
        %4293 = vmatprep.mubr.bf16.mxu0 0
        %4294 = vmatmul.mubr.bf16.gmra.mrb[0].mxu0 %v4130
        %v4295 = vpop.f32.mrb[0].mxu0
        %v4296 = vadd.f32 0.0, %v4295
        %v4297 = vpop.f32.mrb[0].mxu0
        %v4298 = vpop.f32.mrb[0].mxu0
        %v4299 = vadd.f32 0.0, %v4298
        %v4300 = vpop.f32.mrb[0].mxu0
        %4301 = vmatprep.mubr.bf16.mxu0 0
        %4302 = vmatmul.mubr.bf16.gmra.mrb[0].mxu0 %v4131
        %v4303 = vpop.f32.mrb[0].mxu0
        %v4304 = vadd.f32 0.0, %v4303
        %v4305 = vpop.f32.mrb[0].mxu0
        %v4306 = vpop.f32.mrb[0].mxu0
        %v4307 = vadd.f32 0.0, %v4306
        %v4308 = vpop.f32.mrb[0].mxu0
        %4309 = vdwg.mxu0
        %v4310 = vadd.f32 %v4046, %v4232
        %v4311 = vadd.f32 %v4047, %v4235
        %v4312 = vadd.f32 %v4048, %v4240
        %v4313 = vadd.f32 %v4049, %v4243
        %v4314 = vadd.f32 %v4050, %v4248
        %v4315 = vadd.f32 %v4051, %v4251
        %v4316 = vadd.f32 %v4052, %v4256
        %v4317 = vadd.f32 %v4053, %v4259
        %v4318 = vadd.f32 %v4054, %v4264
        %v4319 = vadd.f32 %v4055, %v4267
        %v4320 = vadd.f32 %v4056, %v4272
        %v4321 = vadd.f32 %v4057, %v4275
        %v4322 = vadd.f32 %v4058, %v4280
        %v4323 = vadd.f32 %v4059, %v4283
        %v4324 = vadd.f32 %v4060, %v4288
        %v4325 = vadd.f32 %v4061, %v4291
        %v4326 = vadd.f32 %v4062, %v4296
        %v4327 = vadd.f32 %v4063, %v4299
        %v4328 = vadd.f32 %v4064, %v4304
        %v4329 = vadd.f32 %v4065, %v4307
        %v4330 = vld [vmem:[#allocation4 + $0x8] sm:$0xff]
        %v4331 = vld [vmem:[#allocation4 + $0x10] sm:$0xff]
        %v4332 = vld [vmem:[#allocation4 + $0x18] sm:$0xff]
        %v4333 = vld [vmem:[#allocation4 + $0x20] sm:$0xff]
        %v4334 = vld [vmem:[#allocation4 + $0x28] sm:$0xff]
        %v4335 = vld [vmem:[#allocation4 + $0x30] sm:$0xff]
        %v4336 = vld [vmem:[#allocation4 + $0x38] sm:$0xff]
        %v4337 = vld [vmem:[#allocation4 + $0x40] sm:$0xff]
        %v4338 = vld [vmem:[#allocation4 + $0x48] sm:$0xff]
        %v4339 = vld [vmem:[#allocation4 + $0x50] sm:$0xff]
        %s4340 = scalar_lea.vmem %s3, 448
        %v4341 = vld [vmem:[%s4340] sm:$0xf]
        %v4342 = vld [vmem:[%s4340 + $0x4] sm:$0xf]
        %v4343 = vld [vmem:[%s4340 + $0x8] sm:$0xf]
        %v4344 = vld [vmem:[%s4340 + $0xc] sm:$0xf]
        %v4345 = vld [vmem:[%s4340 + $0x10] sm:$0xf]
        %v4346 = vld [vmem:[%s4340 + $0x14] sm:$0xf]
        %v4347 = vld [vmem:[%s4340 + $0x18] sm:$0xf]
        %v4348 = vld [vmem:[%s4340 + $0x1c] sm:$0xf]
        %v4349 = vld [vmem:[%s4340 + $0x20] sm:$0xf]
        %v4350 = vld [vmem:[%s4340 + $0x24] sm:$0xf]
        %v4351 = vld [vmem:[%s4340 + $0x28] sm:$0xf]
        %v4352 = vld [vmem:[%s4340 + $0x2c] sm:$0xf]
        %v4353 = vld [vmem:[%s4340 + $0x30] sm:$0xf]
        %v4354 = vld [vmem:[%s4340 + $0x34] sm:$0xf]
        %v4355 = vld [vmem:[%s4340 + $0x38] sm:$0xf]
        %v4356 = vld [vmem:[%s4340 + $0x3c] sm:$0xf]
        %v4373 = vunpack.c.l.b16 %v4341
        %v4374 = vunpack.c.l.b16 %v4342
        %v4375 = vunpack.c.l.b16 %v4343
        %v4376 = vunpack.c.l.b16 %v4344
        %v4377 = vunpack.c.l.b16 %v4345
        %v4378 = vunpack.c.l.b16 %v4346
        %v4379 = vunpack.c.l.b16 %v4347
        %v4380 = vunpack.c.l.b16 %v4348
        %v4381 = vunpack.c.l.b16 %v4349
        %v4382 = vunpack.c.l.b16 %v4350
        %v4383 = vunpack.c.l.b16 %v4351
        %v4384 = vunpack.c.l.b16 %v4352
        %v4385 = vunpack.c.l.b16 %v4353
        %v4386 = vunpack.c.l.b16 %v4354
        %v4387 = vunpack.c.l.b16 %v4355
        %v4388 = vunpack.c.l.b16 %v4356
        %v4389 = vpack.c.b16 %v4374, %v4373
        %v4390 = vpack.c.b16 %v4376, %v4375
        %v4391 = vpack.c.b16 %v4378, %v4377
        %v4392 = vpack.c.b16 %v4380, %v4379
        %v4393 = vpack.c.b16 %v4382, %v4381
        %v4394 = vpack.c.b16 %v4384, %v4383
        %v4395 = vpack.c.b16 %v4386, %v4385
        %v4396 = vpack.c.b16 %v4388, %v4387
        %4405 = vmatprep.subr.bf16.mxu0 0
        %4406 = vmatpush1.bf16.msra.mxu0 %v4389
        %4407 = vmatprep.subr.bf16.mxu0 0
        %4408 = vmatpush1.bf16.msra.mxu0 %v4390
        %4409 = vmatprep.subr.bf16.mxu0 0
        %4410 = vmatpush1.bf16.msra.mxu0 %v4391
        %4411 = vmatprep.subr.bf16.mxu0 0
        %4412 = vmatpush1.bf16.msra.mxu0 %v4392
        %4413 = vmatprep.subr.bf16.mxu0 0
        %4414 = vmatpush1.bf16.msra.mxu0 %v4393
        %4415 = vmatprep.subr.bf16.mxu0 0
        %4416 = vmatpush1.bf16.msra.mxu0 %v4394
        %4417 = vmatprep.subr.bf16.mxu0 0
        %4418 = vmatpush1.bf16.msra.mxu0 %v4395
        %4419 = vmatprep.subr.bf16.mxu0 0
        %4420 = vmatpush1.bf16.msra.mxu0 %v4396
        %4421 = vmatprep.subr.bf16.mxu0 0
        %4422 = vmatpush1.bf16.msra.mxu0 0
        %4423 = vmatprep.subr.bf16.mxu0 0
        %4424 = vmatpush1.bf16.msra.mxu0 0
        %4425 = vmatprep.subr.bf16.mxu0 0
        %4426 = vmatpush1.bf16.msra.mxu0 0
        %4427 = vmatprep.subr.bf16.mxu0 0
        %4428 = vmatpush1.bf16.msra.mxu0 0
        %4429 = vmatprep.subr.bf16.mxu0 0
        %4430 = vmatpush1.bf16.msra.mxu0 0
        %4431 = vmatprep.subr.bf16.mxu0 0
        %4432 = vmatpush1.bf16.msra.mxu0 0
        %4433 = vmatprep.subr.bf16.mxu0 0
        %4434 = vmatpush1.bf16.msra.mxu0 0
        %4435 = vmatprep.subr.bf16.mxu0 0
        %4436 = vmatpush1.bf16.msra.mxu0 0
        %4437 = vmatprep.mubr.bf16.mxu0 0
        %4438 = vmatmul.mubr.bf16.gmra.mrb[0].mxu0 %v4330
        %v4439 = vpop.f32.mrb[0].mxu0
        %v4440 = vadd.f32 0.0, %v4439
        %v4441 = vpop.f32.mrb[0].mxu0
        %v4442 = vpop.f32.mrb[0].mxu0
        %v4443 = vadd.f32 0.0, %v4442
        %v4444 = vpop.f32.mrb[0].mxu0
        %4445 = vmatprep.mubr.bf16.mxu0 0
        %4446 = vmatmul.mubr.bf16.gmra.mrb[0].mxu0 %v4331
        %v4447 = vpop.f32.mrb[0].mxu0
        %v4448 = vadd.f32 0.0, %v4447
        %v4449 = vpop.f32.mrb[0].mxu0
        %v4450 = vpop.f32.mrb[0].mxu0
        %v4451 = vadd.f32 0.0, %v4450
        %v4452 = vpop.f32.mrb[0].mxu0
        %4453 = vmatprep.mubr.bf16.mxu0 0
        %4454 = vmatmul.mubr.bf16.gmra.mrb[0].mxu0 %v4332
        %v4455 = vpop.f32.mrb[0].mxu0
        %v4456 = vadd.f32 0.0, %v4455
        %v4457 = vpop.f32.mrb[0].mxu0
        %v4458 = vpop.f32.mrb[0].mxu0
        %v4459 = vadd.f32 0.0, %v4458
        %v4460 = vpop.f32.mrb[0].mxu0
        %4461 = vmatprep.mubr.bf16.mxu0 0
        %4462 = vmatmul.mubr.bf16.gmra.mrb[0].mxu0 %v4333
        %v4463 = vpop.f32.mrb[0].mxu0
        %v4464 = vadd.f32 0.0, %v4463
        %v4465 = vpop.f32.mrb[0].mxu0
        %v4466 = vpop.f32.mrb[0].mxu0
        %v4467 = vadd.f32 0.0, %v4466
        %v4468 = vpop.f32.mrb[0].mxu0
        %4469 = vmatprep.mubr.bf16.mxu0 0
        %4470 = vmatmul.mubr.bf16.gmra.mrb[0].mxu0 %v4334
        %v4471 = vpop.f32.mrb[0].mxu0
        %v4472 = vadd.f32 0.0, %v4471
        %v4473 = vpop.f32.mrb[0].mxu0
        %v4474 = vpop.f32.mrb[0].mxu0
        %v4475 = vadd.f32 0.0, %v4474
        %v4476 = vpop.f32.mrb[0].mxu0
        %4477 = vmatprep.mubr.bf16.mxu0 0
        %4478 = vmatmul.mubr.bf16.gmra.mrb[0].mxu0 %v4335
        %v4479 = vpop.f32.mrb[0].mxu0
        %v4480 = vadd.f32 0.0, %v4479
        %v4481 = vpop.f32.mrb[0].mxu0
        %v4482 = vpop.f32.mrb[0].mxu0
        %v4483 = vadd.f32 0.0, %v4482
        %v4484 = vpop.f32.mrb[0].mxu0
        %4485 = vmatprep.mubr.bf16.mxu0 0
        %4486 = vmatmul.mubr.bf16.gmra.mrb[0].mxu0 %v4336
        %v4487 = vpop.f32.mrb[0].mxu0
        %v4488 = vadd.f32 0.0, %v4487
        %v4489 = vpop.f32.mrb[0].mxu0
        %v4490 = vpop.f32.mrb[0].mxu0
        %v4491 = vadd.f32 0.0, %v4490
        %v4492 = vpop.f32.mrb[0].mxu0
        %4493 = vmatprep.mubr.bf16.mxu0 0
        %4494 = vmatmul.mubr.bf16.gmra.mrb[0].mxu0 %v4337
        %v4495 = vpop.f32.mrb[0].mxu0
        %v4496 = vadd.f32 0.0, %v4495
        %v4497 = vpop.f32.mrb[0].mxu0
        %v4498 = vpop.f32.mrb[0].mxu0
        %v4499 = vadd.f32 0.0, %v4498
        %v4500 = vpop.f32.mrb[0].mxu0
        %4501 = vmatprep.mubr.bf16.mxu0 0
        %4502 = vmatmul.mubr.bf16.gmra.mrb[0].mxu0 %v4338
        %v4503 = vpop.f32.mrb[0].mxu0
        %v4504 = vadd.f32 0.0, %v4503
        %v4505 = vpop.f32.mrb[0].mxu0
        %v4506 = vpop.f32.mrb[0].mxu0
        %v4507 = vadd.f32 0.0, %v4506
        %v4508 = vpop.f32.mrb[0].mxu0
        %4509 = vmatprep.mubr.bf16.mxu0 0
        %4510 = vmatmul.mubr.bf16.gmra.mrb[0].mxu0 %v4339
        %v4511 = vpop.f32.mrb[0].mxu0
        %v4512 = vadd.f32 0.0, %v4511
        %v4513 = vpop.f32.mrb[0].mxu0
        %v4514 = vpop.f32.mrb[0].mxu0
        %v4515 = vadd.f32 0.0, %v4514
        %v4516 = vpop.f32.mrb[0].mxu0
        %4517 = vdwg.mxu0
        %v4518 = vadd.f32 %v4310, %v4440
        %v4519 = vadd.f32 %v4311, %v4443
        %v4520 = vadd.f32 %v4312, %v4448
        %v4521 = vadd.f32 %v4313, %v4451
        %v4522 = vadd.f32 %v4314, %v4456
        %v4523 = vadd.f32 %v4315, %v4459
        %v4524 = vadd.f32 %v4316, %v4464
        %v4525 = vadd.f32 %v4317, %v4467
        %v4526 = vadd.f32 %v4318, %v4472
        %v4527 = vadd.f32 %v4319, %v4475
        %v4528 = vadd.f32 %v4320, %v4480
        %v4529 = vadd.f32 %v4321, %v4483
        %v4530 = vadd.f32 %v4322, %v4488
        %v4531 = vadd.f32 %v4323, %v4491
        %v4532 = vadd.f32 %v4324, %v4496
        %v4533 = vadd.f32 %v4325, %v4499
        %v4534 = vadd.f32 %v4326, %v4504
        %v4535 = vadd.f32 %v4327, %v4507
        %v4536 = vadd.f32 %v4328, %v4512
        %v4537 = vadd.f32 %v4329, %v4515
        %v4538 = vld [vmem:[#allocation4 + $0x10] sm:$0xff]
        %v4539 = vld [vmem:[#allocation4 + $0x18] sm:$0xff]
        %v4540 = vld [vmem:[#allocation4 + $0x20] sm:$0xff]
        %v4541 = vld [vmem:[#allocation4 + $0x28] sm:$0xff]
        %v4542 = vld [vmem:[#allocation4 + $0x30] sm:$0xff]
        %v4543 = vld [vmem:[#allocation4 + $0x38] sm:$0xff]
        %v4544 = vld [vmem:[#allocation4 + $0x40] sm:$0xff]
        %v4545 = vld [vmem:[#allocation4 + $0x48] sm:$0xff]
        %v4546 = vld [vmem:[#allocation4 + $0x50] sm:$0xff]
        %v4547 = vld [vmem:[#allocation4 + $0x58] sm:$0xff]
        %s4548 = scalar_lea.vmem %s3, 768
        %v4549 = vld [vmem:[%s4548] sm:$0xf]
        %v4550 = vld [vmem:[%s4548 + $0x4] sm:$0xf]
        %v4551 = vld [vmem:[%s4548 + $0x8] sm:$0xf]
        %v4552 = vld [vmem:[%s4548 + $0xc] sm:$0xf]
        %v4553 = vld [vmem:[%s4548 + $0x10] sm:$0xf]
        %v4554 = vld [vmem:[%s4548 + $0x14] sm:$0xf]
        %v4555 = vld [vmem:[%s4548 + $0x18] sm:$0xf]
        %v4556 = vld [vmem:[%s4548 + $0x1c] sm:$0xf]
        %v4557 = vld [vmem:[%s4548 + $0x20] sm:$0xf]
        %v4558 = vld [vmem:[%s4548 + $0x24] sm:$0xf]
        %v4559 = vld [vmem:[%s4548 + $0x28] sm:$0xf]
        %v4560 = vld [vmem:[%s4548 + $0x2c] sm:$0xf]
        %v4561 = vld [vmem:[%s4548 + $0x30] sm:$0xf]
        %v4562 = vld [vmem:[%s4548 + $0x34] sm:$0xf]
        %v4563 = vld [vmem:[%s4548 + $0x38] sm:$0xf]
        %v4564 = vld [vmem:[%s4548 + $0x3c] sm:$0xf]
        %v4581 = vunpack.c.l.b16 %v4549
        %v4582 = vunpack.c.l.b16 %v4550
        %v4583 = vunpack.c.l.b16 %v4551
        %v4584 = vunpack.c.l.b16 %v4552
        %v4585 = vunpack.c.l.b16 %v4553
        %v4586 = vunpack.c.l.b16 %v4554
        %v4587 = vunpack.c.l.b16 %v4555
        %v4588 = vunpack.c.l.b16 %v4556
        %v4589 = vunpack.c.l.b16 %v4557
        %v4590 = vunpack.c.l.b16 %v4558
        %v4591 = vunpack.c.l.b16 %v4559
        %v4592 = vunpack.c.l.b16 %v4560
        %v4593 = vunpack.c.l.b16 %v4561
        %v4594 = vunpack.c.l.b16 %v4562
        %v4595 = vunpack.c.l.b16 %v4563
        %v4596 = vunpack.c.l.b16 %v4564
        %v4597 = vpack.c.b16 %v4582, %v4581
        %v4598 = vpack.c.b16 %v4584, %v4583
        %v4599 = vpack.c.b16 %v4586, %v4585
        %v4600 = vpack.c.b16 %v4588, %v4587
        %v4601 = vpack.c.b16 %v4590, %v4589
        %v4602 = vpack.c.b16 %v4592, %v4591
        %v4603 = vpack.c.b16 %v4594, %v4593
        %v4604 = vpack.c.b16 %v4596, %v4595
        %4613 = vmatprep.subr.bf16.mxu0 0
        %4614 = vmatpush1.bf16.msra.mxu0 %v4597
        %4615 = vmatprep.subr.bf16.mxu0 0
        %4616 = vmatpush1.bf16.msra.mxu0 %v4598
        %4617 = vmatprep.subr.bf16.mxu0 0
        %4618 = vmatpush1.bf16.msra.mxu0 %v4599
        %4619 = vmatprep.subr.bf16.mxu0 0
        %4620 = vmatpush1.bf16.msra.mxu0 %v4600
        %4621 = vmatprep.subr.bf16.mxu0 0
        %4622 = vmatpush1.bf16.msra.mxu0 %v4601
        %4623 = vmatprep.subr.bf16.mxu0 0
        %4624 = vmatpush1.bf16.msra.mxu0 %v4602
        %4625 = vmatprep.subr.bf16.mxu0 0
        %4626 = vmatpush1.bf16.msra.mxu0 %v4603
        %4627 = vmatprep.subr.bf16.mxu0 0
        %4628 = vmatpush1.bf16.msra.mxu0 %v4604
        %4629 = vmatprep.subr.bf16.mxu0 0
        %4630 = vmatpush1.bf16.msra.mxu0 0
        %4631 = vmatprep.subr.bf16.mxu0 0
        %4632 = vmatpush1.bf16.msra.mxu0 0
        %4633 = vmatprep.subr.bf16.mxu0 0
        %4634 = vmatpush1.bf16.msra.mxu0 0
        %4635 = vmatprep.subr.bf16.mxu0 0
        %4636 = vmatpush1.bf16.msra.mxu0 0
        %4637 = vmatprep.subr.bf16.mxu0 0
        %4638 = vmatpush1.bf16.msra.mxu0 0
        %4639 = vmatprep.subr.bf16.mxu0 0
        %4640 = vmatpush1.bf16.msra.mxu0 0
        %4641 = vmatprep.subr.bf16.mxu0 0
        %4642 = vmatpush1.bf16.msra.mxu0 0
        %4643 = vmatprep.subr.bf16.mxu0 0
        %4644 = vmatpush1.bf16.msra.mxu0 0
        %4645 = vmatprep.mubr.bf16.mxu0 0
        %4646 = vmatmul.mubr.bf16.gmra.mrb[0].mxu0 %v4538
        %v4647 = vpop.f32.mrb[0].mxu0
        %v4648 = vadd.f32 0.0, %v4647
        %v4649 = vpop.f32.mrb[0].mxu0
        %v4650 = vpop.f32.mrb[0].mxu0
        %v4651 = vadd.f32 0.0, %v4650
        %v4652 = vpop.f32.mrb[0].mxu0
        %4653 = vmatprep.mubr.bf16.mxu0 0
        %4654 = vmatmul.mubr.bf16.gmra.mrb[0].mxu0 %v4539
        %v4655 = vpop.f32.mrb[0].mxu0
        %v4656 = vadd.f32 0.0, %v4655
        %v4657 = vpop.f32.mrb[0].mxu0
        %v4658 = vpop.f32.mrb[0].mxu0
        %v4659 = vadd.f32 0.0, %v4658
        %v4660 = vpop.f32.mrb[0].mxu0
        %4661 = vmatprep.mubr.bf16.mxu0 0
        %4662 = vmatmul.mubr.bf16.gmra.mrb[0].mxu0 %v4540
        %v4663 = vpop.f32.mrb[0].mxu0
        %v4664 = vadd.f32 0.0, %v4663
        %v4665 = vpop.f32.mrb[0].mxu0
        %v4666 = vpop.f32.mrb[0].mxu0
        %v4667 = vadd.f32 0.0, %v4666
        %v4668 = vpop.f32.mrb[0].mxu0
        %4669 = vmatprep.mubr.bf16.mxu0 0
        %4670 = vmatmul.mubr.bf16.gmra.mrb[0].mxu0 %v4541
        %v4671 = vpop.f32.mrb[0].mxu0
        %v4672 = vadd.f32 0.0, %v4671
        %v4673 = vpop.f32.mrb[0].mxu0
        %v4674 = vpop.f32.mrb[0].mxu0
        %v4675 = vadd.f32 0.0, %v4674
        %v4676 = vpop.f32.mrb[0].mxu0
        %4677 = vmatprep.mubr.bf16.mxu0 0
        %4678 = vmatmul.mubr.bf16.gmra.mrb[0].mxu0 %v4542
        %v4679 = vpop.f32.mrb[0].mxu0
        %v4680 = vadd.f32 0.0, %v4679
        %v4681 = vpop.f32.mrb[0].mxu0
        %v4682 = vpop.f32.mrb[0].mxu0
        %v4683 = vadd.f32 0.0, %v4682
        %v4684 = vpop.f32.mrb[0].mxu0
        %4685 = vmatprep.mubr.bf16.mxu0 0
        %4686 = vmatmul.mubr.bf16.gmra.mrb[0].mxu0 %v4543
        %v4687 = vpop.f32.mrb[0].mxu0
        %v4688 = vadd.f32 0.0, %v4687
        %v4689 = vpop.f32.mrb[0].mxu0
        %v4690 = vpop.f32.mrb[0].mxu0
        %v4691 = vadd.f32 0.0, %v4690
        %v4692 = vpop.f32.mrb[0].mxu0
        %4693 = vmatprep.mubr.bf16.mxu0 0
        %4694 = vmatmul.mubr.bf16.gmra.mrb[0].mxu0 %v4544
        %v4695 = vpop.f32.mrb[0].mxu0
        %v4696 = vadd.f32 0.0, %v4695
        %v4697 = vpop.f32.mrb[0].mxu0
        %v4698 = vpop.f32.mrb[0].mxu0
        %v4699 = vadd.f32 0.0, %v4698
        %v4700 = vpop.f32.mrb[0].mxu0
        %4701 = vmatprep.mubr.bf16.mxu0 0
        %4702 = vmatmul.mubr.bf16.gmra.mrb[0].mxu0 %v4545
        %v4703 = vpop.f32.mrb[0].mxu0
        %v4704 = vadd.f32 0.0, %v4703
        %v4705 = vpop.f32.mrb[0].mxu0
        %v4706 = vpop.f32.mrb[0].mxu0
        %v4707 = vadd.f32 0.0, %v4706
        %v4708 = vpop.f32.mrb[0].mxu0
        %4709 = vmatprep.mubr.bf16.mxu0 0
        %4710 = vmatmul.mubr.bf16.gmra.mrb[0].mxu0 %v4546
        %v4711 = vpop.f32.mrb[0].mxu0
        %v4712 = vadd.f32 0.0, %v4711
        %v4713 = vpop.f32.mrb[0].mxu0
        %v4714 = vpop.f32.mrb[0].mxu0
        %v4715 = vadd.f32 0.0, %v4714
        %v4716 = vpop.f32.mrb[0].mxu0
        %4717 = vmatprep.mubr.bf16.mxu0 0
        %4718 = vmatmul.mubr.bf16.gmra.mrb[0].mxu0 %v4547
        %v4719 = vpop.f32.mrb[0].mxu0
        %v4720 = vadd.f32 0.0, %v4719
        %v4721 = vpop.f32.mrb[0].mxu0
        %v4722 = vpop.f32.mrb[0].mxu0
        %v4723 = vadd.f32 0.0, %v4722
        %v4724 = vpop.f32.mrb[0].mxu0
        %4725 = vdwg.mxu0
        %v4726 = vadd.f32 %v4518, %v4648
        %v4727 = vadd.f32 %v4519, %v4651
        %v4728 = vadd.f32 %v4520, %v4656
        %v4729 = vadd.f32 %v4521, %v4659
        %v4730 = vadd.f32 %v4522, %v4664
        %v4731 = vadd.f32 %v4523, %v4667
        %v4732 = vadd.f32 %v4524, %v4672
        %v4733 = vadd.f32 %v4525, %v4675
        %v4734 = vadd.f32 %v4526, %v4680
        %v4735 = vadd.f32 %v4527, %v4683
        %v4736 = vadd.f32 %v4528, %v4688
        %v4737 = vadd.f32 %v4529, %v4691
        %v4738 = vadd.f32 %v4530, %v4696
        %v4739 = vadd.f32 %v4531, %v4699
        %v4740 = vadd.f32 %v4532, %v4704
        %v4741 = vadd.f32 %v4533, %v4707
        %v4742 = vadd.f32 %v4534, %v4712
        %v4743 = vadd.f32 %v4535, %v4715
        %v4744 = vadd.f32 %v4536, %v4720
        %v4745 = vadd.f32 %v4537, %v4723
        %v4746 = vld [vmem:[#allocation4 + $0x18] sm:$0xff]
        %v4747 = vld [vmem:[#allocation4 + $0x20] sm:$0xff]
        %v4748 = vld [vmem:[#allocation4 + $0x28] sm:$0xff]
        %v4749 = vld [vmem:[#allocation4 + $0x30] sm:$0xff]
        %v4750 = vld [vmem:[#allocation4 + $0x38] sm:$0xff]
        %v4751 = vld [vmem:[#allocation4 + $0x40] sm:$0xff]
        %v4752 = vld [vmem:[#allocation4 + $0x48] sm:$0xff]
        %v4753 = vld [vmem:[#allocation4 + $0x50] sm:$0xff]
        %v4754 = vld [vmem:[#allocation4 + $0x58] sm:$0xff]
        %v4755 = vld [vmem:[#allocation4 + $0x60] sm:$0xff]
        %s4756 = scalar_lea.vmem %s3, 1088
        %v4757 = vld [vmem:[%s4756] sm:$0xf]
        %v4758 = vld [vmem:[%s4756 + $0x4] sm:$0xf]
        %v4759 = vld [vmem:[%s4756 + $0x8] sm:$0xf]
        %v4760 = vld [vmem:[%s4756 + $0xc] sm:$0xf]
        %v4761 = vld [vmem:[%s4756 + $0x10] sm:$0xf]
        %v4762 = vld [vmem:[%s4756 + $0x14] sm:$0xf]
        %v4763 = vld [vmem:[%s4756 + $0x18] sm:$0xf]
        %v4764 = vld [vmem:[%s4756 + $0x1c] sm:$0xf]
        %v4765 = vld [vmem:[%s4756 + $0x20] sm:$0xf]
        %v4766 = vld [vmem:[%s4756 + $0x24] sm:$0xf]
        %v4767 = vld [vmem:[%s4756 + $0x28] sm:$0xf]
        %v4768 = vld [vmem:[%s4756 + $0x2c] sm:$0xf]
        %v4769 = vld [vmem:[%s4756 + $0x30] sm:$0xf]
        %v4770 = vld [vmem:[%s4756 + $0x34] sm:$0xf]
        %v4771 = vld [vmem:[%s4756 + $0x38] sm:$0xf]
        %v4772 = vld [vmem:[%s4756 + $0x3c] sm:$0xf]
        %v4789 = vunpack.c.l.b16 %v4757
        %v4790 = vunpack.c.l.b16 %v4758
        %v4791 = vunpack.c.l.b16 %v4759
        %v4792 = vunpack.c.l.b16 %v4760
        %v4793 = vunpack.c.l.b16 %v4761
        %v4794 = vunpack.c.l.b16 %v4762
        %v4795 = vunpack.c.l.b16 %v4763
        %v4796 = vunpack.c.l.b16 %v4764
        %v4797 = vunpack.c.l.b16 %v4765
        %v4798 = vunpack.c.l.b16 %v4766
        %v4799 = vunpack.c.l.b16 %v4767
        %v4800 = vunpack.c.l.b16 %v4768
        %v4801 = vunpack.c.l.b16 %v4769
        %v4802 = vunpack.c.l.b16 %v4770
        %v4803 = vunpack.c.l.b16 %v4771
        %v4804 = vunpack.c.l.b16 %v4772
        %v4805 = vpack.c.b16 %v4790, %v4789
        %v4806 = vpack.c.b16 %v4792, %v4791
        %v4807 = vpack.c.b16 %v4794, %v4793
        %v4808 = vpack.c.b16 %v4796, %v4795
        %v4809 = vpack.c.b16 %v4798, %v4797
        %v4810 = vpack.c.b16 %v4800, %v4799
        %v4811 = vpack.c.b16 %v4802, %v4801
        %v4812 = vpack.c.b16 %v4804, %v4803
        %4821 = vmatprep.subr.bf16.mxu0 0
        %4822 = vmatpush1.bf16.msra.mxu0 %v4805
        %4823 = vmatprep.subr.bf16.mxu0 0
        %4824 = vmatpush1.bf16.msra.mxu0 %v4806
        %4825 = vmatprep.subr.bf16.mxu0 0
        %4826 = vmatpush1.bf16.msra.mxu0 %v4807
        %4827 = vmatprep.subr.bf16.mxu0 0
        %4828 = vmatpush1.bf16.msra.mxu0 %v4808
        %4829 = vmatprep.subr.bf16.mxu0 0
        %4830 = vmatpush1.bf16.msra.mxu0 %v4809
        %4831 = vmatprep.subr.bf16.mxu0 0
        %4832 = vmatpush1.bf16.msra.mxu0 %v4810
        %4833 = vmatprep.subr.bf16.mxu0 0
        %4834 = vmatpush1.bf16.msra.mxu0 %v4811
        %4835 = vmatprep.subr.bf16.mxu0 0
        %4836 = vmatpush1.bf16.msra.mxu0 %v4812
        %4837 = vmatprep.subr.bf16.mxu0 0
        %4838 = vmatpush1.bf16.msra.mxu0 0
        %4839 = vmatprep.subr.bf16.mxu0 0
        %4840 = vmatpush1.bf16.msra.mxu0 0
        %4841 = vmatprep.subr.bf16.mxu0 0
        %4842 = vmatpush1.bf16.msra.mxu0 0
        %4843 = vmatprep.subr.bf16.mxu0 0
        %4844 = vmatpush1.bf16.msra.mxu0 0
        %4845 = vmatprep.subr.bf16.mxu0 0
        %4846 = vmatpush1.bf16.msra.mxu0 0
        %4847 = vmatprep.subr.bf16.mxu0 0
        %4848 = vmatpush1.bf16.msra.mxu0 0
        %4849 = vmatprep.subr.bf16.mxu0 0
        %4850 = vmatpush1.bf16.msra.mxu0 0
        %4851 = vmatprep.subr.bf16.mxu0 0
        %4852 = vmatpush1.bf16.msra.mxu0 0
        %4853 = vmatprep.mubr.bf16.mxu0 0
        %4854 = vmatmul.mubr.bf16.gmra.mrb[0].mxu0 %v4746
        %v4855 = vpop.f32.mrb[0].mxu0
        %v4856 = vadd.f32 0.0, %v4855
        %v4857 = vpop.f32.mrb[0].mxu0
        %v4858 = vpop.f32.mrb[0].mxu0
        %v4859 = vadd.f32 0.0, %v4858
        %v4860 = vpop.f32.mrb[0].mxu0
        %4861 = vmatprep.mubr.bf16.mxu0 0
        %4862 = vmatmul.mubr.bf16.gmra.mrb[0].mxu0 %v4747
        %v4863 = vpop.f32.mrb[0].mxu0
        %v4864 = vadd.f32 0.0, %v4863
        %v4865 = vpop.f32.mrb[0].mxu0
        %v4866 = vpop.f32.mrb[0].mxu0
        %v4867 = vadd.f32 0.0, %v4866
        %v4868 = vpop.f32.mrb[0].mxu0
        %4869 = vmatprep.mubr.bf16.mxu0 0
        %4870 = vmatmul.mubr.bf16.gmra.mrb[0].mxu0 %v4748
        %v4871 = vpop.f32.mrb[0].mxu0
        %v4872 = vadd.f32 0.0, %v4871
        %v4873 = vpop.f32.mrb[0].mxu0
        %v4874 = vpop.f32.mrb[0].mxu0
        %v4875 = vadd.f32 0.0, %v4874
        %v4876 = vpop.f32.mrb[0].mxu0
        %4877 = vmatprep.mubr.bf16.mxu0 0
        %4878 = vmatmul.mubr.bf16.gmra.mrb[0].mxu0 %v4749
        %v4879 = vpop.f32.mrb[0].mxu0
        %v4880 = vadd.f32 0.0, %v4879
        %v4881 = vpop.f32.mrb[0].mxu0
        %v4882 = vpop.f32.mrb[0].mxu0
        %v4883 = vadd.f32 0.0, %v4882
        %v4884 = vpop.f32.mrb[0].mxu0
        %4885 = vmatprep.mubr.bf16.mxu0 0
        %4886 = vmatmul.mubr.bf16.gmra.mrb[0].mxu0 %v4750
        %v4887 = vpop.f32.mrb[0].mxu0
        %v4888 = vadd.f32 0.0, %v4887
        %v4889 = vpop.f32.mrb[0].mxu0
        %v4890 = vpop.f32.mrb[0].mxu0
        %v4891 = vadd.f32 0.0, %v4890
        %v4892 = vpop.f32.mrb[0].mxu0
        %4893 = vmatprep.mubr.bf16.mxu0 0
        %4894 = vmatmul.mubr.bf16.gmra.mrb[0].mxu0 %v4751
        %v4895 = vpop.f32.mrb[0].mxu0
        %v4896 = vadd.f32 0.0, %v4895
        %v4897 = vpop.f32.mrb[0].mxu0
        %v4898 = vpop.f32.mrb[0].mxu0
        %v4899 = vadd.f32 0.0, %v4898
        %v4900 = vpop.f32.mrb[0].mxu0
        %4901 = vmatprep.mubr.bf16.mxu0 0
        %4902 = vmatmul.mubr.bf16.gmra.mrb[0].mxu0 %v4752
        %v4903 = vpop.f32.mrb[0].mxu0
        %v4904 = vadd.f32 0.0, %v4903
        %v4905 = vpop.f32.mrb[0].mxu0
        %v4906 = vpop.f32.mrb[0].mxu0
        %v4907 = vadd.f32 0.0, %v4906
        %v4908 = vpop.f32.mrb[0].mxu0
        %4909 = vmatprep.mubr.bf16.mxu0 0
        %4910 = vmatmul.mubr.bf16.gmra.mrb[0].mxu0 %v4753
        %v4911 = vpop.f32.mrb[0].mxu0
        %v4912 = vadd.f32 0.0, %v4911
        %v4913 = vpop.f32.mrb[0].mxu0
        %v4914 = vpop.f32.mrb[0].mxu0
        %v4915 = vadd.f32 0.0, %v4914
        %v4916 = vpop.f32.mrb[0].mxu0
        %4917 = vmatprep.mubr.bf16.mxu0 0
        %4918 = vmatmul.mubr.bf16.gmra.mrb[0].mxu0 %v4754
        %v4919 = vpop.f32.mrb[0].mxu0
        %v4920 = vadd.f32 0.0, %v4919
        %v4921 = vpop.f32.mrb[0].mxu0
        %v4922 = vpop.f32.mrb[0].mxu0
        %v4923 = vadd.f32 0.0, %v4922
        %v4924 = vpop.f32.mrb[0].mxu0
        %4925 = vmatprep.mubr.bf16.mxu0 0
        %4926 = vmatmul.mubr.bf16.gmra.mrb[0].mxu0 %v4755
        %v4927 = vpop.f32.mrb[0].mxu0
        %v4928 = vadd.f32 0.0, %v4927
        %v4929 = vpop.f32.mrb[0].mxu0
        %v4930 = vpop.f32.mrb[0].mxu0
        %v4931 = vadd.f32 0.0, %v4930
        %v4932 = vpop.f32.mrb[0].mxu0
        %4933 = vdwg.mxu0
        %v4934 = vadd.f32 %v4726, %v4856
        %v4935 = vadd.f32 %v4727, %v4859
        %v4936 = vadd.f32 %v4728, %v4864
        %v4937 = vadd.f32 %v4729, %v4867
        %v4938 = vadd.f32 %v4730, %v4872
        %v4939 = vadd.f32 %v4731, %v4875
        %v4940 = vadd.f32 %v4732, %v4880
        %v4941 = vadd.f32 %v4733, %v4883
        %v4942 = vadd.f32 %v4734, %v4888
        %v4943 = vadd.f32 %v4735, %v4891
        %v4944 = vadd.f32 %v4736, %v4896
        %v4945 = vadd.f32 %v4737, %v4899
        %v4946 = vadd.f32 %v4738, %v4904
        %v4947 = vadd.f32 %v4739, %v4907
        %v4948 = vadd.f32 %v4740, %v4912
        %v4949 = vadd.f32 %v4741, %v4915
        %v4950 = vadd.f32 %v4742, %v4920
        %v4951 = vadd.f32 %v4743, %v4923
        %v4952 = vadd.f32 %v4744, %v4928
        %v4953 = vadd.f32 %v4745, %v4931
        %v4954 = vld [vmem:[#allocation4 + $0x20] sm:$0xff]
        %v4955 = vld [vmem:[#allocation4 + $0x28] sm:$0xff]
        %v4956 = vld [vmem:[#allocation4 + $0x30] sm:$0xff]
        %v4957 = vld [vmem:[#allocation4 + $0x38] sm:$0xff]
        %v4958 = vld [vmem:[#allocation4 + $0x40] sm:$0xff]
        %v4959 = vld [vmem:[#allocation4 + $0x48] sm:$0xff]
        %v4960 = vld [vmem:[#allocation4 + $0x50] sm:$0xff]
        %v4961 = vld [vmem:[#allocation4 + $0x58] sm:$0xff]
        %v4962 = vld [vmem:[#allocation4 + $0x60] sm:$0xff]
        %v4963 = vld [vmem:[#allocation4 + $0x68] sm:$0xff]
        %s4964 = scalar_lea.vmem %s3, 1408
        %v4965 = vld [vmem:[%s4964] sm:$0xf]
        %v4966 = vld [vmem:[%s4964 + $0x4] sm:$0xf]
        %v4967 = vld [vmem:[%s4964 + $0x8] sm:$0xf]
        %v4968 = vld [vmem:[%s4964 + $0xc] sm:$0xf]
        %v4969 = vld [vmem:[%s4964 + $0x10] sm:$0xf]
        %v4970 = vld [vmem:[%s4964 + $0x14] sm:$0xf]
        %v4971 = vld [vmem:[%s4964 + $0x18] sm:$0xf]
        %v4972 = vld [vmem:[%s4964 + $0x1c] sm:$0xf]
        %v4973 = vld [vmem:[%s4964 + $0x20] sm:$0xf]
        %v4974 = vld [vmem:[%s4964 + $0x24] sm:$0xf]
        %v4975 = vld [vmem:[%s4964 + $0x28] sm:$0xf]
        %v4976 = vld [vmem:[%s4964 + $0x2c] sm:$0xf]
        %v4977 = vld [vmem:[%s4964 + $0x30] sm:$0xf]
        %v4978 = vld [vmem:[%s4964 + $0x34] sm:$0xf]
        %v4979 = vld [vmem:[%s4964 + $0x38] sm:$0xf]
        %v4980 = vld [vmem:[%s4964 + $0x3c] sm:$0xf]
        %v4997 = vunpack.c.l.b16 %v4965
        %v4998 = vunpack.c.l.b16 %v4966
        %v4999 = vunpack.c.l.b16 %v4967
        %v5000 = vunpack.c.l.b16 %v4968
        %v5001 = vunpack.c.l.b16 %v4969
        %v5002 = vunpack.c.l.b16 %v4970
        %v5003 = vunpack.c.l.b16 %v4971
        %v5004 = vunpack.c.l.b16 %v4972
        %v5005 = vunpack.c.l.b16 %v4973
        %v5006 = vunpack.c.l.b16 %v4974
        %v5007 = vunpack.c.l.b16 %v4975
        %v5008 = vunpack.c.l.b16 %v4976
        %v5009 = vunpack.c.l.b16 %v4977
        %v5010 = vunpack.c.l.b16 %v4978
        %v5011 = vunpack.c.l.b16 %v4979
        %v5012 = vunpack.c.l.b16 %v4980
        %v5013 = vpack.c.b16 %v4998, %v4997
        %v5014 = vpack.c.b16 %v5000, %v4999
        %v5015 = vpack.c.b16 %v5002, %v5001
        %v5016 = vpack.c.b16 %v5004, %v5003
        %v5017 = vpack.c.b16 %v5006, %v5005
        %v5018 = vpack.c.b16 %v5008, %v5007
        %v5019 = vpack.c.b16 %v5010, %v5009
        %v5020 = vpack.c.b16 %v5012, %v5011
        %5029 = vmatprep.subr.bf16.mxu0 0
        %5030 = vmatpush1.bf16.msra.mxu0 %v5013
        %5031 = vmatprep.subr.bf16.mxu0 0
        %5032 = vmatpush1.bf16.msra.mxu0 %v5014
        %5033 = vmatprep.subr.bf16.mxu0 0
        %5034 = vmatpush1.bf16.msra.mxu0 %v5015
        %5035 = vmatprep.subr.bf16.mxu0 0
        %5036 = vmatpush1.bf16.msra.mxu0 %v5016
        %5037 = vmatprep.subr.bf16.mxu0 0
        %5038 = vmatpush1.bf16.msra.mxu0 %v5017
        %5039 = vmatprep.subr.bf16.mxu0 0
        %5040 = vmatpush1.bf16.msra.mxu0 %v5018
        %5041 = vmatprep.subr.bf16.mxu0 0
        %5042 = vmatpush1.bf16.msra.mxu0 %v5019
        %5043 = vmatprep.subr.bf16.mxu0 0
        %5044 = vmatpush1.bf16.msra.mxu0 %v5020
        %5045 = vmatprep.subr.bf16.mxu0 0
        %5046 = vmatpush1.bf16.msra.mxu0 0
        %5047 = vmatprep.subr.bf16.mxu0 0
        %5048 = vmatpush1.bf16.msra.mxu0 0
        %5049 = vmatprep.subr.bf16.mxu0 0
        %5050 = vmatpush1.bf16.msra.mxu0 0
        %5051 = vmatprep.subr.bf16.mxu0 0
        %5052 = vmatpush1.bf16.msra.mxu0 0
        %5053 = vmatprep.subr.bf16.mxu0 0
        %5054 = vmatpush1.bf16.msra.mxu0 0
        %5055 = vmatprep.subr.bf16.mxu0 0
        %5056 = vmatpush1.bf16.msra.mxu0 0
        %5057 = vmatprep.subr.bf16.mxu0 0
        %5058 = vmatpush1.bf16.msra.mxu0 0
        %5059 = vmatprep.subr.bf16.mxu0 0
        %5060 = vmatpush1.bf16.msra.mxu0 0
        %5061 = vmatprep.mubr.bf16.mxu0 0
        %5062 = vmatmul.mubr.bf16.gmra.mrb[0].mxu0 %v4954
        %v5063 = vpop.f32.mrb[0].mxu0
        %v5064 = vadd.f32 0.0, %v5063
        %v5065 = vpop.f32.mrb[0].mxu0
        %v5066 = vpop.f32.mrb[0].mxu0
        %v5067 = vadd.f32 0.0, %v5066
        %v5068 = vpop.f32.mrb[0].mxu0
        %5069 = vmatprep.mubr.bf16.mxu0 0
        %5070 = vmatmul.mubr.bf16.gmra.mrb[0].mxu0 %v4955
        %v5071 = vpop.f32.mrb[0].mxu0
        %v5072 = vadd.f32 0.0, %v5071
        %v5073 = vpop.f32.mrb[0].mxu0
        %v5074 = vpop.f32.mrb[0].mxu0
        %v5075 = vadd.f32 0.0, %v5074
        %v5076 = vpop.f32.mrb[0].mxu0
        %5077 = vmatprep.mubr.bf16.mxu0 0
        %5078 = vmatmul.mubr.bf16.gmra.mrb[0].mxu0 %v4956
        %v5079 = vpop.f32.mrb[0].mxu0
        %v5080 = vadd.f32 0.0, %v5079
        %v5081 = vpop.f32.mrb[0].mxu0
        %v5082 = vpop.f32.mrb[0].mxu0
        %v5083 = vadd.f32 0.0, %v5082
        %v5084 = vpop.f32.mrb[0].mxu0
        %5085 = vmatprep.mubr.bf16.mxu0 0
        %5086 = vmatmul.mubr.bf16.gmra.mrb[0].mxu0 %v4957
        %v5087 = vpop.f32.mrb[0].mxu0
        %v5088 = vadd.f32 0.0, %v5087
        %v5089 = vpop.f32.mrb[0].mxu0
        %v5090 = vpop.f32.mrb[0].mxu0
        %v5091 = vadd.f32 0.0, %v5090
        %v5092 = vpop.f32.mrb[0].mxu0
        %5093 = vmatprep.mubr.bf16.mxu0 0
        %5094 = vmatmul.mubr.bf16.gmra.mrb[0].mxu0 %v4958
        %v5095 = vpop.f32.mrb[0].mxu0
        %v5096 = vadd.f32 0.0, %v5095
        %v5097 = vpop.f32.mrb[0].mxu0
        %v5098 = vpop.f32.mrb[0].mxu0
        %v5099 = vadd.f32 0.0, %v5098
        %v5100 = vpop.f32.mrb[0].mxu0
        %5101 = vmatprep.mubr.bf16.mxu0 0
        %5102 = vmatmul.mubr.bf16.gmra.mrb[0].mxu0 %v4959
        %v5103 = vpop.f32.mrb[0].mxu0
        %v5104 = vadd.f32 0.0, %v5103
        %v5105 = vpop.f32.mrb[0].mxu0
        %v5106 = vpop.f32.mrb[0].mxu0
        %v5107 = vadd.f32 0.0, %v5106
        %v5108 = vpop.f32.mrb[0].mxu0
        %5109 = vmatprep.mubr.bf16.mxu0 0
        %5110 = vmatmul.mubr.bf16.gmra.mrb[0].mxu0 %v4960
        %v5111 = vpop.f32.mrb[0].mxu0
        %v5112 = vadd.f32 0.0, %v5111
        %v5113 = vpop.f32.mrb[0].mxu0
        %v5114 = vpop.f32.mrb[0].mxu0
        %v5115 = vadd.f32 0.0, %v5114
        %v5116 = vpop.f32.mrb[0].mxu0
        %5117 = vmatprep.mubr.bf16.mxu0 0
        %5118 = vmatmul.mubr.bf16.gmra.mrb[0].mxu0 %v4961
        %v5119 = vpop.f32.mrb[0].mxu0
        %v5120 = vadd.f32 0.0, %v5119
        %v5121 = vpop.f32.mrb[0].mxu0
        %v5122 = vpop.f32.mrb[0].mxu0
        %v5123 = vadd.f32 0.0, %v5122
        %v5124 = vpop.f32.mrb[0].mxu0
        %5125 = vmatprep.mubr.bf16.mxu0 0
        %5126 = vmatmul.mubr.bf16.gmra.mrb[0].mxu0 %v4962
        %v5127 = vpop.f32.mrb[0].mxu0
        %v5128 = vadd.f32 0.0, %v5127
        %v5129 = vpop.f32.mrb[0].mxu0
        %v5130 = vpop.f32.mrb[0].mxu0
        %v5131 = vadd.f32 0.0, %v5130
        %v5132 = vpop.f32.mrb[0].mxu0
        %5133 = vmatprep.mubr.bf16.mxu0 0
        %5134 = vmatmul.mubr.bf16.gmra.mrb[0].mxu0 %v4963
        %v5135 = vpop.f32.mrb[0].mxu0
        %v5136 = vadd.f32 0.0, %v5135
        %v5137 = vpop.f32.mrb[0].mxu0
        %v5138 = vpop.f32.mrb[0].mxu0
        %v5139 = vadd.f32 0.0, %v5138
        %v5140 = vpop.f32.mrb[0].mxu0
        %5141 = vdwg.mxu0
        %v5142 = vadd.f32 %v4934, %v5064
        %v5143 = vadd.f32 %v4935, %v5067
        %v5144 = vadd.f32 %v4936, %v5072
        %v5145 = vadd.f32 %v4937, %v5075
        %v5146 = vadd.f32 %v4938, %v5080
        %v5147 = vadd.f32 %v4939, %v5083
        %v5148 = vadd.f32 %v4940, %v5088
        %v5149 = vadd.f32 %v4941, %v5091
        %v5150 = vadd.f32 %v4942, %v5096
        %v5151 = vadd.f32 %v4943, %v5099
        %v5152 = vadd.f32 %v4944, %v5104
        %v5153 = vadd.f32 %v4945, %v5107
        %v5154 = vadd.f32 %v4946, %v5112
        %v5155 = vadd.f32 %v4947, %v5115
        %v5156 = vadd.f32 %v4948, %v5120
        %v5157 = vadd.f32 %v4949, %v5123
        %v5158 = vadd.f32 %v4950, %v5128
        %v5159 = vadd.f32 %v4951, %v5131
        %v5160 = vadd.f32 %v4952, %v5136
        %v5161 = vadd.f32 %v4953, %v5139
        %v5162 = vld [vmem:[#allocation3 + $0x3] sm:$0xff]
        %v5163 = vld [vmem:[#allocation3 + $0xb] sm:$0xff]
        %v5164 = vld [vmem:[#allocation3 + $0x13] sm:$0xff]
        %v5165 = vld [vmem:[#allocation3 + $0x1b] sm:$0xff]
        %v5166 = vld [vmem:[#allocation3 + $0x23] sm:$0xff]
        %v5167 = vld [vmem:[#allocation3 + $0x2b] sm:$0xff]
        %v5168 = vld [vmem:[#allocation3 + $0x33] sm:$0xff]
        %v5169 = vld [vmem:[#allocation3 + $0x3b] sm:$0xff]
        %v5170 = vld [vmem:[#allocation3 + $0x43] sm:$0xff]
        %v5171 = vld [vmem:[#allocation3 + $0x4b] sm:$0xff]
        %v5172 = vld [vmem:[#allocation3 + $0x53] sm:$0xff]
        %v5173 = vld [vmem:[#allocation3 + $0x5b] sm:$0xff]
        %v5174 = vld [vmem:[#allocation3 + $0x63] sm:$0xff]
        %v5175 = vld [vmem:[#allocation3 + $0x6b] sm:$0xff]
        %v5176 = vld [vmem:[#allocation3 + $0x73] sm:$0xff]
        %v5177 = vld [vmem:[#allocation3 + $0x7b] sm:$0xff]
        %v5178 = vld [vmem:[#allocation3 + $0x83] sm:$0xff]
        %v5179 = vld [vmem:[#allocation3 + $0x8b] sm:$0xff]
        %v5180 = vld [vmem:[#allocation3 + $0x93] sm:$0xff]
        %v5181 = vld [vmem:[#allocation3 + $0x9b] sm:$0xff]
        %v5182 = vld [vmem:[#allocation3 + $0xa3] sm:$0xff]
        %v5183 = vld [vmem:[#allocation3 + $0xab] sm:$0xff]
        %v5184 = vld [vmem:[#allocation3 + $0xb3] sm:$0xff]
        %v5185 = vld [vmem:[#allocation3 + $0xbb] sm:$0xff]
        %v5186 = vld [vmem:[#allocation3 + $0xc3] sm:$0xff]
        %v5187 = vld [vmem:[#allocation3 + $0xcb] sm:$0xff]
        %v5188 = vld [vmem:[#allocation3 + $0xd3] sm:$0xff]
        %v5189 = vld [vmem:[#allocation3 + $0xdb] sm:$0xff]
        %v5190 = vpack.c.bf16 %v5163, %v5162
        %v5191 = vpack.c.bf16 %v5165, %v5164
        %v5192 = vpack.c.bf16 %v5167, %v5166
        %v5193 = vpack.c.bf16 %v5169, %v5168
        %v5194 = vpack.c.bf16 %v5171, %v5170
        %v5195 = vpack.c.bf16 %v5173, %v5172
        %v5196 = vpack.c.bf16 %v5175, %v5174
        %v5197 = vpack.c.bf16 %v5177, %v5176
        %v5198 = vpack.c.bf16 %v5179, %v5178
        %v5199 = vpack.c.bf16 %v5181, %v5180
        %v5200 = vpack.c.bf16 %v5183, %v5182
        %v5201 = vpack.c.bf16 %v5185, %v5184
        %v5202 = vpack.c.bf16 %v5187, %v5186
        %v5203 = vpack.c.bf16 %v5189, %v5188
        %5204 = vst [vmem:[#allocation4] sm:$0xff] %v5190
        %5205 = vst [vmem:[#allocation4 + $0x8] sm:$0xff] %v5191
        %5206 = vst [vmem:[#allocation4 + $0x10] sm:$0xff] %v5192
        %5207 = vst [vmem:[#allocation4 + $0x18] sm:$0xff] %v5193
        %5208 = vst [vmem:[#allocation4 + $0x20] sm:$0xff] %v5194
        %5209 = vst [vmem:[#allocation4 + $0x28] sm:$0xff] %v5195
        %5210 = vst [vmem:[#allocation4 + $0x30] sm:$0xff] %v5196
        %5211 = vst [vmem:[#allocation4 + $0x38] sm:$0xff] %v5197
        %5212 = vst [vmem:[#allocation4 + $0x40] sm:$0xff] %v5198
        %5213 = vst [vmem:[#allocation4 + $0x48] sm:$0xff] %v5199
        %5214 = vst [vmem:[#allocation4 + $0x50] sm:$0xff] %v5200
        %5215 = vst [vmem:[#allocation4 + $0x58] sm:$0xff] %v5201
        %5216 = vst [vmem:[#allocation4 + $0x60] sm:$0xff] %v5202
        %5217 = vst [vmem:[#allocation4 + $0x68] sm:$0xff] %v5203
        %v5218 = vld [vmem:[#allocation4] sm:$0xff]
        %v5219 = vld [vmem:[#allocation4 + $0x8] sm:$0xff]
        %v5220 = vld [vmem:[#allocation4 + $0x10] sm:$0xff]
        %v5221 = vld [vmem:[#allocation4 + $0x18] sm:$0xff]
        %v5222 = vld [vmem:[#allocation4 + $0x20] sm:$0xff]
        %v5223 = vld [vmem:[#allocation4 + $0x28] sm:$0xff]
        %v5224 = vld [vmem:[#allocation4 + $0x30] sm:$0xff]
        %v5225 = vld [vmem:[#allocation4 + $0x38] sm:$0xff]
        %v5226 = vld [vmem:[#allocation4 + $0x40] sm:$0xff]
        %v5227 = vld [vmem:[#allocation4 + $0x48] sm:$0xff]
        %s5228 = scalar_lea.vmem %s3, 192
        %v5229 = vld [vmem:[%s5228] sm:$0xf]
        %v5230 = vld [vmem:[%s5228 + $0x4] sm:$0xf]
        %v5231 = vld [vmem:[%s5228 + $0x8] sm:$0xf]
        %v5232 = vld [vmem:[%s5228 + $0xc] sm:$0xf]
        %v5233 = vld [vmem:[%s5228 + $0x10] sm:$0xf]
        %v5234 = vld [vmem:[%s5228 + $0x14] sm:$0xf]
        %v5235 = vld [vmem:[%s5228 + $0x18] sm:$0xf]
        %v5236 = vld [vmem:[%s5228 + $0x1c] sm:$0xf]
        %v5237 = vld [vmem:[%s5228 + $0x20] sm:$0xf]
        %v5238 = vld [vmem:[%s5228 + $0x24] sm:$0xf]
        %v5239 = vld [vmem:[%s5228 + $0x28] sm:$0xf]
        %v5240 = vld [vmem:[%s5228 + $0x2c] sm:$0xf]
        %v5241 = vld [vmem:[%s5228 + $0x30] sm:$0xf]
        %v5242 = vld [vmem:[%s5228 + $0x34] sm:$0xf]
        %v5243 = vld [vmem:[%s5228 + $0x38] sm:$0xf]
        %v5244 = vld [vmem:[%s5228 + $0x3c] sm:$0xf]
        %v5261 = vunpack.c.l.b16 %v5229
        %v5262 = vunpack.c.l.b16 %v5230
        %v5263 = vunpack.c.l.b16 %v5231
        %v5264 = vunpack.c.l.b16 %v5232
        %v5265 = vunpack.c.l.b16 %v5233
        %v5266 = vunpack.c.l.b16 %v5234
        %v5267 = vunpack.c.l.b16 %v5235
        %v5268 = vunpack.c.l.b16 %v5236
        %v5269 = vunpack.c.l.b16 %v5237
        %v5270 = vunpack.c.l.b16 %v5238
        %v5271 = vunpack.c.l.b16 %v5239
        %v5272 = vunpack.c.l.b16 %v5240
        %v5273 = vunpack.c.l.b16 %v5241
        %v5274 = vunpack.c.l.b16 %v5242
        %v5275 = vunpack.c.l.b16 %v5243
        %v5276 = vunpack.c.l.b16 %v5244
        %v5277 = vpack.c.b16 %v5262, %v5261
        %v5278 = vpack.c.b16 %v5264, %v5263
        %v5279 = vpack.c.b16 %v5266, %v5265
        %v5280 = vpack.c.b16 %v5268, %v5267
        %v5281 = vpack.c.b16 %v5270, %v5269
        %v5282 = vpack.c.b16 %v5272, %v5271
        %v5283 = vpack.c.b16 %v5274, %v5273
        %v5284 = vpack.c.b16 %v5276, %v5275
        %5293 = vmatprep.subr.bf16.mxu0 0
        %5294 = vmatpush1.bf16.msra.mxu0 %v5277
        %5295 = vmatprep.subr.bf16.mxu0 0
        %5296 = vmatpush1.bf16.msra.mxu0 %v5278
        %5297 = vmatprep.subr.bf16.mxu0 0
        %5298 = vmatpush1.bf16.msra.mxu0 %v5279
        %5299 = vmatprep.subr.bf16.mxu0 0
        %5300 = vmatpush1.bf16.msra.mxu0 %v5280
        %5301 = vmatprep.subr.bf16.mxu0 0
        %5302 = vmatpush1.bf16.msra.mxu0 %v5281
        %5303 = vmatprep.subr.bf16.mxu0 0
        %5304 = vmatpush1.bf16.msra.mxu0 %v5282
        %5305 = vmatprep.subr.bf16.mxu0 0
        %5306 = vmatpush1.bf16.msra.mxu0 %v5283
        %5307 = vmatprep.subr.bf16.mxu0 0
        %5308 = vmatpush1.bf16.msra.mxu0 %v5284
        %5309 = vmatprep.subr.bf16.mxu0 0
        %5310 = vmatpush1.bf16.msra.mxu0 0
        %5311 = vmatprep.subr.bf16.mxu0 0
        %5312 = vmatpush1.bf16.msra.mxu0 0
        %5313 = vmatprep.subr.bf16.mxu0 0
        %5314 = vmatpush1.bf16.msra.mxu0 0
        %5315 = vmatprep.subr.bf16.mxu0 0
        %5316 = vmatpush1.bf16.msra.mxu0 0
        %5317 = vmatprep.subr.bf16.mxu0 0
        %5318 = vmatpush1.bf16.msra.mxu0 0
        %5319 = vmatprep.subr.bf16.mxu0 0
        %5320 = vmatpush1.bf16.msra.mxu0 0
        %5321 = vmatprep.subr.bf16.mxu0 0
        %5322 = vmatpush1.bf16.msra.mxu0 0
        %5323 = vmatprep.subr.bf16.mxu0 0
        %5324 = vmatpush1.bf16.msra.mxu0 0
        %5325 = vmatprep.mubr.bf16.mxu0 0
        %5326 = vmatmul.mubr.bf16.gmra.mrb[0].mxu0 %v5218
        %v5327 = vpop.f32.mrb[0].mxu0
        %v5328 = vadd.f32 0.0, %v5327
        %v5329 = vpop.f32.mrb[0].mxu0
        %v5330 = vpop.f32.mrb[0].mxu0
        %v5331 = vadd.f32 0.0, %v5330
        %v5332 = vpop.f32.mrb[0].mxu0
        %5333 = vmatprep.mubr.bf16.mxu0 0
        %5334 = vmatmul.mubr.bf16.gmra.mrb[0].mxu0 %v5219
        %v5335 = vpop.f32.mrb[0].mxu0
        %v5336 = vadd.f32 0.0, %v5335
        %v5337 = vpop.f32.mrb[0].mxu0
        %v5338 = vpop.f32.mrb[0].mxu0
        %v5339 = vadd.f32 0.0, %v5338
        %v5340 = vpop.f32.mrb[0].mxu0
        %5341 = vmatprep.mubr.bf16.mxu0 0
        %5342 = vmatmul.mubr.bf16.gmra.mrb[0].mxu0 %v5220
        %v5343 = vpop.f32.mrb[0].mxu0
        %v5344 = vadd.f32 0.0, %v5343
        %v5345 = vpop.f32.mrb[0].mxu0
        %v5346 = vpop.f32.mrb[0].mxu0
        %v5347 = vadd.f32 0.0, %v5346
        %v5348 = vpop.f32.mrb[0].mxu0
        %5349 = vmatprep.mubr.bf16.mxu0 0
        %5350 = vmatmul.mubr.bf16.gmra.mrb[0].mxu0 %v5221
        %v5351 = vpop.f32.mrb[0].mxu0
        %v5352 = vadd.f32 0.0, %v5351
        %v5353 = vpop.f32.mrb[0].mxu0
        %v5354 = vpop.f32.mrb[0].mxu0
        %v5355 = vadd.f32 0.0, %v5354
        %v5356 = vpop.f32.mrb[0].mxu0
        %5357 = vmatprep.mubr.bf16.mxu0 0
        %5358 = vmatmul.mubr.bf16.gmra.mrb[0].mxu0 %v5222
        %v5359 = vpop.f32.mrb[0].mxu0
        %v5360 = vadd.f32 0.0, %v5359
        %v5361 = vpop.f32.mrb[0].mxu0
        %v5362 = vpop.f32.mrb[0].mxu0
        %v5363 = vadd.f32 0.0, %v5362
        %v5364 = vpop.f32.mrb[0].mxu0
        %5365 = vmatprep.mubr.bf16.mxu0 0
        %5366 = vmatmul.mubr.bf16.gmra.mrb[0].mxu0 %v5223
        %v5367 = vpop.f32.mrb[0].mxu0
        %v5368 = vadd.f32 0.0, %v5367
        %v5369 = vpop.f32.mrb[0].mxu0
        %v5370 = vpop.f32.mrb[0].mxu0
        %v5371 = vadd.f32 0.0, %v5370
        %v5372 = vpop.f32.mrb[0].mxu0
        %5373 = vmatprep.mubr.bf16.mxu0 0
        %5374 = vmatmul.mubr.bf16.gmra.mrb[0].mxu0 %v5224
        %v5375 = vpop.f32.mrb[0].mxu0
        %v5376 = vadd.f32 0.0, %v5375
        %v5377 = vpop.f32.mrb[0].mxu0
        %v5378 = vpop.f32.mrb[0].mxu0
        %v5379 = vadd.f32 0.0, %v5378
        %v5380 = vpop.f32.mrb[0].mxu0
        %5381 = vmatprep.mubr.bf16.mxu0 0
        %5382 = vmatmul.mubr.bf16.gmra.mrb[0].mxu0 %v5225
        %v5383 = vpop.f32.mrb[0].mxu0
        %v5384 = vadd.f32 0.0, %v5383
        %v5385 = vpop.f32.mrb[0].mxu0
        %v5386 = vpop.f32.mrb[0].mxu0
        %v5387 = vadd.f32 0.0, %v5386
        %v5388 = vpop.f32.mrb[0].mxu0
        %5389 = vmatprep.mubr.bf16.mxu0 0
        %5390 = vmatmul.mubr.bf16.gmra.mrb[0].mxu0 %v5226
        %v5391 = vpop.f32.mrb[0].mxu0
        %v5392 = vadd.f32 0.0, %v5391
        %v5393 = vpop.f32.mrb[0].mxu0
        %v5394 = vpop.f32.mrb[0].mxu0
        %v5395 = vadd.f32 0.0, %v5394
        %v5396 = vpop.f32.mrb[0].mxu0
        %5397 = vmatprep.mubr.bf16.mxu0 0
        %5398 = vmatmul.mubr.bf16.gmra.mrb[0].mxu0 %v5227
        %v5399 = vpop.f32.mrb[0].mxu0
        %v5400 = vadd.f32 0.0, %v5399
        %v5401 = vpop.f32.mrb[0].mxu0
        %v5402 = vpop.f32.mrb[0].mxu0
        %v5403 = vadd.f32 0.0, %v5402
        %v5404 = vpop.f32.mrb[0].mxu0
        %5405 = vdwg.mxu0
        %v5406 = vadd.f32 %v5142, %v5328
        %v5407 = vadd.f32 %v5143, %v5331
        %v5408 = vadd.f32 %v5144, %v5336
        %v5409 = vadd.f32 %v5145, %v5339
        %v5410 = vadd.f32 %v5146, %v5344
        %v5411 = vadd.f32 %v5147, %v5347
        %v5412 = vadd.f32 %v5148, %v5352
        %v5413 = vadd.f32 %v5149, %v5355
        %v5414 = vadd.f32 %v5150, %v5360
        %v5415 = vadd.f32 %v5151, %v5363
        %v5416 = vadd.f32 %v5152, %v5368
        %v5417 = vadd.f32 %v5153, %v5371
        %v5418 = vadd.f32 %v5154, %v5376
        %v5419 = vadd.f32 %v5155, %v5379
        %v5420 = vadd.f32 %v5156, %v5384
        %v5421 = vadd.f32 %v5157, %v5387
        %v5422 = vadd.f32 %v5158, %v5392
        %v5423 = vadd.f32 %v5159, %v5395
        %v5424 = vadd.f32 %v5160, %v5400
        %v5425 = vadd.f32 %v5161, %v5403
        %v5426 = vld [vmem:[#allocation4 + $0x8] sm:$0xff]
        %v5427 = vld [vmem:[#allocation4 + $0x10] sm:$0xff]
        %v5428 = vld [vmem:[#allocation4 + $0x18] sm:$0xff]
        %v5429 = vld [vmem:[#allocation4 + $0x20] sm:$0xff]
        %v5430 = vld [vmem:[#allocation4 + $0x28] sm:$0xff]
        %v5431 = vld [vmem:[#allocation4 + $0x30] sm:$0xff]
        %v5432 = vld [vmem:[#allocation4 + $0x38] sm:$0xff]
        %v5433 = vld [vmem:[#allocation4 + $0x40] sm:$0xff]
        %v5434 = vld [vmem:[#allocation4 + $0x48] sm:$0xff]
        %v5435 = vld [vmem:[#allocation4 + $0x50] sm:$0xff]
        %s5436 = scalar_lea.vmem %s3, 512
        %v5437 = vld [vmem:[%s5436] sm:$0xf]
        %v5438 = vld [vmem:[%s5436 + $0x4] sm:$0xf]
        %v5439 = vld [vmem:[%s5436 + $0x8] sm:$0xf]
        %v5440 = vld [vmem:[%s5436 + $0xc] sm:$0xf]
        %v5441 = vld [vmem:[%s5436 + $0x10] sm:$0xf]
        %v5442 = vld [vmem:[%s5436 + $0x14] sm:$0xf]
        %v5443 = vld [vmem:[%s5436 + $0x18] sm:$0xf]
        %v5444 = vld [vmem:[%s5436 + $0x1c] sm:$0xf]
        %v5445 = vld [vmem:[%s5436 + $0x20] sm:$0xf]
        %v5446 = vld [vmem:[%s5436 + $0x24] sm:$0xf]
        %v5447 = vld [vmem:[%s5436 + $0x28] sm:$0xf]
        %v5448 = vld [vmem:[%s5436 + $0x2c] sm:$0xf]
        %v5449 = vld [vmem:[%s5436 + $0x30] sm:$0xf]
        %v5450 = vld [vmem:[%s5436 + $0x34] sm:$0xf]
        %v5451 = vld [vmem:[%s5436 + $0x38] sm:$0xf]
        %v5452 = vld [vmem:[%s5436 + $0x3c] sm:$0xf]
        %v5469 = vunpack.c.l.b16 %v5437
        %v5470 = vunpack.c.l.b16 %v5438
        %v5471 = vunpack.c.l.b16 %v5439
        %v5472 = vunpack.c.l.b16 %v5440
        %v5473 = vunpack.c.l.b16 %v5441
        %v5474 = vunpack.c.l.b16 %v5442
        %v5475 = vunpack.c.l.b16 %v5443
        %v5476 = vunpack.c.l.b16 %v5444
        %v5477 = vunpack.c.l.b16 %v5445
        %v5478 = vunpack.c.l.b16 %v5446
        %v5479 = vunpack.c.l.b16 %v5447
        %v5480 = vunpack.c.l.b16 %v5448
        %v5481 = vunpack.c.l.b16 %v5449
        %v5482 = vunpack.c.l.b16 %v5450
        %v5483 = vunpack.c.l.b16 %v5451
        %v5484 = vunpack.c.l.b16 %v5452
        %v5485 = vpack.c.b16 %v5470, %v5469
        %v5486 = vpack.c.b16 %v5472, %v5471
        %v5487 = vpack.c.b16 %v5474, %v5473
        %v5488 = vpack.c.b16 %v5476, %v5475
        %v5489 = vpack.c.b16 %v5478, %v5477
        %v5490 = vpack.c.b16 %v5480, %v5479
        %v5491 = vpack.c.b16 %v5482, %v5481
        %v5492 = vpack.c.b16 %v5484, %v5483
        %5501 = vmatprep.subr.bf16.mxu0 0
        %5502 = vmatpush1.bf16.msra.mxu0 %v5485
        %5503 = vmatprep.subr.bf16.mxu0 0
        %5504 = vmatpush1.bf16.msra.mxu0 %v5486
        %5505 = vmatprep.subr.bf16.mxu0 0
        %5506 = vmatpush1.bf16.msra.mxu0 %v5487
        %5507 = vmatprep.subr.bf16.mxu0 0
        %5508 = vmatpush1.bf16.msra.mxu0 %v5488
        %5509 = vmatprep.subr.bf16.mxu0 0
        %5510 = vmatpush1.bf16.msra.mxu0 %v5489
        %5511 = vmatprep.subr.bf16.mxu0 0
        %5512 = vmatpush1.bf16.msra.mxu0 %v5490
        %5513 = vmatprep.subr.bf16.mxu0 0
        %5514 = vmatpush1.bf16.msra.mxu0 %v5491
        %5515 = vmatprep.subr.bf16.mxu0 0
        %5516 = vmatpush1.bf16.msra.mxu0 %v5492
        %5517 = vmatprep.subr.bf16.mxu0 0
        %5518 = vmatpush1.bf16.msra.mxu0 0
        %5519 = vmatprep.subr.bf16.mxu0 0
        %5520 = vmatpush1.bf16.msra.mxu0 0
        %5521 = vmatprep.subr.bf16.mxu0 0
        %5522 = vmatpush1.bf16.msra.mxu0 0
        %5523 = vmatprep.subr.bf16.mxu0 0
        %5524 = vmatpush1.bf16.msra.mxu0 0
        %5525 = vmatprep.subr.bf16.mxu0 0
        %5526 = vmatpush1.bf16.msra.mxu0 0
        %5527 = vmatprep.subr.bf16.mxu0 0
        %5528 = vmatpush1.bf16.msra.mxu0 0
        %5529 = vmatprep.subr.bf16.mxu0 0
        %5530 = vmatpush1.bf16.msra.mxu0 0
        %5531 = vmatprep.subr.bf16.mxu0 0
        %5532 = vmatpush1.bf16.msra.mxu0 0
        %5533 = vmatprep.mubr.bf16.mxu0 0
        %5534 = vmatmul.mubr.bf16.gmra.mrb[0].mxu0 %v5426
        %v5535 = vpop.f32.mrb[0].mxu0
        %v5536 = vadd.f32 0.0, %v5535
        %v5537 = vpop.f32.mrb[0].mxu0
        %v5538 = vpop.f32.mrb[0].mxu0
        %v5539 = vadd.f32 0.0, %v5538
        %v5540 = vpop.f32.mrb[0].mxu0
        %5541 = vmatprep.mubr.bf16.mxu0 0
        %5542 = vmatmul.mubr.bf16.gmra.mrb[0].mxu0 %v5427
        %v5543 = vpop.f32.mrb[0].mxu0
        %v5544 = vadd.f32 0.0, %v5543
        %v5545 = vpop.f32.mrb[0].mxu0
        %v5546 = vpop.f32.mrb[0].mxu0
        %v5547 = vadd.f32 0.0, %v5546
        %v5548 = vpop.f32.mrb[0].mxu0
        %5549 = vmatprep.mubr.bf16.mxu0 0
        %5550 = vmatmul.mubr.bf16.gmra.mrb[0].mxu0 %v5428
        %v5551 = vpop.f32.mrb[0].mxu0
        %v5552 = vadd.f32 0.0, %v5551
        %v5553 = vpop.f32.mrb[0].mxu0
        %v5554 = vpop.f32.mrb[0].mxu0
        %v5555 = vadd.f32 0.0, %v5554
        %v5556 = vpop.f32.mrb[0].mxu0
        %5557 = vmatprep.mubr.bf16.mxu0 0
        %5558 = vmatmul.mubr.bf16.gmra.mrb[0].mxu0 %v5429
        %v5559 = vpop.f32.mrb[0].mxu0
        %v5560 = vadd.f32 0.0, %v5559
        %v5561 = vpop.f32.mrb[0].mxu0
        %v5562 = vpop.f32.mrb[0].mxu0
        %v5563 = vadd.f32 0.0, %v5562
        %v5564 = vpop.f32.mrb[0].mxu0
        %5565 = vmatprep.mubr.bf16.mxu0 0
        %5566 = vmatmul.mubr.bf16.gmra.mrb[0].mxu0 %v5430
        %v5567 = vpop.f32.mrb[0].mxu0
        %v5568 = vadd.f32 0.0, %v5567
        %v5569 = vpop.f32.mrb[0].mxu0
        %v5570 = vpop.f32.mrb[0].mxu0
        %v5571 = vadd.f32 0.0, %v5570
        %v5572 = vpop.f32.mrb[0].mxu0
        %5573 = vmatprep.mubr.bf16.mxu0 0
        %5574 = vmatmul.mubr.bf16.gmra.mrb[0].mxu0 %v5431
        %v5575 = vpop.f32.mrb[0].mxu0
        %v5576 = vadd.f32 0.0, %v5575
        %v5577 = vpop.f32.mrb[0].mxu0
        %v5578 = vpop.f32.mrb[0].mxu0
        %v5579 = vadd.f32 0.0, %v5578
        %v5580 = vpop.f32.mrb[0].mxu0
        %5581 = vmatprep.mubr.bf16.mxu0 0
        %5582 = vmatmul.mubr.bf16.gmra.mrb[0].mxu0 %v5432
        %v5583 = vpop.f32.mrb[0].mxu0
        %v5584 = vadd.f32 0.0, %v5583
        %v5585 = vpop.f32.mrb[0].mxu0
        %v5586 = vpop.f32.mrb[0].mxu0
        %v5587 = vadd.f32 0.0, %v5586
        %v5588 = vpop.f32.mrb[0].mxu0
        %5589 = vmatprep.mubr.bf16.mxu0 0
        %5590 = vmatmul.mubr.bf16.gmra.mrb[0].mxu0 %v5433
        %v5591 = vpop.f32.mrb[0].mxu0
        %v5592 = vadd.f32 0.0, %v5591
        %v5593 = vpop.f32.mrb[0].mxu0
        %v5594 = vpop.f32.mrb[0].mxu0
        %v5595 = vadd.f32 0.0, %v5594
        %v5596 = vpop.f32.mrb[0].mxu0
        %5597 = vmatprep.mubr.bf16.mxu0 0
        %5598 = vmatmul.mubr.bf16.gmra.mrb[0].mxu0 %v5434
        %v5599 = vpop.f32.mrb[0].mxu0
        %v5600 = vadd.f32 0.0, %v5599
        %v5601 = vpop.f32.mrb[0].mxu0
        %v5602 = vpop.f32.mrb[0].mxu0
        %v5603 = vadd.f32 0.0, %v5602
        %v5604 = vpop.f32.mrb[0].mxu0
        %5605 = vmatprep.mubr.bf16.mxu0 0
        %5606 = vmatmul.mubr.bf16.gmra.mrb[0].mxu0 %v5435
        %v5607 = vpop.f32.mrb[0].mxu0
        %v5608 = vadd.f32 0.0, %v5607
        %v5609 = vpop.f32.mrb[0].mxu0
        %v5610 = vpop.f32.mrb[0].mxu0
        %v5611 = vadd.f32 0.0, %v5610
        %v5612 = vpop.f32.mrb[0].mxu0
        %5613 = vdwg.mxu0
        %v5614 = vadd.f32 %v5406, %v5536
        %v5615 = vadd.f32 %v5407, %v5539
        %v5616 = vadd.f32 %v5408, %v5544
        %v5617 = vadd.f32 %v5409, %v5547
        %v5618 = vadd.f32 %v5410, %v5552
        %v5619 = vadd.f32 %v5411, %v5555
        %v5620 = vadd.f32 %v5412, %v5560
        %v5621 = vadd.f32 %v5413, %v5563
        %v5622 = vadd.f32 %v5414, %v5568
        %v5623 = vadd.f32 %v5415, %v5571
        %v5624 = vadd.f32 %v5416, %v5576
        %v5625 = vadd.f32 %v5417, %v5579
        %v5626 = vadd.f32 %v5418, %v5584
        %v5627 = vadd.f32 %v5419, %v5587
        %v5628 = vadd.f32 %v5420, %v5592
        %v5629 = vadd.f32 %v5421, %v5595
        %v5630 = vadd.f32 %v5422, %v5600
        %v5631 = vadd.f32 %v5423, %v5603
        %v5632 = vadd.f32 %v5424, %v5608
        %v5633 = vadd.f32 %v5425, %v5611
        %v5634 = vld [vmem:[#allocation4 + $0x10] sm:$0xff]
        %v5635 = vld [vmem:[#allocation4 + $0x18] sm:$0xff]
        %v5636 = vld [vmem:[#allocation4 + $0x20] sm:$0xff]
        %v5637 = vld [vmem:[#allocation4 + $0x28] sm:$0xff]
        %v5638 = vld [vmem:[#allocation4 + $0x30] sm:$0xff]
        %v5639 = vld [vmem:[#allocation4 + $0x38] sm:$0xff]
        %v5640 = vld [vmem:[#allocation4 + $0x40] sm:$0xff]
        %v5641 = vld [vmem:[#allocation4 + $0x48] sm:$0xff]
        %v5642 = vld [vmem:[#allocation4 + $0x50] sm:$0xff]
        %v5643 = vld [vmem:[#allocation4 + $0x58] sm:$0xff]
        %s5644 = scalar_lea.vmem %s3, 832
        %v5645 = vld [vmem:[%s5644] sm:$0xf]
        %v5646 = vld [vmem:[%s5644 + $0x4] sm:$0xf]
        %v5647 = vld [vmem:[%s5644 + $0x8] sm:$0xf]
        %v5648 = vld [vmem:[%s5644 + $0xc] sm:$0xf]
        %v5649 = vld [vmem:[%s5644 + $0x10] sm:$0xf]
        %v5650 = vld [vmem:[%s5644 + $0x14] sm:$0xf]
        %v5651 = vld [vmem:[%s5644 + $0x18] sm:$0xf]
        %v5652 = vld [vmem:[%s5644 + $0x1c] sm:$0xf]
        %v5653 = vld [vmem:[%s5644 + $0x20] sm:$0xf]
        %v5654 = vld [vmem:[%s5644 + $0x24] sm:$0xf]
        %v5655 = vld [vmem:[%s5644 + $0x28] sm:$0xf]
        %v5656 = vld [vmem:[%s5644 + $0x2c] sm:$0xf]
        %v5657 = vld [vmem:[%s5644 + $0x30] sm:$0xf]
        %v5658 = vld [vmem:[%s5644 + $0x34] sm:$0xf]
        %v5659 = vld [vmem:[%s5644 + $0x38] sm:$0xf]
        %v5660 = vld [vmem:[%s5644 + $0x3c] sm:$0xf]
        %v5677 = vunpack.c.l.b16 %v5645
        %v5678 = vunpack.c.l.b16 %v5646
        %v5679 = vunpack.c.l.b16 %v5647
        %v5680 = vunpack.c.l.b16 %v5648
        %v5681 = vunpack.c.l.b16 %v5649
        %v5682 = vunpack.c.l.b16 %v5650
        %v5683 = vunpack.c.l.b16 %v5651
        %v5684 = vunpack.c.l.b16 %v5652
        %v5685 = vunpack.c.l.b16 %v5653
        %v5686 = vunpack.c.l.b16 %v5654
        %v5687 = vunpack.c.l.b16 %v5655
        %v5688 = vunpack.c.l.b16 %v5656
        %v5689 = vunpack.c.l.b16 %v5657
        %v5690 = vunpack.c.l.b16 %v5658
        %v5691 = vunpack.c.l.b16 %v5659
        %v5692 = vunpack.c.l.b16 %v5660
        %v5693 = vpack.c.b16 %v5678, %v5677
        %v5694 = vpack.c.b16 %v5680, %v5679
        %v5695 = vpack.c.b16 %v5682, %v5681
        %v5696 = vpack.c.b16 %v5684, %v5683
        %v5697 = vpack.c.b16 %v5686, %v5685
        %v5698 = vpack.c.b16 %v5688, %v5687
        %v5699 = vpack.c.b16 %v5690, %v5689
        %v5700 = vpack.c.b16 %v5692, %v5691
        %5709 = vmatprep.subr.bf16.mxu0 0
        %5710 = vmatpush1.bf16.msra.mxu0 %v5693
        %5711 = vmatprep.subr.bf16.mxu0 0
        %5712 = vmatpush1.bf16.msra.mxu0 %v5694
        %5713 = vmatprep.subr.bf16.mxu0 0
        %5714 = vmatpush1.bf16.msra.mxu0 %v5695
        %5715 = vmatprep.subr.bf16.mxu0 0
        %5716 = vmatpush1.bf16.msra.mxu0 %v5696
        %5717 = vmatprep.subr.bf16.mxu0 0
        %5718 = vmatpush1.bf16.msra.mxu0 %v5697
        %5719 = vmatprep.subr.bf16.mxu0 0
        %5720 = vmatpush1.bf16.msra.mxu0 %v5698
        %5721 = vmatprep.subr.bf16.mxu0 0
        %5722 = vmatpush1.bf16.msra.mxu0 %v5699
        %5723 = vmatprep.subr.bf16.mxu0 0
        %5724 = vmatpush1.bf16.msra.mxu0 %v5700
        %5725 = vmatprep.subr.bf16.mxu0 0
        %5726 = vmatpush1.bf16.msra.mxu0 0
        %5727 = vmatprep.subr.bf16.mxu0 0
        %5728 = vmatpush1.bf16.msra.mxu0 0
        %5729 = vmatprep.subr.bf16.mxu0 0
        %5730 = vmatpush1.bf16.msra.mxu0 0
        %5731 = vmatprep.subr.bf16.mxu0 0
        %5732 = vmatpush1.bf16.msra.mxu0 0
        %5733 = vmatprep.subr.bf16.mxu0 0
        %5734 = vmatpush1.bf16.msra.mxu0 0
        %5735 = vmatprep.subr.bf16.mxu0 0
        %5736 = vmatpush1.bf16.msra.mxu0 0
        %5737 = vmatprep.subr.bf16.mxu0 0
        %5738 = vmatpush1.bf16.msra.mxu0 0
        %5739 = vmatprep.subr.bf16.mxu0 0
        %5740 = vmatpush1.bf16.msra.mxu0 0
        %5741 = vmatprep.mubr.bf16.mxu0 0
        %5742 = vmatmul.mubr.bf16.gmra.mrb[0].mxu0 %v5634
        %v5743 = vpop.f32.mrb[0].mxu0
        %v5744 = vadd.f32 0.0, %v5743
        %v5745 = vpop.f32.mrb[0].mxu0
        %v5746 = vpop.f32.mrb[0].mxu0
        %v5747 = vadd.f32 0.0, %v5746
        %v5748 = vpop.f32.mrb[0].mxu0
        %5749 = vmatprep.mubr.bf16.mxu0 0
        %5750 = vmatmul.mubr.bf16.gmra.mrb[0].mxu0 %v5635
        %v5751 = vpop.f32.mrb[0].mxu0
        %v5752 = vadd.f32 0.0, %v5751
        %v5753 = vpop.f32.mrb[0].mxu0
        %v5754 = vpop.f32.mrb[0].mxu0
        %v5755 = vadd.f32 0.0, %v5754
        %v5756 = vpop.f32.mrb[0].mxu0
        %5757 = vmatprep.mubr.bf16.mxu0 0
        %5758 = vmatmul.mubr.bf16.gmra.mrb[0].mxu0 %v5636
        %v5759 = vpop.f32.mrb[0].mxu0
        %v5760 = vadd.f32 0.0, %v5759
        %v5761 = vpop.f32.mrb[0].mxu0
        %v5762 = vpop.f32.mrb[0].mxu0
        %v5763 = vadd.f32 0.0, %v5762
        %v5764 = vpop.f32.mrb[0].mxu0
        %5765 = vmatprep.mubr.bf16.mxu0 0
        %5766 = vmatmul.mubr.bf16.gmra.mrb[0].mxu0 %v5637
        %v5767 = vpop.f32.mrb[0].mxu0
        %v5768 = vadd.f32 0.0, %v5767
        %v5769 = vpop.f32.mrb[0].mxu0
        %v5770 = vpop.f32.mrb[0].mxu0
        %v5771 = vadd.f32 0.0, %v5770
        %v5772 = vpop.f32.mrb[0].mxu0
        %5773 = vmatprep.mubr.bf16.mxu0 0
        %5774 = vmatmul.mubr.bf16.gmra.mrb[0].mxu0 %v5638
        %v5775 = vpop.f32.mrb[0].mxu0
        %v5776 = vadd.f32 0.0, %v5775
        %v5777 = vpop.f32.mrb[0].mxu0
        %v5778 = vpop.f32.mrb[0].mxu0
        %v5779 = vadd.f32 0.0, %v5778
        %v5780 = vpop.f32.mrb[0].mxu0
        %5781 = vmatprep.mubr.bf16.mxu0 0
        %5782 = vmatmul.mubr.bf16.gmra.mrb[0].mxu0 %v5639
        %v5783 = vpop.f32.mrb[0].mxu0
        %v5784 = vadd.f32 0.0, %v5783
        %v5785 = vpop.f32.mrb[0].mxu0
        %v5786 = vpop.f32.mrb[0].mxu0
        %v5787 = vadd.f32 0.0, %v5786
        %v5788 = vpop.f32.mrb[0].mxu0
        %5789 = vmatprep.mubr.bf16.mxu0 0
        %5790 = vmatmul.mubr.bf16.gmra.mrb[0].mxu0 %v5640
        %v5791 = vpop.f32.mrb[0].mxu0
        %v5792 = vadd.f32 0.0, %v5791
        %v5793 = vpop.f32.mrb[0].mxu0
        %v5794 = vpop.f32.mrb[0].mxu0
        %v5795 = vadd.f32 0.0, %v5794
        %v5796 = vpop.f32.mrb[0].mxu0
        %5797 = vmatprep.mubr.bf16.mxu0 0
        %5798 = vmatmul.mubr.bf16.gmra.mrb[0].mxu0 %v5641
        %v5799 = vpop.f32.mrb[0].mxu0
        %v5800 = vadd.f32 0.0, %v5799
        %v5801 = vpop.f32.mrb[0].mxu0
        %v5802 = vpop.f32.mrb[0].mxu0
        %v5803 = vadd.f32 0.0, %v5802
        %v5804 = vpop.f32.mrb[0].mxu0
        %5805 = vmatprep.mubr.bf16.mxu0 0
        %5806 = vmatmul.mubr.bf16.gmra.mrb[0].mxu0 %v5642
        %v5807 = vpop.f32.mrb[0].mxu0
        %v5808 = vadd.f32 0.0, %v5807
        %v5809 = vpop.f32.mrb[0].mxu0
        %v5810 = vpop.f32.mrb[0].mxu0
        %v5811 = vadd.f32 0.0, %v5810
        %v5812 = vpop.f32.mrb[0].mxu0
        %5813 = vmatprep.mubr.bf16.mxu0 0
        %5814 = vmatmul.mubr.bf16.gmra.mrb[0].mxu0 %v5643
        %v5815 = vpop.f32.mrb[0].mxu0
        %v5816 = vadd.f32 0.0, %v5815
        %v5817 = vpop.f32.mrb[0].mxu0
        %v5818 = vpop.f32.mrb[0].mxu0
        %v5819 = vadd.f32 0.0, %v5818
        %v5820 = vpop.f32.mrb[0].mxu0
        %5821 = vdwg.mxu0
        %v5822 = vadd.f32 %v5614, %v5744
        %v5823 = vadd.f32 %v5615, %v5747
        %v5824 = vadd.f32 %v5616, %v5752
        %v5825 = vadd.f32 %v5617, %v5755
        %v5826 = vadd.f32 %v5618, %v5760
        %v5827 = vadd.f32 %v5619, %v5763
        %v5828 = vadd.f32 %v5620, %v5768
        %v5829 = vadd.f32 %v5621, %v5771
        %v5830 = vadd.f32 %v5622, %v5776
        %v5831 = vadd.f32 %v5623, %v5779
        %v5832 = vadd.f32 %v5624, %v5784
        %v5833 = vadd.f32 %v5625, %v5787
        %v5834 = vadd.f32 %v5626, %v5792
        %v5835 = vadd.f32 %v5627, %v5795
        %v5836 = vadd.f32 %v5628, %v5800
        %v5837 = vadd.f32 %v5629, %v5803
        %v5838 = vadd.f32 %v5630, %v5808
        %v5839 = vadd.f32 %v5631, %v5811
        %v5840 = vadd.f32 %v5632, %v5816
        %v5841 = vadd.f32 %v5633, %v5819
        %v5842 = vld [vmem:[#allocation4 + $0x18] sm:$0xff]
        %v5843 = vld [vmem:[#allocation4 + $0x20] sm:$0xff]
        %v5844 = vld [vmem:[#allocation4 + $0x28] sm:$0xff]
        %v5845 = vld [vmem:[#allocation4 + $0x30] sm:$0xff]
        %v5846 = vld [vmem:[#allocation4 + $0x38] sm:$0xff]
        %v5847 = vld [vmem:[#allocation4 + $0x40] sm:$0xff]
        %v5848 = vld [vmem:[#allocation4 + $0x48] sm:$0xff]
        %v5849 = vld [vmem:[#allocation4 + $0x50] sm:$0xff]
        %v5850 = vld [vmem:[#allocation4 + $0x58] sm:$0xff]
        %v5851 = vld [vmem:[#allocation4 + $0x60] sm:$0xff]
        %s5852 = scalar_lea.vmem %s3, 1152
        %v5853 = vld [vmem:[%s5852] sm:$0xf]
        %v5854 = vld [vmem:[%s5852 + $0x4] sm:$0xf]
        %v5855 = vld [vmem:[%s5852 + $0x8] sm:$0xf]
        %v5856 = vld [vmem:[%s5852 + $0xc] sm:$0xf]
        %v5857 = vld [vmem:[%s5852 + $0x10] sm:$0xf]
        %v5858 = vld [vmem:[%s5852 + $0x14] sm:$0xf]
        %v5859 = vld [vmem:[%s5852 + $0x18] sm:$0xf]
        %v5860 = vld [vmem:[%s5852 + $0x1c] sm:$0xf]
        %v5861 = vld [vmem:[%s5852 + $0x20] sm:$0xf]
        %v5862 = vld [vmem:[%s5852 + $0x24] sm:$0xf]
        %v5863 = vld [vmem:[%s5852 + $0x28] sm:$0xf]
        %v5864 = vld [vmem:[%s5852 + $0x2c] sm:$0xf]
        %v5865 = vld [vmem:[%s5852 + $0x30] sm:$0xf]
        %v5866 = vld [vmem:[%s5852 + $0x34] sm:$0xf]
        %v5867 = vld [vmem:[%s5852 + $0x38] sm:$0xf]
        %v5868 = vld [vmem:[%s5852 + $0x3c] sm:$0xf]
        %v5885 = vunpack.c.l.b16 %v5853
        %v5886 = vunpack.c.l.b16 %v5854
        %v5887 = vunpack.c.l.b16 %v5855
        %v5888 = vunpack.c.l.b16 %v5856
        %v5889 = vunpack.c.l.b16 %v5857
        %v5890 = vunpack.c.l.b16 %v5858
        %v5891 = vunpack.c.l.b16 %v5859
        %v5892 = vunpack.c.l.b16 %v5860
        %v5893 = vunpack.c.l.b16 %v5861
        %v5894 = vunpack.c.l.b16 %v5862
        %v5895 = vunpack.c.l.b16 %v5863
        %v5896 = vunpack.c.l.b16 %v5864
        %v5897 = vunpack.c.l.b16 %v5865
        %v5898 = vunpack.c.l.b16 %v5866
        %v5899 = vunpack.c.l.b16 %v5867
        %v5900 = vunpack.c.l.b16 %v5868
        %v5901 = vpack.c.b16 %v5886, %v5885
        %v5902 = vpack.c.b16 %v5888, %v5887
        %v5903 = vpack.c.b16 %v5890, %v5889
        %v5904 = vpack.c.b16 %v5892, %v5891
        %v5905 = vpack.c.b16 %v5894, %v5893
        %v5906 = vpack.c.b16 %v5896, %v5895
        %v5907 = vpack.c.b16 %v5898, %v5897
        %v5908 = vpack.c.b16 %v5900, %v5899
        %5917 = vmatprep.subr.bf16.mxu0 0
        %5918 = vmatpush1.bf16.msra.mxu0 %v5901
        %5919 = vmatprep.subr.bf16.mxu0 0
        %5920 = vmatpush1.bf16.msra.mxu0 %v5902
        %5921 = vmatprep.subr.bf16.mxu0 0
        %5922 = vmatpush1.bf16.msra.mxu0 %v5903
        %5923 = vmatprep.subr.bf16.mxu0 0
        %5924 = vmatpush1.bf16.msra.mxu0 %v5904
        %5925 = vmatprep.subr.bf16.mxu0 0
        %5926 = vmatpush1.bf16.msra.mxu0 %v5905
        %5927 = vmatprep.subr.bf16.mxu0 0
        %5928 = vmatpush1.bf16.msra.mxu0 %v5906
        %5929 = vmatprep.subr.bf16.mxu0 0
        %5930 = vmatpush1.bf16.msra.mxu0 %v5907
        %5931 = vmatprep.subr.bf16.mxu0 0
        %5932 = vmatpush1.bf16.msra.mxu0 %v5908
        %5933 = vmatprep.subr.bf16.mxu0 0
        %5934 = vmatpush1.bf16.msra.mxu0 0
        %5935 = vmatprep.subr.bf16.mxu0 0
        %5936 = vmatpush1.bf16.msra.mxu0 0
        %5937 = vmatprep.subr.bf16.mxu0 0
        %5938 = vmatpush1.bf16.msra.mxu0 0
        %5939 = vmatprep.subr.bf16.mxu0 0
        %5940 = vmatpush1.bf16.msra.mxu0 0
        %5941 = vmatprep.subr.bf16.mxu0 0
        %5942 = vmatpush1.bf16.msra.mxu0 0
        %5943 = vmatprep.subr.bf16.mxu0 0
        %5944 = vmatpush1.bf16.msra.mxu0 0
        %5945 = vmatprep.subr.bf16.mxu0 0
        %5946 = vmatpush1.bf16.msra.mxu0 0
        %5947 = vmatprep.subr.bf16.mxu0 0
        %5948 = vmatpush1.bf16.msra.mxu0 0
        %5949 = vmatprep.mubr.bf16.mxu0 0
        %5950 = vmatmul.mubr.bf16.gmra.mrb[0].mxu0 %v5842
        %v5951 = vpop.f32.mrb[0].mxu0
        %v5952 = vadd.f32 0.0, %v5951
        %v5953 = vpop.f32.mrb[0].mxu0
        %v5954 = vpop.f32.mrb[0].mxu0
        %v5955 = vadd.f32 0.0, %v5954
        %v5956 = vpop.f32.mrb[0].mxu0
        %5957 = vmatprep.mubr.bf16.mxu0 0
        %5958 = vmatmul.mubr.bf16.gmra.mrb[0].mxu0 %v5843
        %v5959 = vpop.f32.mrb[0].mxu0
        %v5960 = vadd.f32 0.0, %v5959
        %v5961 = vpop.f32.mrb[0].mxu0
        %v5962 = vpop.f32.mrb[0].mxu0
        %v5963 = vadd.f32 0.0, %v5962
        %v5964 = vpop.f32.mrb[0].mxu0
        %5965 = vmatprep.mubr.bf16.mxu0 0
        %5966 = vmatmul.mubr.bf16.gmra.mrb[0].mxu0 %v5844
        %v5967 = vpop.f32.mrb[0].mxu0
        %v5968 = vadd.f32 0.0, %v5967
        %v5969 = vpop.f32.mrb[0].mxu0
        %v5970 = vpop.f32.mrb[0].mxu0
        %v5971 = vadd.f32 0.0, %v5970
        %v5972 = vpop.f32.mrb[0].mxu0
        %5973 = vmatprep.mubr.bf16.mxu0 0
        %5974 = vmatmul.mubr.bf16.gmra.mrb[0].mxu0 %v5845
        %v5975 = vpop.f32.mrb[0].mxu0
        %v5976 = vadd.f32 0.0, %v5975
        %v5977 = vpop.f32.mrb[0].mxu0
        %v5978 = vpop.f32.mrb[0].mxu0
        %v5979 = vadd.f32 0.0, %v5978
        %v5980 = vpop.f32.mrb[0].mxu0
        %5981 = vmatprep.mubr.bf16.mxu0 0
        %5982 = vmatmul.mubr.bf16.gmra.mrb[0].mxu0 %v5846
        %v5983 = vpop.f32.mrb[0].mxu0
        %v5984 = vadd.f32 0.0, %v5983
        %v5985 = vpop.f32.mrb[0].mxu0
        %v5986 = vpop.f32.mrb[0].mxu0
        %v5987 = vadd.f32 0.0, %v5986
        %v5988 = vpop.f32.mrb[0].mxu0
        %5989 = vmatprep.mubr.bf16.mxu0 0
        %5990 = vmatmul.mubr.bf16.gmra.mrb[0].mxu0 %v5847
        %v5991 = vpop.f32.mrb[0].mxu0
        %v5992 = vadd.f32 0.0, %v5991
        %v5993 = vpop.f32.mrb[0].mxu0
        %v5994 = vpop.f32.mrb[0].mxu0
        %v5995 = vadd.f32 0.0, %v5994
        %v5996 = vpop.f32.mrb[0].mxu0
        %5997 = vmatprep.mubr.bf16.mxu0 0
        %5998 = vmatmul.mubr.bf16.gmra.mrb[0].mxu0 %v5848
        %v5999 = vpop.f32.mrb[0].mxu0
        %v6000 = vadd.f32 0.0, %v5999
        %v6001 = vpop.f32.mrb[0].mxu0
        %v6002 = vpop.f32.mrb[0].mxu0
        %v6003 = vadd.f32 0.0, %v6002
        %v6004 = vpop.f32.mrb[0].mxu0
        %6005 = vmatprep.mubr.bf16.mxu0 0
        %6006 = vmatmul.mubr.bf16.gmra.mrb[0].mxu0 %v5849
        %v6007 = vpop.f32.mrb[0].mxu0
        %v6008 = vadd.f32 0.0, %v6007
        %v6009 = vpop.f32.mrb[0].mxu0
        %v6010 = vpop.f32.mrb[0].mxu0
        %v6011 = vadd.f32 0.0, %v6010
        %v6012 = vpop.f32.mrb[0].mxu0
        %6013 = vmatprep.mubr.bf16.mxu0 0
        %6014 = vmatmul.mubr.bf16.gmra.mrb[0].mxu0 %v5850
        %v6015 = vpop.f32.mrb[0].mxu0
        %v6016 = vadd.f32 0.0, %v6015
        %v6017 = vpop.f32.mrb[0].mxu0
        %v6018 = vpop.f32.mrb[0].mxu0
        %v6019 = vadd.f32 0.0, %v6018
        %v6020 = vpop.f32.mrb[0].mxu0
        %6021 = vmatprep.mubr.bf16.mxu0 0
        %6022 = vmatmul.mubr.bf16.gmra.mrb[0].mxu0 %v5851
        %v6023 = vpop.f32.mrb[0].mxu0
        %v6024 = vadd.f32 0.0, %v6023
        %v6025 = vpop.f32.mrb[0].mxu0
        %v6026 = vpop.f32.mrb[0].mxu0
        %v6027 = vadd.f32 0.0, %v6026
        %v6028 = vpop.f32.mrb[0].mxu0
        %6029 = vdwg.mxu0
        %v6030 = vadd.f32 %v5822, %v5952
        %v6031 = vadd.f32 %v5823, %v5955
        %v6032 = vadd.f32 %v5824, %v5960
        %v6033 = vadd.f32 %v5825, %v5963
        %v6034 = vadd.f32 %v5826, %v5968
        %v6035 = vadd.f32 %v5827, %v5971
        %v6036 = vadd.f32 %v5828, %v5976
        %v6037 = vadd.f32 %v5829, %v5979
        %v6038 = vadd.f32 %v5830, %v5984
        %v6039 = vadd.f32 %v5831, %v5987
        %v6040 = vadd.f32 %v5832, %v5992
        %v6041 = vadd.f32 %v5833, %v5995
        %v6042 = vadd.f32 %v5834, %v6000
        %v6043 = vadd.f32 %v5835, %v6003
        %v6044 = vadd.f32 %v5836, %v6008
        %v6045 = vadd.f32 %v5837, %v6011
        %v6046 = vadd.f32 %v5838, %v6016
        %v6047 = vadd.f32 %v5839, %v6019
        %v6048 = vadd.f32 %v5840, %v6024
        %v6049 = vadd.f32 %v5841, %v6027
        %v6050 = vld [vmem:[#allocation4 + $0x20] sm:$0xff]
        %v6051 = vld [vmem:[#allocation4 + $0x28] sm:$0xff]
        %v6052 = vld [vmem:[#allocation4 + $0x30] sm:$0xff]
        %v6053 = vld [vmem:[#allocation4 + $0x38] sm:$0xff]
        %v6054 = vld [vmem:[#allocation4 + $0x40] sm:$0xff]
        %v6055 = vld [vmem:[#allocation4 + $0x48] sm:$0xff]
        %v6056 = vld [vmem:[#allocation4 + $0x50] sm:$0xff]
        %v6057 = vld [vmem:[#allocation4 + $0x58] sm:$0xff]
        %v6058 = vld [vmem:[#allocation4 + $0x60] sm:$0xff]
        %v6059 = vld [vmem:[#allocation4 + $0x68] sm:$0xff]
        %s6060 = scalar_lea.vmem %s3, 1472
        %v6061 = vld [vmem:[%s6060] sm:$0xf]
        %v6062 = vld [vmem:[%s6060 + $0x4] sm:$0xf]
        %v6063 = vld [vmem:[%s6060 + $0x8] sm:$0xf]
        %v6064 = vld [vmem:[%s6060 + $0xc] sm:$0xf]
        %v6065 = vld [vmem:[%s6060 + $0x10] sm:$0xf]
        %v6066 = vld [vmem:[%s6060 + $0x14] sm:$0xf]
        %v6067 = vld [vmem:[%s6060 + $0x18] sm:$0xf]
        %v6068 = vld [vmem:[%s6060 + $0x1c] sm:$0xf]
        %v6069 = vld [vmem:[%s6060 + $0x20] sm:$0xf]
        %v6070 = vld [vmem:[%s6060 + $0x24] sm:$0xf]
        %v6071 = vld [vmem:[%s6060 + $0x28] sm:$0xf]
        %v6072 = vld [vmem:[%s6060 + $0x2c] sm:$0xf]
        %v6073 = vld [vmem:[%s6060 + $0x30] sm:$0xf]
        %v6074 = vld [vmem:[%s6060 + $0x34] sm:$0xf]
        %v6075 = vld [vmem:[%s6060 + $0x38] sm:$0xf]
        %v6076 = vld [vmem:[%s6060 + $0x3c] sm:$0xf]
        %v6093 = vunpack.c.l.b16 %v6061
        %v6094 = vunpack.c.l.b16 %v6062
        %v6095 = vunpack.c.l.b16 %v6063
        %v6096 = vunpack.c.l.b16 %v6064
        %v6097 = vunpack.c.l.b16 %v6065
        %v6098 = vunpack.c.l.b16 %v6066
        %v6099 = vunpack.c.l.b16 %v6067
        %v6100 = vunpack.c.l.b16 %v6068
        %v6101 = vunpack.c.l.b16 %v6069
        %v6102 = vunpack.c.l.b16 %v6070
        %v6103 = vunpack.c.l.b16 %v6071
        %v6104 = vunpack.c.l.b16 %v6072
        %v6105 = vunpack.c.l.b16 %v6073
        %v6106 = vunpack.c.l.b16 %v6074
        %v6107 = vunpack.c.l.b16 %v6075
        %v6108 = vunpack.c.l.b16 %v6076
        %v6109 = vpack.c.b16 %v6094, %v6093
        %v6110 = vpack.c.b16 %v6096, %v6095
        %v6111 = vpack.c.b16 %v6098, %v6097
        %v6112 = vpack.c.b16 %v6100, %v6099
        %v6113 = vpack.c.b16 %v6102, %v6101
        %v6114 = vpack.c.b16 %v6104, %v6103
        %v6115 = vpack.c.b16 %v6106, %v6105
        %v6116 = vpack.c.b16 %v6108, %v6107
        %6125 = vmatprep.subr.bf16.mxu0 0
        %6126 = vmatpush1.bf16.msra.mxu0 %v6109
        %6127 = vmatprep.subr.bf16.mxu0 0
        %6128 = vmatpush1.bf16.msra.mxu0 %v6110
        %6129 = vmatprep.subr.bf16.mxu0 0
        %6130 = vmatpush1.bf16.msra.mxu0 %v6111
        %6131 = vmatprep.subr.bf16.mxu0 0
        %6132 = vmatpush1.bf16.msra.mxu0 %v6112
        %6133 = vmatprep.subr.bf16.mxu0 0
        %6134 = vmatpush1.bf16.msra.mxu0 %v6113
        %6135 = vmatprep.subr.bf16.mxu0 0
        %6136 = vmatpush1.bf16.msra.mxu0 %v6114
        %6137 = vmatprep.subr.bf16.mxu0 0
        %6138 = vmatpush1.bf16.msra.mxu0 %v6115
        %6139 = vmatprep.subr.bf16.mxu0 0
        %6140 = vmatpush1.bf16.msra.mxu0 %v6116
        %6141 = vmatprep.subr.bf16.mxu0 0
        %6142 = vmatpush1.bf16.msra.mxu0 0
        %6143 = vmatprep.subr.bf16.mxu0 0
        %6144 = vmatpush1.bf16.msra.mxu0 0
        %6145 = vmatprep.subr.bf16.mxu0 0
        %6146 = vmatpush1.bf16.msra.mxu0 0
        %6147 = vmatprep.subr.bf16.mxu0 0
        %6148 = vmatpush1.bf16.msra.mxu0 0
        %6149 = vmatprep.subr.bf16.mxu0 0
        %6150 = vmatpush1.bf16.msra.mxu0 0
        %6151 = vmatprep.subr.bf16.mxu0 0
        %6152 = vmatpush1.bf16.msra.mxu0 0
        %6153 = vmatprep.subr.bf16.mxu0 0
        %6154 = vmatpush1.bf16.msra.mxu0 0
        %6155 = vmatprep.subr.bf16.mxu0 0
        %6156 = vmatpush1.bf16.msra.mxu0 0
        %6157 = vmatprep.mubr.bf16.mxu0 0
        %6158 = vmatmul.mubr.bf16.gmra.mrb[0].mxu0 %v6050
        %v6159 = vpop.f32.mrb[0].mxu0
        %v6160 = vadd.f32 0.0, %v6159
        %v6161 = vpop.f32.mrb[0].mxu0
        %v6162 = vpop.f32.mrb[0].mxu0
        %v6163 = vadd.f32 0.0, %v6162
        %v6164 = vpop.f32.mrb[0].mxu0
        %6165 = vmatprep.mubr.bf16.mxu0 0
        %6166 = vmatmul.mubr.bf16.gmra.mrb[0].mxu0 %v6051
        %v6167 = vpop.f32.mrb[0].mxu0
        %v6168 = vadd.f32 0.0, %v6167
        %v6169 = vpop.f32.mrb[0].mxu0
        %v6170 = vpop.f32.mrb[0].mxu0
        %v6171 = vadd.f32 0.0, %v6170
        %v6172 = vpop.f32.mrb[0].mxu0
        %6173 = vmatprep.mubr.bf16.mxu0 0
        %6174 = vmatmul.mubr.bf16.gmra.mrb[0].mxu0 %v6052
        %v6175 = vpop.f32.mrb[0].mxu0
        %v6176 = vadd.f32 0.0, %v6175
        %v6177 = vpop.f32.mrb[0].mxu0
        %v6178 = vpop.f32.mrb[0].mxu0
        %v6179 = vadd.f32 0.0, %v6178
        %v6180 = vpop.f32.mrb[0].mxu0
        %6181 = vmatprep.mubr.bf16.mxu0 0
        %6182 = vmatmul.mubr.bf16.gmra.mrb[0].mxu0 %v6053
        %v6183 = vpop.f32.mrb[0].mxu0
        %v6184 = vadd.f32 0.0, %v6183
        %v6185 = vpop.f32.mrb[0].mxu0
        %v6186 = vpop.f32.mrb[0].mxu0
        %v6187 = vadd.f32 0.0, %v6186
        %v6188 = vpop.f32.mrb[0].mxu0
        %6189 = vmatprep.mubr.bf16.mxu0 0
        %6190 = vmatmul.mubr.bf16.gmra.mrb[0].mxu0 %v6054
        %v6191 = vpop.f32.mrb[0].mxu0
        %v6192 = vadd.f32 0.0, %v6191
        %v6193 = vpop.f32.mrb[0].mxu0
        %v6194 = vpop.f32.mrb[0].mxu0
        %v6195 = vadd.f32 0.0, %v6194
        %v6196 = vpop.f32.mrb[0].mxu0
        %6197 = vmatprep.mubr.bf16.mxu0 0
        %6198 = vmatmul.mubr.bf16.gmra.mrb[0].mxu0 %v6055
        %v6199 = vpop.f32.mrb[0].mxu0
        %v6200 = vadd.f32 0.0, %v6199
        %v6201 = vpop.f32.mrb[0].mxu0
        %v6202 = vpop.f32.mrb[0].mxu0
        %v6203 = vadd.f32 0.0, %v6202
        %v6204 = vpop.f32.mrb[0].mxu0
        %6205 = vmatprep.mubr.bf16.mxu0 0
        %6206 = vmatmul.mubr.bf16.gmra.mrb[0].mxu0 %v6056
        %v6207 = vpop.f32.mrb[0].mxu0
        %v6208 = vadd.f32 0.0, %v6207
        %v6209 = vpop.f32.mrb[0].mxu0
        %v6210 = vpop.f32.mrb[0].mxu0
        %v6211 = vadd.f32 0.0, %v6210
        %v6212 = vpop.f32.mrb[0].mxu0
        %6213 = vmatprep.mubr.bf16.mxu0 0
        %6214 = vmatmul.mubr.bf16.gmra.mrb[0].mxu0 %v6057
        %v6215 = vpop.f32.mrb[0].mxu0
        %v6216 = vadd.f32 0.0, %v6215
        %v6217 = vpop.f32.mrb[0].mxu0
        %v6218 = vpop.f32.mrb[0].mxu0
        %v6219 = vadd.f32 0.0, %v6218
        %v6220 = vpop.f32.mrb[0].mxu0
        %6221 = vmatprep.mubr.bf16.mxu0 0
        %6222 = vmatmul.mubr.bf16.gmra.mrb[0].mxu0 %v6058
        %v6223 = vpop.f32.mrb[0].mxu0
        %v6224 = vadd.f32 0.0, %v6223
        %v6225 = vpop.f32.mrb[0].mxu0
        %v6226 = vpop.f32.mrb[0].mxu0
        %v6227 = vadd.f32 0.0, %v6226
        %v6228 = vpop.f32.mrb[0].mxu0
        %6229 = vmatprep.mubr.bf16.mxu0 0
        %6230 = vmatmul.mubr.bf16.gmra.mrb[0].mxu0 %v6059
        %v6231 = vpop.f32.mrb[0].mxu0
        %v6232 = vadd.f32 0.0, %v6231
        %v6233 = vpop.f32.mrb[0].mxu0
        %v6234 = vpop.f32.mrb[0].mxu0
        %v6235 = vadd.f32 0.0, %v6234
        %v6236 = vpop.f32.mrb[0].mxu0
        %6237 = vdwg.mxu0
        %v6238 = vadd.f32 %v6030, %v6160
        %v6239 = vadd.f32 %v6031, %v6163
        %v6240 = vadd.f32 %v6032, %v6168
        %v6241 = vadd.f32 %v6033, %v6171
        %v6242 = vadd.f32 %v6034, %v6176
        %v6243 = vadd.f32 %v6035, %v6179
        %v6244 = vadd.f32 %v6036, %v6184
        %v6245 = vadd.f32 %v6037, %v6187
        %v6246 = vadd.f32 %v6038, %v6192
        %v6247 = vadd.f32 %v6039, %v6195
        %v6248 = vadd.f32 %v6040, %v6200
        %v6249 = vadd.f32 %v6041, %v6203
        %v6250 = vadd.f32 %v6042, %v6208
        %v6251 = vadd.f32 %v6043, %v6211
        %v6252 = vadd.f32 %v6044, %v6216
        %v6253 = vadd.f32 %v6045, %v6219
        %v6254 = vadd.f32 %v6046, %v6224
        %v6255 = vadd.f32 %v6047, %v6227
        %v6256 = vadd.f32 %v6048, %v6232
        %v6257 = vadd.f32 %v6049, %v6235
        %v6258 = vld [vmem:[#allocation3 + $0x4] sm:$0xff]
        %v6259 = vld [vmem:[#allocation3 + $0xc] sm:$0xff]
        %v6260 = vld [vmem:[#allocation3 + $0x14] sm:$0xff]
        %v6261 = vld [vmem:[#allocation3 + $0x1c] sm:$0xff]
        %v6262 = vld [vmem:[#allocation3 + $0x24] sm:$0xff]
        %v6263 = vld [vmem:[#allocation3 + $0x2c] sm:$0xff]
        %v6264 = vld [vmem:[#allocation3 + $0x34] sm:$0xff]
        %v6265 = vld [vmem:[#allocation3 + $0x3c] sm:$0xff]
        %v6266 = vld [vmem:[#allocation3 + $0x44] sm:$0xff]
        %v6267 = vld [vmem:[#allocation3 + $0x4c] sm:$0xff]
        %v6268 = vld [vmem:[#allocation3 + $0x54] sm:$0xff]
        %v6269 = vld [vmem:[#allocation3 + $0x5c] sm:$0xff]
        %v6270 = vld [vmem:[#allocation3 + $0x64] sm:$0xff]
        %v6271 = vld [vmem:[#allocation3 + $0x6c] sm:$0xff]
        %v6272 = vld [vmem:[#allocation3 + $0x74] sm:$0xff]
        %v6273 = vld [vmem:[#allocation3 + $0x7c] sm:$0xff]
        %v6274 = vld [vmem:[#allocation3 + $0x84] sm:$0xff]
        %v6275 = vld [vmem:[#allocation3 + $0x8c] sm:$0xff]
        %v6276 = vld [vmem:[#allocation3 + $0x94] sm:$0xff]
        %v6277 = vld [vmem:[#allocation3 + $0x9c] sm:$0xff]
        %v6278 = vld [vmem:[#allocation3 + $0xa4] sm:$0xff]
        %v6279 = vld [vmem:[#allocation3 + $0xac] sm:$0xff]
        %v6280 = vld [vmem:[#allocation3 + $0xb4] sm:$0xff]
        %v6281 = vld [vmem:[#allocation3 + $0xbc] sm:$0xff]
        %v6282 = vld [vmem:[#allocation3 + $0xc4] sm:$0xff]
        %v6283 = vld [vmem:[#allocation3 + $0xcc] sm:$0xff]
        %v6284 = vld [vmem:[#allocation3 + $0xd4] sm:$0xff]
        %v6285 = vld [vmem:[#allocation3 + $0xdc] sm:$0xff]
        %v6286 = vpack.c.bf16 %v6259, %v6258
        %v6287 = vpack.c.bf16 %v6261, %v6260
        %v6288 = vpack.c.bf16 %v6263, %v6262
        %v6289 = vpack.c.bf16 %v6265, %v6264
        %v6290 = vpack.c.bf16 %v6267, %v6266
        %v6291 = vpack.c.bf16 %v6269, %v6268
        %v6292 = vpack.c.bf16 %v6271, %v6270
        %v6293 = vpack.c.bf16 %v6273, %v6272
        %v6294 = vpack.c.bf16 %v6275, %v6274
        %v6295 = vpack.c.bf16 %v6277, %v6276
        %v6296 = vpack.c.bf16 %v6279, %v6278
        %v6297 = vpack.c.bf16 %v6281, %v6280
        %v6298 = vpack.c.bf16 %v6283, %v6282
        %v6299 = vpack.c.bf16 %v6285, %v6284
        %6300 = vst [vmem:[#allocation4] sm:$0xff] %v6286
        %6301 = vst [vmem:[#allocation4 + $0x8] sm:$0xff] %v6287
        %6302 = vst [vmem:[#allocation4 + $0x10] sm:$0xff] %v6288
        %6303 = vst [vmem:[#allocation4 + $0x18] sm:$0xff] %v6289
        %6304 = vst [vmem:[#allocation4 + $0x20] sm:$0xff] %v6290
        %6305 = vst [vmem:[#allocation4 + $0x28] sm:$0xff] %v6291
        %6306 = vst [vmem:[#allocation4 + $0x30] sm:$0xff] %v6292
        %6307 = vst [vmem:[#allocation4 + $0x38] sm:$0xff] %v6293
        %6308 = vst [vmem:[#allocation4 + $0x40] sm:$0xff] %v6294
        %6309 = vst [vmem:[#allocation4 + $0x48] sm:$0xff] %v6295
        %6310 = vst [vmem:[#allocation4 + $0x50] sm:$0xff] %v6296
        %6311 = vst [vmem:[#allocation4 + $0x58] sm:$0xff] %v6297
        %6312 = vst [vmem:[#allocation4 + $0x60] sm:$0xff] %v6298
        %6313 = vst [vmem:[#allocation4 + $0x68] sm:$0xff] %v6299
        %v6314 = vld [vmem:[#allocation4] sm:$0xff]
        %v6315 = vld [vmem:[#allocation4 + $0x8] sm:$0xff]
        %v6316 = vld [vmem:[#allocation4 + $0x10] sm:$0xff]
        %v6317 = vld [vmem:[#allocation4 + $0x18] sm:$0xff]
        %v6318 = vld [vmem:[#allocation4 + $0x20] sm:$0xff]
        %v6319 = vld [vmem:[#allocation4 + $0x28] sm:$0xff]
        %v6320 = vld [vmem:[#allocation4 + $0x30] sm:$0xff]
        %v6321 = vld [vmem:[#allocation4 + $0x38] sm:$0xff]
        %v6322 = vld [vmem:[#allocation4 + $0x40] sm:$0xff]
        %v6323 = vld [vmem:[#allocation4 + $0x48] sm:$0xff]
        %s6324 = scalar_lea.vmem %s3, 256
        %v6325 = vld [vmem:[%s6324] sm:$0xf]
        %v6326 = vld [vmem:[%s6324 + $0x4] sm:$0xf]
        %v6327 = vld [vmem:[%s6324 + $0x8] sm:$0xf]
        %v6328 = vld [vmem:[%s6324 + $0xc] sm:$0xf]
        %v6329 = vld [vmem:[%s6324 + $0x10] sm:$0xf]
        %v6330 = vld [vmem:[%s6324 + $0x14] sm:$0xf]
        %v6331 = vld [vmem:[%s6324 + $0x18] sm:$0xf]
        %v6332 = vld [vmem:[%s6324 + $0x1c] sm:$0xf]
        %v6333 = vld [vmem:[%s6324 + $0x20] sm:$0xf]
        %v6334 = vld [vmem:[%s6324 + $0x24] sm:$0xf]
        %v6335 = vld [vmem:[%s6324 + $0x28] sm:$0xf]
        %v6336 = vld [vmem:[%s6324 + $0x2c] sm:$0xf]
        %v6337 = vld [vmem:[%s6324 + $0x30] sm:$0xf]
        %v6338 = vld [vmem:[%s6324 + $0x34] sm:$0xf]
        %v6339 = vld [vmem:[%s6324 + $0x38] sm:$0xf]
        %v6340 = vld [vmem:[%s6324 + $0x3c] sm:$0xf]
        %v6357 = vunpack.c.l.b16 %v6325
        %v6358 = vunpack.c.l.b16 %v6326
        %v6359 = vunpack.c.l.b16 %v6327
        %v6360 = vunpack.c.l.b16 %v6328
        %v6361 = vunpack.c.l.b16 %v6329
        %v6362 = vunpack.c.l.b16 %v6330
        %v6363 = vunpack.c.l.b16 %v6331
        %v6364 = vunpack.c.l.b16 %v6332
        %v6365 = vunpack.c.l.b16 %v6333
        %v6366 = vunpack.c.l.b16 %v6334
        %v6367 = vunpack.c.l.b16 %v6335
        %v6368 = vunpack.c.l.b16 %v6336
        %v6369 = vunpack.c.l.b16 %v6337
        %v6370 = vunpack.c.l.b16 %v6338
        %v6371 = vunpack.c.l.b16 %v6339
        %v6372 = vunpack.c.l.b16 %v6340
        %v6373 = vpack.c.b16 %v6358, %v6357
        %v6374 = vpack.c.b16 %v6360, %v6359
        %v6375 = vpack.c.b16 %v6362, %v6361
        %v6376 = vpack.c.b16 %v6364, %v6363
        %v6377 = vpack.c.b16 %v6366, %v6365
        %v6378 = vpack.c.b16 %v6368, %v6367
        %v6379 = vpack.c.b16 %v6370, %v6369
        %v6380 = vpack.c.b16 %v6372, %v6371
        %6389 = vmatprep.subr.bf16.mxu0 0
        %6390 = vmatpush1.bf16.msra.mxu0 %v6373
        %6391 = vmatprep.subr.bf16.mxu0 0
        %6392 = vmatpush1.bf16.msra.mxu0 %v6374
        %6393 = vmatprep.subr.bf16.mxu0 0
        %6394 = vmatpush1.bf16.msra.mxu0 %v6375
        %6395 = vmatprep.subr.bf16.mxu0 0
        %6396 = vmatpush1.bf16.msra.mxu0 %v6376
        %6397 = vmatprep.subr.bf16.mxu0 0
        %6398 = vmatpush1.bf16.msra.mxu0 %v6377
        %6399 = vmatprep.subr.bf16.mxu0 0
        %6400 = vmatpush1.bf16.msra.mxu0 %v6378
        %6401 = vmatprep.subr.bf16.mxu0 0
        %6402 = vmatpush1.bf16.msra.mxu0 %v6379
        %6403 = vmatprep.subr.bf16.mxu0 0
        %6404 = vmatpush1.bf16.msra.mxu0 %v6380
        %6405 = vmatprep.subr.bf16.mxu0 0
        %6406 = vmatpush1.bf16.msra.mxu0 0
        %6407 = vmatprep.subr.bf16.mxu0 0
        %6408 = vmatpush1.bf16.msra.mxu0 0
        %6409 = vmatprep.subr.bf16.mxu0 0
        %6410 = vmatpush1.bf16.msra.mxu0 0
        %6411 = vmatprep.subr.bf16.mxu0 0
        %6412 = vmatpush1.bf16.msra.mxu0 0
        %6413 = vmatprep.subr.bf16.mxu0 0
        %6414 = vmatpush1.bf16.msra.mxu0 0
        %6415 = vmatprep.subr.bf16.mxu0 0
        %6416 = vmatpush1.bf16.msra.mxu0 0
        %6417 = vmatprep.subr.bf16.mxu0 0
        %6418 = vmatpush1.bf16.msra.mxu0 0
        %6419 = vmatprep.subr.bf16.mxu0 0
        %6420 = vmatpush1.bf16.msra.mxu0 0
        %6421 = vmatprep.mubr.bf16.mxu0 0
        %6422 = vmatmul.mubr.bf16.gmra.mrb[0].mxu0 %v6314
        %v6423 = vpop.f32.mrb[0].mxu0
        %v6424 = vadd.f32 0.0, %v6423
        %v6425 = vpop.f32.mrb[0].mxu0
        %v6426 = vpop.f32.mrb[0].mxu0
        %v6427 = vadd.f32 0.0, %v6426
        %v6428 = vpop.f32.mrb[0].mxu0
        %6429 = vmatprep.mubr.bf16.mxu0 0
        %6430 = vmatmul.mubr.bf16.gmra.mrb[0].mxu0 %v6315
        %v6431 = vpop.f32.mrb[0].mxu0
        %v6432 = vadd.f32 0.0, %v6431
        %v6433 = vpop.f32.mrb[0].mxu0
        %v6434 = vpop.f32.mrb[0].mxu0
        %v6435 = vadd.f32 0.0, %v6434
        %v6436 = vpop.f32.mrb[0].mxu0
        %6437 = vmatprep.mubr.bf16.mxu0 0
        %6438 = vmatmul.mubr.bf16.gmra.mrb[0].mxu0 %v6316
        %v6439 = vpop.f32.mrb[0].mxu0
        %v6440 = vadd.f32 0.0, %v6439
        %v6441 = vpop.f32.mrb[0].mxu0
        %v6442 = vpop.f32.mrb[0].mxu0
        %v6443 = vadd.f32 0.0, %v6442
        %v6444 = vpop.f32.mrb[0].mxu0
        %6445 = vmatprep.mubr.bf16.mxu0 0
        %6446 = vmatmul.mubr.bf16.gmra.mrb[0].mxu0 %v6317
        %v6447 = vpop.f32.mrb[0].mxu0
        %v6448 = vadd.f32 0.0, %v6447
        %v6449 = vpop.f32.mrb[0].mxu0
        %v6450 = vpop.f32.mrb[0].mxu0
        %v6451 = vadd.f32 0.0, %v6450
        %v6452 = vpop.f32.mrb[0].mxu0
        %6453 = vmatprep.mubr.bf16.mxu0 0
        %6454 = vmatmul.mubr.bf16.gmra.mrb[0].mxu0 %v6318
        %v6455 = vpop.f32.mrb[0].mxu0
        %v6456 = vadd.f32 0.0, %v6455
        %v6457 = vpop.f32.mrb[0].mxu0
        %v6458 = vpop.f32.mrb[0].mxu0
        %v6459 = vadd.f32 0.0, %v6458
        %v6460 = vpop.f32.mrb[0].mxu0
        %6461 = vmatprep.mubr.bf16.mxu0 0
        %6462 = vmatmul.mubr.bf16.gmra.mrb[0].mxu0 %v6319
        %v6463 = vpop.f32.mrb[0].mxu0
        %v6464 = vadd.f32 0.0, %v6463
        %v6465 = vpop.f32.mrb[0].mxu0
        %v6466 = vpop.f32.mrb[0].mxu0
        %v6467 = vadd.f32 0.0, %v6466
        %v6468 = vpop.f32.mrb[0].mxu0
        %6469 = vmatprep.mubr.bf16.mxu0 0
        %6470 = vmatmul.mubr.bf16.gmra.mrb[0].mxu0 %v6320
        %v6471 = vpop.f32.mrb[0].mxu0
        %v6472 = vadd.f32 0.0, %v6471
        %v6473 = vpop.f32.mrb[0].mxu0
        %v6474 = vpop.f32.mrb[0].mxu0
        %v6475 = vadd.f32 0.0, %v6474
        %v6476 = vpop.f32.mrb[0].mxu0
        %6477 = vmatprep.mubr.bf16.mxu0 0
        %6478 = vmatmul.mubr.bf16.gmra.mrb[0].mxu0 %v6321
        %v6479 = vpop.f32.mrb[0].mxu0
        %v6480 = vadd.f32 0.0, %v6479
        %v6481 = vpop.f32.mrb[0].mxu0
        %v6482 = vpop.f32.mrb[0].mxu0
        %v6483 = vadd.f32 0.0, %v6482
        %v6484 = vpop.f32.mrb[0].mxu0
        %6485 = vmatprep.mubr.bf16.mxu0 0
        %6486 = vmatmul.mubr.bf16.gmra.mrb[0].mxu0 %v6322
        %v6487 = vpop.f32.mrb[0].mxu0
        %v6488 = vadd.f32 0.0, %v6487
        %v6489 = vpop.f32.mrb[0].mxu0
        %v6490 = vpop.f32.mrb[0].mxu0
        %v6491 = vadd.f32 0.0, %v6490
        %v6492 = vpop.f32.mrb[0].mxu0
        %6493 = vmatprep.mubr.bf16.mxu0 0
        %6494 = vmatmul.mubr.bf16.gmra.mrb[0].mxu0 %v6323
        %v6495 = vpop.f32.mrb[0].mxu0
        %v6496 = vadd.f32 0.0, %v6495
        %v6497 = vpop.f32.mrb[0].mxu0
        %v6498 = vpop.f32.mrb[0].mxu0
        %v6499 = vadd.f32 0.0, %v6498
        %v6500 = vpop.f32.mrb[0].mxu0
        %6501 = vdwg.mxu0
        %v6502 = vadd.f32 %v6238, %v6424
        %v6503 = vadd.f32 %v6239, %v6427
        %v6504 = vadd.f32 %v6240, %v6432
        %v6505 = vadd.f32 %v6241, %v6435
        %v6506 = vadd.f32 %v6242, %v6440
        %v6507 = vadd.f32 %v6243, %v6443
        %v6508 = vadd.f32 %v6244, %v6448
        %v6509 = vadd.f32 %v6245, %v6451
        %v6510 = vadd.f32 %v6246, %v6456
        %v6511 = vadd.f32 %v6247, %v6459
        %v6512 = vadd.f32 %v6248, %v6464
        %v6513 = vadd.f32 %v6249, %v6467
        %v6514 = vadd.f32 %v6250, %v6472
        %v6515 = vadd.f32 %v6251, %v6475
        %v6516 = vadd.f32 %v6252, %v6480
        %v6517 = vadd.f32 %v6253, %v6483
        %v6518 = vadd.f32 %v6254, %v6488
        %v6519 = vadd.f32 %v6255, %v6491
        %v6520 = vadd.f32 %v6256, %v6496
        %v6521 = vadd.f32 %v6257, %v6499
        %v6522 = vld [vmem:[#allocation4 + $0x8] sm:$0xff]
        %v6523 = vld [vmem:[#allocation4 + $0x10] sm:$0xff]
        %v6524 = vld [vmem:[#allocation4 + $0x18] sm:$0xff]
        %v6525 = vld [vmem:[#allocation4 + $0x20] sm:$0xff]
        %v6526 = vld [vmem:[#allocation4 + $0x28] sm:$0xff]
        %v6527 = vld [vmem:[#allocation4 + $0x30] sm:$0xff]
        %v6528 = vld [vmem:[#allocation4 + $0x38] sm:$0xff]
        %v6529 = vld [vmem:[#allocation4 + $0x40] sm:$0xff]
        %v6530 = vld [vmem:[#allocation4 + $0x48] sm:$0xff]
        %v6531 = vld [vmem:[#allocation4 + $0x50] sm:$0xff]
        %s6532 = scalar_lea.vmem %s3, 576
        %v6533 = vld [vmem:[%s6532] sm:$0xf]
        %v6534 = vld [vmem:[%s6532 + $0x4] sm:$0xf]
        %v6535 = vld [vmem:[%s6532 + $0x8] sm:$0xf]
        %v6536 = vld [vmem:[%s6532 + $0xc] sm:$0xf]
        %v6537 = vld [vmem:[%s6532 + $0x10] sm:$0xf]
        %v6538 = vld [vmem:[%s6532 + $0x14] sm:$0xf]
        %v6539 = vld [vmem:[%s6532 + $0x18] sm:$0xf]
        %v6540 = vld [vmem:[%s6532 + $0x1c] sm:$0xf]
        %v6541 = vld [vmem:[%s6532 + $0x20] sm:$0xf]
        %v6542 = vld [vmem:[%s6532 + $0x24] sm:$0xf]
        %v6543 = vld [vmem:[%s6532 + $0x28] sm:$0xf]
        %v6544 = vld [vmem:[%s6532 + $0x2c] sm:$0xf]
        %v6545 = vld [vmem:[%s6532 + $0x30] sm:$0xf]
        %v6546 = vld [vmem:[%s6532 + $0x34] sm:$0xf]
        %v6547 = vld [vmem:[%s6532 + $0x38] sm:$0xf]
        %v6548 = vld [vmem:[%s6532 + $0x3c] sm:$0xf]
        %v6565 = vunpack.c.l.b16 %v6533
        %v6566 = vunpack.c.l.b16 %v6534
        %v6567 = vunpack.c.l.b16 %v6535
        %v6568 = vunpack.c.l.b16 %v6536
        %v6569 = vunpack.c.l.b16 %v6537
        %v6570 = vunpack.c.l.b16 %v6538
        %v6571 = vunpack.c.l.b16 %v6539
        %v6572 = vunpack.c.l.b16 %v6540
        %v6573 = vunpack.c.l.b16 %v6541
        %v6574 = vunpack.c.l.b16 %v6542
        %v6575 = vunpack.c.l.b16 %v6543
        %v6576 = vunpack.c.l.b16 %v6544
        %v6577 = vunpack.c.l.b16 %v6545
        %v6578 = vunpack.c.l.b16 %v6546
        %v6579 = vunpack.c.l.b16 %v6547
        %v6580 = vunpack.c.l.b16 %v6548
        %v6581 = vpack.c.b16 %v6566, %v6565
        %v6582 = vpack.c.b16 %v6568, %v6567
        %v6583 = vpack.c.b16 %v6570, %v6569
        %v6584 = vpack.c.b16 %v6572, %v6571
        %v6585 = vpack.c.b16 %v6574, %v6573
        %v6586 = vpack.c.b16 %v6576, %v6575
        %v6587 = vpack.c.b16 %v6578, %v6577
        %v6588 = vpack.c.b16 %v6580, %v6579
        %6597 = vmatprep.subr.bf16.mxu0 0
        %6598 = vmatpush1.bf16.msra.mxu0 %v6581
        %6599 = vmatprep.subr.bf16.mxu0 0
        %6600 = vmatpush1.bf16.msra.mxu0 %v6582
        %6601 = vmatprep.subr.bf16.mxu0 0
        %6602 = vmatpush1.bf16.msra.mxu0 %v6583
        %6603 = vmatprep.subr.bf16.mxu0 0
        %6604 = vmatpush1.bf16.msra.mxu0 %v6584
        %6605 = vmatprep.subr.bf16.mxu0 0
        %6606 = vmatpush1.bf16.msra.mxu0 %v6585
        %6607 = vmatprep.subr.bf16.mxu0 0
        %6608 = vmatpush1.bf16.msra.mxu0 %v6586
        %6609 = vmatprep.subr.bf16.mxu0 0
        %6610 = vmatpush1.bf16.msra.mxu0 %v6587
        %6611 = vmatprep.subr.bf16.mxu0 0
        %6612 = vmatpush1.bf16.msra.mxu0 %v6588
        %6613 = vmatprep.subr.bf16.mxu0 0
        %6614 = vmatpush1.bf16.msra.mxu0 0
        %6615 = vmatprep.subr.bf16.mxu0 0
        %6616 = vmatpush1.bf16.msra.mxu0 0
        %6617 = vmatprep.subr.bf16.mxu0 0
        %6618 = vmatpush1.bf16.msra.mxu0 0
        %6619 = vmatprep.subr.bf16.mxu0 0
        %6620 = vmatpush1.bf16.msra.mxu0 0
        %6621 = vmatprep.subr.bf16.mxu0 0
        %6622 = vmatpush1.bf16.msra.mxu0 0
        %6623 = vmatprep.subr.bf16.mxu0 0
        %6624 = vmatpush1.bf16.msra.mxu0 0
        %6625 = vmatprep.subr.bf16.mxu0 0
        %6626 = vmatpush1.bf16.msra.mxu0 0
        %6627 = vmatprep.subr.bf16.mxu0 0
        %6628 = vmatpush1.bf16.msra.mxu0 0
        %6629 = vmatprep.mubr.bf16.mxu0 0
        %6630 = vmatmul.mubr.bf16.gmra.mrb[0].mxu0 %v6522
        %v6631 = vpop.f32.mrb[0].mxu0
        %v6632 = vadd.f32 0.0, %v6631
        %v6633 = vpop.f32.mrb[0].mxu0
        %v6634 = vpop.f32.mrb[0].mxu0
        %v6635 = vadd.f32 0.0, %v6634
        %v6636 = vpop.f32.mrb[0].mxu0
        %6637 = vmatprep.mubr.bf16.mxu0 0
        %6638 = vmatmul.mubr.bf16.gmra.mrb[0].mxu0 %v6523
        %v6639 = vpop.f32.mrb[0].mxu0
        %v6640 = vadd.f32 0.0, %v6639
        %v6641 = vpop.f32.mrb[0].mxu0
        %v6642 = vpop.f32.mrb[0].mxu0
        %v6643 = vadd.f32 0.0, %v6642
        %v6644 = vpop.f32.mrb[0].mxu0
        %6645 = vmatprep.mubr.bf16.mxu0 0
        %6646 = vmatmul.mubr.bf16.gmra.mrb[0].mxu0 %v6524
        %v6647 = vpop.f32.mrb[0].mxu0
        %v6648 = vadd.f32 0.0, %v6647
        %v6649 = vpop.f32.mrb[0].mxu0
        %v6650 = vpop.f32.mrb[0].mxu0
        %v6651 = vadd.f32 0.0, %v6650
        %v6652 = vpop.f32.mrb[0].mxu0
        %6653 = vmatprep.mubr.bf16.mxu0 0
        %6654 = vmatmul.mubr.bf16.gmra.mrb[0].mxu0 %v6525
        %v6655 = vpop.f32.mrb[0].mxu0
        %v6656 = vadd.f32 0.0, %v6655
        %v6657 = vpop.f32.mrb[0].mxu0
        %v6658 = vpop.f32.mrb[0].mxu0
        %v6659 = vadd.f32 0.0, %v6658
        %v6660 = vpop.f32.mrb[0].mxu0
        %6661 = vmatprep.mubr.bf16.mxu0 0
        %6662 = vmatmul.mubr.bf16.gmra.mrb[0].mxu0 %v6526
        %v6663 = vpop.f32.mrb[0].mxu0
        %v6664 = vadd.f32 0.0, %v6663
        %v6665 = vpop.f32.mrb[0].mxu0
        %v6666 = vpop.f32.mrb[0].mxu0
        %v6667 = vadd.f32 0.0, %v6666
        %v6668 = vpop.f32.mrb[0].mxu0
        %6669 = vmatprep.mubr.bf16.mxu0 0
        %6670 = vmatmul.mubr.bf16.gmra.mrb[0].mxu0 %v6527
        %v6671 = vpop.f32.mrb[0].mxu0
        %v6672 = vadd.f32 0.0, %v6671
        %v6673 = vpop.f32.mrb[0].mxu0
        %v6674 = vpop.f32.mrb[0].mxu0
        %v6675 = vadd.f32 0.0, %v6674
        %v6676 = vpop.f32.mrb[0].mxu0
        %6677 = vmatprep.mubr.bf16.mxu0 0
        %6678 = vmatmul.mubr.bf16.gmra.mrb[0].mxu0 %v6528
        %v6679 = vpop.f32.mrb[0].mxu0
        %v6680 = vadd.f32 0.0, %v6679
        %v6681 = vpop.f32.mrb[0].mxu0
        %v6682 = vpop.f32.mrb[0].mxu0
        %v6683 = vadd.f32 0.0, %v6682
        %v6684 = vpop.f32.mrb[0].mxu0
        %6685 = vmatprep.mubr.bf16.mxu0 0
        %6686 = vmatmul.mubr.bf16.gmra.mrb[0].mxu0 %v6529
        %v6687 = vpop.f32.mrb[0].mxu0
        %v6688 = vadd.f32 0.0, %v6687
        %v6689 = vpop.f32.mrb[0].mxu0
        %v6690 = vpop.f32.mrb[0].mxu0
        %v6691 = vadd.f32 0.0, %v6690
        %v6692 = vpop.f32.mrb[0].mxu0
        %6693 = vmatprep.mubr.bf16.mxu0 0
        %6694 = vmatmul.mubr.bf16.gmra.mrb[0].mxu0 %v6530
        %v6695 = vpop.f32.mrb[0].mxu0
        %v6696 = vadd.f32 0.0, %v6695
        %v6697 = vpop.f32.mrb[0].mxu0
        %v6698 = vpop.f32.mrb[0].mxu0
        %v6699 = vadd.f32 0.0, %v6698
        %v6700 = vpop.f32.mrb[0].mxu0
        %6701 = vmatprep.mubr.bf16.mxu0 0
        %6702 = vmatmul.mubr.bf16.gmra.mrb[0].mxu0 %v6531
        %v6703 = vpop.f32.mrb[0].mxu0
        %v6704 = vadd.f32 0.0, %v6703
        %v6705 = vpop.f32.mrb[0].mxu0
        %v6706 = vpop.f32.mrb[0].mxu0
        %v6707 = vadd.f32 0.0, %v6706
        %v6708 = vpop.f32.mrb[0].mxu0
        %6709 = vdwg.mxu0
        %v6710 = vadd.f32 %v6502, %v6632
        %v6711 = vadd.f32 %v6503, %v6635
        %v6712 = vadd.f32 %v6504, %v6640
        %v6713 = vadd.f32 %v6505, %v6643
        %v6714 = vadd.f32 %v6506, %v6648
        %v6715 = vadd.f32 %v6507, %v6651
        %v6716 = vadd.f32 %v6508, %v6656
        %v6717 = vadd.f32 %v6509, %v6659
        %v6718 = vadd.f32 %v6510, %v6664
        %v6719 = vadd.f32 %v6511, %v6667
        %v6720 = vadd.f32 %v6512, %v6672
        %v6721 = vadd.f32 %v6513, %v6675
        %v6722 = vadd.f32 %v6514, %v6680
        %v6723 = vadd.f32 %v6515, %v6683
        %v6724 = vadd.f32 %v6516, %v6688
        %v6725 = vadd.f32 %v6517, %v6691
        %v6726 = vadd.f32 %v6518, %v6696
        %v6727 = vadd.f32 %v6519, %v6699
        %v6728 = vadd.f32 %v6520, %v6704
        %v6729 = vadd.f32 %v6521, %v6707
        %v6730 = vld [vmem:[#allocation4 + $0x10] sm:$0xff]
        %v6731 = vld [vmem:[#allocation4 + $0x18] sm:$0xff]
        %v6732 = vld [vmem:[#allocation4 + $0x20] sm:$0xff]
        %v6733 = vld [vmem:[#allocation4 + $0x28] sm:$0xff]
        %v6734 = vld [vmem:[#allocation4 + $0x30] sm:$0xff]
        %v6735 = vld [vmem:[#allocation4 + $0x38] sm:$0xff]
        %v6736 = vld [vmem:[#allocation4 + $0x40] sm:$0xff]
        %v6737 = vld [vmem:[#allocation4 + $0x48] sm:$0xff]
        %v6738 = vld [vmem:[#allocation4 + $0x50] sm:$0xff]
        %v6739 = vld [vmem:[#allocation4 + $0x58] sm:$0xff]
        %s6740 = scalar_lea.vmem %s3, 896
        %v6741 = vld [vmem:[%s6740] sm:$0xf]
        %v6742 = vld [vmem:[%s6740 + $0x4] sm:$0xf]
        %v6743 = vld [vmem:[%s6740 + $0x8] sm:$0xf]
        %v6744 = vld [vmem:[%s6740 + $0xc] sm:$0xf]
        %v6745 = vld [vmem:[%s6740 + $0x10] sm:$0xf]
        %v6746 = vld [vmem:[%s6740 + $0x14] sm:$0xf]
        %v6747 = vld [vmem:[%s6740 + $0x18] sm:$0xf]
        %v6748 = vld [vmem:[%s6740 + $0x1c] sm:$0xf]
        %v6749 = vld [vmem:[%s6740 + $0x20] sm:$0xf]
        %v6750 = vld [vmem:[%s6740 + $0x24] sm:$0xf]
        %v6751 = vld [vmem:[%s6740 + $0x28] sm:$0xf]
        %v6752 = vld [vmem:[%s6740 + $0x2c] sm:$0xf]
        %v6753 = vld [vmem:[%s6740 + $0x30] sm:$0xf]
        %v6754 = vld [vmem:[%s6740 + $0x34] sm:$0xf]
        %v6755 = vld [vmem:[%s6740 + $0x38] sm:$0xf]
        %v6756 = vld [vmem:[%s6740 + $0x3c] sm:$0xf]
        %v6773 = vunpack.c.l.b16 %v6741
        %v6774 = vunpack.c.l.b16 %v6742
        %v6775 = vunpack.c.l.b16 %v6743
        %v6776 = vunpack.c.l.b16 %v6744
        %v6777 = vunpack.c.l.b16 %v6745
        %v6778 = vunpack.c.l.b16 %v6746
        %v6779 = vunpack.c.l.b16 %v6747
        %v6780 = vunpack.c.l.b16 %v6748
        %v6781 = vunpack.c.l.b16 %v6749
        %v6782 = vunpack.c.l.b16 %v6750
        %v6783 = vunpack.c.l.b16 %v6751
        %v6784 = vunpack.c.l.b16 %v6752
        %v6785 = vunpack.c.l.b16 %v6753
        %v6786 = vunpack.c.l.b16 %v6754
        %v6787 = vunpack.c.l.b16 %v6755
        %v6788 = vunpack.c.l.b16 %v6756
        %v6789 = vpack.c.b16 %v6774, %v6773
        %v6790 = vpack.c.b16 %v6776, %v6775
        %v6791 = vpack.c.b16 %v6778, %v6777
        %v6792 = vpack.c.b16 %v6780, %v6779
        %v6793 = vpack.c.b16 %v6782, %v6781
        %v6794 = vpack.c.b16 %v6784, %v6783
        %v6795 = vpack.c.b16 %v6786, %v6785
        %v6796 = vpack.c.b16 %v6788, %v6787
        %6805 = vmatprep.subr.bf16.mxu0 0
        %6806 = vmatpush1.bf16.msra.mxu0 %v6789
        %6807 = vmatprep.subr.bf16.mxu0 0
        %6808 = vmatpush1.bf16.msra.mxu0 %v6790
        %6809 = vmatprep.subr.bf16.mxu0 0
        %6810 = vmatpush1.bf16.msra.mxu0 %v6791
        %6811 = vmatprep.subr.bf16.mxu0 0
        %6812 = vmatpush1.bf16.msra.mxu0 %v6792
        %6813 = vmatprep.subr.bf16.mxu0 0
        %6814 = vmatpush1.bf16.msra.mxu0 %v6793
        %6815 = vmatprep.subr.bf16.mxu0 0
        %6816 = vmatpush1.bf16.msra.mxu0 %v6794
        %6817 = vmatprep.subr.bf16.mxu0 0
        %6818 = vmatpush1.bf16.msra.mxu0 %v6795
        %6819 = vmatprep.subr.bf16.mxu0 0
        %6820 = vmatpush1.bf16.msra.mxu0 %v6796
        %6821 = vmatprep.subr.bf16.mxu0 0
        %6822 = vmatpush1.bf16.msra.mxu0 0
        %6823 = vmatprep.subr.bf16.mxu0 0
        %6824 = vmatpush1.bf16.msra.mxu0 0
        %6825 = vmatprep.subr.bf16.mxu0 0
        %6826 = vmatpush1.bf16.msra.mxu0 0
        %6827 = vmatprep.subr.bf16.mxu0 0
        %6828 = vmatpush1.bf16.msra.mxu0 0
        %6829 = vmatprep.subr.bf16.mxu0 0
        %6830 = vmatpush1.bf16.msra.mxu0 0
        %6831 = vmatprep.subr.bf16.mxu0 0
        %6832 = vmatpush1.bf16.msra.mxu0 0
        %6833 = vmatprep.subr.bf16.mxu0 0
        %6834 = vmatpush1.bf16.msra.mxu0 0
        %6835 = vmatprep.subr.bf16.mxu0 0
        %6836 = vmatpush1.bf16.msra.mxu0 0
        %6837 = vmatprep.mubr.bf16.mxu0 0
        %6838 = vmatmul.mubr.bf16.gmra.mrb[0].mxu0 %v6730
        %v6839 = vpop.f32.mrb[0].mxu0
        %v6840 = vadd.f32 0.0, %v6839
        %v6841 = vpop.f32.mrb[0].mxu0
        %v6842 = vpop.f32.mrb[0].mxu0
        %v6843 = vadd.f32 0.0, %v6842
        %v6844 = vpop.f32.mrb[0].mxu0
        %6845 = vmatprep.mubr.bf16.mxu0 0
        %6846 = vmatmul.mubr.bf16.gmra.mrb[0].mxu0 %v6731
        %v6847 = vpop.f32.mrb[0].mxu0
        %v6848 = vadd.f32 0.0, %v6847
        %v6849 = vpop.f32.mrb[0].mxu0
        %v6850 = vpop.f32.mrb[0].mxu0
        %v6851 = vadd.f32 0.0, %v6850
        %v6852 = vpop.f32.mrb[0].mxu0
        %6853 = vmatprep.mubr.bf16.mxu0 0
        %6854 = vmatmul.mubr.bf16.gmra.mrb[0].mxu0 %v6732
        %v6855 = vpop.f32.mrb[0].mxu0
        %v6856 = vadd.f32 0.0, %v6855
        %v6857 = vpop.f32.mrb[0].mxu0
        %v6858 = vpop.f32.mrb[0].mxu0
        %v6859 = vadd.f32 0.0, %v6858
        %v6860 = vpop.f32.mrb[0].mxu0
        %6861 = vmatprep.mubr.bf16.mxu0 0
        %6862 = vmatmul.mubr.bf16.gmra.mrb[0].mxu0 %v6733
        %v6863 = vpop.f32.mrb[0].mxu0
        %v6864 = vadd.f32 0.0, %v6863
        %v6865 = vpop.f32.mrb[0].mxu0
        %v6866 = vpop.f32.mrb[0].mxu0
        %v6867 = vadd.f32 0.0, %v6866
        %v6868 = vpop.f32.mrb[0].mxu0
        %6869 = vmatprep.mubr.bf16.mxu0 0
        %6870 = vmatmul.mubr.bf16.gmra.mrb[0].mxu0 %v6734
        %v6871 = vpop.f32.mrb[0].mxu0
        %v6872 = vadd.f32 0.0, %v6871
        %v6873 = vpop.f32.mrb[0].mxu0
        %v6874 = vpop.f32.mrb[0].mxu0
        %v6875 = vadd.f32 0.0, %v6874
        %v6876 = vpop.f32.mrb[0].mxu0
        %6877 = vmatprep.mubr.bf16.mxu0 0
        %6878 = vmatmul.mubr.bf16.gmra.mrb[0].mxu0 %v6735
        %v6879 = vpop.f32.mrb[0].mxu0
        %v6880 = vadd.f32 0.0, %v6879
        %v6881 = vpop.f32.mrb[0].mxu0
        %v6882 = vpop.f32.mrb[0].mxu0
        %v6883 = vadd.f32 0.0, %v6882
        %v6884 = vpop.f32.mrb[0].mxu0
        %6885 = vmatprep.mubr.bf16.mxu0 0
        %6886 = vmatmul.mubr.bf16.gmra.mrb[0].mxu0 %v6736
        %v6887 = vpop.f32.mrb[0].mxu0
        %v6888 = vadd.f32 0.0, %v6887
        %v6889 = vpop.f32.mrb[0].mxu0
        %v6890 = vpop.f32.mrb[0].mxu0
        %v6891 = vadd.f32 0.0, %v6890
        %v6892 = vpop.f32.mrb[0].mxu0
        %6893 = vmatprep.mubr.bf16.mxu0 0
        %6894 = vmatmul.mubr.bf16.gmra.mrb[0].mxu0 %v6737
        %v6895 = vpop.f32.mrb[0].mxu0
        %v6896 = vadd.f32 0.0, %v6895
        %v6897 = vpop.f32.mrb[0].mxu0
        %v6898 = vpop.f32.mrb[0].mxu0
        %v6899 = vadd.f32 0.0, %v6898
        %v6900 = vpop.f32.mrb[0].mxu0
        %6901 = vmatprep.mubr.bf16.mxu0 0
        %6902 = vmatmul.mubr.bf16.gmra.mrb[0].mxu0 %v6738
        %v6903 = vpop.f32.mrb[0].mxu0
        %v6904 = vadd.f32 0.0, %v6903
        %v6905 = vpop.f32.mrb[0].mxu0
        %v6906 = vpop.f32.mrb[0].mxu0
        %v6907 = vadd.f32 0.0, %v6906
        %v6908 = vpop.f32.mrb[0].mxu0
        %6909 = vmatprep.mubr.bf16.mxu0 0
        %6910 = vmatmul.mubr.bf16.gmra.mrb[0].mxu0 %v6739
        %v6911 = vpop.f32.mrb[0].mxu0
        %v6912 = vadd.f32 0.0, %v6911
        %v6913 = vpop.f32.mrb[0].mxu0
        %v6914 = vpop.f32.mrb[0].mxu0
        %v6915 = vadd.f32 0.0, %v6914
        %v6916 = vpop.f32.mrb[0].mxu0
        %6917 = vdwg.mxu0
        %v6918 = vadd.f32 %v6710, %v6840
        %v6919 = vadd.f32 %v6711, %v6843
        %v6920 = vadd.f32 %v6712, %v6848
        %v6921 = vadd.f32 %v6713, %v6851
        %v6922 = vadd.f32 %v6714, %v6856
        %v6923 = vadd.f32 %v6715, %v6859
        %v6924 = vadd.f32 %v6716, %v6864
        %v6925 = vadd.f32 %v6717, %v6867
        %v6926 = vadd.f32 %v6718, %v6872
        %v6927 = vadd.f32 %v6719, %v6875
        %v6928 = vadd.f32 %v6720, %v6880
        %v6929 = vadd.f32 %v6721, %v6883
        %v6930 = vadd.f32 %v6722, %v6888
        %v6931 = vadd.f32 %v6723, %v6891
        %v6932 = vadd.f32 %v6724, %v6896
        %v6933 = vadd.f32 %v6725, %v6899
        %v6934 = vadd.f32 %v6726, %v6904
        %v6935 = vadd.f32 %v6727, %v6907
        %v6936 = vadd.f32 %v6728, %v6912
        %v6937 = vadd.f32 %v6729, %v6915
        %v6938 = vld [vmem:[#allocation4 + $0x18] sm:$0xff]
        %v6939 = vld [vmem:[#allocation4 + $0x20] sm:$0xff]
        %v6940 = vld [vmem:[#allocation4 + $0x28] sm:$0xff]
        %v6941 = vld [vmem:[#allocation4 + $0x30] sm:$0xff]
        %v6942 = vld [vmem:[#allocation4 + $0x38] sm:$0xff]
        %v6943 = vld [vmem:[#allocation4 + $0x40] sm:$0xff]
        %v6944 = vld [vmem:[#allocation4 + $0x48] sm:$0xff]
        %v6945 = vld [vmem:[#allocation4 + $0x50] sm:$0xff]
        %v6946 = vld [vmem:[#allocation4 + $0x58] sm:$0xff]
        %v6947 = vld [vmem:[#allocation4 + $0x60] sm:$0xff]
        %s6948 = scalar_lea.vmem %s3, 1216
        %v6949 = vld [vmem:[%s6948] sm:$0xf]
        %v6950 = vld [vmem:[%s6948 + $0x4] sm:$0xf]
        %v6951 = vld [vmem:[%s6948 + $0x8] sm:$0xf]
        %v6952 = vld [vmem:[%s6948 + $0xc] sm:$0xf]
        %v6953 = vld [vmem:[%s6948 + $0x10] sm:$0xf]
        %v6954 = vld [vmem:[%s6948 + $0x14] sm:$0xf]
        %v6955 = vld [vmem:[%s6948 + $0x18] sm:$0xf]
        %v6956 = vld [vmem:[%s6948 + $0x1c] sm:$0xf]
        %v6957 = vld [vmem:[%s6948 + $0x20] sm:$0xf]
        %v6958 = vld [vmem:[%s6948 + $0x24] sm:$0xf]
        %v6959 = vld [vmem:[%s6948 + $0x28] sm:$0xf]
        %v6960 = vld [vmem:[%s6948 + $0x2c] sm:$0xf]
        %v6961 = vld [vmem:[%s6948 + $0x30] sm:$0xf]
        %v6962 = vld [vmem:[%s6948 + $0x34] sm:$0xf]
        %v6963 = vld [vmem:[%s6948 + $0x38] sm:$0xf]
        %v6964 = vld [vmem:[%s6948 + $0x3c] sm:$0xf]
        %v6981 = vunpack.c.l.b16 %v6949
        %v6982 = vunpack.c.l.b16 %v6950
        %v6983 = vunpack.c.l.b16 %v6951
        %v6984 = vunpack.c.l.b16 %v6952
        %v6985 = vunpack.c.l.b16 %v6953
        %v6986 = vunpack.c.l.b16 %v6954
        %v6987 = vunpack.c.l.b16 %v6955
        %v6988 = vunpack.c.l.b16 %v6956
        %v6989 = vunpack.c.l.b16 %v6957
        %v6990 = vunpack.c.l.b16 %v6958
        %v6991 = vunpack.c.l.b16 %v6959
        %v6992 = vunpack.c.l.b16 %v6960
        %v6993 = vunpack.c.l.b16 %v6961
        %v6994 = vunpack.c.l.b16 %v6962
        %v6995 = vunpack.c.l.b16 %v6963
        %v6996 = vunpack.c.l.b16 %v6964
        %v6997 = vpack.c.b16 %v6982, %v6981
        %v6998 = vpack.c.b16 %v6984, %v6983
        %v6999 = vpack.c.b16 %v6986, %v6985
        %v7000 = vpack.c.b16 %v6988, %v6987
        %v7001 = vpack.c.b16 %v6990, %v6989
        %v7002 = vpack.c.b16 %v6992, %v6991
        %v7003 = vpack.c.b16 %v6994, %v6993
        %v7004 = vpack.c.b16 %v6996, %v6995
        %7013 = vmatprep.subr.bf16.mxu0 0
        %7014 = vmatpush1.bf16.msra.mxu0 %v6997
        %7015 = vmatprep.subr.bf16.mxu0 0
        %7016 = vmatpush1.bf16.msra.mxu0 %v6998
        %7017 = vmatprep.subr.bf16.mxu0 0
        %7018 = vmatpush1.bf16.msra.mxu0 %v6999
        %7019 = vmatprep.subr.bf16.mxu0 0
        %7020 = vmatpush1.bf16.msra.mxu0 %v7000
        %7021 = vmatprep.subr.bf16.mxu0 0
        %7022 = vmatpush1.bf16.msra.mxu0 %v7001
        %7023 = vmatprep.subr.bf16.mxu0 0
        %7024 = vmatpush1.bf16.msra.mxu0 %v7002
        %7025 = vmatprep.subr.bf16.mxu0 0
        %7026 = vmatpush1.bf16.msra.mxu0 %v7003
        %7027 = vmatprep.subr.bf16.mxu0 0
        %7028 = vmatpush1.bf16.msra.mxu0 %v7004
        %7029 = vmatprep.subr.bf16.mxu0 0
        %7030 = vmatpush1.bf16.msra.mxu0 0
        %7031 = vmatprep.subr.bf16.mxu0 0
        %7032 = vmatpush1.bf16.msra.mxu0 0
        %7033 = vmatprep.subr.bf16.mxu0 0
        %7034 = vmatpush1.bf16.msra.mxu0 0
        %7035 = vmatprep.subr.bf16.mxu0 0
        %7036 = vmatpush1.bf16.msra.mxu0 0
        %7037 = vmatprep.subr.bf16.mxu0 0
        %7038 = vmatpush1.bf16.msra.mxu0 0
        %7039 = vmatprep.subr.bf16.mxu0 0
        %7040 = vmatpush1.bf16.msra.mxu0 0
        %7041 = vmatprep.subr.bf16.mxu0 0
        %7042 = vmatpush1.bf16.msra.mxu0 0
        %7043 = vmatprep.subr.bf16.mxu0 0
        %7044 = vmatpush1.bf16.msra.mxu0 0
        %7045 = vmatprep.mubr.bf16.mxu0 0
        %7046 = vmatmul.mubr.bf16.gmra.mrb[0].mxu0 %v6938
        %v7047 = vpop.f32.mrb[0].mxu0
        %v7048 = vadd.f32 0.0, %v7047
        %v7049 = vpop.f32.mrb[0].mxu0
        %v7050 = vpop.f32.mrb[0].mxu0
        %v7051 = vadd.f32 0.0, %v7050
        %v7052 = vpop.f32.mrb[0].mxu0
        %7053 = vmatprep.mubr.bf16.mxu0 0
        %7054 = vmatmul.mubr.bf16.gmra.mrb[0].mxu0 %v6939
        %v7055 = vpop.f32.mrb[0].mxu0
        %v7056 = vadd.f32 0.0, %v7055
        %v7057 = vpop.f32.mrb[0].mxu0
        %v7058 = vpop.f32.mrb[0].mxu0
        %v7059 = vadd.f32 0.0, %v7058
        %v7060 = vpop.f32.mrb[0].mxu0
        %7061 = vmatprep.mubr.bf16.mxu0 0
        %7062 = vmatmul.mubr.bf16.gmra.mrb[0].mxu0 %v6940
        %v7063 = vpop.f32.mrb[0].mxu0
        %v7064 = vadd.f32 0.0, %v7063
        %v7065 = vpop.f32.mrb[0].mxu0
        %v7066 = vpop.f32.mrb[0].mxu0
        %v7067 = vadd.f32 0.0, %v7066
        %v7068 = vpop.f32.mrb[0].mxu0
        %7069 = vmatprep.mubr.bf16.mxu0 0
        %7070 = vmatmul.mubr.bf16.gmra.mrb[0].mxu0 %v6941
        %v7071 = vpop.f32.mrb[0].mxu0
        %v7072 = vadd.f32 0.0, %v7071
        %v7073 = vpop.f32.mrb[0].mxu0
        %v7074 = vpop.f32.mrb[0].mxu0
        %v7075 = vadd.f32 0.0, %v7074
        %v7076 = vpop.f32.mrb[0].mxu0
        %7077 = vmatprep.mubr.bf16.mxu0 0
        %7078 = vmatmul.mubr.bf16.gmra.mrb[0].mxu0 %v6942
        %v7079 = vpop.f32.mrb[0].mxu0
        %v7080 = vadd.f32 0.0, %v7079
        %v7081 = vpop.f32.mrb[0].mxu0
        %v7082 = vpop.f32.mrb[0].mxu0
        %v7083 = vadd.f32 0.0, %v7082
        %v7084 = vpop.f32.mrb[0].mxu0
        %7085 = vmatprep.mubr.bf16.mxu0 0
        %7086 = vmatmul.mubr.bf16.gmra.mrb[0].mxu0 %v6943
        %v7087 = vpop.f32.mrb[0].mxu0
        %v7088 = vadd.f32 0.0, %v7087
        %v7089 = vpop.f32.mrb[0].mxu0
        %v7090 = vpop.f32.mrb[0].mxu0
        %v7091 = vadd.f32 0.0, %v7090
        %v7092 = vpop.f32.mrb[0].mxu0
        %7093 = vmatprep.mubr.bf16.mxu0 0
        %7094 = vmatmul.mubr.bf16.gmra.mrb[0].mxu0 %v6944
        %v7095 = vpop.f32.mrb[0].mxu0
        %v7096 = vadd.f32 0.0, %v7095
        %v7097 = vpop.f32.mrb[0].mxu0
        %v7098 = vpop.f32.mrb[0].mxu0
        %v7099 = vadd.f32 0.0, %v7098
        %v7100 = vpop.f32.mrb[0].mxu0
        %7101 = vmatprep.mubr.bf16.mxu0 0
        %7102 = vmatmul.mubr.bf16.gmra.mrb[0].mxu0 %v6945
        %v7103 = vpop.f32.mrb[0].mxu0
        %v7104 = vadd.f32 0.0, %v7103
        %v7105 = vpop.f32.mrb[0].mxu0
        %v7106 = vpop.f32.mrb[0].mxu0
        %v7107 = vadd.f32 0.0, %v7106
        %v7108 = vpop.f32.mrb[0].mxu0
        %7109 = vmatprep.mubr.bf16.mxu0 0
        %7110 = vmatmul.mubr.bf16.gmra.mrb[0].mxu0 %v6946
        %v7111 = vpop.f32.mrb[0].mxu0
        %v7112 = vadd.f32 0.0, %v7111
        %v7113 = vpop.f32.mrb[0].mxu0
        %v7114 = vpop.f32.mrb[0].mxu0
        %v7115 = vadd.f32 0.0, %v7114
        %v7116 = vpop.f32.mrb[0].mxu0
        %7117 = vmatprep.mubr.bf16.mxu0 0
        %7118 = vmatmul.mubr.bf16.gmra.mrb[0].mxu0 %v6947
        %v7119 = vpop.f32.mrb[0].mxu0
        %v7120 = vadd.f32 0.0, %v7119
        %v7121 = vpop.f32.mrb[0].mxu0
        %v7122 = vpop.f32.mrb[0].mxu0
        %v7123 = vadd.f32 0.0, %v7122
        %v7124 = vpop.f32.mrb[0].mxu0
        %7125 = vdwg.mxu0
        %v7126 = vadd.f32 %v6918, %v7048
        %v7127 = vadd.f32 %v6919, %v7051
        %v7128 = vadd.f32 %v6920, %v7056
        %v7129 = vadd.f32 %v6921, %v7059
        %v7130 = vadd.f32 %v6922, %v7064
        %v7131 = vadd.f32 %v6923, %v7067
        %v7132 = vadd.f32 %v6924, %v7072
        %v7133 = vadd.f32 %v6925, %v7075
        %v7134 = vadd.f32 %v6926, %v7080
        %v7135 = vadd.f32 %v6927, %v7083
        %v7136 = vadd.f32 %v6928, %v7088
        %v7137 = vadd.f32 %v6929, %v7091
        %v7138 = vadd.f32 %v6930, %v7096
        %v7139 = vadd.f32 %v6931, %v7099
        %v7140 = vadd.f32 %v6932, %v7104
        %v7141 = vadd.f32 %v6933, %v7107
        %v7142 = vadd.f32 %v6934, %v7112
        %v7143 = vadd.f32 %v6935, %v7115
        %v7144 = vadd.f32 %v6936, %v7120
        %v7145 = vadd.f32 %v6937, %v7123
        %v7146 = vld [vmem:[#allocation4 + $0x20] sm:$0xff]
        %v7147 = vld [vmem:[#allocation4 + $0x28] sm:$0xff]
        %v7148 = vld [vmem:[#allocation4 + $0x30] sm:$0xff]
        %v7149 = vld [vmem:[#allocation4 + $0x38] sm:$0xff]
        %v7150 = vld [vmem:[#allocation4 + $0x40] sm:$0xff]
        %v7151 = vld [vmem:[#allocation4 + $0x48] sm:$0xff]
        %v7152 = vld [vmem:[#allocation4 + $0x50] sm:$0xff]
        %v7153 = vld [vmem:[#allocation4 + $0x58] sm:$0xff]
        %v7154 = vld [vmem:[#allocation4 + $0x60] sm:$0xff]
        %v7155 = vld [vmem:[#allocation4 + $0x68] sm:$0xff]
        %s7156 = scalar_lea.vmem %s3, 1536
        %v7157 = vld [vmem:[%s7156] sm:$0xf]
        %v7158 = vld [vmem:[%s7156 + $0x4] sm:$0xf]
        %v7159 = vld [vmem:[%s7156 + $0x8] sm:$0xf]
        %v7160 = vld [vmem:[%s7156 + $0xc] sm:$0xf]
        %v7161 = vld [vmem:[%s7156 + $0x10] sm:$0xf]
        %v7162 = vld [vmem:[%s7156 + $0x14] sm:$0xf]
        %v7163 = vld [vmem:[%s7156 + $0x18] sm:$0xf]
        %v7164 = vld [vmem:[%s7156 + $0x1c] sm:$0xf]
        %v7165 = vld [vmem:[%s7156 + $0x20] sm:$0xf]
        %v7166 = vld [vmem:[%s7156 + $0x24] sm:$0xf]
        %v7167 = vld [vmem:[%s7156 + $0x28] sm:$0xf]
        %v7168 = vld [vmem:[%s7156 + $0x2c] sm:$0xf]
        %v7169 = vld [vmem:[%s7156 + $0x30] sm:$0xf]
        %v7170 = vld [vmem:[%s7156 + $0x34] sm:$0xf]
        %v7171 = vld [vmem:[%s7156 + $0x38] sm:$0xf]
        %v7172 = vld [vmem:[%s7156 + $0x3c] sm:$0xf]
        %v7189 = vunpack.c.l.b16 %v7157
        %v7190 = vunpack.c.l.b16 %v7158
        %v7191 = vunpack.c.l.b16 %v7159
        %v7192 = vunpack.c.l.b16 %v7160
        %v7193 = vunpack.c.l.b16 %v7161
        %v7194 = vunpack.c.l.b16 %v7162
        %v7195 = vunpack.c.l.b16 %v7163
        %v7196 = vunpack.c.l.b16 %v7164
        %v7197 = vunpack.c.l.b16 %v7165
        %v7198 = vunpack.c.l.b16 %v7166
        %v7199 = vunpack.c.l.b16 %v7167
        %v7200 = vunpack.c.l.b16 %v7168
        %v7201 = vunpack.c.l.b16 %v7169
        %v7202 = vunpack.c.l.b16 %v7170
        %v7203 = vunpack.c.l.b16 %v7171
        %v7204 = vunpack.c.l.b16 %v7172
        %v7205 = vpack.c.b16 %v7190, %v7189
        %v7206 = vpack.c.b16 %v7192, %v7191
        %v7207 = vpack.c.b16 %v7194, %v7193
        %v7208 = vpack.c.b16 %v7196, %v7195
        %v7209 = vpack.c.b16 %v7198, %v7197
        %v7210 = vpack.c.b16 %v7200, %v7199
        %v7211 = vpack.c.b16 %v7202, %v7201
        %v7212 = vpack.c.b16 %v7204, %v7203
        %7221 = vmatprep.subr.bf16.mxu0 0
        %7222 = vmatpush1.bf16.msra.mxu0 %v7205
        %7223 = vmatprep.subr.bf16.mxu0 0
        %7224 = vmatpush1.bf16.msra.mxu0 %v7206
        %7225 = vmatprep.subr.bf16.mxu0 0
        %7226 = vmatpush1.bf16.msra.mxu0 %v7207
        %7227 = vmatprep.subr.bf16.mxu0 0
        %7228 = vmatpush1.bf16.msra.mxu0 %v7208
        %7229 = vmatprep.subr.bf16.mxu0 0
        %7230 = vmatpush1.bf16.msra.mxu0 %v7209
        %7231 = vmatprep.subr.bf16.mxu0 0
        %7232 = vmatpush1.bf16.msra.mxu0 %v7210
        %7233 = vmatprep.subr.bf16.mxu0 0
        %7234 = vmatpush1.bf16.msra.mxu0 %v7211
        %7235 = vmatprep.subr.bf16.mxu0 0
        %7236 = vmatpush1.bf16.msra.mxu0 %v7212
        %7237 = vmatprep.subr.bf16.mxu0 0
        %7238 = vmatpush1.bf16.msra.mxu0 0
        %7239 = vmatprep.subr.bf16.mxu0 0
        %7240 = vmatpush1.bf16.msra.mxu0 0
        %7241 = vmatprep.subr.bf16.mxu0 0
        %7242 = vmatpush1.bf16.msra.mxu0 0
        %7243 = vmatprep.subr.bf16.mxu0 0
        %7244 = vmatpush1.bf16.msra.mxu0 0
        %7245 = vmatprep.subr.bf16.mxu0 0
        %7246 = vmatpush1.bf16.msra.mxu0 0
        %7247 = vmatprep.subr.bf16.mxu0 0
        %7248 = vmatpush1.bf16.msra.mxu0 0
        %7249 = vmatprep.subr.bf16.mxu0 0
        %7250 = vmatpush1.bf16.msra.mxu0 0
        %7251 = vmatprep.subr.bf16.mxu0 0
        %7252 = vmatpush1.bf16.msra.mxu0 0
        %7253 = vmatprep.mubr.bf16.mxu0 0
        %7254 = vmatmul.mubr.bf16.gmra.mrb[0].mxu0 %v7146
        %v7255 = vpop.f32.mrb[0].mxu0
        %v7256 = vadd.f32 0.0, %v7255
        %v7257 = vpop.f32.mrb[0].mxu0
        %v7258 = vpop.f32.mrb[0].mxu0
        %v7259 = vadd.f32 0.0, %v7258
        %v7260 = vpop.f32.mrb[0].mxu0
        %7261 = vmatprep.mubr.bf16.mxu0 0
        %7262 = vmatmul.mubr.bf16.gmra.mrb[0].mxu0 %v7147
        %v7263 = vpop.f32.mrb[0].mxu0
        %v7264 = vadd.f32 0.0, %v7263
        %v7265 = vpop.f32.mrb[0].mxu0
        %v7266 = vpop.f32.mrb[0].mxu0
        %v7267 = vadd.f32 0.0, %v7266
        %v7268 = vpop.f32.mrb[0].mxu0
        %7269 = vmatprep.mubr.bf16.mxu0 0
        %7270 = vmatmul.mubr.bf16.gmra.mrb[0].mxu0 %v7148
        %v7271 = vpop.f32.mrb[0].mxu0
        %v7272 = vadd.f32 0.0, %v7271
        %v7273 = vpop.f32.mrb[0].mxu0
        %v7274 = vpop.f32.mrb[0].mxu0
        %v7275 = vadd.f32 0.0, %v7274
        %v7276 = vpop.f32.mrb[0].mxu0
        %7277 = vmatprep.mubr.bf16.mxu0 0
        %7278 = vmatmul.mubr.bf16.gmra.mrb[0].mxu0 %v7149
        %v7279 = vpop.f32.mrb[0].mxu0
        %v7280 = vadd.f32 0.0, %v7279
        %v7281 = vpop.f32.mrb[0].mxu0
        %v7282 = vpop.f32.mrb[0].mxu0
        %v7283 = vadd.f32 0.0, %v7282
        %v7284 = vpop.f32.mrb[0].mxu0
        %7285 = vmatprep.mubr.bf16.mxu0 0
        %7286 = vmatmul.mubr.bf16.gmra.mrb[0].mxu0 %v7150
        %v7287 = vpop.f32.mrb[0].mxu0
        %v7288 = vadd.f32 0.0, %v7287
        %v7289 = vpop.f32.mrb[0].mxu0
        %v7290 = vpop.f32.mrb[0].mxu0
        %v7291 = vadd.f32 0.0, %v7290
        %v7292 = vpop.f32.mrb[0].mxu0
        %7293 = vmatprep.mubr.bf16.mxu0 0
        %7294 = vmatmul.mubr.bf16.gmra.mrb[0].mxu0 %v7151
        %v7295 = vpop.f32.mrb[0].mxu0
        %v7296 = vadd.f32 0.0, %v7295
        %v7297 = vpop.f32.mrb[0].mxu0
        %v7298 = vpop.f32.mrb[0].mxu0
        %v7299 = vadd.f32 0.0, %v7298
        %v7300 = vpop.f32.mrb[0].mxu0
        %7301 = vmatprep.mubr.bf16.mxu0 0
        %7302 = vmatmul.mubr.bf16.gmra.mrb[0].mxu0 %v7152
        %v7303 = vpop.f32.mrb[0].mxu0
        %v7304 = vadd.f32 0.0, %v7303
        %v7305 = vpop.f32.mrb[0].mxu0
        %v7306 = vpop.f32.mrb[0].mxu0
        %v7307 = vadd.f32 0.0, %v7306
        %v7308 = vpop.f32.mrb[0].mxu0
        %7309 = vmatprep.mubr.bf16.mxu0 0
        %7310 = vmatmul.mubr.bf16.gmra.mrb[0].mxu0 %v7153
        %v7311 = vpop.f32.mrb[0].mxu0
        %v7312 = vadd.f32 0.0, %v7311
        %v7313 = vpop.f32.mrb[0].mxu0
        %v7314 = vpop.f32.mrb[0].mxu0
        %v7315 = vadd.f32 0.0, %v7314
        %v7316 = vpop.f32.mrb[0].mxu0
        %7317 = vmatprep.mubr.bf16.mxu0 0
        %7318 = vmatmul.mubr.bf16.gmra.mrb[0].mxu0 %v7154
        %v7319 = vpop.f32.mrb[0].mxu0
        %v7320 = vadd.f32 0.0, %v7319
        %v7321 = vpop.f32.mrb[0].mxu0
        %v7322 = vpop.f32.mrb[0].mxu0
        %v7323 = vadd.f32 0.0, %v7322
        %v7324 = vpop.f32.mrb[0].mxu0
        %7325 = vmatprep.mubr.bf16.mxu0 0
        %7326 = vmatmul.mubr.bf16.gmra.mrb[0].mxu0 %v7155
        %v7327 = vpop.f32.mrb[0].mxu0
        %v7328 = vadd.f32 0.0, %v7327
        %v7329 = vpop.f32.mrb[0].mxu0
        %v7330 = vpop.f32.mrb[0].mxu0
        %v7331 = vadd.f32 0.0, %v7330
        %v7332 = vpop.f32.mrb[0].mxu0
        %7333 = vdwg.mxu0
        %v7334 = vadd.f32 %v7126, %v7256
        %v7335 = vadd.f32 %v7127, %v7259
        %v7336 = vadd.f32 %v7128, %v7264
        %v7337 = vadd.f32 %v7129, %v7267
        %v7338 = vadd.f32 %v7130, %v7272
        %v7339 = vadd.f32 %v7131, %v7275
        %v7340 = vadd.f32 %v7132, %v7280
        %v7341 = vadd.f32 %v7133, %v7283
        %v7342 = vadd.f32 %v7134, %v7288
        %v7343 = vadd.f32 %v7135, %v7291
        %v7344 = vadd.f32 %v7136, %v7296
        %v7345 = vadd.f32 %v7137, %v7299
        %v7346 = vadd.f32 %v7138, %v7304
        %v7347 = vadd.f32 %v7139, %v7307
        %v7348 = vadd.f32 %v7140, %v7312
        %v7349 = vadd.f32 %v7141, %v7315
        %v7350 = vadd.f32 %v7142, %v7320
        %v7351 = vadd.f32 %v7143, %v7323
        %v7352 = vadd.f32 %v7144, %v7328
        %v7353 = vadd.f32 %v7145, %v7331
        %v7355 = vlaneseq
        %v7356 = vshrl.u32 %v7355, 7
        %v7357 = vsub.s32 0, %v7356
        %v7358 = vrot.slane %v1923, %v7357
        %v7360 = vadd.f32 %v7334, %v7358
        %v7361 = vadd.f32 %v7335, %v7358
        %v7362 = vadd.f32 %v7336, %v7358
        %v7363 = vadd.f32 %v7337, %v7358
        %v7364 = vadd.f32 %v7338, %v7358
        %v7365 = vadd.f32 %v7339, %v7358
        %v7366 = vadd.f32 %v7340, %v7358
        %v7367 = vadd.f32 %v7341, %v7358
        %v7368 = vadd.f32 %v7342, %v7358
        %v7369 = vadd.f32 %v7343, %v7358
        %v7370 = vadd.f32 %v7344, %v7358
        %v7371 = vadd.f32 %v7345, %v7358
        %v7372 = vadd.f32 %v7346, %v7358
        %v7373 = vadd.f32 %v7347, %v7358
        %v7374 = vadd.f32 %v7348, %v7358
        %v7375 = vadd.f32 %v7349, %v7358
        %v7376 = vadd.f32 %v7350, %v7358
        %v7377 = vadd.f32 %v7351, %v7358
        %v7378 = vadd.f32 %v7352, %v7358
        %v7379 = vadd.f32 %v7353, %v7358
        %v7380 = vmax.f32 %v7360, 0.0
        %v7381 = vmax.f32 %v7361, 0.0
        %v7382 = vmax.f32 %v7362, 0.0
        %v7383 = vmax.f32 %v7363, 0.0
        %v7384 = vmax.f32 %v7364, 0.0
        %v7385 = vmax.f32 %v7365, 0.0
        %v7386 = vmax.f32 %v7366, 0.0
        %v7387 = vmax.f32 %v7367, 0.0
        %v7388 = vmax.f32 %v7368, 0.0
        %v7389 = vmax.f32 %v7369, 0.0
        %v7390 = vmax.f32 %v7370, 0.0
        %v7391 = vmax.f32 %v7371, 0.0
        %v7392 = vmax.f32 %v7372, 0.0
        %v7393 = vmax.f32 %v7373, 0.0
        %v7394 = vmax.f32 %v7374, 0.0
        %v7395 = vmax.f32 %v7375, 0.0
        %v7396 = vmax.f32 %v7376, 0.0
        %v7397 = vmax.f32 %v7377, 0.0
        %v7398 = vmax.f32 %v7378, 0.0
        %v7399 = vmax.f32 %v7379, 0.0
        %7400 = vst [vmem:[#allocation5] sm:$0xff] %v7380
        %7401 = vst [vmem:[#allocation5 + $0x8] sm:$0xff] %v7381
        %7402 = vst [vmem:[#allocation5 + $0x10] sm:$0xff] %v7382
        %7403 = vst [vmem:[#allocation5 + $0x18] sm:$0xff] %v7383
        %7404 = vst [vmem:[#allocation5 + $0x20] sm:$0xff] %v7384
        %7405 = vst [vmem:[#allocation5 + $0x28] sm:$0xff] %v7385
        %7406 = vst [vmem:[#allocation5 + $0x30] sm:$0xff] %v7386
        %7407 = vst [vmem:[#allocation5 + $0x38] sm:$0xff] %v7387
        %7408 = vst [vmem:[#allocation5 + $0x40] sm:$0xff] %v7388
        %7409 = vst [vmem:[#allocation5 + $0x48] sm:$0xff] %v7389
        %7410 = vst [vmem:[#allocation5 + $0x50] sm:$0xff] %v7390
        %7411 = vst [vmem:[#allocation5 + $0x58] sm:$0xff] %v7391
        %7412 = vst [vmem:[#allocation5 + $0x60] sm:$0xff] %v7392
        %7413 = vst [vmem:[#allocation5 + $0x68] sm:$0xff] %v7393
        %7414 = vst [vmem:[#allocation5 + $0x70] sm:$0xff] %v7394
        %7415 = vst [vmem:[#allocation5 + $0x78] sm:$0xff] %v7395
        %7416 = vst [vmem:[#allocation5 + $0x80] sm:$0xff] %v7396
        %7417 = vst [vmem:[#allocation5 + $0x88] sm:$0xff] %v7397
        %7418 = vst [vmem:[#allocation5 + $0x90] sm:$0xff] %v7398
        %7419 = vst [vmem:[#allocation5 + $0x98] sm:$0xff] %v7399
        %v7420 = vld [vmem:[#allocation5] sm:$0x1]
        %v7421 = vld [vmem:[#allocation5 + $0x1] sm:$0x1]
        %v7422 = vmax.f32 %v7420, %v7421
        %v7423 = vld [vmem:[#allocation5 + $0x10] sm:$0x1]
        %v7424 = vld [vmem:[#allocation5 + $0x11] sm:$0x1]
        %v7425 = vmax.f32 %v7423, %v7424
        %v7426 = vmax.f32 %v7422, %v7425
        %v7427 = vld [vmem:[#allocation5 + $0x2] sm:$0x1]
        %v7428 = vld [vmem:[#allocation5 + $0x3] sm:$0x1]
        %v7429 = vmax.f32 %v7427, %v7428
        %v7430 = vld [vmem:[#allocation5 + $0x12] sm:$0x1]
        %v7431 = vld [vmem:[#allocation5 + $0x13] sm:$0x1]
        %v7432 = vmax.f32 %v7430, %v7431
        %v7433 = vmax.f32 %v7429, %v7432
        %v7434 = vld [vmem:[#allocation5 + $0x4] sm:$0x1]
        %v7435 = vld [vmem:[#allocation5 + $0x5] sm:$0x1]
        %v7436 = vmax.f32 %v7434, %v7435
        %v7437 = vld [vmem:[#allocation5 + $0x14] sm:$0x1]
        %v7438 = vld [vmem:[#allocation5 + $0x15] sm:$0x1]
        %v7439 = vmax.f32 %v7437, %v7438
        %v7440 = vmax.f32 %v7436, %v7439
        %v7441 = vld [vmem:[#allocation5 + $0x6] sm:$0x1]
        %v7442 = vld [vmem:[#allocation5 + $0x7] sm:$0x1]
        %v7443 = vmax.f32 %v7441, %v7442
        %v7444 = vld [vmem:[#allocation5 + $0x16] sm:$0x1]
        %v7445 = vld [vmem:[#allocation5 + $0x17] sm:$0x1]
        %v7446 = vmax.f32 %v7444, %v7445
        %v7447 = vmax.f32 %v7443, %v7446
        %v7448 = vld [vmem:[#allocation5 + $0x8] sm:$0x1]
        %v7449 = vld [vmem:[#allocation5 + $0x9] sm:$0x1]
        %v7450 = vmax.f32 %v7448, %v7449
        %v7451 = vld [vmem:[#allocation5 + $0x18] sm:$0x1]
        %v7452 = vld [vmem:[#allocation5 + $0x19] sm:$0x1]
        %v7453 = vmax.f32 %v7451, %v7452
        %v7454 = vmax.f32 %v7450, %v7453
        %v7455 = vld [vmem:[#allocation5 + $0x20] sm:$0x1]
        %v7456 = vld [vmem:[#allocation5 + $0x21] sm:$0x1]
        %v7457 = vmax.f32 %v7455, %v7456
        %v7458 = vld [vmem:[#allocation5 + $0x30] sm:$0x1]
        %v7459 = vld [vmem:[#allocation5 + $0x31] sm:$0x1]
        %v7460 = vmax.f32 %v7458, %v7459
        %v7461 = vmax.f32 %v7457, %v7460
        %v7462 = vld [vmem:[#allocation5 + $0x22] sm:$0x1]
        %v7463 = vld [vmem:[#allocation5 + $0x23] sm:$0x1]
        %v7464 = vmax.f32 %v7462, %v7463
        %v7465 = vld [vmem:[#allocation5 + $0x32] sm:$0x1]
        %v7466 = vld [vmem:[#allocation5 + $0x33] sm:$0x1]
        %v7467 = vmax.f32 %v7465, %v7466
        %v7468 = vmax.f32 %v7464, %v7467
        %v7469 = vld [vmem:[#allocation5 + $0x24] sm:$0x1]
        %v7470 = vld [vmem:[#allocation5 + $0x25] sm:$0x1]
        %v7471 = vmax.f32 %v7469, %v7470
        %v7472 = vld [vmem:[#allocation5 + $0x34] sm:$0x1]
        %v7473 = vld [vmem:[#allocation5 + $0x35] sm:$0x1]
        %v7474 = vmax.f32 %v7472, %v7473
        %v7475 = vmax.f32 %v7471, %v7474
        %v7476 = vld [vmem:[#allocation5 + $0x26] sm:$0x1]
        %v7477 = vld [vmem:[#allocation5 + $0x27] sm:$0x1]
        %v7478 = vmax.f32 %v7476, %v7477
        %v7479 = vld [vmem:[#allocation5 + $0x36] sm:$0x1]
        %v7480 = vld [vmem:[#allocation5 + $0x37] sm:$0x1]
        %v7481 = vmax.f32 %v7479, %v7480
        %v7482 = vmax.f32 %v7478, %v7481
        %v7483 = vld [vmem:[#allocation5 + $0x28] sm:$0x1]
        %v7484 = vld [vmem:[#allocation5 + $0x29] sm:$0x1]
        %v7485 = vmax.f32 %v7483, %v7484
        %v7486 = vld [vmem:[#allocation5 + $0x38] sm:$0x1]
        %v7487 = vld [vmem:[#allocation5 + $0x39] sm:$0x1]
        %v7488 = vmax.f32 %v7486, %v7487
        %v7489 = vmax.f32 %v7485, %v7488
        %v7490 = vld [vmem:[#allocation5 + $0x40] sm:$0x1]
        %v7491 = vld [vmem:[#allocation5 + $0x41] sm:$0x1]
        %v7492 = vmax.f32 %v7490, %v7491
        %v7493 = vld [vmem:[#allocation5 + $0x50] sm:$0x1]
        %v7494 = vld [vmem:[#allocation5 + $0x51] sm:$0x1]
        %v7495 = vmax.f32 %v7493, %v7494
        %v7496 = vmax.f32 %v7492, %v7495
        %v7497 = vld [vmem:[#allocation5 + $0x42] sm:$0x1]
        %v7498 = vld [vmem:[#allocation5 + $0x43] sm:$0x1]
        %v7499 = vmax.f32 %v7497, %v7498
        %v7500 = vld [vmem:[#allocation5 + $0x52] sm:$0x1]
        %v7501 = vld [vmem:[#allocation5 + $0x53] sm:$0x1]
        %v7502 = vmax.f32 %v7500, %v7501
        %v7503 = vmax.f32 %v7499, %v7502
        %v7504 = vld [vmem:[#allocation5 + $0x44] sm:$0x1]
        %v7505 = vld [vmem:[#allocation5 + $0x45] sm:$0x1]
        %v7506 = vmax.f32 %v7504, %v7505
        %v7507 = vld [vmem:[#allocation5 + $0x54] sm:$0x1]
        %v7508 = vld [vmem:[#allocation5 + $0x55] sm:$0x1]
        %v7509 = vmax.f32 %v7507, %v7508
        %v7510 = vmax.f32 %v7506, %v7509
        %v7511 = vld [vmem:[#allocation5 + $0x46] sm:$0x1]
        %v7512 = vld [vmem:[#allocation5 + $0x47] sm:$0x1]
        %v7513 = vmax.f32 %v7511, %v7512
        %v7514 = vld [vmem:[#allocation5 + $0x56] sm:$0x1]
        %v7515 = vld [vmem:[#allocation5 + $0x57] sm:$0x1]
        %v7516 = vmax.f32 %v7514, %v7515
        %v7517 = vmax.f32 %v7513, %v7516
        %v7518 = vld [vmem:[#allocation5 + $0x48] sm:$0x1]
        %v7519 = vld [vmem:[#allocation5 + $0x49] sm:$0x1]
        %v7520 = vmax.f32 %v7518, %v7519
        %v7521 = vld [vmem:[#allocation5 + $0x58] sm:$0x1]
        %v7522 = vld [vmem:[#allocation5 + $0x59] sm:$0x1]
        %v7523 = vmax.f32 %v7521, %v7522
        %v7524 = vmax.f32 %v7520, %v7523
        %v7525 = vld [vmem:[#allocation5 + $0x60] sm:$0x1]
        %v7526 = vld [vmem:[#allocation5 + $0x61] sm:$0x1]
        %v7527 = vmax.f32 %v7525, %v7526
        %v7528 = vld [vmem:[#allocation5 + $0x70] sm:$0x1]
        %v7529 = vld [vmem:[#allocation5 + $0x71] sm:$0x1]
        %v7530 = vmax.f32 %v7528, %v7529
        %v7531 = vmax.f32 %v7527, %v7530
        %v7532 = vld [vmem:[#allocation5 + $0x62] sm:$0x1]
        %v7533 = vld [vmem:[#allocation5 + $0x63] sm:$0x1]
        %v7534 = vmax.f32 %v7532, %v7533
        %v7535 = vld [vmem:[#allocation5 + $0x72] sm:$0x1]
        %v7536 = vld [vmem:[#allocation5 + $0x73] sm:$0x1]
        %v7537 = vmax.f32 %v7535, %v7536
        %v7538 = vmax.f32 %v7534, %v7537
        %v7539 = vld [vmem:[#allocation5 + $0x64] sm:$0x1]
        %v7540 = vld [vmem:[#allocation5 + $0x65] sm:$0x1]
        %v7541 = vmax.f32 %v7539, %v7540
        %v7542 = vld [vmem:[#allocation5 + $0x74] sm:$0x1]
        %v7543 = vld [vmem:[#allocation5 + $0x75] sm:$0x1]
        %v7544 = vmax.f32 %v7542, %v7543
        %v7545 = vmax.f32 %v7541, %v7544
        %v7546 = vld [vmem:[#allocation5 + $0x66] sm:$0x1]
        %v7547 = vld [vmem:[#allocation5 + $0x67] sm:$0x1]
        %v7548 = vmax.f32 %v7546, %v7547
        %v7549 = vld [vmem:[#allocation5 + $0x76] sm:$0x1]
        %v7550 = vld [vmem:[#allocation5 + $0x77] sm:$0x1]
        %v7551 = vmax.f32 %v7549, %v7550
        %v7552 = vmax.f32 %v7548, %v7551
        %v7553 = vld [vmem:[#allocation5 + $0x68] sm:$0x1]
        %v7554 = vld [vmem:[#allocation5 + $0x69] sm:$0x1]
        %v7555 = vmax.f32 %v7553, %v7554
        %v7556 = vld [vmem:[#allocation5 + $0x78] sm:$0x1]
        %v7557 = vld [vmem:[#allocation5 + $0x79] sm:$0x1]
        %v7558 = vmax.f32 %v7556, %v7557
        %v7559 = vmax.f32 %v7555, %v7558
        %v7560 = vld [vmem:[#allocation5 + $0x80] sm:$0x1]
        %v7561 = vld [vmem:[#allocation5 + $0x81] sm:$0x1]
        %v7562 = vmax.f32 %v7560, %v7561
        %v7563 = vld [vmem:[#allocation5 + $0x90] sm:$0x1]
        %v7564 = vld [vmem:[#allocation5 + $0x91] sm:$0x1]
        %v7565 = vmax.f32 %v7563, %v7564
        %v7566 = vmax.f32 %v7562, %v7565
        %v7567 = vld [vmem:[#allocation5 + $0x82] sm:$0x1]
        %v7568 = vld [vmem:[#allocation5 + $0x83] sm:$0x1]
        %v7569 = vmax.f32 %v7567, %v7568
        %v7570 = vld [vmem:[#allocation5 + $0x92] sm:$0x1]
        %v7571 = vld [vmem:[#allocation5 + $0x93] sm:$0x1]
        %v7572 = vmax.f32 %v7570, %v7571
        %v7573 = vmax.f32 %v7569, %v7572
        %v7574 = vld [vmem:[#allocation5 + $0x84] sm:$0x1]
        %v7575 = vld [vmem:[#allocation5 + $0x85] sm:$0x1]
        %v7576 = vmax.f32 %v7574, %v7575
        %v7577 = vld [vmem:[#allocation5 + $0x94] sm:$0x1]
        %v7578 = vld [vmem:[#allocation5 + $0x95] sm:$0x1]
        %v7579 = vmax.f32 %v7577, %v7578
        %v7580 = vmax.f32 %v7576, %v7579
        %v7581 = vld [vmem:[#allocation5 + $0x86] sm:$0x1]
        %v7582 = vld [vmem:[#allocation5 + $0x87] sm:$0x1]
        %v7583 = vmax.f32 %v7581, %v7582
        %v7584 = vld [vmem:[#allocation5 + $0x96] sm:$0x1]
        %v7585 = vld [vmem:[#allocation5 + $0x97] sm:$0x1]
        %v7586 = vmax.f32 %v7584, %v7585
        %v7587 = vmax.f32 %v7583, %v7586
        %v7588 = vld [vmem:[#allocation5 + $0x88] sm:$0x1]
        %v7589 = vld [vmem:[#allocation5 + $0x89] sm:$0x1]
        %v7590 = vmax.f32 %v7588, %v7589
        %v7591 = vld [vmem:[#allocation5 + $0x98] sm:$0x1]
        %v7592 = vld [vmem:[#allocation5 + $0x99] sm:$0x1]
        %v7593 = vmax.f32 %v7591, %v7592
        %v7594 = vmax.f32 %v7590, %v7593
        %v7595 = vpack.c.bf16 %v7426, %v7426
        %v7596 = vpack.c.bf16 %v7433, %v7433
        %v7597 = vpack.c.bf16 %v7440, %v7440
        %v7598 = vpack.c.bf16 %v7447, %v7447
        %v7599 = vpack.c.bf16 %v7454, %v7454
        %v7600 = vpack.c.bf16 %v7461, %v7461
        %v7601 = vpack.c.bf16 %v7468, %v7468
        %v7602 = vpack.c.bf16 %v7475, %v7475
        %v7603 = vpack.c.bf16 %v7482, %v7482
        %v7604 = vpack.c.bf16 %v7489, %v7489
        %v7605 = vpack.c.bf16 %v7496, %v7496
        %v7606 = vpack.c.bf16 %v7503, %v7503
        %v7607 = vpack.c.bf16 %v7510, %v7510
        %v7608 = vpack.c.bf16 %v7517, %v7517
        %v7609 = vpack.c.bf16 %v7524, %v7524
        %v7610 = vpack.c.bf16 %v7531, %v7531
        %v7611 = vpack.c.bf16 %v7538, %v7538
        %v7612 = vpack.c.bf16 %v7545, %v7545
        %v7613 = vpack.c.bf16 %v7552, %v7552
        %v7614 = vpack.c.bf16 %v7559, %v7559
        %v7615 = vpack.c.bf16 %v7566, %v7566
        %v7616 = vpack.c.bf16 %v7573, %v7573
        %v7617 = vpack.c.bf16 %v7580, %v7580
        %v7618 = vpack.c.bf16 %v7587, %v7587
        %v7619 = vpack.c.bf16 %v7594, %v7594
        %v7620 = vld [vmem:[%s5] sm:$0xf]
        %v7621 = vld [vmem:[%s5 + $0x4] sm:$0xf]
        %v7622 = vld [vmem:[%s5 + $0x8] sm:$0xf]
        %v7623 = vld [vmem:[%s5 + $0xc] sm:$0xf]
        %v7624 = vld [vmem:[%s5 + $0x10] sm:$0xf]
        %v7625 = vld [vmem:[%s5 + $0x14] sm:$0xf]
        %v7626 = vld [vmem:[%s5 + $0x18] sm:$0xf]
        %v7627 = vld [vmem:[%s5 + $0x1c] sm:$0xf]
        %v7628 = vld [vmem:[%s5 + $0x20] sm:$0xf]
        %v7629 = vld [vmem:[%s5 + $0x24] sm:$0xf]
        %v7630 = vld [vmem:[%s5 + $0x28] sm:$0xf]
        %v7631 = vld [vmem:[%s5 + $0x2c] sm:$0xf]
        %v7632 = vld [vmem:[%s5 + $0x30] sm:$0xf]
        %v7633 = vld [vmem:[%s5 + $0x34] sm:$0xf]
        %v7634 = vld [vmem:[%s5 + $0x38] sm:$0xf]
        %v7635 = vld [vmem:[%s5 + $0x3c] sm:$0xf]
        %v7636 = vld [vmem:[%s5 + $0x40] sm:$0xf]
        %v7637 = vld [vmem:[%s5 + $0x44] sm:$0xf]
        %v7638 = vld [vmem:[%s5 + $0x48] sm:$0xf]
        %v7639 = vld [vmem:[%s5 + $0x4c] sm:$0xf]
        %v7640 = vld [vmem:[%s5 + $0x50] sm:$0xf]
        %v7641 = vld [vmem:[%s5 + $0x54] sm:$0xf]
        %v7642 = vld [vmem:[%s5 + $0x58] sm:$0xf]
        %v7643 = vld [vmem:[%s5 + $0x5c] sm:$0xf]
        %v7644 = vld [vmem:[%s5 + $0x60] sm:$0xf]
        %v7645 = vld [vmem:[%s5 + $0x64] sm:$0xf]
        %v7646 = vld [vmem:[%s5 + $0x68] sm:$0xf]
        %v7647 = vld [vmem:[%s5 + $0x6c] sm:$0xf]
        %v7648 = vld [vmem:[%s5 + $0x70] sm:$0xf]
        %v7649 = vld [vmem:[%s5 + $0x74] sm:$0xf]
        %v7650 = vld [vmem:[%s5 + $0x78] sm:$0xf]
        %v7651 = vld [vmem:[%s5 + $0x7c] sm:$0xf]
        %v7652 = vld [vmem:[%s5 + $0x80] sm:$0xf]
        %v7653 = vld [vmem:[%s5 + $0x84] sm:$0xf]
        %v7654 = vld [vmem:[%s5 + $0x88] sm:$0xf]
        %v7655 = vld [vmem:[%s5 + $0x8c] sm:$0xf]
        %v7656 = vld [vmem:[%s5 + $0x90] sm:$0xf]
        %v7657 = vld [vmem:[%s5 + $0x94] sm:$0xf]
        %v7658 = vld [vmem:[%s5 + $0x98] sm:$0xf]
        %v7659 = vld [vmem:[%s5 + $0x9c] sm:$0xf]
        %v7660 = vld [vmem:[%s5 + $0xa0] sm:$0xf]
        %v7661 = vld [vmem:[%s5 + $0xa4] sm:$0xf]
        %v7662 = vld [vmem:[%s5 + $0xa8] sm:$0xf]
        %v7663 = vld [vmem:[%s5 + $0xac] sm:$0xf]
        %v7664 = vld [vmem:[%s5 + $0xb0] sm:$0xf]
        %v7665 = vld [vmem:[%s5 + $0xb4] sm:$0xf]
        %v7666 = vld [vmem:[%s5 + $0xb8] sm:$0xf]
        %v7667 = vld [vmem:[%s5 + $0xbc] sm:$0xf]
        %v7668 = vld [vmem:[%s5 + $0xc0] sm:$0xf]
        %v7669 = vld [vmem:[%s5 + $0xc4] sm:$0xf]
        %v7670 = vld [vmem:[%s5 + $0xc8] sm:$0xf]
        %v7671 = vld [vmem:[%s5 + $0xcc] sm:$0xf]
        %v7672 = vld [vmem:[%s5 + $0xd0] sm:$0xf]
        %v7673 = vld [vmem:[%s5 + $0xd4] sm:$0xf]
        %v7674 = vld [vmem:[%s5 + $0xd8] sm:$0xf]
        %v7675 = vld [vmem:[%s5 + $0xdc] sm:$0xf]
        %v7676 = vld [vmem:[%s5 + $0xe0] sm:$0xf]
        %v7677 = vld [vmem:[%s5 + $0xe4] sm:$0xf]
        %v7678 = vld [vmem:[%s5 + $0xe8] sm:$0xf]
        %v7679 = vld [vmem:[%s5 + $0xec] sm:$0xf]
        %v7680 = vld [vmem:[%s5 + $0xf0] sm:$0xf]
        %v7681 = vld [vmem:[%s5 + $0xf4] sm:$0xf]
        %v7682 = vld [vmem:[%s5 + $0xf8] sm:$0xf]
        %v7683 = vld [vmem:[%s5 + $0xfc] sm:$0xf]
        %v7684 = vld [vmem:[%s5 + $0x100] sm:$0xf]
        %v7685 = vld [vmem:[%s5 + $0x104] sm:$0xf]
        %v7686 = vld [vmem:[%s5 + $0x108] sm:$0xf]
        %v7687 = vld [vmem:[%s5 + $0x10c] sm:$0xf]
        %v7688 = vld [vmem:[%s5 + $0x110] sm:$0xf]
        %v7689 = vld [vmem:[%s5 + $0x114] sm:$0xf]
        %v7690 = vld [vmem:[%s5 + $0x118] sm:$0xf]
        %v7691 = vld [vmem:[%s5 + $0x11c] sm:$0xf]
        %v7692 = vld [vmem:[%s5 + $0x120] sm:$0xf]
        %v7693 = vld [vmem:[%s5 + $0x124] sm:$0xf]
        %v7694 = vld [vmem:[%s5 + $0x128] sm:$0xf]
        %v7695 = vld [vmem:[%s5 + $0x12c] sm:$0xf]
        %v7696 = vld [vmem:[%s5 + $0x130] sm:$0xf]
        %v7697 = vld [vmem:[%s5 + $0x134] sm:$0xf]
        %v7698 = vld [vmem:[%s5 + $0x138] sm:$0xf]
        %v7699 = vld [vmem:[%s5 + $0x13c] sm:$0xf]
        %v7700 = vld [vmem:[%s5 + $0x140] sm:$0xf]
        %v7701 = vld [vmem:[%s5 + $0x144] sm:$0xf]
        %v7702 = vld [vmem:[%s5 + $0x148] sm:$0xf]
        %v7703 = vld [vmem:[%s5 + $0x14c] sm:$0xf]
        %v7704 = vld [vmem:[%s5 + $0x150] sm:$0xf]
        %v7705 = vld [vmem:[%s5 + $0x154] sm:$0xf]
        %v7706 = vld [vmem:[%s5 + $0x158] sm:$0xf]
        %v7707 = vld [vmem:[%s5 + $0x15c] sm:$0xf]
        %v7708 = vld [vmem:[%s5 + $0x160] sm:$0xf]
        %v7709 = vld [vmem:[%s5 + $0x164] sm:$0xf]
        %v7710 = vld [vmem:[%s5 + $0x168] sm:$0xf]
        %v7711 = vld [vmem:[%s5 + $0x16c] sm:$0xf]
        %v7712 = vld [vmem:[%s5 + $0x170] sm:$0xf]
        %v7713 = vld [vmem:[%s5 + $0x174] sm:$0xf]
        %v7714 = vld [vmem:[%s5 + $0x178] sm:$0xf]
        %v7715 = vld [vmem:[%s5 + $0x17c] sm:$0xf]
        %v7716 = vld [vmem:[%s5 + $0x180] sm:$0xf]
        %v7717 = vld [vmem:[%s5 + $0x184] sm:$0xf]
        %v7718 = vld [vmem:[%s5 + $0x188] sm:$0xf]
        %v7719 = vld [vmem:[%s5 + $0x18c] sm:$0xf]
        %v7720 = vld [vmem:[%s5 + $0x190] sm:$0xf]
        %v7721 = vld [vmem:[%s5 + $0x194] sm:$0xf]
        %v7722 = vld [vmem:[%s5 + $0x198] sm:$0xf]
        %v7723 = vld [vmem:[%s5 + $0x19c] sm:$0xf]
        %v7724 = vld [vmem:[%s5 + $0x1a0] sm:$0xf]
        %v7725 = vld [vmem:[%s5 + $0x1a4] sm:$0xf]
        %v7726 = vld [vmem:[%s5 + $0x1a8] sm:$0xf]
        %v7727 = vld [vmem:[%s5 + $0x1ac] sm:$0xf]
        %v7728 = vld [vmem:[%s5 + $0x1b0] sm:$0xf]
        %v7729 = vld [vmem:[%s5 + $0x1b4] sm:$0xf]
        %v7730 = vld [vmem:[%s5 + $0x1b8] sm:$0xf]
        %v7731 = vld [vmem:[%s5 + $0x1bc] sm:$0xf]
        %v7732 = vld [vmem:[%s5 + $0x1c0] sm:$0xf]
        %v7733 = vld [vmem:[%s5 + $0x1c4] sm:$0xf]
        %v7734 = vld [vmem:[%s5 + $0x1c8] sm:$0xf]
        %v7735 = vld [vmem:[%s5 + $0x1cc] sm:$0xf]
        %v7736 = vld [vmem:[%s5 + $0x1d0] sm:$0xf]
        %v7737 = vld [vmem:[%s5 + $0x1d4] sm:$0xf]
        %v7738 = vld [vmem:[%s5 + $0x1d8] sm:$0xf]
        %v7739 = vld [vmem:[%s5 + $0x1dc] sm:$0xf]
        %v7740 = vld [vmem:[%s5 + $0x1e0] sm:$0xf]
        %v7741 = vld [vmem:[%s5 + $0x1e4] sm:$0xf]
        %v7742 = vld [vmem:[%s5 + $0x1e8] sm:$0xf]
        %v7743 = vld [vmem:[%s5 + $0x1ec] sm:$0xf]
        %v7744 = vld [vmem:[%s5 + $0x1f0] sm:$0xf]
        %v7745 = vld [vmem:[%s5 + $0x1f4] sm:$0xf]
        %v7746 = vld [vmem:[%s5 + $0x1f8] sm:$0xf]
        %v7747 = vld [vmem:[%s5 + $0x1fc] sm:$0xf]
        %v7748 = vld [vmem:[%s5 + $0x200] sm:$0xf]
        %v7749 = vld [vmem:[%s5 + $0x204] sm:$0xf]
        %v7750 = vld [vmem:[%s5 + $0x208] sm:$0xf]
        %v7751 = vld [vmem:[%s5 + $0x20c] sm:$0xf]
        %v7752 = vld [vmem:[%s5 + $0x210] sm:$0xf]
        %v7753 = vld [vmem:[%s5 + $0x214] sm:$0xf]
        %v7754 = vld [vmem:[%s5 + $0x218] sm:$0xf]
        %v7755 = vld [vmem:[%s5 + $0x21c] sm:$0xf]
        %v7756 = vld [vmem:[%s5 + $0x220] sm:$0xf]
        %v7757 = vld [vmem:[%s5 + $0x224] sm:$0xf]
        %v7758 = vld [vmem:[%s5 + $0x228] sm:$0xf]
        %v7759 = vld [vmem:[%s5 + $0x22c] sm:$0xf]
        %v7760 = vld [vmem:[%s5 + $0x230] sm:$0xf]
        %v7761 = vld [vmem:[%s5 + $0x234] sm:$0xf]
        %v7762 = vld [vmem:[%s5 + $0x238] sm:$0xf]
        %v7763 = vld [vmem:[%s5 + $0x23c] sm:$0xf]
        %v7764 = vld [vmem:[%s5 + $0x240] sm:$0xf]
        %v7765 = vld [vmem:[%s5 + $0x244] sm:$0xf]
        %v7766 = vld [vmem:[%s5 + $0x248] sm:$0xf]
        %v7767 = vld [vmem:[%s5 + $0x24c] sm:$0xf]
        %v7768 = vld [vmem:[%s5 + $0x250] sm:$0xf]
        %v7769 = vld [vmem:[%s5 + $0x254] sm:$0xf]
        %v7770 = vld [vmem:[%s5 + $0x258] sm:$0xf]
        %v7771 = vld [vmem:[%s5 + $0x25c] sm:$0xf]
        %v7772 = vld [vmem:[%s5 + $0x260] sm:$0xf]
        %v7773 = vld [vmem:[%s5 + $0x264] sm:$0xf]
        %v7774 = vld [vmem:[%s5 + $0x268] sm:$0xf]
        %v7775 = vld [vmem:[%s5 + $0x26c] sm:$0xf]
        %v7776 = vld [vmem:[%s5 + $0x270] sm:$0xf]
        %v7777 = vld [vmem:[%s5 + $0x274] sm:$0xf]
        %v7778 = vld [vmem:[%s5 + $0x278] sm:$0xf]
        %v7779 = vld [vmem:[%s5 + $0x27c] sm:$0xf]
        %v7780 = vld [vmem:[%s5 + $0x280] sm:$0xf]
        %v7781 = vld [vmem:[%s5 + $0x284] sm:$0xf]
        %v7782 = vld [vmem:[%s5 + $0x288] sm:$0xf]
        %v7783 = vld [vmem:[%s5 + $0x28c] sm:$0xf]
        %v7784 = vld [vmem:[%s5 + $0x290] sm:$0xf]
        %v7785 = vld [vmem:[%s5 + $0x294] sm:$0xf]
        %v7786 = vld [vmem:[%s5 + $0x298] sm:$0xf]
        %v7787 = vld [vmem:[%s5 + $0x29c] sm:$0xf]
        %v7788 = vld [vmem:[%s5 + $0x2a0] sm:$0xf]
        %v7789 = vld [vmem:[%s5 + $0x2a4] sm:$0xf]
        %v7790 = vld [vmem:[%s5 + $0x2a8] sm:$0xf]
        %v7791 = vld [vmem:[%s5 + $0x2ac] sm:$0xf]
        %v7792 = vld [vmem:[%s5 + $0x2b0] sm:$0xf]
        %v7793 = vld [vmem:[%s5 + $0x2b4] sm:$0xf]
        %v7794 = vld [vmem:[%s5 + $0x2b8] sm:$0xf]
        %v7795 = vld [vmem:[%s5 + $0x2bc] sm:$0xf]
        %v7796 = vld [vmem:[%s5 + $0x2c0] sm:$0xf]
        %v7797 = vld [vmem:[%s5 + $0x2c4] sm:$0xf]
        %v7798 = vld [vmem:[%s5 + $0x2c8] sm:$0xf]
        %v7799 = vld [vmem:[%s5 + $0x2cc] sm:$0xf]
        %v7800 = vld [vmem:[%s5 + $0x2d0] sm:$0xf]
        %v7801 = vld [vmem:[%s5 + $0x2d4] sm:$0xf]
        %v7802 = vld [vmem:[%s5 + $0x2d8] sm:$0xf]
        %v7803 = vld [vmem:[%s5 + $0x2dc] sm:$0xf]
        %v7804 = vld [vmem:[%s5 + $0x2e0] sm:$0xf]
        %v7805 = vld [vmem:[%s5 + $0x2e4] sm:$0xf]
        %v7806 = vld [vmem:[%s5 + $0x2e8] sm:$0xf]
        %v7807 = vld [vmem:[%s5 + $0x2ec] sm:$0xf]
        %v7808 = vld [vmem:[%s5 + $0x2f0] sm:$0xf]
        %v7809 = vld [vmem:[%s5 + $0x2f4] sm:$0xf]
        %v7810 = vld [vmem:[%s5 + $0x2f8] sm:$0xf]
        %v7811 = vld [vmem:[%s5 + $0x2fc] sm:$0xf]
        %v7812 = vld [vmem:[%s5 + $0x300] sm:$0xf]
        %v7813 = vld [vmem:[%s5 + $0x304] sm:$0xf]
        %v7814 = vld [vmem:[%s5 + $0x308] sm:$0xf]
        %v7815 = vld [vmem:[%s5 + $0x30c] sm:$0xf]
        %v7816 = vld [vmem:[%s5 + $0x310] sm:$0xf]
        %v7817 = vld [vmem:[%s5 + $0x314] sm:$0xf]
        %v7818 = vld [vmem:[%s5 + $0x318] sm:$0xf]
        %v7819 = vld [vmem:[%s5 + $0x31c] sm:$0xf]
        %v7820 = vld [vmem:[%s5 + $0x320] sm:$0xf]
        %v7821 = vld [vmem:[%s5 + $0x324] sm:$0xf]
        %v7822 = vld [vmem:[%s5 + $0x328] sm:$0xf]
        %v7823 = vld [vmem:[%s5 + $0x32c] sm:$0xf]
        %v7824 = vld [vmem:[%s5 + $0x330] sm:$0xf]
        %v7825 = vld [vmem:[%s5 + $0x334] sm:$0xf]
        %v7826 = vld [vmem:[%s5 + $0x338] sm:$0xf]
        %v7827 = vld [vmem:[%s5 + $0x33c] sm:$0xf]
        %v7828 = vld [vmem:[%s5 + $0x340] sm:$0xf]
        %v7829 = vld [vmem:[%s5 + $0x344] sm:$0xf]
        %v7830 = vld [vmem:[%s5 + $0x348] sm:$0xf]
        %v7831 = vld [vmem:[%s5 + $0x34c] sm:$0xf]
        %v7832 = vld [vmem:[%s5 + $0x350] sm:$0xf]
        %v7833 = vld [vmem:[%s5 + $0x354] sm:$0xf]
        %v7834 = vld [vmem:[%s5 + $0x358] sm:$0xf]
        %v7835 = vld [vmem:[%s5 + $0x35c] sm:$0xf]
        %v7836 = vld [vmem:[%s5 + $0x360] sm:$0xf]
        %v7837 = vld [vmem:[%s5 + $0x364] sm:$0xf]
        %v7838 = vld [vmem:[%s5 + $0x368] sm:$0xf]
        %v7839 = vld [vmem:[%s5 + $0x36c] sm:$0xf]
        %v7840 = vld [vmem:[%s5 + $0x370] sm:$0xf]
        %v7841 = vld [vmem:[%s5 + $0x374] sm:$0xf]
        %v7842 = vld [vmem:[%s5 + $0x378] sm:$0xf]
        %v7843 = vld [vmem:[%s5 + $0x37c] sm:$0xf]
        %v7844 = vld [vmem:[%s5 + $0x380] sm:$0xf]
        %v7845 = vld [vmem:[%s5 + $0x384] sm:$0xf]
        %v7846 = vld [vmem:[%s5 + $0x388] sm:$0xf]
        %v7847 = vld [vmem:[%s5 + $0x38c] sm:$0xf]
        %v7848 = vld [vmem:[%s5 + $0x390] sm:$0xf]
        %v7849 = vld [vmem:[%s5 + $0x394] sm:$0xf]
        %v7850 = vld [vmem:[%s5 + $0x398] sm:$0xf]
        %v7851 = vld [vmem:[%s5 + $0x39c] sm:$0xf]
        %v7852 = vld [vmem:[%s5 + $0x3a0] sm:$0xf]
        %v7853 = vld [vmem:[%s5 + $0x3a4] sm:$0xf]
        %v7854 = vld [vmem:[%s5 + $0x3a8] sm:$0xf]
        %v7855 = vld [vmem:[%s5 + $0x3ac] sm:$0xf]
        %v7856 = vld [vmem:[%s5 + $0x3b0] sm:$0xf]
        %v7857 = vld [vmem:[%s5 + $0x3b4] sm:$0xf]
        %v7858 = vld [vmem:[%s5 + $0x3b8] sm:$0xf]
        %v7859 = vld [vmem:[%s5 + $0x3bc] sm:$0xf]
        %v7860 = vld [vmem:[%s5 + $0x3c0] sm:$0xf]
        %v7861 = vld [vmem:[%s5 + $0x3c4] sm:$0xf]
        %v7862 = vld [vmem:[%s5 + $0x3c8] sm:$0xf]
        %v7863 = vld [vmem:[%s5 + $0x3cc] sm:$0xf]
        %v7864 = vld [vmem:[%s5 + $0x3d0] sm:$0xf]
        %v7865 = vld [vmem:[%s5 + $0x3d4] sm:$0xf]
        %v7866 = vld [vmem:[%s5 + $0x3d8] sm:$0xf]
        %v7867 = vld [vmem:[%s5 + $0x3dc] sm:$0xf]
        %v7868 = vld [vmem:[%s5 + $0x3e0] sm:$0xf]
        %v7869 = vld [vmem:[%s5 + $0x3e4] sm:$0xf]
        %v7870 = vld [vmem:[%s5 + $0x3e8] sm:$0xf]
        %v7871 = vld [vmem:[%s5 + $0x3ec] sm:$0xf]
        %v7872 = vld [vmem:[%s5 + $0x3f0] sm:$0xf]
        %v7873 = vld [vmem:[%s5 + $0x3f4] sm:$0xf]
        %v7874 = vld [vmem:[%s5 + $0x3f8] sm:$0xf]
        %v7875 = vld [vmem:[%s5 + $0x3fc] sm:$0xf]
        %v7876 = vld [vmem:[%s5 + $0x400] sm:$0xf]
        %v7877 = vld [vmem:[%s5 + $0x404] sm:$0xf]
        %v7878 = vld [vmem:[%s5 + $0x408] sm:$0xf]
        %v7879 = vld [vmem:[%s5 + $0x40c] sm:$0xf]
        %v7880 = vld [vmem:[%s5 + $0x410] sm:$0xf]
        %v7881 = vld [vmem:[%s5 + $0x414] sm:$0xf]
        %v7882 = vld [vmem:[%s5 + $0x418] sm:$0xf]
        %v7883 = vld [vmem:[%s5 + $0x41c] sm:$0xf]
        %v7884 = vld [vmem:[%s5 + $0x420] sm:$0xf]
        %v7885 = vld [vmem:[%s5 + $0x424] sm:$0xf]
        %v7886 = vld [vmem:[%s5 + $0x428] sm:$0xf]
        %v7887 = vld [vmem:[%s5 + $0x42c] sm:$0xf]
        %v7888 = vld [vmem:[%s5 + $0x430] sm:$0xf]
        %v7889 = vld [vmem:[%s5 + $0x434] sm:$0xf]
        %v7890 = vld [vmem:[%s5 + $0x438] sm:$0xf]
        %v7891 = vld [vmem:[%s5 + $0x43c] sm:$0xf]
        %v7892 = vld [vmem:[%s5 + $0x440] sm:$0xf]
        %v7893 = vld [vmem:[%s5 + $0x444] sm:$0xf]
        %v7894 = vld [vmem:[%s5 + $0x448] sm:$0xf]
        %v7895 = vld [vmem:[%s5 + $0x44c] sm:$0xf]
        %v7896 = vld [vmem:[%s5 + $0x450] sm:$0xf]
        %v7897 = vld [vmem:[%s5 + $0x454] sm:$0xf]
        %v7898 = vld [vmem:[%s5 + $0x458] sm:$0xf]
        %v7899 = vld [vmem:[%s5 + $0x45c] sm:$0xf]
        %v7900 = vld [vmem:[%s5 + $0x460] sm:$0xf]
        %v7901 = vld [vmem:[%s5 + $0x464] sm:$0xf]
        %v7902 = vld [vmem:[%s5 + $0x468] sm:$0xf]
        %v7903 = vld [vmem:[%s5 + $0x46c] sm:$0xf]
        %v7904 = vld [vmem:[%s5 + $0x470] sm:$0xf]
        %v7905 = vld [vmem:[%s5 + $0x474] sm:$0xf]
        %v7906 = vld [vmem:[%s5 + $0x478] sm:$0xf]
        %v7907 = vld [vmem:[%s5 + $0x47c] sm:$0xf]
        %v7908 = vld [vmem:[%s5 + $0x480] sm:$0xf]
        %v7909 = vld [vmem:[%s5 + $0x484] sm:$0xf]
        %v7910 = vld [vmem:[%s5 + $0x488] sm:$0xf]
        %v7911 = vld [vmem:[%s5 + $0x48c] sm:$0xf]
        %v7912 = vld [vmem:[%s5 + $0x490] sm:$0xf]
        %v7913 = vld [vmem:[%s5 + $0x494] sm:$0xf]
        %v7914 = vld [vmem:[%s5 + $0x498] sm:$0xf]
        %v7915 = vld [vmem:[%s5 + $0x49c] sm:$0xf]
        %v7916 = vld [vmem:[%s5 + $0x4a0] sm:$0xf]
        %v7917 = vld [vmem:[%s5 + $0x4a4] sm:$0xf]
        %v7918 = vld [vmem:[%s5 + $0x4a8] sm:$0xf]
        %v7919 = vld [vmem:[%s5 + $0x4ac] sm:$0xf]
        %v7920 = vld [vmem:[%s5 + $0x4b0] sm:$0xf]
        %v7921 = vld [vmem:[%s5 + $0x4b4] sm:$0xf]
        %v7922 = vld [vmem:[%s5 + $0x4b8] sm:$0xf]
        %v7923 = vld [vmem:[%s5 + $0x4bc] sm:$0xf]
        %v7924 = vld [vmem:[%s5 + $0x4c0] sm:$0xf]
        %v7925 = vld [vmem:[%s5 + $0x4c4] sm:$0xf]
        %v7926 = vld [vmem:[%s5 + $0x4c8] sm:$0xf]
        %v7927 = vld [vmem:[%s5 + $0x4cc] sm:$0xf]
        %v7928 = vld [vmem:[%s5 + $0x4d0] sm:$0xf]
        %v7929 = vld [vmem:[%s5 + $0x4d4] sm:$0xf]
        %v7930 = vld [vmem:[%s5 + $0x4d8] sm:$0xf]
        %v7931 = vld [vmem:[%s5 + $0x4dc] sm:$0xf]
        %v7932 = vld [vmem:[%s5 + $0x4e0] sm:$0xf]
        %v7933 = vld [vmem:[%s5 + $0x4e4] sm:$0xf]
        %v7934 = vld [vmem:[%s5 + $0x4e8] sm:$0xf]
        %v7935 = vld [vmem:[%s5 + $0x4ec] sm:$0xf]
        %v7936 = vld [vmem:[%s5 + $0x4f0] sm:$0xf]
        %v7937 = vld [vmem:[%s5 + $0x4f4] sm:$0xf]
        %v7938 = vld [vmem:[%s5 + $0x4f8] sm:$0xf]
        %v7939 = vld [vmem:[%s5 + $0x4fc] sm:$0xf]
        %v7940 = vld [vmem:[%s5 + $0x500] sm:$0xf]
        %v7941 = vld [vmem:[%s5 + $0x504] sm:$0xf]
        %v7942 = vld [vmem:[%s5 + $0x508] sm:$0xf]
        %v7943 = vld [vmem:[%s5 + $0x50c] sm:$0xf]
        %v7944 = vld [vmem:[%s5 + $0x510] sm:$0xf]
        %v7945 = vld [vmem:[%s5 + $0x514] sm:$0xf]
        %v7946 = vld [vmem:[%s5 + $0x518] sm:$0xf]
        %v7947 = vld [vmem:[%s5 + $0x51c] sm:$0xf]
        %v7948 = vld [vmem:[%s5 + $0x520] sm:$0xf]
        %v7949 = vld [vmem:[%s5 + $0x524] sm:$0xf]
        %v7950 = vld [vmem:[%s5 + $0x528] sm:$0xf]
        %v7951 = vld [vmem:[%s5 + $0x52c] sm:$0xf]
        %v7952 = vld [vmem:[%s5 + $0x530] sm:$0xf]
        %v7953 = vld [vmem:[%s5 + $0x534] sm:$0xf]
        %v7954 = vld [vmem:[%s5 + $0x538] sm:$0xf]
        %v7955 = vld [vmem:[%s5 + $0x53c] sm:$0xf]
        %v7956 = vld [vmem:[%s5 + $0x540] sm:$0xf]
        %v7957 = vld [vmem:[%s5 + $0x544] sm:$0xf]
        %v7958 = vld [vmem:[%s5 + $0x548] sm:$0xf]
        %v7959 = vld [vmem:[%s5 + $0x54c] sm:$0xf]
        %v7960 = vld [vmem:[%s5 + $0x550] sm:$0xf]
        %v7961 = vld [vmem:[%s5 + $0x554] sm:$0xf]
        %v7962 = vld [vmem:[%s5 + $0x558] sm:$0xf]
        %v7963 = vld [vmem:[%s5 + $0x55c] sm:$0xf]
        %v7964 = vld [vmem:[%s5 + $0x560] sm:$0xf]
        %v7965 = vld [vmem:[%s5 + $0x564] sm:$0xf]
        %v7966 = vld [vmem:[%s5 + $0x568] sm:$0xf]
        %v7967 = vld [vmem:[%s5 + $0x56c] sm:$0xf]
        %v7968 = vld [vmem:[%s5 + $0x570] sm:$0xf]
        %v7969 = vld [vmem:[%s5 + $0x574] sm:$0xf]
        %v7970 = vld [vmem:[%s5 + $0x578] sm:$0xf]
        %v7971 = vld [vmem:[%s5 + $0x57c] sm:$0xf]
        %v7972 = vld [vmem:[%s5 + $0x580] sm:$0xf]
        %v7973 = vld [vmem:[%s5 + $0x584] sm:$0xf]
        %v7974 = vld [vmem:[%s5 + $0x588] sm:$0xf]
        %v7975 = vld [vmem:[%s5 + $0x58c] sm:$0xf]
        %v7976 = vld [vmem:[%s5 + $0x590] sm:$0xf]
        %v7977 = vld [vmem:[%s5 + $0x594] sm:$0xf]
        %v7978 = vld [vmem:[%s5 + $0x598] sm:$0xf]
        %v7979 = vld [vmem:[%s5 + $0x59c] sm:$0xf]
        %v7980 = vld [vmem:[%s5 + $0x5a0] sm:$0xf]
        %v7981 = vld [vmem:[%s5 + $0x5a4] sm:$0xf]
        %v7982 = vld [vmem:[%s5 + $0x5a8] sm:$0xf]
        %v7983 = vld [vmem:[%s5 + $0x5ac] sm:$0xf]
        %v7984 = vld [vmem:[%s5 + $0x5b0] sm:$0xf]
        %v7985 = vld [vmem:[%s5 + $0x5b4] sm:$0xf]
        %v7986 = vld [vmem:[%s5 + $0x5b8] sm:$0xf]
        %v7987 = vld [vmem:[%s5 + $0x5bc] sm:$0xf]
        %v7988 = vld [vmem:[%s5 + $0x5c0] sm:$0xf]
        %v7989 = vld [vmem:[%s5 + $0x5c4] sm:$0xf]
        %v7990 = vld [vmem:[%s5 + $0x5c8] sm:$0xf]
        %v7991 = vld [vmem:[%s5 + $0x5cc] sm:$0xf]
        %v7992 = vld [vmem:[%s5 + $0x5d0] sm:$0xf]
        %v7993 = vld [vmem:[%s5 + $0x5d4] sm:$0xf]
        %v7994 = vld [vmem:[%s5 + $0x5d8] sm:$0xf]
        %v7995 = vld [vmem:[%s5 + $0x5dc] sm:$0xf]
        %v7996 = vld [vmem:[%s5 + $0x5e0] sm:$0xf]
        %v7997 = vld [vmem:[%s5 + $0x5e4] sm:$0xf]
        %v7998 = vld [vmem:[%s5 + $0x5e8] sm:$0xf]
        %v7999 = vld [vmem:[%s5 + $0x5ec] sm:$0xf]
        %v8000 = vld [vmem:[%s5 + $0x5f0] sm:$0xf]
        %v8001 = vld [vmem:[%s5 + $0x5f4] sm:$0xf]
        %v8002 = vld [vmem:[%s5 + $0x5f8] sm:$0xf]
        %v8003 = vld [vmem:[%s5 + $0x5fc] sm:$0xf]
        %v8004 = vld [vmem:[%s5 + $0x600] sm:$0xf]
        %v8005 = vld [vmem:[%s5 + $0x604] sm:$0xf]
        %v8006 = vld [vmem:[%s5 + $0x608] sm:$0xf]
        %v8007 = vld [vmem:[%s5 + $0x60c] sm:$0xf]
        %v8008 = vld [vmem:[%s5 + $0x610] sm:$0xf]
        %v8009 = vld [vmem:[%s5 + $0x614] sm:$0xf]
        %v8010 = vld [vmem:[%s5 + $0x618] sm:$0xf]
        %v8011 = vld [vmem:[%s5 + $0x61c] sm:$0xf]
        %v8012 = vld [vmem:[%s5 + $0x620] sm:$0xf]
        %v8013 = vld [vmem:[%s5 + $0x624] sm:$0xf]
        %v8014 = vld [vmem:[%s5 + $0x628] sm:$0xf]
        %v8015 = vld [vmem:[%s5 + $0x62c] sm:$0xf]
        %v8016 = vld [vmem:[%s5 + $0x630] sm:$0xf]
        %v8017 = vld [vmem:[%s5 + $0x634] sm:$0xf]
        %v8018 = vld [vmem:[%s5 + $0x638] sm:$0xf]
        %v8019 = vld [vmem:[%s5 + $0x63c] sm:$0xf]
        %v8020 = vld [vmem:[%s6] sm:$0x1]
        %v8421 = vunpack.c.l.b16 %v7620
        %v8422 = vunpack.c.l.b16 %v7621
        %v8423 = vunpack.c.l.b16 %v7622
        %v8424 = vunpack.c.l.b16 %v7623
        %v8425 = vunpack.c.l.b16 %v7624
        %v8426 = vunpack.c.l.b16 %v7625
        %v8427 = vunpack.c.l.b16 %v7626
        %v8428 = vunpack.c.l.b16 %v7627
        %v8429 = vunpack.c.l.b16 %v7628
        %v8430 = vunpack.c.l.b16 %v7629
        %v8431 = vunpack.c.l.b16 %v7630
        %v8432 = vunpack.c.l.b16 %v7631
        %v8433 = vunpack.c.l.b16 %v7632
        %v8434 = vunpack.c.l.b16 %v7633
        %v8435 = vunpack.c.l.b16 %v7634
        %v8436 = vunpack.c.l.b16 %v7635
        %v8437 = vunpack.c.l.b16 %v7636
        %v8438 = vunpack.c.l.b16 %v7637
        %v8439 = vunpack.c.l.b16 %v7638
        %v8440 = vunpack.c.l.b16 %v7639
        %v8441 = vunpack.c.l.b16 %v7640
        %v8442 = vunpack.c.l.b16 %v7641
        %v8443 = vunpack.c.l.b16 %v7642
        %v8444 = vunpack.c.l.b16 %v7643
        %v8445 = vunpack.c.l.b16 %v7644
        %v8446 = vunpack.c.l.b16 %v7645
        %v8447 = vunpack.c.l.b16 %v7646
        %v8448 = vunpack.c.l.b16 %v7647
        %v8449 = vunpack.c.l.b16 %v7648
        %v8450 = vunpack.c.l.b16 %v7649
        %v8451 = vunpack.c.l.b16 %v7650
        %v8452 = vunpack.c.l.b16 %v7651
        %v8453 = vunpack.c.l.b16 %v7652
        %v8454 = vunpack.c.l.b16 %v7653
        %v8455 = vunpack.c.l.b16 %v7654
        %v8456 = vunpack.c.l.b16 %v7655
        %v8457 = vunpack.c.l.b16 %v7656
        %v8458 = vunpack.c.l.b16 %v7657
        %v8459 = vunpack.c.l.b16 %v7658
        %v8460 = vunpack.c.l.b16 %v7659
        %v8461 = vunpack.c.l.b16 %v7660
        %v8462 = vunpack.c.l.b16 %v7661
        %v8463 = vunpack.c.l.b16 %v7662
        %v8464 = vunpack.c.l.b16 %v7663
        %v8465 = vunpack.c.l.b16 %v7664
        %v8466 = vunpack.c.l.b16 %v7665
        %v8467 = vunpack.c.l.b16 %v7666
        %v8468 = vunpack.c.l.b16 %v7667
        %v8469 = vunpack.c.l.b16 %v7668
        %v8470 = vunpack.c.l.b16 %v7669
        %v8471 = vunpack.c.l.b16 %v7670
        %v8472 = vunpack.c.l.b16 %v7671
        %v8473 = vunpack.c.l.b16 %v7672
        %v8474 = vunpack.c.l.b16 %v7673
        %v8475 = vunpack.c.l.b16 %v7674
        %v8476 = vunpack.c.l.b16 %v7675
        %v8477 = vunpack.c.l.b16 %v7676
        %v8478 = vunpack.c.l.b16 %v7677
        %v8479 = vunpack.c.l.b16 %v7678
        %v8480 = vunpack.c.l.b16 %v7679
        %v8481 = vunpack.c.l.b16 %v7680
        %v8482 = vunpack.c.l.b16 %v7681
        %v8483 = vunpack.c.l.b16 %v7682
        %v8484 = vunpack.c.l.b16 %v7683
        %v8485 = vunpack.c.l.b16 %v7684
        %v8486 = vunpack.c.l.b16 %v7685
        %v8487 = vunpack.c.l.b16 %v7686
        %v8488 = vunpack.c.l.b16 %v7687
        %v8489 = vunpack.c.l.b16 %v7688
        %v8490 = vunpack.c.l.b16 %v7689
        %v8491 = vunpack.c.l.b16 %v7690
        %v8492 = vunpack.c.l.b16 %v7691
        %v8493 = vunpack.c.l.b16 %v7692
        %v8494 = vunpack.c.l.b16 %v7693
        %v8495 = vunpack.c.l.b16 %v7694
        %v8496 = vunpack.c.l.b16 %v7695
        %v8497 = vunpack.c.l.b16 %v7696
        %v8498 = vunpack.c.l.b16 %v7697
        %v8499 = vunpack.c.l.b16 %v7698
        %v8500 = vunpack.c.l.b16 %v7699
        %v8501 = vunpack.c.l.b16 %v7700
        %v8502 = vunpack.c.l.b16 %v7701
        %v8503 = vunpack.c.l.b16 %v7702
        %v8504 = vunpack.c.l.b16 %v7703
        %v8505 = vunpack.c.l.b16 %v7704
        %v8506 = vunpack.c.l.b16 %v7705
        %v8507 = vunpack.c.l.b16 %v7706
        %v8508 = vunpack.c.l.b16 %v7707
        %v8509 = vunpack.c.l.b16 %v7708
        %v8510 = vunpack.c.l.b16 %v7709
        %v8511 = vunpack.c.l.b16 %v7710
        %v8512 = vunpack.c.l.b16 %v7711
        %v8513 = vunpack.c.l.b16 %v7712
        %v8514 = vunpack.c.l.b16 %v7713
        %v8515 = vunpack.c.l.b16 %v7714
        %v8516 = vunpack.c.l.b16 %v7715
        %v8517 = vunpack.c.l.b16 %v7716
        %v8518 = vunpack.c.l.b16 %v7717
        %v8519 = vunpack.c.l.b16 %v7718
        %v8520 = vunpack.c.l.b16 %v7719
        %v8521 = vunpack.c.l.b16 %v7720
        %v8522 = vunpack.c.l.b16 %v7721
        %v8523 = vunpack.c.l.b16 %v7722
        %v8524 = vunpack.c.l.b16 %v7723
        %v8525 = vunpack.c.l.b16 %v7724
        %v8526 = vunpack.c.l.b16 %v7725
        %v8527 = vunpack.c.l.b16 %v7726
        %v8528 = vunpack.c.l.b16 %v7727
        %v8529 = vunpack.c.l.b16 %v7728
        %v8530 = vunpack.c.l.b16 %v7729
        %v8531 = vunpack.c.l.b16 %v7730
        %v8532 = vunpack.c.l.b16 %v7731
        %v8533 = vunpack.c.l.b16 %v7732
        %v8534 = vunpack.c.l.b16 %v7733
        %v8535 = vunpack.c.l.b16 %v7734
        %v8536 = vunpack.c.l.b16 %v7735
        %v8537 = vunpack.c.l.b16 %v7736
        %v8538 = vunpack.c.l.b16 %v7737
        %v8539 = vunpack.c.l.b16 %v7738
        %v8540 = vunpack.c.l.b16 %v7739
        %v8541 = vunpack.c.l.b16 %v7740
        %v8542 = vunpack.c.l.b16 %v7741
        %v8543 = vunpack.c.l.b16 %v7742
        %v8544 = vunpack.c.l.b16 %v7743
        %v8545 = vunpack.c.l.b16 %v7744
        %v8546 = vunpack.c.l.b16 %v7745
        %v8547 = vunpack.c.l.b16 %v7746
        %v8548 = vunpack.c.l.b16 %v7747
        %v8549 = vunpack.c.l.b16 %v7748
        %v8550 = vunpack.c.l.b16 %v7749
        %v8551 = vunpack.c.l.b16 %v7750
        %v8552 = vunpack.c.l.b16 %v7751
        %v8553 = vunpack.c.l.b16 %v7752
        %v8554 = vunpack.c.l.b16 %v7753
        %v8555 = vunpack.c.l.b16 %v7754
        %v8556 = vunpack.c.l.b16 %v7755
        %v8557 = vunpack.c.l.b16 %v7756
        %v8558 = vunpack.c.l.b16 %v7757
        %v8559 = vunpack.c.l.b16 %v7758
        %v8560 = vunpack.c.l.b16 %v7759
        %v8561 = vunpack.c.l.b16 %v7760
        %v8562 = vunpack.c.l.b16 %v7761
        %v8563 = vunpack.c.l.b16 %v7762
        %v8564 = vunpack.c.l.b16 %v7763
        %v8565 = vunpack.c.l.b16 %v7764
        %v8566 = vunpack.c.l.b16 %v7765
        %v8567 = vunpack.c.l.b16 %v7766
        %v8568 = vunpack.c.l.b16 %v7767
        %v8569 = vunpack.c.l.b16 %v7768
        %v8570 = vunpack.c.l.b16 %v7769
        %v8571 = vunpack.c.l.b16 %v7770
        %v8572 = vunpack.c.l.b16 %v7771
        %v8573 = vunpack.c.l.b16 %v7772
        %v8574 = vunpack.c.l.b16 %v7773
        %v8575 = vunpack.c.l.b16 %v7774
        %v8576 = vunpack.c.l.b16 %v7775
        %v8577 = vunpack.c.l.b16 %v7776
        %v8578 = vunpack.c.l.b16 %v7777
        %v8579 = vunpack.c.l.b16 %v7778
        %v8580 = vunpack.c.l.b16 %v7779
        %v8581 = vunpack.c.l.b16 %v7780
        %v8582 = vunpack.c.l.b16 %v7781
        %v8583 = vunpack.c.l.b16 %v7782
        %v8584 = vunpack.c.l.b16 %v7783
        %v8585 = vunpack.c.l.b16 %v7784
        %v8586 = vunpack.c.l.b16 %v7785
        %v8587 = vunpack.c.l.b16 %v7786
        %v8588 = vunpack.c.l.b16 %v7787
        %v8589 = vunpack.c.l.b16 %v7788
        %v8590 = vunpack.c.l.b16 %v7789
        %v8591 = vunpack.c.l.b16 %v7790
        %v8592 = vunpack.c.l.b16 %v7791
        %v8593 = vunpack.c.l.b16 %v7792
        %v8594 = vunpack.c.l.b16 %v7793
        %v8595 = vunpack.c.l.b16 %v7794
        %v8596 = vunpack.c.l.b16 %v7795
        %v8597 = vunpack.c.l.b16 %v7796
        %v8598 = vunpack.c.l.b16 %v7797
        %v8599 = vunpack.c.l.b16 %v7798
        %v8600 = vunpack.c.l.b16 %v7799
        %v8601 = vunpack.c.l.b16 %v7800
        %v8602 = vunpack.c.l.b16 %v7801
        %v8603 = vunpack.c.l.b16 %v7802
        %v8604 = vunpack.c.l.b16 %v7803
        %v8605 = vunpack.c.l.b16 %v7804
        %v8606 = vunpack.c.l.b16 %v7805
        %v8607 = vunpack.c.l.b16 %v7806
        %v8608 = vunpack.c.l.b16 %v7807
        %v8609 = vunpack.c.l.b16 %v7808
        %v8610 = vunpack.c.l.b16 %v7809
        %v8611 = vunpack.c.l.b16 %v7810
        %v8612 = vunpack.c.l.b16 %v7811
        %v8613 = vunpack.c.l.b16 %v7812
        %v8614 = vunpack.c.l.b16 %v7813
        %v8615 = vunpack.c.l.b16 %v7814
        %v8616 = vunpack.c.l.b16 %v7815
        %v8617 = vunpack.c.l.b16 %v7816
        %v8618 = vunpack.c.l.b16 %v7817
        %v8619 = vunpack.c.l.b16 %v7818
        %v8620 = vunpack.c.l.b16 %v7819
        %v8621 = vunpack.c.l.b16 %v7820
        %v8622 = vunpack.c.l.b16 %v7821
        %v8623 = vunpack.c.l.b16 %v7822
        %v8624 = vunpack.c.l.b16 %v7823
        %v8625 = vunpack.c.l.b16 %v7824
        %v8626 = vunpack.c.l.b16 %v7825
        %v8627 = vunpack.c.l.b16 %v7826
        %v8628 = vunpack.c.l.b16 %v7827
        %v8629 = vunpack.c.l.b16 %v7828
        %v8630 = vunpack.c.l.b16 %v7829
        %v8631 = vunpack.c.l.b16 %v7830
        %v8632 = vunpack.c.l.b16 %v7831
        %v8633 = vunpack.c.l.b16 %v7832
        %v8634 = vunpack.c.l.b16 %v7833
        %v8635 = vunpack.c.l.b16 %v7834
        %v8636 = vunpack.c.l.b16 %v7835
        %v8637 = vunpack.c.l.b16 %v7836
        %v8638 = vunpack.c.l.b16 %v7837
        %v8639 = vunpack.c.l.b16 %v7838
        %v8640 = vunpack.c.l.b16 %v7839
        %v8641 = vunpack.c.l.b16 %v7840
        %v8642 = vunpack.c.l.b16 %v7841
        %v8643 = vunpack.c.l.b16 %v7842
        %v8644 = vunpack.c.l.b16 %v7843
        %v8645 = vunpack.c.l.b16 %v7844
        %v8646 = vunpack.c.l.b16 %v7845
        %v8647 = vunpack.c.l.b16 %v7846
        %v8648 = vunpack.c.l.b16 %v7847
        %v8649 = vunpack.c.l.b16 %v7848
        %v8650 = vunpack.c.l.b16 %v7849
        %v8651 = vunpack.c.l.b16 %v7850
        %v8652 = vunpack.c.l.b16 %v7851
        %v8653 = vunpack.c.l.b16 %v7852
        %v8654 = vunpack.c.l.b16 %v7853
        %v8655 = vunpack.c.l.b16 %v7854
        %v8656 = vunpack.c.l.b16 %v7855
        %v8657 = vunpack.c.l.b16 %v7856
        %v8658 = vunpack.c.l.b16 %v7857
        %v8659 = vunpack.c.l.b16 %v7858
        %v8660 = vunpack.c.l.b16 %v7859
        %v8661 = vunpack.c.l.b16 %v7860
        %v8662 = vunpack.c.l.b16 %v7861
        %v8663 = vunpack.c.l.b16 %v7862
        %v8664 = vunpack.c.l.b16 %v7863
        %v8665 = vunpack.c.l.b16 %v7864
        %v8666 = vunpack.c.l.b16 %v7865
        %v8667 = vunpack.c.l.b16 %v7866
        %v8668 = vunpack.c.l.b16 %v7867
        %v8669 = vunpack.c.l.b16 %v7868
        %v8670 = vunpack.c.l.b16 %v7869
        %v8671 = vunpack.c.l.b16 %v7870
        %v8672 = vunpack.c.l.b16 %v7871
        %v8673 = vunpack.c.l.b16 %v7872
        %v8674 = vunpack.c.l.b16 %v7873
        %v8675 = vunpack.c.l.b16 %v7874
        %v8676 = vunpack.c.l.b16 %v7875
        %v8677 = vunpack.c.l.b16 %v7876
        %v8678 = vunpack.c.l.b16 %v7877
        %v8679 = vunpack.c.l.b16 %v7878
        %v8680 = vunpack.c.l.b16 %v7879
        %v8681 = vunpack.c.l.b16 %v7880
        %v8682 = vunpack.c.l.b16 %v7881
        %v8683 = vunpack.c.l.b16 %v7882
        %v8684 = vunpack.c.l.b16 %v7883
        %v8685 = vunpack.c.l.b16 %v7884
        %v8686 = vunpack.c.l.b16 %v7885
        %v8687 = vunpack.c.l.b16 %v7886
        %v8688 = vunpack.c.l.b16 %v7887
        %v8689 = vunpack.c.l.b16 %v7888
        %v8690 = vunpack.c.l.b16 %v7889
        %v8691 = vunpack.c.l.b16 %v7890
        %v8692 = vunpack.c.l.b16 %v7891
        %v8693 = vunpack.c.l.b16 %v7892
        %v8694 = vunpack.c.l.b16 %v7893
        %v8695 = vunpack.c.l.b16 %v7894
        %v8696 = vunpack.c.l.b16 %v7895
        %v8697 = vunpack.c.l.b16 %v7896
        %v8698 = vunpack.c.l.b16 %v7897
        %v8699 = vunpack.c.l.b16 %v7898
        %v8700 = vunpack.c.l.b16 %v7899
        %v8701 = vunpack.c.l.b16 %v7900
        %v8702 = vunpack.c.l.b16 %v7901
        %v8703 = vunpack.c.l.b16 %v7902
        %v8704 = vunpack.c.l.b16 %v7903
        %v8705 = vunpack.c.l.b16 %v7904
        %v8706 = vunpack.c.l.b16 %v7905
        %v8707 = vunpack.c.l.b16 %v7906
        %v8708 = vunpack.c.l.b16 %v7907
        %v8709 = vunpack.c.l.b16 %v7908
        %v8710 = vunpack.c.l.b16 %v7909
        %v8711 = vunpack.c.l.b16 %v7910
        %v8712 = vunpack.c.l.b16 %v7911
        %v8713 = vunpack.c.l.b16 %v7912
        %v8714 = vunpack.c.l.b16 %v7913
        %v8715 = vunpack.c.l.b16 %v7914
        %v8716 = vunpack.c.l.b16 %v7915
        %v8717 = vunpack.c.l.b16 %v7916
        %v8718 = vunpack.c.l.b16 %v7917
        %v8719 = vunpack.c.l.b16 %v7918
        %v8720 = vunpack.c.l.b16 %v7919
        %v8721 = vunpack.c.l.b16 %v7920
        %v8722 = vunpack.c.l.b16 %v7921
        %v8723 = vunpack.c.l.b16 %v7922
        %v8724 = vunpack.c.l.b16 %v7923
        %v8725 = vunpack.c.l.b16 %v7924
        %v8726 = vunpack.c.l.b16 %v7925
        %v8727 = vunpack.c.l.b16 %v7926
        %v8728 = vunpack.c.l.b16 %v7927
        %v8729 = vunpack.c.l.b16 %v7928
        %v8730 = vunpack.c.l.b16 %v7929
        %v8731 = vunpack.c.l.b16 %v7930
        %v8732 = vunpack.c.l.b16 %v7931
        %v8733 = vunpack.c.l.b16 %v7932
        %v8734 = vunpack.c.l.b16 %v7933
        %v8735 = vunpack.c.l.b16 %v7934
        %v8736 = vunpack.c.l.b16 %v7935
        %v8737 = vunpack.c.l.b16 %v7936
        %v8738 = vunpack.c.l.b16 %v7937
        %v8739 = vunpack.c.l.b16 %v7938
        %v8740 = vunpack.c.l.b16 %v7939
        %v8741 = vunpack.c.l.b16 %v7940
        %v8742 = vunpack.c.l.b16 %v7941
        %v8743 = vunpack.c.l.b16 %v7942
        %v8744 = vunpack.c.l.b16 %v7943
        %v8745 = vunpack.c.l.b16 %v7944
        %v8746 = vunpack.c.l.b16 %v7945
        %v8747 = vunpack.c.l.b16 %v7946
        %v8748 = vunpack.c.l.b16 %v7947
        %v8749 = vunpack.c.l.b16 %v7948
        %v8750 = vunpack.c.l.b16 %v7949
        %v8751 = vunpack.c.l.b16 %v7950
        %v8752 = vunpack.c.l.b16 %v7951
        %v8753 = vunpack.c.l.b16 %v7952
        %v8754 = vunpack.c.l.b16 %v7953
        %v8755 = vunpack.c.l.b16 %v7954
        %v8756 = vunpack.c.l.b16 %v7955
        %v8757 = vunpack.c.l.b16 %v7956
        %v8758 = vunpack.c.l.b16 %v7957
        %v8759 = vunpack.c.l.b16 %v7958
        %v8760 = vunpack.c.l.b16 %v7959
        %v8761 = vunpack.c.l.b16 %v7960
        %v8762 = vunpack.c.l.b16 %v7961
        %v8763 = vunpack.c.l.b16 %v7962
        %v8764 = vunpack.c.l.b16 %v7963
        %v8765 = vunpack.c.l.b16 %v7964
        %v8766 = vunpack.c.l.b16 %v7965
        %v8767 = vunpack.c.l.b16 %v7966
        %v8768 = vunpack.c.l.b16 %v7967
        %v8769 = vunpack.c.l.b16 %v7968
        %v8770 = vunpack.c.l.b16 %v7969
        %v8771 = vunpack.c.l.b16 %v7970
        %v8772 = vunpack.c.l.b16 %v7971
        %v8773 = vunpack.c.l.b16 %v7972
        %v8774 = vunpack.c.l.b16 %v7973
        %v8775 = vunpack.c.l.b16 %v7974
        %v8776 = vunpack.c.l.b16 %v7975
        %v8777 = vunpack.c.l.b16 %v7976
        %v8778 = vunpack.c.l.b16 %v7977
        %v8779 = vunpack.c.l.b16 %v7978
        %v8780 = vunpack.c.l.b16 %v7979
        %v8781 = vunpack.c.l.b16 %v7980
        %v8782 = vunpack.c.l.b16 %v7981
        %v8783 = vunpack.c.l.b16 %v7982
        %v8784 = vunpack.c.l.b16 %v7983
        %v8785 = vunpack.c.l.b16 %v7984
        %v8786 = vunpack.c.l.b16 %v7985
        %v8787 = vunpack.c.l.b16 %v7986
        %v8788 = vunpack.c.l.b16 %v7987
        %v8789 = vunpack.c.l.b16 %v7988
        %v8790 = vunpack.c.l.b16 %v7989
        %v8791 = vunpack.c.l.b16 %v7990
        %v8792 = vunpack.c.l.b16 %v7991
        %v8793 = vunpack.c.l.b16 %v7992
        %v8794 = vunpack.c.l.b16 %v7993
        %v8795 = vunpack.c.l.b16 %v7994
        %v8796 = vunpack.c.l.b16 %v7995
        %v8797 = vunpack.c.l.b16 %v7996
        %v8798 = vunpack.c.l.b16 %v7997
        %v8799 = vunpack.c.l.b16 %v7998
        %v8800 = vunpack.c.l.b16 %v7999
        %v8801 = vunpack.c.l.b16 %v8000
        %v8802 = vunpack.c.l.b16 %v8001
        %v8803 = vunpack.c.l.b16 %v8002
        %v8804 = vunpack.c.l.b16 %v8003
        %v8805 = vunpack.c.l.b16 %v8004
        %v8806 = vunpack.c.l.b16 %v8005
        %v8807 = vunpack.c.l.b16 %v8006
        %v8808 = vunpack.c.l.b16 %v8007
        %v8809 = vunpack.c.l.b16 %v8008
        %v8810 = vunpack.c.l.b16 %v8009
        %v8811 = vunpack.c.l.b16 %v8010
        %v8812 = vunpack.c.l.b16 %v8011
        %v8813 = vunpack.c.l.b16 %v8012
        %v8814 = vunpack.c.l.b16 %v8013
        %v8815 = vunpack.c.l.b16 %v8014
        %v8816 = vunpack.c.l.b16 %v8015
        %v8817 = vunpack.c.l.b16 %v8016
        %v8818 = vunpack.c.l.b16 %v8017
        %v8819 = vunpack.c.l.b16 %v8018
        %v8820 = vunpack.c.l.b16 %v8019
        %v8821 = vpack.c.b16 %v8422, %v8421
        %v8822 = vpack.c.b16 %v8424, %v8423
        %v8823 = vpack.c.b16 %v8426, %v8425
        %v8824 = vpack.c.b16 %v8428, %v8427
        %v8825 = vpack.c.b16 %v8430, %v8429
        %v8826 = vpack.c.b16 %v8432, %v8431
        %v8827 = vpack.c.b16 %v8434, %v8433
        %v8828 = vpack.c.b16 %v8436, %v8435
        %v8829 = vpack.c.b16 %v8438, %v8437
        %v8830 = vpack.c.b16 %v8440, %v8439
        %v8831 = vpack.c.b16 %v8442, %v8441
        %v8832 = vpack.c.b16 %v8444, %v8443
        %v8833 = vpack.c.b16 %v8446, %v8445
        %v8834 = vpack.c.b16 %v8448, %v8447
        %v8835 = vpack.c.b16 %v8450, %v8449
        %v8836 = vpack.c.b16 %v8452, %v8451
        %v8837 = vpack.c.b16 %v8454, %v8453
        %v8838 = vpack.c.b16 %v8456, %v8455
        %v8839 = vpack.c.b16 %v8458, %v8457
        %v8840 = vpack.c.b16 %v8460, %v8459
        %v8841 = vpack.c.b16 %v8462, %v8461
        %v8842 = vpack.c.b16 %v8464, %v8463
        %v8843 = vpack.c.b16 %v8466, %v8465
        %v8844 = vpack.c.b16 %v8468, %v8467
        %v8845 = vpack.c.b16 %v8470, %v8469
        %v8846 = vpack.c.b16 %v8472, %v8471
        %v8847 = vpack.c.b16 %v8474, %v8473
        %v8848 = vpack.c.b16 %v8476, %v8475
        %v8849 = vpack.c.b16 %v8478, %v8477
        %v8850 = vpack.c.b16 %v8480, %v8479
        %v8851 = vpack.c.b16 %v8482, %v8481
        %v8852 = vpack.c.b16 %v8484, %v8483
        %v8853 = vpack.c.b16 %v8486, %v8485
        %v8854 = vpack.c.b16 %v8488, %v8487
        %v8855 = vpack.c.b16 %v8490, %v8489
        %v8856 = vpack.c.b16 %v8492, %v8491
        %v8857 = vpack.c.b16 %v8494, %v8493
        %v8858 = vpack.c.b16 %v8496, %v8495
        %v8859 = vpack.c.b16 %v8498, %v8497
        %v8860 = vpack.c.b16 %v8500, %v8499
        %v8861 = vpack.c.b16 %v8502, %v8501
        %v8862 = vpack.c.b16 %v8504, %v8503
        %v8863 = vpack.c.b16 %v8506, %v8505
        %v8864 = vpack.c.b16 %v8508, %v8507
        %v8865 = vpack.c.b16 %v8510, %v8509
        %v8866 = vpack.c.b16 %v8512, %v8511
        %v8867 = vpack.c.b16 %v8514, %v8513
        %v8868 = vpack.c.b16 %v8516, %v8515
        %v8869 = vpack.c.b16 %v8518, %v8517
        %v8870 = vpack.c.b16 %v8520, %v8519
        %v8871 = vpack.c.b16 %v8522, %v8521
        %v8872 = vpack.c.b16 %v8524, %v8523
        %v8873 = vpack.c.b16 %v8526, %v8525
        %v8874 = vpack.c.b16 %v8528, %v8527
        %v8875 = vpack.c.b16 %v8530, %v8529
        %v8876 = vpack.c.b16 %v8532, %v8531
        %v8877 = vpack.c.b16 %v8534, %v8533
        %v8878 = vpack.c.b16 %v8536, %v8535
        %v8879 = vpack.c.b16 %v8538, %v8537
        %v8880 = vpack.c.b16 %v8540, %v8539
        %v8881 = vpack.c.b16 %v8542, %v8541
        %v8882 = vpack.c.b16 %v8544, %v8543
        %v8883 = vpack.c.b16 %v8546, %v8545
        %v8884 = vpack.c.b16 %v8548, %v8547
        %v8885 = vpack.c.b16 %v8550, %v8549
        %v8886 = vpack.c.b16 %v8552, %v8551
        %v8887 = vpack.c.b16 %v8554, %v8553
        %v8888 = vpack.c.b16 %v8556, %v8555
        %v8889 = vpack.c.b16 %v8558, %v8557
        %v8890 = vpack.c.b16 %v8560, %v8559
        %v8891 = vpack.c.b16 %v8562, %v8561
        %v8892 = vpack.c.b16 %v8564, %v8563
        %v8893 = vpack.c.b16 %v8566, %v8565
        %v8894 = vpack.c.b16 %v8568, %v8567
        %v8895 = vpack.c.b16 %v8570, %v8569
        %v8896 = vpack.c.b16 %v8572, %v8571
        %v8897 = vpack.c.b16 %v8574, %v8573
        %v8898 = vpack.c.b16 %v8576, %v8575
        %v8899 = vpack.c.b16 %v8578, %v8577
        %v8900 = vpack.c.b16 %v8580, %v8579
        %v8901 = vpack.c.b16 %v8582, %v8581
        %v8902 = vpack.c.b16 %v8584, %v8583
        %v8903 = vpack.c.b16 %v8586, %v8585
        %v8904 = vpack.c.b16 %v8588, %v8587
        %v8905 = vpack.c.b16 %v8590, %v8589
        %v8906 = vpack.c.b16 %v8592, %v8591
        %v8907 = vpack.c.b16 %v8594, %v8593
        %v8908 = vpack.c.b16 %v8596, %v8595
        %v8909 = vpack.c.b16 %v8598, %v8597
        %v8910 = vpack.c.b16 %v8600, %v8599
        %v8911 = vpack.c.b16 %v8602, %v8601
        %v8912 = vpack.c.b16 %v8604, %v8603
        %v8913 = vpack.c.b16 %v8606, %v8605
        %v8914 = vpack.c.b16 %v8608, %v8607
        %v8915 = vpack.c.b16 %v8610, %v8609
        %v8916 = vpack.c.b16 %v8612, %v8611
        %v8917 = vpack.c.b16 %v8614, %v8613
        %v8918 = vpack.c.b16 %v8616, %v8615
        %v8919 = vpack.c.b16 %v8618, %v8617
        %v8920 = vpack.c.b16 %v8620, %v8619
        %v8921 = vpack.c.b16 %v8622, %v8621
        %v8922 = vpack.c.b16 %v8624, %v8623
        %v8923 = vpack.c.b16 %v8626, %v8625
        %v8924 = vpack.c.b16 %v8628, %v8627
        %v8925 = vpack.c.b16 %v8630, %v8629
        %v8926 = vpack.c.b16 %v8632, %v8631
        %v8927 = vpack.c.b16 %v8634, %v8633
        %v8928 = vpack.c.b16 %v8636, %v8635
        %v8929 = vpack.c.b16 %v8638, %v8637
        %v8930 = vpack.c.b16 %v8640, %v8639
        %v8931 = vpack.c.b16 %v8642, %v8641
        %v8932 = vpack.c.b16 %v8644, %v8643
        %v8933 = vpack.c.b16 %v8646, %v8645
        %v8934 = vpack.c.b16 %v8648, %v8647
        %v8935 = vpack.c.b16 %v8650, %v8649
        %v8936 = vpack.c.b16 %v8652, %v8651
        %v8937 = vpack.c.b16 %v8654, %v8653
        %v8938 = vpack.c.b16 %v8656, %v8655
        %v8939 = vpack.c.b16 %v8658, %v8657
        %v8940 = vpack.c.b16 %v8660, %v8659
        %v8941 = vpack.c.b16 %v8662, %v8661
        %v8942 = vpack.c.b16 %v8664, %v8663
        %v8943 = vpack.c.b16 %v8666, %v8665
        %v8944 = vpack.c.b16 %v8668, %v8667
        %v8945 = vpack.c.b16 %v8670, %v8669
        %v8946 = vpack.c.b16 %v8672, %v8671
        %v8947 = vpack.c.b16 %v8674, %v8673
        %v8948 = vpack.c.b16 %v8676, %v8675
        %v8949 = vpack.c.b16 %v8678, %v8677
        %v8950 = vpack.c.b16 %v8680, %v8679
        %v8951 = vpack.c.b16 %v8682, %v8681
        %v8952 = vpack.c.b16 %v8684, %v8683
        %v8953 = vpack.c.b16 %v8686, %v8685
        %v8954 = vpack.c.b16 %v8688, %v8687
        %v8955 = vpack.c.b16 %v8690, %v8689
        %v8956 = vpack.c.b16 %v8692, %v8691
        %v8957 = vpack.c.b16 %v8694, %v8693
        %v8958 = vpack.c.b16 %v8696, %v8695
        %v8959 = vpack.c.b16 %v8698, %v8697
        %v8960 = vpack.c.b16 %v8700, %v8699
        %v8961 = vpack.c.b16 %v8702, %v8701
        %v8962 = vpack.c.b16 %v8704, %v8703
        %v8963 = vpack.c.b16 %v8706, %v8705
        %v8964 = vpack.c.b16 %v8708, %v8707
        %v8965 = vpack.c.b16 %v8710, %v8709
        %v8966 = vpack.c.b16 %v8712, %v8711
        %v8967 = vpack.c.b16 %v8714, %v8713
        %v8968 = vpack.c.b16 %v8716, %v8715
        %v8969 = vpack.c.b16 %v8718, %v8717
        %v8970 = vpack.c.b16 %v8720, %v8719
        %v8971 = vpack.c.b16 %v8722, %v8721
        %v8972 = vpack.c.b16 %v8724, %v8723
        %v8973 = vpack.c.b16 %v8726, %v8725
        %v8974 = vpack.c.b16 %v8728, %v8727
        %v8975 = vpack.c.b16 %v8730, %v8729
        %v8976 = vpack.c.b16 %v8732, %v8731
        %v8977 = vpack.c.b16 %v8734, %v8733
        %v8978 = vpack.c.b16 %v8736, %v8735
        %v8979 = vpack.c.b16 %v8738, %v8737
        %v8980 = vpack.c.b16 %v8740, %v8739
        %v8981 = vpack.c.b16 %v8742, %v8741
        %v8982 = vpack.c.b16 %v8744, %v8743
        %v8983 = vpack.c.b16 %v8746, %v8745
        %v8984 = vpack.c.b16 %v8748, %v8747
        %v8985 = vpack.c.b16 %v8750, %v8749
        %v8986 = vpack.c.b16 %v8752, %v8751
        %v8987 = vpack.c.b16 %v8754, %v8753
        %v8988 = vpack.c.b16 %v8756, %v8755
        %v8989 = vpack.c.b16 %v8758, %v8757
        %v8990 = vpack.c.b16 %v8760, %v8759
        %v8991 = vpack.c.b16 %v8762, %v8761
        %v8992 = vpack.c.b16 %v8764, %v8763
        %v8993 = vpack.c.b16 %v8766, %v8765
        %v8994 = vpack.c.b16 %v8768, %v8767
        %v8995 = vpack.c.b16 %v8770, %v8769
        %v8996 = vpack.c.b16 %v8772, %v8771
        %v8997 = vpack.c.b16 %v8774, %v8773
        %v8998 = vpack.c.b16 %v8776, %v8775
        %v8999 = vpack.c.b16 %v8778, %v8777
        %v9000 = vpack.c.b16 %v8780, %v8779
        %v9001 = vpack.c.b16 %v8782, %v8781
        %v9002 = vpack.c.b16 %v8784, %v8783
        %v9003 = vpack.c.b16 %v8786, %v8785
        %v9004 = vpack.c.b16 %v8788, %v8787
        %v9005 = vpack.c.b16 %v8790, %v8789
        %v9006 = vpack.c.b16 %v8792, %v8791
        %v9007 = vpack.c.b16 %v8794, %v8793
        %v9008 = vpack.c.b16 %v8796, %v8795
        %v9009 = vpack.c.b16 %v8798, %v8797
        %v9010 = vpack.c.b16 %v8800, %v8799
        %v9011 = vpack.c.b16 %v8802, %v8801
        %v9012 = vpack.c.b16 %v8804, %v8803
        %v9013 = vpack.c.b16 %v8806, %v8805
        %v9014 = vpack.c.b16 %v8808, %v8807
        %v9015 = vpack.c.b16 %v8810, %v8809
        %v9016 = vpack.c.b16 %v8812, %v8811
        %v9017 = vpack.c.b16 %v8814, %v8813
        %v9018 = vpack.c.b16 %v8816, %v8815
        %v9019 = vpack.c.b16 %v8818, %v8817
        %v9020 = vpack.c.b16 %v8820, %v8819
        %9221 = vmatprep.subr.bf16.mxu0 0
        %9222 = vmatpush1.bf16.msra.mxu0 %v8821
        %9223 = vmatprep.subr.bf16.mxu0 0
        %9224 = vmatpush1.bf16.msra.mxu0 %v8822
        %9225 = vmatprep.subr.bf16.mxu0 0
        %9226 = vmatpush1.bf16.msra.mxu0 %v8823
        %9227 = vmatprep.subr.bf16.mxu0 0
        %9228 = vmatpush1.bf16.msra.mxu0 %v8824
        %9229 = vmatprep.subr.bf16.mxu0 0
        %9230 = vmatpush1.bf16.msra.mxu0 %v8825
        %9231 = vmatprep.subr.bf16.mxu0 0
        %9232 = vmatpush1.bf16.msra.mxu0 %v8826
        %9233 = vmatprep.subr.bf16.mxu0 0
        %9234 = vmatpush1.bf16.msra.mxu0 %v8827
        %9235 = vmatprep.subr.bf16.mxu0 0
        %9236 = vmatpush1.bf16.msra.mxu0 %v8828
        %9237 = vmatprep.subr.bf16.mxu0 0
        %9238 = vmatpush1.bf16.msra.mxu0 %v8829
        %9239 = vmatprep.subr.bf16.mxu0 0
        %9240 = vmatpush1.bf16.msra.mxu0 %v8830
        %9241 = vmatprep.subr.bf16.mxu0 0
        %9242 = vmatpush1.bf16.msra.mxu0 %v8831
        %9243 = vmatprep.subr.bf16.mxu0 0
        %9244 = vmatpush1.bf16.msra.mxu0 %v8832
        %9245 = vmatprep.subr.bf16.mxu0 0
        %9246 = vmatpush1.bf16.msra.mxu0 %v8833
        %9247 = vmatprep.subr.bf16.mxu0 0
        %9248 = vmatpush1.bf16.msra.mxu0 %v8834
        %9249 = vmatprep.subr.bf16.mxu0 0
        %9250 = vmatpush1.bf16.msra.mxu0 %v8835
        %9251 = vmatprep.subr.bf16.mxu0 0
        %9252 = vmatpush1.bf16.msra.mxu0 %v8836
        %9253 = vmatprep.mubr.bf16.mxu0 %v7596
        %9254 = vmatmul.mubr.bf16.gmra.mrb[0].mxu0 %v7595
        %v9255 = vpop.f32.mrb[0].mxu0
        %v9256 = vadd.f32 %v8020, %v9255
        %v9257 = vpop.f32.mrb[0].mxu0
        %v9258 = vpop.f32.mrb[0].mxu0
        %v9259 = vpop.f32.mrb[0].mxu0
        %9260 = vdwg.mxu0
        %9261 = vmatprep.subr.bf16.mxu0 0
        %9262 = vmatpush1.bf16.msra.mxu0 %v8837
        %9263 = vmatprep.subr.bf16.mxu0 0
        %9264 = vmatpush1.bf16.msra.mxu0 %v8838
        %9265 = vmatprep.subr.bf16.mxu0 0
        %9266 = vmatpush1.bf16.msra.mxu0 %v8839
        %9267 = vmatprep.subr.bf16.mxu0 0
        %9268 = vmatpush1.bf16.msra.mxu0 %v8840
        %9269 = vmatprep.subr.bf16.mxu0 0
        %9270 = vmatpush1.bf16.msra.mxu0 %v8841
        %9271 = vmatprep.subr.bf16.mxu0 0
        %9272 = vmatpush1.bf16.msra.mxu0 %v8842
        %9273 = vmatprep.subr.bf16.mxu0 0
        %9274 = vmatpush1.bf16.msra.mxu0 %v8843
        %9275 = vmatprep.subr.bf16.mxu0 0
        %9276 = vmatpush1.bf16.msra.mxu0 %v8844
        %9277 = vmatprep.subr.bf16.mxu0 0
        %9278 = vmatpush1.bf16.msra.mxu0 %v8845
        %9279 = vmatprep.subr.bf16.mxu0 0
        %9280 = vmatpush1.bf16.msra.mxu0 %v8846
        %9281 = vmatprep.subr.bf16.mxu0 0
        %9282 = vmatpush1.bf16.msra.mxu0 %v8847
        %9283 = vmatprep.subr.bf16.mxu0 0
        %9284 = vmatpush1.bf16.msra.mxu0 %v8848
        %9285 = vmatprep.subr.bf16.mxu0 0
        %9286 = vmatpush1.bf16.msra.mxu0 %v8849
        %9287 = vmatprep.subr.bf16.mxu0 0
        %9288 = vmatpush1.bf16.msra.mxu0 %v8850
        %9289 = vmatprep.subr.bf16.mxu0 0
        %9290 = vmatpush1.bf16.msra.mxu0 %v8851
        %9291 = vmatprep.subr.bf16.mxu0 0
        %9292 = vmatpush1.bf16.msra.mxu0 %v8852
        %9293 = vmatprep.mubr.bf16.mxu0 %v7598
        %9294 = vmatmul.mubr.bf16.gmra.mrb[0].mxu0 %v7597
        %v9295 = vpop.f32.mrb[0].mxu0
        %v9296 = vadd.f32 %v9256, %v9295
        %v9297 = vpop.f32.mrb[0].mxu0
        %v9298 = vpop.f32.mrb[0].mxu0
        %v9299 = vpop.f32.mrb[0].mxu0
        %9300 = vdwg.mxu0
        %9301 = vmatprep.subr.bf16.mxu0 0
        %9302 = vmatpush1.bf16.msra.mxu0 %v8853
        %9303 = vmatprep.subr.bf16.mxu0 0
        %9304 = vmatpush1.bf16.msra.mxu0 %v8854
        %9305 = vmatprep.subr.bf16.mxu0 0
        %9306 = vmatpush1.bf16.msra.mxu0 %v8855
        %9307 = vmatprep.subr.bf16.mxu0 0
        %9308 = vmatpush1.bf16.msra.mxu0 %v8856
        %9309 = vmatprep.subr.bf16.mxu0 0
        %9310 = vmatpush1.bf16.msra.mxu0 %v8857
        %9311 = vmatprep.subr.bf16.mxu0 0
        %9312 = vmatpush1.bf16.msra.mxu0 %v8858
        %9313 = vmatprep.subr.bf16.mxu0 0
        %9314 = vmatpush1.bf16.msra.mxu0 %v8859
        %9315 = vmatprep.subr.bf16.mxu0 0
        %9316 = vmatpush1.bf16.msra.mxu0 %v8860
        %9317 = vmatprep.subr.bf16.mxu0 0
        %9318 = vmatpush1.bf16.msra.mxu0 %v8861
        %9319 = vmatprep.subr.bf16.mxu0 0
        %9320 = vmatpush1.bf16.msra.mxu0 %v8862
        %9321 = vmatprep.subr.bf16.mxu0 0
        %9322 = vmatpush1.bf16.msra.mxu0 %v8863
        %9323 = vmatprep.subr.bf16.mxu0 0
        %9324 = vmatpush1.bf16.msra.mxu0 %v8864
        %9325 = vmatprep.subr.bf16.mxu0 0
        %9326 = vmatpush1.bf16.msra.mxu0 %v8865
        %9327 = vmatprep.subr.bf16.mxu0 0
        %9328 = vmatpush1.bf16.msra.mxu0 %v8866
        %9329 = vmatprep.subr.bf16.mxu0 0
        %9330 = vmatpush1.bf16.msra.mxu0 %v8867
        %9331 = vmatprep.subr.bf16.mxu0 0
        %9332 = vmatpush1.bf16.msra.mxu0 %v8868
        %9333 = vmatprep.mubr.bf16.mxu0 %v7600
        %9334 = vmatmul.mubr.bf16.gmra.mrb[0].mxu0 %v7599
        %v9335 = vpop.f32.mrb[0].mxu0
        %v9336 = vadd.f32 %v9296, %v9335
        %v9337 = vpop.f32.mrb[0].mxu0
        %v9338 = vpop.f32.mrb[0].mxu0
        %v9339 = vpop.f32.mrb[0].mxu0
        %9340 = vdwg.mxu0
        %9341 = vmatprep.subr.bf16.mxu0 0
        %9342 = vmatpush1.bf16.msra.mxu0 %v8869
        %9343 = vmatprep.subr.bf16.mxu0 0
        %9344 = vmatpush1.bf16.msra.mxu0 %v8870
        %9345 = vmatprep.subr.bf16.mxu0 0
        %9346 = vmatpush1.bf16.msra.mxu0 %v8871
        %9347 = vmatprep.subr.bf16.mxu0 0
        %9348 = vmatpush1.bf16.msra.mxu0 %v8872
        %9349 = vmatprep.subr.bf16.mxu0 0
        %9350 = vmatpush1.bf16.msra.mxu0 %v8873
        %9351 = vmatprep.subr.bf16.mxu0 0
        %9352 = vmatpush1.bf16.msra.mxu0 %v8874
        %9353 = vmatprep.subr.bf16.mxu0 0
        %9354 = vmatpush1.bf16.msra.mxu0 %v8875
        %9355 = vmatprep.subr.bf16.mxu0 0
        %9356 = vmatpush1.bf16.msra.mxu0 %v8876
        %9357 = vmatprep.subr.bf16.mxu0 0
        %9358 = vmatpush1.bf16.msra.mxu0 %v8877
        %9359 = vmatprep.subr.bf16.mxu0 0
        %9360 = vmatpush1.bf16.msra.mxu0 %v8878
        %9361 = vmatprep.subr.bf16.mxu0 0
        %9362 = vmatpush1.bf16.msra.mxu0 %v8879
        %9363 = vmatprep.subr.bf16.mxu0 0
        %9364 = vmatpush1.bf16.msra.mxu0 %v8880
        %9365 = vmatprep.subr.bf16.mxu0 0
        %9366 = vmatpush1.bf16.msra.mxu0 %v8881
        %9367 = vmatprep.subr.bf16.mxu0 0
        %9368 = vmatpush1.bf16.msra.mxu0 %v8882
        %9369 = vmatprep.subr.bf16.mxu0 0
        %9370 = vmatpush1.bf16.msra.mxu0 %v8883
        %9371 = vmatprep.subr.bf16.mxu0 0
        %9372 = vmatpush1.bf16.msra.mxu0 %v8884
        %9373 = vmatprep.mubr.bf16.mxu0 %v7602
        %9374 = vmatmul.mubr.bf16.gmra.mrb[0].mxu0 %v7601
        %v9375 = vpop.f32.mrb[0].mxu0
        %v9376 = vadd.f32 %v9336, %v9375
        %v9377 = vpop.f32.mrb[0].mxu0
        %v9378 = vpop.f32.mrb[0].mxu0
        %v9379 = vpop.f32.mrb[0].mxu0
        %9380 = vdwg.mxu0
        %9381 = vmatprep.subr.bf16.mxu0 0
        %9382 = vmatpush1.bf16.msra.mxu0 %v8885
        %9383 = vmatprep.subr.bf16.mxu0 0
        %9384 = vmatpush1.bf16.msra.mxu0 %v8886
        %9385 = vmatprep.subr.bf16.mxu0 0
        %9386 = vmatpush1.bf16.msra.mxu0 %v8887
        %9387 = vmatprep.subr.bf16.mxu0 0
        %9388 = vmatpush1.bf16.msra.mxu0 %v8888
        %9389 = vmatprep.subr.bf16.mxu0 0
        %9390 = vmatpush1.bf16.msra.mxu0 %v8889
        %9391 = vmatprep.subr.bf16.mxu0 0
        %9392 = vmatpush1.bf16.msra.mxu0 %v8890
        %9393 = vmatprep.subr.bf16.mxu0 0
        %9394 = vmatpush1.bf16.msra.mxu0 %v8891
        %9395 = vmatprep.subr.bf16.mxu0 0
        %9396 = vmatpush1.bf16.msra.mxu0 %v8892
        %9397 = vmatprep.subr.bf16.mxu0 0
        %9398 = vmatpush1.bf16.msra.mxu0 %v8893
        %9399 = vmatprep.subr.bf16.mxu0 0
        %9400 = vmatpush1.bf16.msra.mxu0 %v8894
        %9401 = vmatprep.subr.bf16.mxu0 0
        %9402 = vmatpush1.bf16.msra.mxu0 %v8895
        %9403 = vmatprep.subr.bf16.mxu0 0
        %9404 = vmatpush1.bf16.msra.mxu0 %v8896
        %9405 = vmatprep.subr.bf16.mxu0 0
        %9406 = vmatpush1.bf16.msra.mxu0 %v8897
        %9407 = vmatprep.subr.bf16.mxu0 0
        %9408 = vmatpush1.bf16.msra.mxu0 %v8898
        %9409 = vmatprep.subr.bf16.mxu0 0
        %9410 = vmatpush1.bf16.msra.mxu0 %v8899
        %9411 = vmatprep.subr.bf16.mxu0 0
        %9412 = vmatpush1.bf16.msra.mxu0 %v8900
        %9413 = vmatprep.mubr.bf16.mxu0 %v7604
        %9414 = vmatmul.mubr.bf16.gmra.mrb[0].mxu0 %v7603
        %v9415 = vpop.f32.mrb[0].mxu0
        %v9416 = vadd.f32 %v9376, %v9415
        %v9417 = vpop.f32.mrb[0].mxu0
        %v9418 = vpop.f32.mrb[0].mxu0
        %v9419 = vpop.f32.mrb[0].mxu0
        %9420 = vdwg.mxu0
        %9421 = vmatprep.subr.bf16.mxu0 0
        %9422 = vmatpush1.bf16.msra.mxu0 %v8901
        %9423 = vmatprep.subr.bf16.mxu0 0
        %9424 = vmatpush1.bf16.msra.mxu0 %v8902
        %9425 = vmatprep.subr.bf16.mxu0 0
        %9426 = vmatpush1.bf16.msra.mxu0 %v8903
        %9427 = vmatprep.subr.bf16.mxu0 0
        %9428 = vmatpush1.bf16.msra.mxu0 %v8904
        %9429 = vmatprep.subr.bf16.mxu0 0
        %9430 = vmatpush1.bf16.msra.mxu0 %v8905
        %9431 = vmatprep.subr.bf16.mxu0 0
        %9432 = vmatpush1.bf16.msra.mxu0 %v8906
        %9433 = vmatprep.subr.bf16.mxu0 0
        %9434 = vmatpush1.bf16.msra.mxu0 %v8907
        %9435 = vmatprep.subr.bf16.mxu0 0
        %9436 = vmatpush1.bf16.msra.mxu0 %v8908
        %9437 = vmatprep.subr.bf16.mxu0 0
        %9438 = vmatpush1.bf16.msra.mxu0 %v8909
        %9439 = vmatprep.subr.bf16.mxu0 0
        %9440 = vmatpush1.bf16.msra.mxu0 %v8910
        %9441 = vmatprep.subr.bf16.mxu0 0
        %9442 = vmatpush1.bf16.msra.mxu0 %v8911
        %9443 = vmatprep.subr.bf16.mxu0 0
        %9444 = vmatpush1.bf16.msra.mxu0 %v8912
        %9445 = vmatprep.subr.bf16.mxu0 0
        %9446 = vmatpush1.bf16.msra.mxu0 %v8913
        %9447 = vmatprep.subr.bf16.mxu0 0
        %9448 = vmatpush1.bf16.msra.mxu0 %v8914
        %9449 = vmatprep.subr.bf16.mxu0 0
        %9450 = vmatpush1.bf16.msra.mxu0 %v8915
        %9451 = vmatprep.subr.bf16.mxu0 0
        %9452 = vmatpush1.bf16.msra.mxu0 %v8916
        %9453 = vmatprep.mubr.bf16.mxu0 %v7606
        %9454 = vmatmul.mubr.bf16.gmra.mrb[0].mxu0 %v7605
        %v9455 = vpop.f32.mrb[0].mxu0
        %v9456 = vadd.f32 %v9416, %v9455
        %v9457 = vpop.f32.mrb[0].mxu0
        %v9458 = vpop.f32.mrb[0].mxu0
        %v9459 = vpop.f32.mrb[0].mxu0
        %9460 = vdwg.mxu0
        %9461 = vmatprep.subr.bf16.mxu0 0
        %9462 = vmatpush1.bf16.msra.mxu0 %v8917
        %9463 = vmatprep.subr.bf16.mxu0 0
        %9464 = vmatpush1.bf16.msra.mxu0 %v8918
        %9465 = vmatprep.subr.bf16.mxu0 0
        %9466 = vmatpush1.bf16.msra.mxu0 %v8919
        %9467 = vmatprep.subr.bf16.mxu0 0
        %9468 = vmatpush1.bf16.msra.mxu0 %v8920
        %9469 = vmatprep.subr.bf16.mxu0 0
        %9470 = vmatpush1.bf16.msra.mxu0 %v8921
        %9471 = vmatprep.subr.bf16.mxu0 0
        %9472 = vmatpush1.bf16.msra.mxu0 %v8922
        %9473 = vmatprep.subr.bf16.mxu0 0
        %9474 = vmatpush1.bf16.msra.mxu0 %v8923
        %9475 = vmatprep.subr.bf16.mxu0 0
        %9476 = vmatpush1.bf16.msra.mxu0 %v8924
        %9477 = vmatprep.subr.bf16.mxu0 0
        %9478 = vmatpush1.bf16.msra.mxu0 %v8925
        %9479 = vmatprep.subr.bf16.mxu0 0
        %9480 = vmatpush1.bf16.msra.mxu0 %v8926
        %9481 = vmatprep.subr.bf16.mxu0 0
        %9482 = vmatpush1.bf16.msra.mxu0 %v8927
        %9483 = vmatprep.subr.bf16.mxu0 0
        %9484 = vmatpush1.bf16.msra.mxu0 %v8928
        %9485 = vmatprep.subr.bf16.mxu0 0
        %9486 = vmatpush1.bf16.msra.mxu0 %v8929
        %9487 = vmatprep.subr.bf16.mxu0 0
        %9488 = vmatpush1.bf16.msra.mxu0 %v8930
        %9489 = vmatprep.subr.bf16.mxu0 0
        %9490 = vmatpush1.bf16.msra.mxu0 %v8931
        %9491 = vmatprep.subr.bf16.mxu0 0
        %9492 = vmatpush1.bf16.msra.mxu0 %v8932
        %9493 = vmatprep.mubr.bf16.mxu0 %v7608
        %9494 = vmatmul.mubr.bf16.gmra.mrb[0].mxu0 %v7607
        %v9495 = vpop.f32.mrb[0].mxu0
        %v9496 = vadd.f32 %v9456, %v9495
        %v9497 = vpop.f32.mrb[0].mxu0
        %v9498 = vpop.f32.mrb[0].mxu0
        %v9499 = vpop.f32.mrb[0].mxu0
        %9500 = vdwg.mxu0
        %9501 = vmatprep.subr.bf16.mxu0 0
        %9502 = vmatpush1.bf16.msra.mxu0 %v8933
        %9503 = vmatprep.subr.bf16.mxu0 0
        %9504 = vmatpush1.bf16.msra.mxu0 %v8934
        %9505 = vmatprep.subr.bf16.mxu0 0
        %9506 = vmatpush1.bf16.msra.mxu0 %v8935
        %9507 = vmatprep.subr.bf16.mxu0 0
        %9508 = vmatpush1.bf16.msra.mxu0 %v8936
        %9509 = vmatprep.subr.bf16.mxu0 0
        %9510 = vmatpush1.bf16.msra.mxu0 %v8937
        %9511 = vmatprep.subr.bf16.mxu0 0
        %9512 = vmatpush1.bf16.msra.mxu0 %v8938
        %9513 = vmatprep.subr.bf16.mxu0 0
        %9514 = vmatpush1.bf16.msra.mxu0 %v8939
        %9515 = vmatprep.subr.bf16.mxu0 0
        %9516 = vmatpush1.bf16.msra.mxu0 %v8940
        %9517 = vmatprep.subr.bf16.mxu0 0
        %9518 = vmatpush1.bf16.msra.mxu0 %v8941
        %9519 = vmatprep.subr.bf16.mxu0 0
        %9520 = vmatpush1.bf16.msra.mxu0 %v8942
        %9521 = vmatprep.subr.bf16.mxu0 0
        %9522 = vmatpush1.bf16.msra.mxu0 %v8943
        %9523 = vmatprep.subr.bf16.mxu0 0
        %9524 = vmatpush1.bf16.msra.mxu0 %v8944
        %9525 = vmatprep.subr.bf16.mxu0 0
        %9526 = vmatpush1.bf16.msra.mxu0 %v8945
        %9527 = vmatprep.subr.bf16.mxu0 0
        %9528 = vmatpush1.bf16.msra.mxu0 %v8946
        %9529 = vmatprep.subr.bf16.mxu0 0
        %9530 = vmatpush1.bf16.msra.mxu0 %v8947
        %9531 = vmatprep.subr.bf16.mxu0 0
        %9532 = vmatpush1.bf16.msra.mxu0 %v8948
        %9533 = vmatprep.mubr.bf16.mxu0 %v7610
        %9534 = vmatmul.mubr.bf16.gmra.mrb[0].mxu0 %v7609
        %v9535 = vpop.f32.mrb[0].mxu0
        %v9536 = vadd.f32 %v9496, %v9535
        %v9537 = vpop.f32.mrb[0].mxu0
        %v9538 = vpop.f32.mrb[0].mxu0
        %v9539 = vpop.f32.mrb[0].mxu0
        %9540 = vdwg.mxu0
        %9541 = vmatprep.subr.bf16.mxu0 0
        %9542 = vmatpush1.bf16.msra.mxu0 %v8949
        %9543 = vmatprep.subr.bf16.mxu0 0
        %9544 = vmatpush1.bf16.msra.mxu0 %v8950
        %9545 = vmatprep.subr.bf16.mxu0 0
        %9546 = vmatpush1.bf16.msra.mxu0 %v8951
        %9547 = vmatprep.subr.bf16.mxu0 0
        %9548 = vmatpush1.bf16.msra.mxu0 %v8952
        %9549 = vmatprep.subr.bf16.mxu0 0
        %9550 = vmatpush1.bf16.msra.mxu0 %v8953
        %9551 = vmatprep.subr.bf16.mxu0 0
        %9552 = vmatpush1.bf16.msra.mxu0 %v8954
        %9553 = vmatprep.subr.bf16.mxu0 0
        %9554 = vmatpush1.bf16.msra.mxu0 %v8955
        %9555 = vmatprep.subr.bf16.mxu0 0
        %9556 = vmatpush1.bf16.msra.mxu0 %v8956
        %9557 = vmatprep.subr.bf16.mxu0 0
        %9558 = vmatpush1.bf16.msra.mxu0 %v8957
        %9559 = vmatprep.subr.bf16.mxu0 0
        %9560 = vmatpush1.bf16.msra.mxu0 %v8958
        %9561 = vmatprep.subr.bf16.mxu0 0
        %9562 = vmatpush1.bf16.msra.mxu0 %v8959
        %9563 = vmatprep.subr.bf16.mxu0 0
        %9564 = vmatpush1.bf16.msra.mxu0 %v8960
        %9565 = vmatprep.subr.bf16.mxu0 0
        %9566 = vmatpush1.bf16.msra.mxu0 %v8961
        %9567 = vmatprep.subr.bf16.mxu0 0
        %9568 = vmatpush1.bf16.msra.mxu0 %v8962
        %9569 = vmatprep.subr.bf16.mxu0 0
        %9570 = vmatpush1.bf16.msra.mxu0 %v8963
        %9571 = vmatprep.subr.bf16.mxu0 0
        %9572 = vmatpush1.bf16.msra.mxu0 %v8964
        %9573 = vmatprep.mubr.bf16.mxu0 %v7612
        %9574 = vmatmul.mubr.bf16.gmra.mrb[0].mxu0 %v7611
        %v9575 = vpop.f32.mrb[0].mxu0
        %v9576 = vadd.f32 %v9536, %v9575
        %v9577 = vpop.f32.mrb[0].mxu0
        %v9578 = vpop.f32.mrb[0].mxu0
        %v9579 = vpop.f32.mrb[0].mxu0
        %9580 = vdwg.mxu0
        %9581 = vmatprep.subr.bf16.mxu0 0
        %9582 = vmatpush1.bf16.msra.mxu0 %v8965
        %9583 = vmatprep.subr.bf16.mxu0 0
        %9584 = vmatpush1.bf16.msra.mxu0 %v8966
        %9585 = vmatprep.subr.bf16.mxu0 0
        %9586 = vmatpush1.bf16.msra.mxu0 %v8967
        %9587 = vmatprep.subr.bf16.mxu0 0
        %9588 = vmatpush1.bf16.msra.mxu0 %v8968
        %9589 = vmatprep.subr.bf16.mxu0 0
        %9590 = vmatpush1.bf16.msra.mxu0 %v8969
        %9591 = vmatprep.subr.bf16.mxu0 0
        %9592 = vmatpush1.bf16.msra.mxu0 %v8970
        %9593 = vmatprep.subr.bf16.mxu0 0
        %9594 = vmatpush1.bf16.msra.mxu0 %v8971
        %9595 = vmatprep.subr.bf16.mxu0 0
        %9596 = vmatpush1.bf16.msra.mxu0 %v8972
        %9597 = vmatprep.subr.bf16.mxu0 0
        %9598 = vmatpush1.bf16.msra.mxu0 %v8973
        %9599 = vmatprep.subr.bf16.mxu0 0
        %9600 = vmatpush1.bf16.msra.mxu0 %v8974
        %9601 = vmatprep.subr.bf16.mxu0 0
        %9602 = vmatpush1.bf16.msra.mxu0 %v8975
        %9603 = vmatprep.subr.bf16.mxu0 0
        %9604 = vmatpush1.bf16.msra.mxu0 %v8976
        %9605 = vmatprep.subr.bf16.mxu0 0
        %9606 = vmatpush1.bf16.msra.mxu0 %v8977
        %9607 = vmatprep.subr.bf16.mxu0 0
        %9608 = vmatpush1.bf16.msra.mxu0 %v8978
        %9609 = vmatprep.subr.bf16.mxu0 0
        %9610 = vmatpush1.bf16.msra.mxu0 %v8979
        %9611 = vmatprep.subr.bf16.mxu0 0
        %9612 = vmatpush1.bf16.msra.mxu0 %v8980
        %9613 = vmatprep.mubr.bf16.mxu0 %v7614
        %9614 = vmatmul.mubr.bf16.gmra.mrb[0].mxu0 %v7613
        %v9615 = vpop.f32.mrb[0].mxu0
        %v9616 = vadd.f32 %v9576, %v9615
        %v9617 = vpop.f32.mrb[0].mxu0
        %v9618 = vpop.f32.mrb[0].mxu0
        %v9619 = vpop.f32.mrb[0].mxu0
        %9620 = vdwg.mxu0
        %9621 = vmatprep.subr.bf16.mxu0 0
        %9622 = vmatpush1.bf16.msra.mxu0 %v8981
        %9623 = vmatprep.subr.bf16.mxu0 0
        %9624 = vmatpush1.bf16.msra.mxu0 %v8982
        %9625 = vmatprep.subr.bf16.mxu0 0
        %9626 = vmatpush1.bf16.msra.mxu0 %v8983
        %9627 = vmatprep.subr.bf16.mxu0 0
        %9628 = vmatpush1.bf16.msra.mxu0 %v8984
        %9629 = vmatprep.subr.bf16.mxu0 0
        %9630 = vmatpush1.bf16.msra.mxu0 %v8985
        %9631 = vmatprep.subr.bf16.mxu0 0
        %9632 = vmatpush1.bf16.msra.mxu0 %v8986
        %9633 = vmatprep.subr.bf16.mxu0 0
        %9634 = vmatpush1.bf16.msra.mxu0 %v8987
        %9635 = vmatprep.subr.bf16.mxu0 0
        %9636 = vmatpush1.bf16.msra.mxu0 %v8988
        %9637 = vmatprep.subr.bf16.mxu0 0
        %9638 = vmatpush1.bf16.msra.mxu0 %v8989
        %9639 = vmatprep.subr.bf16.mxu0 0
        %9640 = vmatpush1.bf16.msra.mxu0 %v8990
        %9641 = vmatprep.subr.bf16.mxu0 0
        %9642 = vmatpush1.bf16.msra.mxu0 %v8991
        %9643 = vmatprep.subr.bf16.mxu0 0
        %9644 = vmatpush1.bf16.msra.mxu0 %v8992
        %9645 = vmatprep.subr.bf16.mxu0 0
        %9646 = vmatpush1.bf16.msra.mxu0 %v8993
        %9647 = vmatprep.subr.bf16.mxu0 0
        %9648 = vmatpush1.bf16.msra.mxu0 %v8994
        %9649 = vmatprep.subr.bf16.mxu0 0
        %9650 = vmatpush1.bf16.msra.mxu0 %v8995
        %9651 = vmatprep.subr.bf16.mxu0 0
        %9652 = vmatpush1.bf16.msra.mxu0 %v8996
        %9653 = vmatprep.mubr.bf16.mxu0 %v7616
        %9654 = vmatmul.mubr.bf16.gmra.mrb[0].mxu0 %v7615
        %v9655 = vpop.f32.mrb[0].mxu0
        %v9656 = vadd.f32 %v9616, %v9655
        %v9657 = vpop.f32.mrb[0].mxu0
        %v9658 = vpop.f32.mrb[0].mxu0
        %v9659 = vpop.f32.mrb[0].mxu0
        %9660 = vdwg.mxu0
        %9661 = vmatprep.subr.bf16.mxu0 0
        %9662 = vmatpush1.bf16.msra.mxu0 %v8997
        %9663 = vmatprep.subr.bf16.mxu0 0
        %9664 = vmatpush1.bf16.msra.mxu0 %v8998
        %9665 = vmatprep.subr.bf16.mxu0 0
        %9666 = vmatpush1.bf16.msra.mxu0 %v8999
        %9667 = vmatprep.subr.bf16.mxu0 0
        %9668 = vmatpush1.bf16.msra.mxu0 %v9000
        %9669 = vmatprep.subr.bf16.mxu0 0
        %9670 = vmatpush1.bf16.msra.mxu0 %v9001
        %9671 = vmatprep.subr.bf16.mxu0 0
        %9672 = vmatpush1.bf16.msra.mxu0 %v9002
        %9673 = vmatprep.subr.bf16.mxu0 0
        %9674 = vmatpush1.bf16.msra.mxu0 %v9003
        %9675 = vmatprep.subr.bf16.mxu0 0
        %9676 = vmatpush1.bf16.msra.mxu0 %v9004
        %9677 = vmatprep.subr.bf16.mxu0 0
        %9678 = vmatpush1.bf16.msra.mxu0 %v9005
        %9679 = vmatprep.subr.bf16.mxu0 0
        %9680 = vmatpush1.bf16.msra.mxu0 %v9006
        %9681 = vmatprep.subr.bf16.mxu0 0
        %9682 = vmatpush1.bf16.msra.mxu0 %v9007
        %9683 = vmatprep.subr.bf16.mxu0 0
        %9684 = vmatpush1.bf16.msra.mxu0 %v9008
        %9685 = vmatprep.subr.bf16.mxu0 0
        %9686 = vmatpush1.bf16.msra.mxu0 %v9009
        %9687 = vmatprep.subr.bf16.mxu0 0
        %9688 = vmatpush1.bf16.msra.mxu0 %v9010
        %9689 = vmatprep.subr.bf16.mxu0 0
        %9690 = vmatpush1.bf16.msra.mxu0 %v9011
        %9691 = vmatprep.subr.bf16.mxu0 0
        %9692 = vmatpush1.bf16.msra.mxu0 %v9012
        %9693 = vmatprep.mubr.bf16.mxu0 %v7618
        %9694 = vmatmul.mubr.bf16.gmra.mrb[0].mxu0 %v7617
        %v9695 = vpop.f32.mrb[0].mxu0
        %v9696 = vadd.f32 %v9656, %v9695
        %v9697 = vpop.f32.mrb[0].mxu0
        %v9698 = vpop.f32.mrb[0].mxu0
        %v9699 = vpop.f32.mrb[0].mxu0
        %9700 = vdwg.mxu0
        %9701 = vmatprep.subr.bf16.mxu0 0
        %9702 = vmatpush1.bf16.msra.mxu0 %v9013
        %9703 = vmatprep.subr.bf16.mxu0 0
        %9704 = vmatpush1.bf16.msra.mxu0 %v9014
        %9705 = vmatprep.subr.bf16.mxu0 0
        %9706 = vmatpush1.bf16.msra.mxu0 %v9015
        %9707 = vmatprep.subr.bf16.mxu0 0
        %9708 = vmatpush1.bf16.msra.mxu0 %v9016
        %9709 = vmatprep.subr.bf16.mxu0 0
        %9710 = vmatpush1.bf16.msra.mxu0 %v9017
        %9711 = vmatprep.subr.bf16.mxu0 0
        %9712 = vmatpush1.bf16.msra.mxu0 %v9018
        %9713 = vmatprep.subr.bf16.mxu0 0
        %9714 = vmatpush1.bf16.msra.mxu0 %v9019
        %9715 = vmatprep.subr.bf16.mxu0 0
        %9716 = vmatpush1.bf16.msra.mxu0 %v9020
        %9717 = vmatprep.subr.bf16.mxu0 0
        %9718 = vmatpush1.bf16.msra.mxu0 0
        %9719 = vmatprep.subr.bf16.mxu0 0
        %9720 = vmatpush1.bf16.msra.mxu0 0
        %9721 = vmatprep.subr.bf16.mxu0 0
        %9722 = vmatpush1.bf16.msra.mxu0 0
        %9723 = vmatprep.subr.bf16.mxu0 0
        %9724 = vmatpush1.bf16.msra.mxu0 0
        %9725 = vmatprep.subr.bf16.mxu0 0
        %9726 = vmatpush1.bf16.msra.mxu0 0
        %9727 = vmatprep.subr.bf16.mxu0 0
        %9728 = vmatpush1.bf16.msra.mxu0 0
        %9729 = vmatprep.subr.bf16.mxu0 0
        %9730 = vmatpush1.bf16.msra.mxu0 0
        %9731 = vmatprep.subr.bf16.mxu0 0
        %9732 = vmatpush1.bf16.msra.mxu0 0
        %9733 = vmatprep.mubr.bf16.mxu0 0
        %9734 = vmatmul.mubr.bf16.gmra.mrb[0].mxu0 %v7619
        %v9735 = vpop.f32.mrb[0].mxu0
        %v9736 = vadd.f32 %v9696, %v9735
        %v9737 = vpop.f32.mrb[0].mxu0
        %v9738 = vpop.f32.mrb[0].mxu0
        %v9739 = vpop.f32.mrb[0].mxu0
        %9740 = vdwg.mxu0
        %v9741 = vmax.f32 %v9736, 0.0
        %v9742 = vpack.c.bf16 %v9741, %v9741
        %v9743 = vld [vmem:[%s7] sm:$0xf]
        %v9744 = vld [vmem:[%s7 + $0x4] sm:$0xf]
        %v9745 = vld [vmem:[%s7 + $0x8] sm:$0xf]
        %v9746 = vld [vmem:[%s7 + $0xc] sm:$0xf]
        %v9747 = vld [vmem:[%s7 + $0x10] sm:$0xf]
        %v9748 = vld [vmem:[%s7 + $0x14] sm:$0xf]
        %v9749 = vld [vmem:[%s7 + $0x18] sm:$0xf]
        %v9750 = vld [vmem:[%s7 + $0x1c] sm:$0xf]
        %v9751 = vld [vmem:[%s7 + $0x20] sm:$0xf]
        %v9752 = vld [vmem:[%s7 + $0x24] sm:$0xf]
        %v9753 = vld [vmem:[%s7 + $0x28] sm:$0xf]
        %v9754 = vld [vmem:[%s7 + $0x2c] sm:$0xf]
        %v9755 = vld [vmem:[%s7 + $0x30] sm:$0xf]
        %v9756 = vld [vmem:[%s7 + $0x34] sm:$0xf]
        %v9757 = vld [vmem:[%s7 + $0x38] sm:$0xf]
        %v9758 = vld [vmem:[%s7 + $0x3c] sm:$0xf]
        %v9759 = vld [vmem:[%s8] sm:$0x1]
        %v9776 = vunpack.c.l.b16 %v9743
        %v9777 = vunpack.c.l.b16 %v9744
        %v9778 = vunpack.c.l.b16 %v9745
        %v9779 = vunpack.c.l.b16 %v9746
        %v9780 = vunpack.c.l.b16 %v9747
        %v9781 = vunpack.c.l.b16 %v9748
        %v9782 = vunpack.c.l.b16 %v9749
        %v9783 = vunpack.c.l.b16 %v9750
        %v9784 = vunpack.c.l.b16 %v9751
        %v9785 = vunpack.c.l.b16 %v9752
        %v9786 = vunpack.c.l.b16 %v9753
        %v9787 = vunpack.c.l.b16 %v9754
        %v9788 = vunpack.c.l.b16 %v9755
        %v9789 = vunpack.c.l.b16 %v9756
        %v9790 = vunpack.c.l.b16 %v9757
        %v9791 = vunpack.c.l.b16 %v9758
        %v9792 = vpack.c.b16 %v9777, %v9776
        %v9793 = vpack.c.b16 %v9779, %v9778
        %v9794 = vpack.c.b16 %v9781, %v9780
        %v9795 = vpack.c.b16 %v9783, %v9782
        %v9796 = vpack.c.b16 %v9785, %v9784
        %v9797 = vpack.c.b16 %v9787, %v9786
        %v9798 = vpack.c.b16 %v9789, %v9788
        %v9799 = vpack.c.b16 %v9791, %v9790
        %9808 = vmatprep.subr.bf16.mxu0 0
        %9809 = vmatpush1.bf16.msra.mxu0 %v9792
        %9810 = vmatprep.subr.bf16.mxu0 0
        %9811 = vmatpush1.bf16.msra.mxu0 %v9793
        %9812 = vmatprep.subr.bf16.mxu0 0
        %9813 = vmatpush1.bf16.msra.mxu0 %v9794
        %9814 = vmatprep.subr.bf16.mxu0 0
        %9815 = vmatpush1.bf16.msra.mxu0 %v9795
        %9816 = vmatprep.subr.bf16.mxu0 0
        %9817 = vmatpush1.bf16.msra.mxu0 %v9796
        %9818 = vmatprep.subr.bf16.mxu0 0
        %9819 = vmatpush1.bf16.msra.mxu0 %v9797
        %9820 = vmatprep.subr.bf16.mxu0 0
        %9821 = vmatpush1.bf16.msra.mxu0 %v9798
        %9822 = vmatprep.subr.bf16.mxu0 0
        %9823 = vmatpush1.bf16.msra.mxu0 %v9799
        %9824 = vmatprep.subr.bf16.mxu0 0
        %9825 = vmatpush1.bf16.msra.mxu0 0
        %9826 = vmatprep.subr.bf16.mxu0 0
        %9827 = vmatpush1.bf16.msra.mxu0 0
        %9828 = vmatprep.subr.bf16.mxu0 0
        %9829 = vmatpush1.bf16.msra.mxu0 0
        %9830 = vmatprep.subr.bf16.mxu0 0
        %9831 = vmatpush1.bf16.msra.mxu0 0
        %9832 = vmatprep.subr.bf16.mxu0 0
        %9833 = vmatpush1.bf16.msra.mxu0 0
        %9834 = vmatprep.subr.bf16.mxu0 0
        %9835 = vmatpush1.bf16.msra.mxu0 0
        %9836 = vmatprep.subr.bf16.mxu0 0
        %9837 = vmatpush1.bf16.msra.mxu0 0
        %9838 = vmatprep.subr.bf16.mxu0 0
        %9839 = vmatpush1.bf16.msra.mxu0 0
        %9840 = vmatprep.mubr.bf16.mxu0 0
        %9841 = vmatmul.mubr.bf16.gmra.mrb[0].mxu0 %v9742
        %v9842 = vpop.f32.mrb[0].mxu0
        %v9843 = vadd.f32 %v9759, %v9842
        %v9844 = vpop.f32.mrb[0].mxu0
        %v9845 = vpop.f32.mrb[0].mxu0
        %v9846 = vpop.f32.mrb[0].mxu0
        %9847 = vdwg.mxu0
        %v9848 = vmax.f32 %v9843, 0.0
        %v9849 = vpack.c.bf16 %v9848, %v9848
        %v9850 = vld [vmem:[%s9] sm:$0xf]
        %v9851 = vld [vmem:[%s9 + $0x4] sm:$0xf]
        %v9852 = vld [vmem:[%s9 + $0x8] sm:$0xf]
        %v9853 = vld [vmem:[%s9 + $0xc] sm:$0xf]
        %v9854 = vld [vmem:[%s9 + $0x10] sm:$0xf]
        %v9855 = vld [vmem:[%s9 + $0x14] sm:$0xf]
        %v9856 = vld [vmem:[%s9 + $0x18] sm:$0xf]
        %v9857 = vld [vmem:[%s9 + $0x1c] sm:$0xf]
        %v9858 = vld [vmem:[%s9 + $0x20] sm:$0xf]
        %v9859 = vld [vmem:[%s9 + $0x24] sm:$0xf]
        %v9860 = vld [vmem:[%s9 + $0x28] sm:$0xf]
        %v9861 = vld [vmem:[%s9 + $0x2c] sm:$0xf]
        %v9862 = vld [vmem:[%s9 + $0x30] sm:$0xf]
        %v9863 = vld [vmem:[%s9 + $0x34] sm:$0xf]
        %v9864 = vld [vmem:[%s9 + $0x38] sm:$0xf]
        %v9865 = vld [vmem:[%s9 + $0x3c] sm:$0xf]
        %v9866 = vld [vmem:[%s10] sm:$0x1]
        %v9883 = vunpack.c.l.b16 %v9850
        %v9884 = vunpack.c.l.b16 %v9851
        %v9885 = vunpack.c.l.b16 %v9852
        %v9886 = vunpack.c.l.b16 %v9853
        %v9887 = vunpack.c.l.b16 %v9854
        %v9888 = vunpack.c.l.b16 %v9855
        %v9889 = vunpack.c.l.b16 %v9856
        %v9890 = vunpack.c.l.b16 %v9857
        %v9891 = vunpack.c.l.b16 %v9858
        %v9892 = vunpack.c.l.b16 %v9859
        %v9893 = vunpack.c.l.b16 %v9860
        %v9894 = vunpack.c.l.b16 %v9861
        %v9895 = vunpack.c.l.b16 %v9862
        %v9896 = vunpack.c.l.b16 %v9863
        %v9897 = vunpack.c.l.b16 %v9864
        %v9898 = vunpack.c.l.b16 %v9865
        %v9899 = vpack.c.b16 %v9884, %v9883
        %v9900 = vpack.c.b16 %v9886, %v9885
        %v9901 = vpack.c.b16 %v9888, %v9887
        %v9902 = vpack.c.b16 %v9890, %v9889
        %v9903 = vpack.c.b16 %v9892, %v9891
        %v9904 = vpack.c.b16 %v9894, %v9893
        %v9905 = vpack.c.b16 %v9896, %v9895
        %v9906 = vpack.c.b16 %v9898, %v9897
        %9915 = vmatprep.subr.bf16.mxu0 0
        %9916 = vmatpush1.bf16.msra.mxu0 %v9899
        %9917 = vmatprep.subr.bf16.mxu0 0
        %9918 = vmatpush1.bf16.msra.mxu0 %v9900
        %9919 = vmatprep.subr.bf16.mxu0 0
        %9920 = vmatpush1.bf16.msra.mxu0 %v9901
        %9921 = vmatprep.subr.bf16.mxu0 0
        %9922 = vmatpush1.bf16.msra.mxu0 %v9902
        %9923 = vmatprep.subr.bf16.mxu0 0
        %9924 = vmatpush1.bf16.msra.mxu0 %v9903
        %9925 = vmatprep.subr.bf16.mxu0 0
        %9926 = vmatpush1.bf16.msra.mxu0 %v9904
        %9927 = vmatprep.subr.bf16.mxu0 0
        %9928 = vmatpush1.bf16.msra.mxu0 %v9905
        %9929 = vmatprep.subr.bf16.mxu0 0
        %9930 = vmatpush1.bf16.msra.mxu0 %v9906
        %9931 = vmatprep.subr.bf16.mxu0 0
        %9932 = vmatpush1.bf16.msra.mxu0 0
        %9933 = vmatprep.subr.bf16.mxu0 0
        %9934 = vmatpush1.bf16.msra.mxu0 0
        %9935 = vmatprep.subr.bf16.mxu0 0
        %9936 = vmatpush1.bf16.msra.mxu0 0
        %9937 = vmatprep.subr.bf16.mxu0 0
        %9938 = vmatpush1.bf16.msra.mxu0 0
        %9939 = vmatprep.subr.bf16.mxu0 0
        %9940 = vmatpush1.bf16.msra.mxu0 0
        %9941 = vmatprep.subr.bf16.mxu0 0
        %9942 = vmatpush1.bf16.msra.mxu0 0
        %9943 = vmatprep.subr.bf16.mxu0 0
        %9944 = vmatpush1.bf16.msra.mxu0 0
        %9945 = vmatprep.subr.bf16.mxu0 0
        %9946 = vmatpush1.bf16.msra.mxu0 0
        %9947 = vmatprep.mubr.bf16.mxu0 0
        %9948 = vmatmul.mubr.bf16.gmra.mrb[0].mxu0 %v9849
        %v9949 = vpop.f32.mrb[0].mxu0
        %v9950 = vadd.f32 %v9866, %v9949
        %v9951 = vpop.f32.mrb[0].mxu0
        %v9952 = vpop.f32.mrb[0].mxu0
        %v9953 = vpop.f32.mrb[0].mxu0
        %9954 = vdwg.mxu0
        %9955 = vst [vmem:[%s378] sm:$0x1] %v9950
        %s9956 = sand.u32 %s269, 1
        %s9957 = scalar_lea.sflag [#allocation7], %s9956
        %s9958 = sand.u32 %s269, 1
        %s9959 = scalar_lea.vmem [#allocation6], %s9958
        // Predicated region
        $region65: #{simple_cnn_forward.1} parent=63 // pred_check
          %p9960 = pneg %p279
        $region66: #{simple_cnn_forward.1} parent=63 // pred_check_branch
          %9962 = sbr.rel (%p9960) target = $region68
        $region67: #{simple_cnn_forward.1} parent=63 // pred_region
          %s9964 = ssub.s32 16, 16
          %9965 = vsyncadd %s9957, %s9964
          %s9966 = smul.addr %s25, 16
          %s9967 = scalar_lea.hbm %s11, %s9966
          %s9969 = sshll.u32 %s9959, 4
          %s9970 = int_to_ptr.vmem [resolvable:$true] %s9969
          %9972 = dma.vmem_to_hbm [thread:$0]  %s9970, 16, %s9967, %s9957
        $region68: #{simple_cnn_forward.1} parent=63 // pred_fallthru
          _
      $region64: #{simple_cnn_forward.1} parent=5 // pred_fallthru
        _
      %p9973 = scmp.le.s32.totalorder 2, %s20
      // Predicated region
      $region69: #{simple_cnn_forward.1} parent=5 // pred_check
        %p9974 = pneg %p9973
      $region70: #{simple_cnn_forward.1} parent=5 // pred_check_branch
        %9976 = sbr.rel (%p9974) target = $region72
      $region71: #{simple_cnn_forward.1} parent=5 // pred_region
        %s9977 = ssub.s32 %s20, 2
        // Predicated region
        $region73: #{simple_cnn_forward.1} parent=71 // pred_check
          %p9978 = pneg %p285
        $region74: #{simple_cnn_forward.1} parent=71 // pred_check_branch
          %9980 = sbr.rel (%p9978) target = $region76
        $region75: #{simple_cnn_forward.1} parent=71 // pred_region
          %s9981 = sand.u32 %s270, 1
          %s9982 = scalar_lea.sflag [#allocation7], %s9981
          %s9983 = sand.u32 %s270, 1
          %s9984 = scalar_lea.vmem [#allocation6], %s9983
          %9985 = dma.done %s9982, 16
        $region76: #{simple_cnn_forward.1} parent=71 // pred_fallthru
          _
      $region72: #{simple_cnn_forward.1} parent=5 // pred_fallthru
        _
    $region6: #{simple_cnn_forward.1} parent=1 // loop_footer
      %s24 = sadd.s32 1, %s20
    $region7: #{simple_cnn_forward.1} parent=1 // loop_footer_branch
      %19 = sbr.rel target = $region3
    $region8: #{simple_cnn_forward.1} parent=1 // loop_exit
      _
    %9986 = vsyncpa [#allocation7], 1
    %s9987 = scalar_lea.sflag [#allocation7], 1
    %9988 = vsyncpa %s9987, 1

</llo_original>
